<compile_context>
chip_gen: v6e
topology: v6e:2x2x1
jax: 0.10.0
libtpu: 0.0.40
codegen_flags: <defaults>
</compile_context>

<pallas_src>
import functools

import jax
import jax.numpy as jnp
from jax.experimental import pallas as pl
from jax.experimental.pallas import tpu as pltpu


# Tunables (per perf review): a 256-1024 row tile keeps the MXU fed while the
# double-buffered bf16 patch tile (512 x 1152 = 1.2 MiB) stays far below even
# v7x's 64 MiB VMEM; 32 MiB scoped VMEM is set explicitly for all generations.
_TM = 512
_LANES = 128
_VMEM_LIMIT_BYTES = 32 * 1024 * 1024


def _round_up(a, b):
    return (a + b - 1) // b * b


# ----------------------------------------------------------------------------
# Pallas kernel: fused matmul + bias + (optional) ReLU — the conv hot path.
# ----------------------------------------------------------------------------
def _matmul_bias_act_kernel(x_ref, w_ref, b_ref, o_ref, *, apply_relu):
    # bf16 x bf16 -> f32 accumulate on the MXU; bias + ReLU in f32 on the VPU.
    acc = jnp.dot(x_ref[...], w_ref[...], preferred_element_type=jnp.float32)
    acc = acc + b_ref[...]
    if apply_relu:
        acc = jnp.maximum(acc, 0.0)
    o_ref[...] = acc.astype(o_ref.dtype)


def matmul_bias_act(x, w, b, apply_relu):
    """x: (M, K) patches, w: (K, Cout), b: (Cout,) -> (M, Cout) float32."""
    M, K = x.shape
    K2, Cout = w.shape
    assert K == K2

    # Lane-dense output: pad Cout to a multiple of 128 so stores are unmasked.
    Cout_p = _round_up(Cout, _LANES)
    if Cout_p != Cout:
        w = jnp.pad(w, ((0, 0), (0, Cout_p - Cout)))
        b = jnp.pad(b, ((0, Cout_p - Cout),))

    # Row tiling: tm multiple of 16 (bf16 sublane packing), capped at _TM so
    # VMEM usage is independent of the image resolution; pad M so every grid
    # step sees a full tile (padding rows are sliced off below).
    tm = min(_TM, _round_up(M, 16))
    M_p = _round_up(M, tm)
    if M_p != M:
        x = jnp.pad(x, ((0, M_p - M), (0, 0)))

    x = x.astype(jnp.bfloat16)
    w = w.astype(jnp.bfloat16)
    b2 = b.reshape(1, Cout_p).astype(jnp.float32)

    kernel = functools.partial(_matmul_bias_act_kernel, apply_relu=apply_relu)
    cost = pl.CostEstimate(
        flops=2 * M_p * K * Cout_p,
        transcendentals=0,
        bytes_accessed=M_p * K * 2 + K * Cout_p * 2 + M_p * Cout_p * 4,
    )
    out = pl.pallas_call(
        kernel,
        out_shape=jax.ShapeDtypeStruct((M_p, Cout_p), jnp.float32),
        grid=(M_p // tm,),
        in_specs=[
            pl.BlockSpec((tm, K), lambda i: (i, 0)),      # streamed row tiles
            pl.BlockSpec((K, Cout_p), lambda i: (0, 0)),  # resident weights
            pl.BlockSpec((1, Cout_p), lambda i: (0, 0)),  # resident bias
        ],
        out_specs=pl.BlockSpec((tm, Cout_p), lambda i: (i, 0)),
        compiler_params=pltpu.CompilerParams(
            dimension_semantics=("parallel",),            # v7x: shard M on 2 TCs
            vmem_limit_bytes=_VMEM_LIMIT_BYTES),
        cost_estimate=cost,
    )(x, w, b2)
    return out[:M, :Cout]


# ----------------------------------------------------------------------------
# Conv2d (replicate padding, arbitrary stride) via im2col + Pallas matmul.
# Replicate padding is folded into the tap gather (clipped indices), so the
# padded activation copy is never materialized.
# ----------------------------------------------------------------------------
def conv2d_nhwc(x, w, b, *, stride=1, pad=0, apply_relu=False):
    """x: (N, H, W, Cin); w: (kH, kW, Cin, Cout); b: (Cout,)."""
    kH, kW, Cin, Cout = w.shape
    N, H, W, _ = x.shape
    Ho = (H + 2 * pad - kH) // stride + 1
    Wo = (W + 2 * pad - kW) // stride + 1

    x = x.astype(jnp.bfloat16)  # halve im2col HBM traffic; MXU wants bf16 anyway
    base_r = jnp.arange(Ho) * stride - pad
    base_c = jnp.arange(Wo) * stride - pad
    taps = []
    for ky in range(kH):
        rows = jnp.clip(base_r + ky, 0, H - 1)
        xr = x[:, rows]
        for kx in range(kW):
            cols = jnp.clip(base_c + kx, 0, W - 1)
            taps.append(xr[:, :, cols])
    patches = jnp.concatenate(taps, axis=-1).reshape(N * Ho * Wo, kH * kW * Cin)
    out = matmul_bias_act(patches, w.reshape(kH * kW * Cin, Cout), b, apply_relu)
    return out.reshape(N, Ho, Wo, Cout)


def interpolate_nearest(x, out_h, out_w):
    """F.interpolate(..., size=(out_h, out_w)) default 'nearest' semantics."""
    N, H, W, C = x.shape
    rows = (jnp.arange(out_h) * H) // out_h
    cols = (jnp.arange(out_w) * W) // out_w
    return x[:, rows][:, :, cols]


# ----------------------------------------------------------------------------
# Parameters (deterministic, PyTorch-default-like uniform init).
# ----------------------------------------------------------------------------
def init_params(key, channel=64, kernel_size=3):
    shapes = {
        "conv0_1":   (kernel_size, kernel_size, 4, channel),
        "conv1_1":   (kernel_size, kernel_size, channel, channel),
        "conv1_2":   (kernel_size, kernel_size, channel, channel),
        "conv1_3":   (kernel_size, kernel_size, channel, channel),
        "deconv1_1": (kernel_size, kernel_size, 2 * channel, channel),
        "deconv1_2": (kernel_size, kernel_size, 2 * channel, channel),
        "deconv1_3": (kernel_size, kernel_size, 2 * channel, channel),
        "fusion":    (1, 1, 3 * channel, channel),
        "output":    (kernel_size, kernel_size, channel, 1),
    }
    params = {}
    for i, (name, shp) in enumerate(shapes.items()):
        kw, kb = jax.random.split(jax.random.fold_in(key, i))
        fan_in = shp[0] * shp[1] * shp[2]
        bound = 1.0 / float(fan_in) ** 0.5
        params[name] = {
            "w": jax.random.uniform(kw, shp, jnp.float32, -bound, bound),
            "b": jax.random.uniform(kb, (shp[3],), jnp.float32, -bound, bound),
        }
    return params


# ----------------------------------------------------------------------------
# RelightNet forward (mirrors the PyTorch module exactly).
# ----------------------------------------------------------------------------
def relight_net_forward(params, input_L, input_R):
    # input_L: (N, 1, H, W), input_R: (N, 3, H, W)  -- PyTorch NCHW convention.
    p = params
    x = jnp.concatenate([input_R, input_L], axis=1)      # (N, 4, H, W)
    x = jnp.transpose(x, (0, 2, 3, 1))                   # -> NHWC
    H, W = x.shape[1], x.shape[2]

    out0 = conv2d_nhwc(x, p["conv0_1"]["w"], p["conv0_1"]["b"], stride=1, pad=1)
    out1 = conv2d_nhwc(out0, p["conv1_1"]["w"], p["conv1_1"]["b"],
                       stride=2, pad=1, apply_relu=True)
    out2 = conv2d_nhwc(out1, p["conv1_2"]["w"], p["conv1_2"]["b"],
                       stride=2, pad=1, apply_relu=True)
    out3 = conv2d_nhwc(out2, p["conv1_3"]["w"], p["conv1_3"]["b"],
                       stride=2, pad=1, apply_relu=True)

    out3_up = interpolate_nearest(out3, out2.shape[1], out2.shape[2])
    deconv1 = conv2d_nhwc(jnp.concatenate([out3_up, out2], axis=-1),
                          p["deconv1_1"]["w"], p["deconv1_1"]["b"],
                          stride=1, pad=1, apply_relu=True)
    deconv1_up = interpolate_nearest(deconv1, out1.shape[1], out1.shape[2])
    deconv2 = conv2d_nhwc(jnp.concatenate([deconv1_up, out1], axis=-1),
                          p["deconv1_2"]["w"], p["deconv1_2"]["b"],
                          stride=1, pad=1, apply_relu=True)
    deconv2_up = interpolate_nearest(deconv2, out0.shape[1], out0.shape[2])
    deconv3 = conv2d_nhwc(jnp.concatenate([deconv2_up, out0], axis=-1),
                          p["deconv1_3"]["w"], p["deconv1_3"]["b"],
                          stride=1, pad=1, apply_relu=True)

    deconv1_rs = interpolate_nearest(deconv1, H, W)
    deconv2_rs = interpolate_nearest(deconv2, H, W)
    feats_all = jnp.concatenate([deconv1_rs, deconv2_rs, deconv3], axis=-1)
    # 1x1 conv with padding=1 replicate => spatial grows to (H+2, W+2).
    feats_fus = conv2d_nhwc(feats_all, p["fusion"]["w"], p["fusion"]["b"],
                            stride=1, pad=1)
    # 3x3 conv, padding=0 => back to (H, W).
    output = conv2d_nhwc(feats_fus, p["output"]["w"], p["output"]["b"],
                         stride=1, pad=0)
    return jnp.transpose(output, (0, 3, 1, 2))           # (N, 1, H, W)


if __name__ == "__main__":
    key = jax.random.PRNGKey(0)
    k_params, k_L, k_R = jax.random.split(key, 3)

    channel = 64
    N, H, W = 2, 16, 16
    params = init_params(k_params, channel=channel, kernel_size=3)
    input_L = jax.random.uniform(k_L, (N, 1, H, W), jnp.float32)
    input_R = jax.random.uniform(k_R, (N, 3, H, W), jnp.float32)

    out = jax.jit(relight_net_forward)(params, input_L, input_R)
    out = jax.block_until_ready(out)
    assert out.shape == (N, 1, H, W), out.shape
    assert out.dtype == jnp.float32
    print("KERNEL_OK")
</pallas_src>

<mosaic_0001>
module attributes {stable_mosaic.version = 11 : i64} {
  func.func @_matmul_bias_act_kernel(%arg0: i32, %arg1: memref<512x36xbf16, #tpu.memory_space<vmem>>, %arg2: memref<36x128xbf16, #tpu.memory_space<vmem>>, %arg3: memref<1x128xf32, #tpu.memory_space<vmem>>, %arg4: memref<512x128xf32, #tpu.memory_space<vmem>>) attributes {dimension_semantics = [#tpu.dimension_semantics<parallel>], iteration_bounds = array<i64: 1>, scalar_prefetch = 0 : i64, scratch_operands = 0 : i64, tpu.core_type = #tpu.core_type<tc>, window_params = [{transform_indices = @transform_0, window_bounds = array<i64: 512, 36>}, {pipeline_mode = #tpu.pipeline_mode<synchronous>, transform_indices = @transform_1, window_bounds = array<i64: 36, 128>}, {pipeline_mode = #tpu.pipeline_mode<synchronous>, transform_indices = @transform_2, window_bounds = array<i64: 1, 128>}, {transform_indices = @transform_3, window_bounds = array<i64: 512, 128>}]} {
    %c0 = arith.constant 0 : index
    %c0_0 = arith.constant 0 : index
    %0 = vector.load %arg1[%c0, %c0_0] : memref<512x36xbf16, #tpu.memory_space<vmem>>, vector<512x36xbf16>
    %c0_1 = arith.constant 0 : index
    %c0_2 = arith.constant 0 : index
    %1 = vector.load %arg2[%c0_1, %c0_2] : memref<36x128xbf16, #tpu.memory_space<vmem>>, vector<36x128xbf16>
    %cst = arith.constant dense<0.000000e+00> : vector<512x128xf32>
    %2 = tpu.matmul %0, %1, %cst {dimension_numbers = #tpu.dot_dimension_numbers<[1], [0], [0], [1], [0, 0, 1, 1], [], []>} : vector<512x36xbf16>, vector<36x128xbf16>, vector<512x128xf32> -> vector<512x128xf32>
    %c0_3 = arith.constant 0 : index
    %c0_4 = arith.constant 0 : index
    %3 = vector.load %arg3[%c0_3, %c0_4] : memref<1x128xf32, #tpu.memory_space<vmem>>, vector<1x128xf32>
    %4 = vector.broadcast %3 : vector<1x128xf32> to vector<512x128xf32>
    %5 = arith.addf %2, %4 : vector<512x128xf32>
    %c0_5 = arith.constant 0 : index
    %c0_6 = arith.constant 0 : index
    %6 = vector.load %arg4[%c0_5, %c0_6] : memref<512x128xf32, #tpu.memory_space<vmem>>, vector<512x128xf32>
    tpu.vector_store %arg4[%c0_5, %c0_6], %5 {strides = array<i32>} : memref<512x128xf32, #tpu.memory_space<vmem>>, vector<512x128xf32>,
    return
  }
  func.func @transform_0(%arg0: i32) -> (i32, i32) {
    %c0_i32 = arith.constant 0 : i32
    %c0_i32_0 = arith.constant 0 : i32
    return %arg0, %c0_i32 : i32, i32
  }
  func.func @transform_1(%arg0: i32) -> (i32, i32) {
    %c0_i32 = arith.constant 0 : i32
    %c0_i32_0 = arith.constant 0 : i32
    %c0_i32_1 = arith.constant 0 : i32
    return %c0_i32, %c0_i32_0 : i32, i32
  }
  func.func @transform_2(%arg0: i32) -> (i32, i32) {
    %c0_i32 = arith.constant 0 : i32
    %c0_i32_0 = arith.constant 0 : i32
    %c0_i32_1 = arith.constant 0 : i32
    return %c0_i32, %c0_i32_0 : i32, i32
  }
  func.func @transform_3(%arg0: i32) -> (i32, i32) {
    %c0_i32 = arith.constant 0 : i32
    %c0_i32_0 = arith.constant 0 : i32
    return %arg0, %c0_i32 : i32, i32
  }
}

module attributes {stable_mosaic.version = 11 : i64} {
  func.func @_matmul_bias_act_kernel(%arg0: i32, %arg1: memref<128x576xbf16, #tpu.memory_space<vmem>>, %arg2: memref<576x128xbf16, #tpu.memory_space<vmem>>, %arg3: memref<1x128xf32, #tpu.memory_space<vmem>>, %arg4: memref<128x128xf32, #tpu.memory_space<vmem>>) attributes {dimension_semantics = [#tpu.dimension_semantics<parallel>], iteration_bounds = array<i64: 1>, scalar_prefetch = 0 : i64, scratch_operands = 0 : i64, tpu.core_type = #tpu.core_type<tc>, window_params = [{transform_indices = @transform_0, window_bounds = array<i64: 128, 576>}, {pipeline_mode = #tpu.pipeline_mode<synchronous>, transform_indices = @transform_1, window_bounds = array<i64: 576, 128>}, {pipeline_mode = #tpu.pipeline_mode<synchronous>, transform_indices = @transform_2, window_bounds = array<i64: 1, 128>}, {transform_indices = @transform_3, window_bounds = array<i64: 128, 128>}]} {
    %c0 = arith.constant 0 : index
    %c0_0 = arith.constant 0 : index
    %0 = vector.load %arg1[%c0, %c0_0] : memref<128x576xbf16, #tpu.memory_space<vmem>>, vector<128x576xbf16>
    %c0_1 = arith.constant 0 : index
    %c0_2 = arith.constant 0 : index
    %1 = vector.load %arg2[%c0_1, %c0_2] : memref<576x128xbf16, #tpu.memory_space<vmem>>, vector<576x128xbf16>
    %cst = arith.constant dense<0.000000e+00> : vector<128x128xf32>
    %2 = tpu.matmul %0, %1, %cst {dimension_numbers = #tpu.dot_dimension_numbers<[1], [0], [0], [1], [0, 0, 1, 1], [], []>} : vector<128x576xbf16>, vector<576x128xbf16>, vector<128x128xf32> -> vector<128x128xf32>
    %c0_3 = arith.constant 0 : index
    %c0_4 = arith.constant 0 : index
    %3 = vector.load %arg3[%c0_3, %c0_4] : memref<1x128xf32, #tpu.memory_space<vmem>>, vector<1x128xf32>
    %4 = vector.broadcast %3 : vector<1x128xf32> to vector<128x128xf32>
    %5 = arith.addf %2, %4 : vector<128x128xf32>
    %cst_5 = arith.constant 0.000000e+00 : f32
    %6 = vector.broadcast %cst_5 : f32 to vector<128x128xf32>
    %7 = arith.maximumf %5, %6 : vector<128x128xf32>
    %c0_6 = arith.constant 0 : index
    %c0_7 = arith.constant 0 : index
    %8 = vector.load %arg4[%c0_6, %c0_7] : memref<128x128xf32, #tpu.memory_space<vmem>>, vector<128x128xf32>
    tpu.vector_store %arg4[%c0_6, %c0_7], %7 {strides = array<i32>} : memref<128x128xf32, #tpu.memory_space<vmem>>, vector<128x128xf32>,
    return
  }
  func.func @transform_0(%arg0: i32) -> (i32, i32) {
    %c0_i32 = arith.constant 0 : i32
    %c0_i32_0 = arith.constant 0 : i32
    return %arg0, %c0_i32 : i32, i32
  }
  func.func @transform_1(%arg0: i32) -> (i32, i32) {
    %c0_i32 = arith.constant 0 : i32
    %c0_i32_0 = arith.constant 0 : i32
    %c0_i32_1 = arith.constant 0 : i32
    return %c0_i32, %c0_i32_0 : i32, i32
  }
  func.func @transform_2(%arg0: i32) -> (i32, i32) {
    %c0_i32 = arith.constant 0 : i32
    %c0_i32_0 = arith.constant 0 : i32
    %c0_i32_1 = arith.constant 0 : i32
    return %c0_i32, %c0_i32_0 : i32, i32
  }
  func.func @transform_3(%arg0: i32) -> (i32, i32) {
    %c0_i32 = arith.constant 0 : i32
    %c0_i32_0 = arith.constant 0 : i32
    return %arg0, %c0_i32 : i32, i32
  }
}

module attributes {stable_mosaic.version = 11 : i64} {
  func.func @_matmul_bias_act_kernel(%arg0: i32, %arg1: memref<32x576xbf16, #tpu.memory_space<vmem>>, %arg2: memref<576x128xbf16, #tpu.memory_space<vmem>>, %arg3: memref<1x128xf32, #tpu.memory_space<vmem>>, %arg4: memref<32x128xf32, #tpu.memory_space<vmem>>) attributes {dimension_semantics = [#tpu.dimension_semantics<parallel>], iteration_bounds = array<i64: 1>, scalar_prefetch = 0 : i64, scratch_operands = 0 : i64, tpu.core_type = #tpu.core_type<tc>, window_params = [{transform_indices = @transform_0, window_bounds = array<i64: 32, 576>}, {pipeline_mode = #tpu.pipeline_mode<synchronous>, transform_indices = @transform_1, window_bounds = array<i64: 576, 128>}, {pipeline_mode = #tpu.pipeline_mode<synchronous>, transform_indices = @transform_2, window_bounds = array<i64: 1, 128>}, {transform_indices = @transform_3, window_bounds = array<i64: 32, 128>}]} {
    %c0 = arith.constant 0 : index
    %c0_0 = arith.constant 0 : index
    %0 = vector.load %arg1[%c0, %c0_0] : memref<32x576xbf16, #tpu.memory_space<vmem>>, vector<32x576xbf16>
    %c0_1 = arith.constant 0 : index
    %c0_2 = arith.constant 0 : index
    %1 = vector.load %arg2[%c0_1, %c0_2] : memref<576x128xbf16, #tpu.memory_space<vmem>>, vector<576x128xbf16>
    %cst = arith.constant dense<0.000000e+00> : vector<32x128xf32>
    %2 = tpu.matmul %0, %1, %cst {dimension_numbers = #tpu.dot_dimension_numbers<[1], [0], [0], [1], [0, 0, 1, 1], [], []>} : vector<32x576xbf16>, vector<576x128xbf16>, vector<32x128xf32> -> vector<32x128xf32>
    %c0_3 = arith.constant 0 : index
    %c0_4 = arith.constant 0 : index
    %3 = vector.load %arg3[%c0_3, %c0_4] : memref<1x128xf32, #tpu.memory_space<vmem>>, vector<1x128xf32>
    %4 = vector.broadcast %3 : vector<1x128xf32> to vector<32x128xf32>
    %5 = arith.addf %2, %4 : vector<32x128xf32>
    %cst_5 = arith.constant 0.000000e+00 : f32
    %6 = vector.broadcast %cst_5 : f32 to vector<32x128xf32>
    %7 = arith.maximumf %5, %6 : vector<32x128xf32>
    %c0_6 = arith.constant 0 : index
    %c0_7 = arith.constant 0 : index
    %8 = vector.load %arg4[%c0_6, %c0_7] : memref<32x128xf32, #tpu.memory_space<vmem>>, vector<32x128xf32>
    tpu.vector_store %arg4[%c0_6, %c0_7], %7 {strides = array<i32>} : memref<32x128xf32, #tpu.memory_space<vmem>>, vector<32x128xf32>,
    return
  }
  func.func @transform_0(%arg0: i32) -> (i32, i32) {
    %c0_i32 = arith.constant 0 : i32
    %c0_i32_0 = arith.constant 0 : i32
    return %arg0, %c0_i32 : i32, i32
  }
  func.func @transform_1(%arg0: i32) -> (i32, i32) {
    %c0_i32 = arith.constant 0 : i32
    %c0_i32_0 = arith.constant 0 : i32
    %c0_i32_1 = arith.constant 0 : i32
    return %c0_i32, %c0_i32_0 : i32, i32
  }
  func.func @transform_2(%arg0: i32) -> (i32, i32) {
    %c0_i32 = arith.constant 0 : i32
    %c0_i32_0 = arith.constant 0 : i32
    %c0_i32_1 = arith.constant 0 : i32
    return %c0_i32, %c0_i32_0 : i32, i32
  }
  func.func @transform_3(%arg0: i32) -> (i32, i32) {
    %c0_i32 = arith.constant 0 : i32
    %c0_i32_0 = arith.constant 0 : i32
    return %arg0, %c0_i32 : i32, i32
  }
}

module attributes {stable_mosaic.version = 11 : i64} {
  func.func @_matmul_bias_act_kernel(%arg0: i32, %arg1: memref<16x576xbf16, #tpu.memory_space<vmem>>, %arg2: memref<576x128xbf16, #tpu.memory_space<vmem>>, %arg3: memref<1x128xf32, #tpu.memory_space<vmem>>, %arg4: memref<16x128xf32, #tpu.memory_space<vmem>>) attributes {dimension_semantics = [#tpu.dimension_semantics<parallel>], iteration_bounds = array<i64: 1>, scalar_prefetch = 0 : i64, scratch_operands = 0 : i64, tpu.core_type = #tpu.core_type<tc>, window_params = [{transform_indices = @transform_0, window_bounds = array<i64: 16, 576>}, {pipeline_mode = #tpu.pipeline_mode<synchronous>, transform_indices = @transform_1, window_bounds = array<i64: 576, 128>}, {pipeline_mode = #tpu.pipeline_mode<synchronous>, transform_indices = @transform_2, window_bounds = array<i64: 1, 128>}, {transform_indices = @transform_3, window_bounds = array<i64: 16, 128>}]} {
    %c0 = arith.constant 0 : index
    %c0_0 = arith.constant 0 : index
    %0 = vector.load %arg1[%c0, %c0_0] : memref<16x576xbf16, #tpu.memory_space<vmem>>, vector<16x576xbf16>
    %c0_1 = arith.constant 0 : index
    %c0_2 = arith.constant 0 : index
    %1 = vector.load %arg2[%c0_1, %c0_2] : memref<576x128xbf16, #tpu.memory_space<vmem>>, vector<576x128xbf16>
    %cst = arith.constant dense<0.000000e+00> : vector<16x128xf32>
    %2 = tpu.matmul %0, %1, %cst {dimension_numbers = #tpu.dot_dimension_numbers<[1], [0], [0], [1], [0, 0, 1, 1], [], []>} : vector<16x576xbf16>, vector<576x128xbf16>, vector<16x128xf32> -> vector<16x128xf32>
    %c0_3 = arith.constant 0 : index
    %c0_4 = arith.constant 0 : index
    %3 = vector.load %arg3[%c0_3, %c0_4] : memref<1x128xf32, #tpu.memory_space<vmem>>, vector<1x128xf32>
    %4 = vector.broadcast %3 : vector<1x128xf32> to vector<16x128xf32>
    %5 = arith.addf %2, %4 : vector<16x128xf32>
    %cst_5 = arith.constant 0.000000e+00 : f32
    %6 = vector.broadcast %cst_5 : f32 to vector<16x128xf32>
    %7 = arith.maximumf %5, %6 : vector<16x128xf32>
    %c0_6 = arith.constant 0 : index
    %c0_7 = arith.constant 0 : index
    %8 = vector.load %arg4[%c0_6, %c0_7] : memref<16x128xf32, #tpu.memory_space<vmem>>, vector<16x128xf32>
    tpu.vector_store %arg4[%c0_6, %c0_7], %7 {strides = array<i32>} : memref<16x128xf32, #tpu.memory_space<vmem>>, vector<16x128xf32>,
    return
  }
  func.func @transform_0(%arg0: i32) -> (i32, i32) {
    %c0_i32 = arith.constant 0 : i32
    %c0_i32_0 = arith.constant 0 : i32
    return %arg0, %c0_i32 : i32, i32
  }
  func.func @transform_1(%arg0: i32) -> (i32, i32) {
    %c0_i32 = arith.constant 0 : i32
    %c0_i32_0 = arith.constant 0 : i32
    %c0_i32_1 = arith.constant 0 : i32
    return %c0_i32, %c0_i32_0 : i32, i32
  }
  func.func @transform_2(%arg0: i32) -> (i32, i32) {
    %c0_i32 = arith.constant 0 : i32
    %c0_i32_0 = arith.constant 0 : i32
    %c0_i32_1 = arith.constant 0 : i32
    return %c0_i32, %c0_i32_0 : i32, i32
  }
  func.func @transform_3(%arg0: i32) -> (i32, i32) {
    %c0_i32 = arith.constant 0 : i32
    %c0_i32_0 = arith.constant 0 : i32
    return %arg0, %c0_i32 : i32, i32
  }
}

module attributes {stable_mosaic.version = 11 : i64} {
  func.func @_matmul_bias_act_kernel(%arg0: i32, %arg1: memref<32x1152xbf16, #tpu.memory_space<vmem>>, %arg2: memref<1152x128xbf16, #tpu.memory_space<vmem>>, %arg3: memref<1x128xf32, #tpu.memory_space<vmem>>, %arg4: memref<32x128xf32, #tpu.memory_space<vmem>>) attributes {dimension_semantics = [#tpu.dimension_semantics<parallel>], iteration_bounds = array<i64: 1>, scalar_prefetch = 0 : i64, scratch_operands = 0 : i64, tpu.core_type = #tpu.core_type<tc>, window_params = [{transform_indices = @transform_0, window_bounds = array<i64: 32, 1152>}, {pipeline_mode = #tpu.pipeline_mode<synchronous>, transform_indices = @transform_1, window_bounds = array<i64: 1152, 128>}, {pipeline_mode = #tpu.pipeline_mode<synchronous>, transform_indices = @transform_2, window_bounds = array<i64: 1, 128>}, {transform_indices = @transform_3, window_bounds = array<i64: 32, 128>}]} {
    %c0 = arith.constant 0 : index
    %c0_0 = arith.constant 0 : index
    %0 = vector.load %arg1[%c0, %c0_0] : memref<32x1152xbf16, #tpu.memory_space<vmem>>, vector<32x1152xbf16>
    %c0_1 = arith.constant 0 : index
    %c0_2 = arith.constant 0 : index
    %1 = vector.load %arg2[%c0_1, %c0_2] : memref<1152x128xbf16, #tpu.memory_space<vmem>>, vector<1152x128xbf16>
    %cst = arith.constant dense<0.000000e+00> : vector<32x128xf32>
    %2 = tpu.matmul %0, %1, %cst {dimension_numbers = #tpu.dot_dimension_numbers<[1], [0], [0], [1], [0, 0, 1, 1], [], []>} : vector<32x1152xbf16>, vector<1152x128xbf16>, vector<32x128xf32> -> vector<32x128xf32>
    %c0_3 = arith.constant 0 : index
    %c0_4 = arith.constant 0 : index
    %3 = vector.load %arg3[%c0_3, %c0_4] : memref<1x128xf32, #tpu.memory_space<vmem>>, vector<1x128xf32>
    %4 = vector.broadcast %3 : vector<1x128xf32> to vector<32x128xf32>
    %5 = arith.addf %2, %4 : vector<32x128xf32>
    %cst_5 = arith.constant 0.000000e+00 : f32
    %6 = vector.broadcast %cst_5 : f32 to vector<32x128xf32>
    %7 = arith.maximumf %5, %6 : vector<32x128xf32>
    %c0_6 = arith.constant 0 : index
    %c0_7 = arith.constant 0 : index
    %8 = vector.load %arg4[%c0_6, %c0_7] : memref<32x128xf32, #tpu.memory_space<vmem>>, vector<32x128xf32>
    tpu.vector_store %arg4[%c0_6, %c0_7], %7 {strides = array<i32>} : memref<32x128xf32, #tpu.memory_space<vmem>>, vector<32x128xf32>,
    return
  }
  func.func @transform_0(%arg0: i32) -> (i32, i32) {
    %c0_i32 = arith.constant 0 : i32
    %c0_i32_0 = arith.constant 0 : i32
    return %arg0, %c0_i32 : i32, i32
  }
  func.func @transform_1(%arg0: i32) -> (i32, i32) {
    %c0_i32 = arith.constant 0 : i32
    %c0_i32_0 = arith.constant 0 : i32
    %c0_i32_1 = arith.constant 0 : i32
    return %c0_i32, %c0_i32_0 : i32, i32
  }
  func.func @transform_2(%arg0: i32) -> (i32, i32) {
    %c0_i32 = arith.constant 0 : i32
    %c0_i32_0 = arith.constant 0 : i32
    %c0_i32_1 = arith.constant 0 : i32
    return %c0_i32, %c0_i32_0 : i32, i32
  }
  func.func @transform_3(%arg0: i32) -> (i32, i32) {
    %c0_i32 = arith.constant 0 : i32
    %c0_i32_0 = arith.constant 0 : i32
    return %arg0, %c0_i32 : i32, i32
  }
}

module attributes {stable_mosaic.version = 11 : i64} {
  func.func @_matmul_bias_act_kernel(%arg0: i32, %arg1: memref<128x1152xbf16, #tpu.memory_space<vmem>>, %arg2: memref<1152x128xbf16, #tpu.memory_space<vmem>>, %arg3: memref<1x128xf32, #tpu.memory_space<vmem>>, %arg4: memref<128x128xf32, #tpu.memory_space<vmem>>) attributes {dimension_semantics = [#tpu.dimension_semantics<parallel>], iteration_bounds = array<i64: 1>, scalar_prefetch = 0 : i64, scratch_operands = 0 : i64, tpu.core_type = #tpu.core_type<tc>, window_params = [{transform_indices = @transform_0, window_bounds = array<i64: 128, 1152>}, {pipeline_mode = #tpu.pipeline_mode<synchronous>, transform_indices = @transform_1, window_bounds = array<i64: 1152, 128>}, {pipeline_mode = #tpu.pipeline_mode<synchronous>, transform_indices = @transform_2, window_bounds = array<i64: 1, 128>}, {transform_indices = @transform_3, window_bounds = array<i64: 128, 128>}]} {
    %c0 = arith.constant 0 : index
    %c0_0 = arith.constant 0 : index
    %0 = vector.load %arg1[%c0, %c0_0] : memref<128x1152xbf16, #tpu.memory_space<vmem>>, vector<128x1152xbf16>
    %c0_1 = arith.constant 0 : index
    %c0_2 = arith.constant 0 : index
    %1 = vector.load %arg2[%c0_1, %c0_2] : memref<1152x128xbf16, #tpu.memory_space<vmem>>, vector<1152x128xbf16>
    %cst = arith.constant dense<0.000000e+00> : vector<128x128xf32>
    %2 = tpu.matmul %0, %1, %cst {dimension_numbers = #tpu.dot_dimension_numbers<[1], [0], [0], [1], [0, 0, 1, 1], [], []>} : vector<128x1152xbf16>, vector<1152x128xbf16>, vector<128x128xf32> -> vector<128x128xf32>
    %c0_3 = arith.constant 0 : index
    %c0_4 = arith.constant 0 : index
    %3 = vector.load %arg3[%c0_3, %c0_4] : memref<1x128xf32, #tpu.memory_space<vmem>>, vector<1x128xf32>
    %4 = vector.broadcast %3 : vector<1x128xf32> to vector<128x128xf32>
    %5 = arith.addf %2, %4 : vector<128x128xf32>
    %cst_5 = arith.constant 0.000000e+00 : f32
    %6 = vector.broadcast %cst_5 : f32 to vector<128x128xf32>
    %7 = arith.maximumf %5, %6 : vector<128x128xf32>
    %c0_6 = arith.constant 0 : index
    %c0_7 = arith.constant 0 : index
    %8 = vector.load %arg4[%c0_6, %c0_7] : memref<128x128xf32, #tpu.memory_space<vmem>>, vector<128x128xf32>
    tpu.vector_store %arg4[%c0_6, %c0_7], %7 {strides = array<i32>} : memref<128x128xf32, #tpu.memory_space<vmem>>, vector<128x128xf32>,
    return
  }
  func.func @transform_0(%arg0: i32) -> (i32, i32) {
    %c0_i32 = arith.constant 0 : i32
    %c0_i32_0 = arith.constant 0 : i32
    return %arg0, %c0_i32 : i32, i32
  }
  func.func @transform_1(%arg0: i32) -> (i32, i32) {
    %c0_i32 = arith.constant 0 : i32
    %c0_i32_0 = arith.constant 0 : i32
    %c0_i32_1 = arith.constant 0 : i32
    return %c0_i32, %c0_i32_0 : i32, i32
  }
  func.func @transform_2(%arg0: i32) -> (i32, i32) {
    %c0_i32 = arith.constant 0 : i32
    %c0_i32_0 = arith.constant 0 : i32
    %c0_i32_1 = arith.constant 0 : i32
    return %c0_i32, %c0_i32_0 : i32, i32
  }
  func.func @transform_3(%arg0: i32) -> (i32, i32) {
    %c0_i32 = arith.constant 0 : i32
    %c0_i32_0 = arith.constant 0 : i32
    return %arg0, %c0_i32 : i32, i32
  }
}

module attributes {stable_mosaic.version = 11 : i64} {
  func.func @_matmul_bias_act_kernel(%arg0: i32, %arg1: memref<512x1152xbf16, #tpu.memory_space<vmem>>, %arg2: memref<1152x128xbf16, #tpu.memory_space<vmem>>, %arg3: memref<1x128xf32, #tpu.memory_space<vmem>>, %arg4: memref<512x128xf32, #tpu.memory_space<vmem>>) attributes {dimension_semantics = [#tpu.dimension_semantics<parallel>], iteration_bounds = array<i64: 1>, scalar_prefetch = 0 : i64, scratch_operands = 0 : i64, tpu.core_type = #tpu.core_type<tc>, window_params = [{transform_indices = @transform_0, window_bounds = array<i64: 512, 1152>}, {pipeline_mode = #tpu.pipeline_mode<synchronous>, transform_indices = @transform_1, window_bounds = array<i64: 1152, 128>}, {pipeline_mode = #tpu.pipeline_mode<synchronous>, transform_indices = @transform_2, window_bounds = array<i64: 1, 128>}, {transform_indices = @transform_3, window_bounds = array<i64: 512, 128>}]} {
    %c0 = arith.constant 0 : index
    %c0_0 = arith.constant 0 : index
    %0 = vector.load %arg1[%c0, %c0_0] : memref<512x1152xbf16, #tpu.memory_space<vmem>>, vector<512x1152xbf16>
    %c0_1 = arith.constant 0 : index
    %c0_2 = arith.constant 0 : index
    %1 = vector.load %arg2[%c0_1, %c0_2] : memref<1152x128xbf16, #tpu.memory_space<vmem>>, vector<1152x128xbf16>
    %cst = arith.constant dense<0.000000e+00> : vector<512x128xf32>
    %2 = tpu.matmul %0, %1, %cst {dimension_numbers = #tpu.dot_dimension_numbers<[1], [0], [0], [1], [0, 0, 1, 1], [], []>} : vector<512x1152xbf16>, vector<1152x128xbf16>, vector<512x128xf32> -> vector<512x128xf32>
    %c0_3 = arith.constant 0 : index
    %c0_4 = arith.constant 0 : index
    %3 = vector.load %arg3[%c0_3, %c0_4] : memref<1x128xf32, #tpu.memory_space<vmem>>, vector<1x128xf32>
    %4 = vector.broadcast %3 : vector<1x128xf32> to vector<512x128xf32>
    %5 = arith.addf %2, %4 : vector<512x128xf32>
    %cst_5 = arith.constant 0.000000e+00 : f32
    %6 = vector.broadcast %cst_5 : f32 to vector<512x128xf32>
    %7 = arith.maximumf %5, %6 : vector<512x128xf32>
    %c0_6 = arith.constant 0 : index
    %c0_7 = arith.constant 0 : index
    %8 = vector.load %arg4[%c0_6, %c0_7] : memref<512x128xf32, #tpu.memory_space<vmem>>, vector<512x128xf32>
    tpu.vector_store %arg4[%c0_6, %c0_7], %7 {strides = array<i32>} : memref<512x128xf32, #tpu.memory_space<vmem>>, vector<512x128xf32>,
    return
  }
  func.func @transform_0(%arg0: i32) -> (i32, i32) {
    %c0_i32 = arith.constant 0 : i32
    %c0_i32_0 = arith.constant 0 : i32
    return %arg0, %c0_i32 : i32, i32
  }
  func.func @transform_1(%arg0: i32) -> (i32, i32) {
    %c0_i32 = arith.constant 0 : i32
    %c0_i32_0 = arith.constant 0 : i32
    %c0_i32_1 = arith.constant 0 : i32
    return %c0_i32, %c0_i32_0 : i32, i32
  }
  func.func @transform_2(%arg0: i32) -> (i32, i32) {
    %c0_i32 = arith.constant 0 : i32
    %c0_i32_0 = arith.constant 0 : i32
    %c0_i32_1 = arith.constant 0 : i32
    return %c0_i32, %c0_i32_0 : i32, i32
  }
  func.func @transform_3(%arg0: i32) -> (i32, i32) {
    %c0_i32 = arith.constant 0 : i32
    %c0_i32_0 = arith.constant 0 : i32
    return %arg0, %c0_i32 : i32, i32
  }
}

module attributes {stable_mosaic.version = 11 : i64} {
  func.func @_matmul_bias_act_kernel(%arg0: i32, %arg1: memref<512x192xbf16, #tpu.memory_space<vmem>>, %arg2: memref<192x128xbf16, #tpu.memory_space<vmem>>, %arg3: memref<1x128xf32, #tpu.memory_space<vmem>>, %arg4: memref<512x128xf32, #tpu.memory_space<vmem>>) attributes {dimension_semantics = [#tpu.dimension_semantics<parallel>], iteration_bounds = array<i64: 2>, scalar_prefetch = 0 : i64, scratch_operands = 0 : i64, tpu.core_type = #tpu.core_type<tc>, window_params = [{transform_indices = @transform_0, window_bounds = array<i64: 512, 192>}, {pipeline_mode = #tpu.pipeline_mode<synchronous>, transform_indices = @transform_1, window_bounds = array<i64: 192, 128>}, {pipeline_mode = #tpu.pipeline_mode<synchronous>, transform_indices = @transform_2, window_bounds = array<i64: 1, 128>}, {transform_indices = @transform_3, window_bounds = array<i64: 512, 128>}]} {
    %c0 = arith.constant 0 : index
    %c0_0 = arith.constant 0 : index
    %0 = vector.load %arg1[%c0, %c0_0] : memref<512x192xbf16, #tpu.memory_space<vmem>>, vector<512x192xbf16>
    %c0_1 = arith.constant 0 : index
    %c0_2 = arith.constant 0 : index
    %1 = vector.load %arg2[%c0_1, %c0_2] : memref<192x128xbf16, #tpu.memory_space<vmem>>, vector<192x128xbf16>
    %cst = arith.constant dense<0.000000e+00> : vector<512x128xf32>
    %2 = tpu.matmul %0, %1, %cst {dimension_numbers = #tpu.dot_dimension_numbers<[1], [0], [0], [1], [0, 0, 1, 1], [], []>} : vector<512x192xbf16>, vector<192x128xbf16>, vector<512x128xf32> -> vector<512x128xf32>
    %c0_3 = arith.constant 0 : index
    %c0_4 = arith.constant 0 : index
    %3 = vector.load %arg3[%c0_3, %c0_4] : memref<1x128xf32, #tpu.memory_space<vmem>>, vector<1x128xf32>
    %4 = vector.broadcast %3 : vector<1x128xf32> to vector<512x128xf32>
    %5 = arith.addf %2, %4 : vector<512x128xf32>
    %c0_5 = arith.constant 0 : index
    %c0_6 = arith.constant 0 : index
    %6 = vector.load %arg4[%c0_5, %c0_6] : memref<512x128xf32, #tpu.memory_space<vmem>>, vector<512x128xf32>
    tpu.vector_store %arg4[%c0_5, %c0_6], %5 {strides = array<i32>} : memref<512x128xf32, #tpu.memory_space<vmem>>, vector<512x128xf32>,
    return
  }
  func.func @transform_0(%arg0: i32) -> (i32, i32) {
    %c0_i32 = arith.constant 0 : i32
    %c0_i32_0 = arith.constant 0 : i32
    return %arg0, %c0_i32 : i32, i32
  }
  func.func @transform_1(%arg0: i32) -> (i32, i32) {
    %c0_i32 = arith.constant 0 : i32
    %c0_i32_0 = arith.constant 0 : i32
    %c0_i32_1 = arith.constant 0 : i32
    return %c0_i32, %c0_i32_0 : i32, i32
  }
  func.func @transform_2(%arg0: i32) -> (i32, i32) {
    %c0_i32 = arith.constant 0 : i32
    %c0_i32_0 = arith.constant 0 : i32
    %c0_i32_1 = arith.constant 0 : i32
    return %c0_i32, %c0_i32_0 : i32, i32
  }
  func.func @transform_3(%arg0: i32) -> (i32, i32) {
    %c0_i32 = arith.constant 0 : i32
    %c0_i32_0 = arith.constant 0 : i32
    return %arg0, %c0_i32 : i32, i32
  }
}

module attributes {stable_mosaic.version = 11 : i64} {
  func.func @_matmul_bias_act_kernel(%arg0: i32, %arg1: memref<512x576xbf16, #tpu.memory_space<vmem>>, %arg2: memref<576x128xbf16, #tpu.memory_space<vmem>>, %arg3: memref<1x128xf32, #tpu.memory_space<vmem>>, %arg4: memref<512x128xf32, #tpu.memory_space<vmem>>) attributes {dimension_semantics = [#tpu.dimension_semantics<parallel>], iteration_bounds = array<i64: 1>, scalar_prefetch = 0 : i64, scratch_operands = 0 : i64, tpu.core_type = #tpu.core_type<tc>, window_params = [{transform_indices = @transform_0, window_bounds = array<i64: 512, 576>}, {pipeline_mode = #tpu.pipeline_mode<synchronous>, transform_indices = @transform_1, window_bounds = array<i64: 576, 128>}, {pipeline_mode = #tpu.pipeline_mode<synchronous>, transform_indices = @transform_2, window_bounds = array<i64: 1, 128>}, {transform_indices = @transform_3, window_bounds = array<i64: 512, 128>}]} {
    %c0 = arith.constant 0 : index
    %c0_0 = arith.constant 0 : index
    %0 = vector.load %arg1[%c0, %c0_0] : memref<512x576xbf16, #tpu.memory_space<vmem>>, vector<512x576xbf16>
    %c0_1 = arith.constant 0 : index
    %c0_2 = arith.constant 0 : index
    %1 = vector.load %arg2[%c0_1, %c0_2] : memref<576x128xbf16, #tpu.memory_space<vmem>>, vector<576x128xbf16>
    %cst = arith.constant dense<0.000000e+00> : vector<512x128xf32>
    %2 = tpu.matmul %0, %1, %cst {dimension_numbers = #tpu.dot_dimension_numbers<[1], [0], [0], [1], [0, 0, 1, 1], [], []>} : vector<512x576xbf16>, vector<576x128xbf16>, vector<512x128xf32> -> vector<512x128xf32>
    %c0_3 = arith.constant 0 : index
    %c0_4 = arith.constant 0 : index
    %3 = vector.load %arg3[%c0_3, %c0_4] : memref<1x128xf32, #tpu.memory_space<vmem>>, vector<1x128xf32>
    %4 = vector.broadcast %3 : vector<1x128xf32> to vector<512x128xf32>
    %5 = arith.addf %2, %4 : vector<512x128xf32>
    %c0_5 = arith.constant 0 : index
    %c0_6 = arith.constant 0 : index
    %6 = vector.load %arg4[%c0_5, %c0_6] : memref<512x128xf32, #tpu.memory_space<vmem>>, vector<512x128xf32>
    tpu.vector_store %arg4[%c0_5, %c0_6], %5 {strides = array<i32>} : memref<512x128xf32, #tpu.memory_space<vmem>>, vector<512x128xf32>,
    return
  }
  func.func @transform_0(%arg0: i32) -> (i32, i32) {
    %c0_i32 = arith.constant 0 : i32
    %c0_i32_0 = arith.constant 0 : i32
    return %arg0, %c0_i32 : i32, i32
  }
  func.func @transform_1(%arg0: i32) -> (i32, i32) {
    %c0_i32 = arith.constant 0 : i32
    %c0_i32_0 = arith.constant 0 : i32
    %c0_i32_1 = arith.constant 0 : i32
    return %c0_i32, %c0_i32_0 : i32, i32
  }
  func.func @transform_2(%arg0: i32) -> (i32, i32) {
    %c0_i32 = arith.constant 0 : i32
    %c0_i32_0 = arith.constant 0 : i32
    %c0_i32_1 = arith.constant 0 : i32
    return %c0_i32, %c0_i32_0 : i32, i32
  }
  func.func @transform_3(%arg0: i32) -> (i32, i32) {
    %c0_i32 = arith.constant 0 : i32
    %c0_i32_0 = arith.constant 0 : i32
    return %arg0, %c0_i32 : i32, i32
  }
}

</mosaic_0001>

<llo_original>
// kernel: relight_net_forward.9
$region0: #{relight_net_forward.9}
  #allocation0 [shape = 'u32[]', space=smem, size = 0x4, offset = 0x4, fixed_abs, tag = 'smem constant byte address 0x4 - core index']
  #allocation1 [shape = 'u32[144,128]{1,0:T(1,128)}', space=vmem, size = 0x12000, scoped, tag = 'internal scratch']
  %s0 = inlined_call_operand.vmem [shape: bf16[512,36], index: 0, kind: input, shape index: {}]
  %s1 = inlined_call_operand.vmem [shape: bf16[36,128], index: 1, kind: input, shape index: {}]
  %s2 = inlined_call_operand.vmem [shape: f32[1,128], index: 2, kind: input, shape index: {}]
  %s3 = inlined_call_operand.vmem [shape: f32[512,128], index: 3, kind: output, shape index: {}]
  %s4 = sld [smem:[#allocation0]]
  $region22: #{relight_net_forward.9} parent=0
    _
  %s6 = ssub.s32 1, %s4
  %s7 = scalar_select 0, %s6, %s4
  // Predicated region
  $region2: #{relight_net_forward.9} parent=0 // pred_check
    _
  $region3: #{relight_net_forward.9} parent=0 // pred_check_branch
    %9 = sbr.rel (0) target = $region5
  $region4: #{relight_net_forward.9} parent=0 // pred_region
    _
  $region5: #{relight_net_forward.9} parent=0 // pred_fallthru
    _
  // Predicated region
  $region6: #{relight_net_forward.9} parent=0 // pred_check
    _
  $region7: #{relight_net_forward.9} parent=0 // pred_check_branch
    %11 = sbr.rel (0) target = $region9
  $region8: #{relight_net_forward.9} parent=0 // pred_region
    _
  $region9: #{relight_net_forward.9} parent=0 // pred_fallthru
    _
  // Predicated region
  $region10: #{relight_net_forward.9} parent=0 // pred_check
    _
  $region11: #{relight_net_forward.9} parent=0 // pred_check_branch
    %13 = sbr.rel (0) target = $region13
  $region12: #{relight_net_forward.9} parent=0 // pred_region
    _
  $region13: #{relight_net_forward.9} parent=0 // pred_fallthru
    _
  %v15 = vld [vmem:[%s0] sm:$0xf]
  %v16 = vld [vmem:[%s0 + $0x4] sm:$0xf]
  %v17 = vld [vmem:[%s0 + $0x8] sm:$0xf]
  %v18 = vld [vmem:[%s0 + $0xc] sm:$0xf]
  %v19 = vld [vmem:[%s0 + $0x10] sm:$0xf]
  %v20 = vld [vmem:[%s0 + $0x14] sm:$0xf]
  %v21 = vld [vmem:[%s0 + $0x18] sm:$0xf]
  %v22 = vld [vmem:[%s0 + $0x1c] sm:$0xf]
  %v23 = vld [vmem:[%s0 + $0x20] sm:$0xf]
  %v24 = vld [vmem:[%s0 + $0x24] sm:$0xf]
  %v25 = vld [vmem:[%s0 + $0x28] sm:$0xf]
  %v26 = vld [vmem:[%s0 + $0x2c] sm:$0xf]
  %v27 = vld [vmem:[%s0 + $0x30] sm:$0xf]
  %v28 = vld [vmem:[%s0 + $0x34] sm:$0xf]
  %v29 = vld [vmem:[%s0 + $0x38] sm:$0xf]
  %v30 = vld [vmem:[%s0 + $0x3c] sm:$0xf]
  %v31 = vld [vmem:[%s0 + $0x40] sm:$0xf]
  %v32 = vld [vmem:[%s0 + $0x44] sm:$0xf]
  %v33 = vld [vmem:[%s0 + $0x48] sm:$0xf]
  %v34 = vld [vmem:[%s0 + $0x4c] sm:$0xf]
  %v35 = vld [vmem:[%s0 + $0x50] sm:$0xf]
  %v36 = vld [vmem:[%s0 + $0x54] sm:$0xf]
  %v37 = vld [vmem:[%s0 + $0x58] sm:$0xf]
  %v38 = vld [vmem:[%s0 + $0x5c] sm:$0xf]
  %v39 = vld [vmem:[%s0 + $0x60] sm:$0xf]
  %v40 = vld [vmem:[%s0 + $0x64] sm:$0xf]
  %v41 = vld [vmem:[%s0 + $0x68] sm:$0xf]
  %v42 = vld [vmem:[%s0 + $0x6c] sm:$0xf]
  %v43 = vld [vmem:[%s0 + $0x70] sm:$0xf]
  %v44 = vld [vmem:[%s0 + $0x74] sm:$0xf]
  %v45 = vld [vmem:[%s0 + $0x78] sm:$0xf]
  %v46 = vld [vmem:[%s0 + $0x7c] sm:$0xf]
  %v47 = vld [vmem:[%s0 + $0x80] sm:$0xf]
  %v48 = vld [vmem:[%s0 + $0x84] sm:$0xf]
  %v49 = vld [vmem:[%s0 + $0x88] sm:$0xf]
  %v50 = vld [vmem:[%s0 + $0x8c] sm:$0xf]
  %v51 = vld [vmem:[%s0 + $0x90] sm:$0xf]
  %v52 = vld [vmem:[%s0 + $0x94] sm:$0xf]
  %v53 = vld [vmem:[%s0 + $0x98] sm:$0xf]
  %v54 = vld [vmem:[%s0 + $0x9c] sm:$0xf]
  %v55 = vld [vmem:[%s0 + $0xa0] sm:$0xf]
  %v56 = vld [vmem:[%s0 + $0xa4] sm:$0xf]
  %v57 = vld [vmem:[%s0 + $0xa8] sm:$0xf]
  %v58 = vld [vmem:[%s0 + $0xac] sm:$0xf]
  %v59 = vld [vmem:[%s0 + $0xb0] sm:$0xf]
  %v60 = vld [vmem:[%s0 + $0xb4] sm:$0xf]
  %v61 = vld [vmem:[%s0 + $0xb8] sm:$0xf]
  %v62 = vld [vmem:[%s0 + $0xbc] sm:$0xf]
  %v63 = vld [vmem:[%s0 + $0xc0] sm:$0xf]
  %v64 = vld [vmem:[%s0 + $0xc4] sm:$0xf]
  %v65 = vld [vmem:[%s0 + $0xc8] sm:$0xf]
  %v66 = vld [vmem:[%s0 + $0xcc] sm:$0xf]
  %v67 = vld [vmem:[%s0 + $0xd0] sm:$0xf]
  %v68 = vld [vmem:[%s0 + $0xd4] sm:$0xf]
  %v69 = vld [vmem:[%s0 + $0xd8] sm:$0xf]
  %v70 = vld [vmem:[%s0 + $0xdc] sm:$0xf]
  %v71 = vld [vmem:[%s0 + $0xe0] sm:$0xf]
  %v72 = vld [vmem:[%s0 + $0xe4] sm:$0xf]
  %v73 = vld [vmem:[%s0 + $0xe8] sm:$0xf]
  %v74 = vld [vmem:[%s0 + $0xec] sm:$0xf]
  %v75 = vld [vmem:[%s0 + $0xf0] sm:$0xf]
  %v76 = vld [vmem:[%s0 + $0xf4] sm:$0xf]
  %v77 = vld [vmem:[%s0 + $0xf8] sm:$0xf]
  %v78 = vld [vmem:[%s0 + $0xfc] sm:$0xf]
  %v79 = vld [vmem:[%s1] sm:$0xf]
  %v80 = vld [vmem:[%s1 + $0x4] sm:$0xf]
  %v81 = vld [vmem:[%s1 + $0x8] sm:$0xf]
  %v82 = vld [vmem:[%s1 + $0xc] sm:$0xf]
  %v83 = vld [vmem:[%s1 + $0x10] sm:$0x3]
  %v84 = vld [vmem:[%s2] sm:$0x1]
  %v86 = vlaneseq
  %v87 = vshrl.u32 %v86, 7
  %v88 = vsub.s32 0, %v87
  %v89 = vrot.slane %v84, %v88
  %v155 = vunpack.c.l.b16 %v15
  %v156 = vunpack.c.l.b16 %v16
  %v157 = vunpack.c.l.b16 %v17
  %v158 = vunpack.c.l.b16 %v18
  %v159 = vunpack.c.l.b16 %v19
  %v160 = vunpack.c.l.b16 %v20
  %v161 = vunpack.c.l.b16 %v21
  %v162 = vunpack.c.l.b16 %v22
  %v163 = vunpack.c.l.b16 %v23
  %v164 = vunpack.c.l.b16 %v24
  %v165 = vunpack.c.l.b16 %v25
  %v166 = vunpack.c.l.b16 %v26
  %v167 = vunpack.c.l.b16 %v27
  %v168 = vunpack.c.l.b16 %v28
  %v169 = vunpack.c.l.b16 %v29
  %v170 = vunpack.c.l.b16 %v30
  %v171 = vunpack.c.l.b16 %v31
  %v172 = vunpack.c.l.b16 %v32
  %v173 = vunpack.c.l.b16 %v33
  %v174 = vunpack.c.l.b16 %v34
  %v175 = vunpack.c.l.b16 %v35
  %v176 = vunpack.c.l.b16 %v36
  %v177 = vunpack.c.l.b16 %v37
  %v178 = vunpack.c.l.b16 %v38
  %v179 = vunpack.c.l.b16 %v39
  %v180 = vunpack.c.l.b16 %v40
  %v181 = vunpack.c.l.b16 %v41
  %v182 = vunpack.c.l.b16 %v42
  %v183 = vunpack.c.l.b16 %v43
  %v184 = vunpack.c.l.b16 %v44
  %v185 = vunpack.c.l.b16 %v45
  %v186 = vunpack.c.l.b16 %v46
  %v187 = vunpack.c.l.b16 %v47
  %v188 = vunpack.c.l.b16 %v48
  %v189 = vunpack.c.l.b16 %v49
  %v190 = vunpack.c.l.b16 %v50
  %v191 = vunpack.c.l.b16 %v51
  %v192 = vunpack.c.l.b16 %v52
  %v193 = vunpack.c.l.b16 %v53
  %v194 = vunpack.c.l.b16 %v54
  %v195 = vunpack.c.l.b16 %v55
  %v196 = vunpack.c.l.b16 %v56
  %v197 = vunpack.c.l.b16 %v57
  %v198 = vunpack.c.l.b16 %v58
  %v199 = vunpack.c.l.b16 %v59
  %v200 = vunpack.c.l.b16 %v60
  %v201 = vunpack.c.l.b16 %v61
  %v202 = vunpack.c.l.b16 %v62
  %v203 = vunpack.c.l.b16 %v63
  %v204 = vunpack.c.l.b16 %v64
  %v205 = vunpack.c.l.b16 %v65
  %v206 = vunpack.c.l.b16 %v66
  %v207 = vunpack.c.l.b16 %v67
  %v208 = vunpack.c.l.b16 %v68
  %v209 = vunpack.c.l.b16 %v69
  %v210 = vunpack.c.l.b16 %v70
  %v211 = vunpack.c.l.b16 %v71
  %v212 = vunpack.c.l.b16 %v72
  %v213 = vunpack.c.l.b16 %v73
  %v214 = vunpack.c.l.b16 %v74
  %v215 = vunpack.c.l.b16 %v75
  %v216 = vunpack.c.l.b16 %v76
  %v217 = vunpack.c.l.b16 %v77
  %v218 = vunpack.c.l.b16 %v78
  %v219 = vpack.c.b16 %v156, %v155
  %v220 = vpack.c.b16 %v158, %v157
  %v221 = vpack.c.b16 %v160, %v159
  %v222 = vpack.c.b16 %v162, %v161
  %v223 = vpack.c.b16 %v164, %v163
  %v224 = vpack.c.b16 %v166, %v165
  %v225 = vpack.c.b16 %v168, %v167
  %v226 = vpack.c.b16 %v170, %v169
  %v227 = vpack.c.b16 %v172, %v171
  %v228 = vpack.c.b16 %v174, %v173
  %v229 = vpack.c.b16 %v176, %v175
  %v230 = vpack.c.b16 %v178, %v177
  %v231 = vpack.c.b16 %v180, %v179
  %v232 = vpack.c.b16 %v182, %v181
  %v233 = vpack.c.b16 %v184, %v183
  %v234 = vpack.c.b16 %v186, %v185
  %v235 = vpack.c.b16 %v188, %v187
  %v236 = vpack.c.b16 %v190, %v189
  %v237 = vpack.c.b16 %v192, %v191
  %v238 = vpack.c.b16 %v194, %v193
  %v239 = vpack.c.b16 %v196, %v195
  %v240 = vpack.c.b16 %v198, %v197
  %v241 = vpack.c.b16 %v200, %v199
  %v242 = vpack.c.b16 %v202, %v201
  %v243 = vpack.c.b16 %v204, %v203
  %v244 = vpack.c.b16 %v206, %v205
  %v245 = vpack.c.b16 %v208, %v207
  %v246 = vpack.c.b16 %v210, %v209
  %v247 = vpack.c.b16 %v212, %v211
  %v248 = vpack.c.b16 %v214, %v213
  %v249 = vpack.c.b16 %v216, %v215
  %v250 = vpack.c.b16 %v218, %v217
  %v256 = vunpack.c.l.b16 %v79
  %v257 = vunpack.c.l.b16 %v80
  %v258 = vunpack.c.l.b16 %v81
  %v259 = vunpack.c.l.b16 %v82
  %v260 = vunpack.c.l.b16 %v83
  %v261 = vpack.c.b16 %v257, %v256
  %v262 = vpack.c.b16 %v259, %v258
  %v263 = vpack.c.b16 %v260, %v260
  %vm266 = vcmask 293888
  %v268 = vsel %vm266, %v219, 0
  %v271 = vsel %vm266, %v220, 0
  %v274 = vsel %vm266, %v221, 0
  %v277 = vsel %vm266, %v222, 0
  %v280 = vsel %vm266, %v223, 0
  %v283 = vsel %vm266, %v224, 0
  %v286 = vsel %vm266, %v225, 0
  %v289 = vsel %vm266, %v226, 0
  %v292 = vsel %vm266, %v227, 0
  %v295 = vsel %vm266, %v228, 0
  %v298 = vsel %vm266, %v229, 0
  %v301 = vsel %vm266, %v230, 0
  %v304 = vsel %vm266, %v231, 0
  %v307 = vsel %vm266, %v232, 0
  %v310 = vsel %vm266, %v233, 0
  %v313 = vsel %vm266, %v234, 0
  %v316 = vsel %vm266, %v235, 0
  %v319 = vsel %vm266, %v236, 0
  %v322 = vsel %vm266, %v237, 0
  %v325 = vsel %vm266, %v238, 0
  %v328 = vsel %vm266, %v239, 0
  %v331 = vsel %vm266, %v240, 0
  %v334 = vsel %vm266, %v241, 0
  %v337 = vsel %vm266, %v242, 0
  %v340 = vsel %vm266, %v243, 0
  %v343 = vsel %vm266, %v244, 0
  %v346 = vsel %vm266, %v245, 0
  %v349 = vsel %vm266, %v246, 0
  %v352 = vsel %vm266, %v247, 0
  %v355 = vsel %vm266, %v248, 0
  %v358 = vsel %vm266, %v249, 0
  %v361 = vsel %vm266, %v250, 0
  %vm363 = vcmask 1041408
  %v365 = vsel %vm363, %v263, 0
  %367 = vmatprep.subr.bf16.mxu0 0
  %368 = vmatpush1.bf16.msra.mxu0 0
  %369 = vmatprep.subr.bf16.mxu0 0
  %370 = vmatpush1.bf16.msra.mxu0 0
  %371 = vmatprep.subr.bf16.mxu0 0
  %372 = vmatpush1.bf16.msra.mxu0 0
  %373 = vmatprep.subr.bf16.mxu0 0
  %374 = vmatpush1.bf16.msra.mxu0 0
  %375 = vmatprep.subr.bf16.mxu0 0
  %376 = vmatpush1.bf16.msra.mxu0 0
  %377 = vmatprep.subr.bf16.mxu0 0
  %378 = vmatpush1.bf16.msra.mxu0 %v365
  %379 = vmatprep.subr.bf16.mxu0 0
  %380 = vmatpush1.bf16.msra.mxu0 %v262
  %381 = vmatprep.subr.bf16.mxu0 0
  %382 = vmatpush1.bf16.msra.mxu0 %v261
  %383 = vmatprep.subr.bf16.mxu0 0
  %384 = vmatpush2.bf16.msra.mxu0 0
  %385 = vmatprep.subr.bf16.mxu0 0
  %386 = vmatpush2.bf16.msra.mxu0 0
  %387 = vmatprep.subr.bf16.mxu0 0
  %388 = vmatpush2.bf16.msra.mxu0 0
  %389 = vmatprep.subr.bf16.mxu0 0
  %390 = vmatpush2.bf16.msra.mxu0 0
  %391 = vmatprep.subr.bf16.mxu0 0
  %392 = vmatpush2.bf16.msra.mxu0 0
  %393 = vmatprep.subr.bf16.mxu0 0
  %394 = vmatpush2.bf16.msra.mxu0 0
  %395 = vmatprep.subr.bf16.mxu0 0
  %396 = vmatpush2.bf16.msra.mxu0 0
  %397 = vmatprep.subr.bf16.mxu0 0
  %398 = vmatpush2.bf16.msra.mxu0 0
  %399 = vmatprep.mubr.bf16.mxu0 0
  %400 = vmatmul.mubr.bf16.gmra.mxu0 %v268
  %v401 = vpop.f32.mrf.mxu0
  %v402 = vadd.f32 %v89, %v401
  %v403 = vpop.f32.mrf.mxu0
  %v404 = vpop.f32.mrf.mxu0
  %v405 = vadd.f32 %v89, %v404
  %v406 = vpop.f32.mrf.mxu0
  %407 = vmatprep.mubr.bf16.mxu0 0
  %408 = vmatmul.mubr.bf16.gmra.mxu0 %v271
  %v409 = vpop.f32.mrf.mxu0
  %v410 = vadd.f32 %v89, %v409
  %v411 = vpop.f32.mrf.mxu0
  %v412 = vpop.f32.mrf.mxu0
  %v413 = vadd.f32 %v89, %v412
  %v414 = vpop.f32.mrf.mxu0
  %415 = vmatprep.mubr.bf16.mxu0 0
  %416 = vmatmul.mubr.bf16.gmra.mxu0 %v274
  %v417 = vpop.f32.mrf.mxu0
  %v418 = vadd.f32 %v89, %v417
  %v419 = vpop.f32.mrf.mxu0
  %v420 = vpop.f32.mrf.mxu0
  %v421 = vadd.f32 %v89, %v420
  %v422 = vpop.f32.mrf.mxu0
  %423 = vmatprep.mubr.bf16.mxu0 0
  %424 = vmatmul.mubr.bf16.gmra.mxu0 %v277
  %v425 = vpop.f32.mrf.mxu0
  %v426 = vadd.f32 %v89, %v425
  %v427 = vpop.f32.mrf.mxu0
  %v428 = vpop.f32.mrf.mxu0
  %v429 = vadd.f32 %v89, %v428
  %v430 = vpop.f32.mrf.mxu0
  %431 = vmatprep.mubr.bf16.mxu0 0
  %432 = vmatmul.mubr.bf16.gmra.mxu0 %v280
  %v433 = vpop.f32.mrf.mxu0
  %v434 = vadd.f32 %v89, %v433
  %v435 = vpop.f32.mrf.mxu0
  %v436 = vpop.f32.mrf.mxu0
  %v437 = vadd.f32 %v89, %v436
  %v438 = vpop.f32.mrf.mxu0
  %439 = vmatprep.mubr.bf16.mxu0 0
  %440 = vmatmul.mubr.bf16.gmra.mxu0 %v283
  %v441 = vpop.f32.mrf.mxu0
  %v442 = vadd.f32 %v89, %v441
  %v443 = vpop.f32.mrf.mxu0
  %v444 = vpop.f32.mrf.mxu0
  %v445 = vadd.f32 %v89, %v444
  %v446 = vpop.f32.mrf.mxu0
  %447 = vmatprep.mubr.bf16.mxu0 0
  %448 = vmatmul.mubr.bf16.gmra.mxu0 %v286
  %v449 = vpop.f32.mrf.mxu0
  %v450 = vadd.f32 %v89, %v449
  %v451 = vpop.f32.mrf.mxu0
  %v452 = vpop.f32.mrf.mxu0
  %v453 = vadd.f32 %v89, %v452
  %v454 = vpop.f32.mrf.mxu0
  %455 = vmatprep.mubr.bf16.mxu0 0
  %456 = vmatmul.mubr.bf16.gmra.mxu0 %v289
  %v457 = vpop.f32.mrf.mxu0
  %v458 = vadd.f32 %v89, %v457
  %v459 = vpop.f32.mrf.mxu0
  %v460 = vpop.f32.mrf.mxu0
  %v461 = vadd.f32 %v89, %v460
  %v462 = vpop.f32.mrf.mxu0
  %463 = vmatprep.mubr.bf16.mxu0 0
  %464 = vmatmul.mubr.bf16.gmra.mxu0 %v292
  %v465 = vpop.f32.mrf.mxu0
  %v466 = vadd.f32 %v89, %v465
  %v467 = vpop.f32.mrf.mxu0
  %v468 = vpop.f32.mrf.mxu0
  %v469 = vadd.f32 %v89, %v468
  %v470 = vpop.f32.mrf.mxu0
  %471 = vmatprep.mubr.bf16.mxu0 0
  %472 = vmatmul.mubr.bf16.gmra.mxu0 %v295
  %v473 = vpop.f32.mrf.mxu0
  %v474 = vadd.f32 %v89, %v473
  %v475 = vpop.f32.mrf.mxu0
  %v476 = vpop.f32.mrf.mxu0
  %v477 = vadd.f32 %v89, %v476
  %v478 = vpop.f32.mrf.mxu0
  %479 = vmatprep.mubr.bf16.mxu0 0
  %480 = vmatmul.mubr.bf16.gmra.mxu0 %v298
  %v481 = vpop.f32.mrf.mxu0
  %v482 = vadd.f32 %v89, %v481
  %v483 = vpop.f32.mrf.mxu0
  %v484 = vpop.f32.mrf.mxu0
  %v485 = vadd.f32 %v89, %v484
  %v486 = vpop.f32.mrf.mxu0
  %487 = vmatprep.mubr.bf16.mxu0 0
  %488 = vmatmul.mubr.bf16.gmra.mxu0 %v301
  %v489 = vpop.f32.mrf.mxu0
  %v490 = vadd.f32 %v89, %v489
  %v491 = vpop.f32.mrf.mxu0
  %v492 = vpop.f32.mrf.mxu0
  %v493 = vadd.f32 %v89, %v492
  %v494 = vpop.f32.mrf.mxu0
  %495 = vmatprep.mubr.bf16.mxu0 0
  %496 = vmatmul.mubr.bf16.gmra.mxu0 %v304
  %v497 = vpop.f32.mrf.mxu0
  %v498 = vadd.f32 %v89, %v497
  %v499 = vpop.f32.mrf.mxu0
  %v500 = vpop.f32.mrf.mxu0
  %v501 = vadd.f32 %v89, %v500
  %v502 = vpop.f32.mrf.mxu0
  %503 = vmatprep.mubr.bf16.mxu0 0
  %504 = vmatmul.mubr.bf16.gmra.mxu0 %v307
  %v505 = vpop.f32.mrf.mxu0
  %v506 = vadd.f32 %v89, %v505
  %v507 = vpop.f32.mrf.mxu0
  %v508 = vpop.f32.mrf.mxu0
  %v509 = vadd.f32 %v89, %v508
  %v510 = vpop.f32.mrf.mxu0
  %511 = vmatprep.mubr.bf16.mxu0 0
  %512 = vmatmul.mubr.bf16.gmra.mxu0 %v310
  %v513 = vpop.f32.mrf.mxu0
  %v514 = vadd.f32 %v89, %v513
  %v515 = vpop.f32.mrf.mxu0
  %v516 = vpop.f32.mrf.mxu0
  %v517 = vadd.f32 %v89, %v516
  %v518 = vpop.f32.mrf.mxu0
  %519 = vmatprep.mubr.bf16.mxu0 0
  %520 = vmatmul.mubr.bf16.gmra.mxu0 %v313
  %v521 = vpop.f32.mrf.mxu0
  %v522 = vadd.f32 %v89, %v521
  %v523 = vpop.f32.mrf.mxu0
  %v524 = vpop.f32.mrf.mxu0
  %v525 = vadd.f32 %v89, %v524
  %v526 = vpop.f32.mrf.mxu0
  %527 = vmatprep.mubr.bf16.mxu0 0
  %528 = vmatmul.mubr.bf16.gmra.mxu0 %v316
  %v529 = vpop.f32.mrf.mxu0
  %v530 = vadd.f32 %v89, %v529
  %v531 = vpop.f32.mrf.mxu0
  %v532 = vpop.f32.mrf.mxu0
  %v533 = vadd.f32 %v89, %v532
  %v534 = vpop.f32.mrf.mxu0
  %535 = vmatprep.mubr.bf16.mxu0 0
  %536 = vmatmul.mubr.bf16.gmra.mxu0 %v319
  %v537 = vpop.f32.mrf.mxu0
  %v538 = vadd.f32 %v89, %v537
  %v539 = vpop.f32.mrf.mxu0
  %v540 = vpop.f32.mrf.mxu0
  %v541 = vadd.f32 %v89, %v540
  %v542 = vpop.f32.mrf.mxu0
  %543 = vmatprep.mubr.bf16.mxu0 0
  %544 = vmatmul.mubr.bf16.gmra.mxu0 %v322
  %v545 = vpop.f32.mrf.mxu0
  %v546 = vadd.f32 %v89, %v545
  %v547 = vpop.f32.mrf.mxu0
  %v548 = vpop.f32.mrf.mxu0
  %v549 = vadd.f32 %v89, %v548
  %v550 = vpop.f32.mrf.mxu0
  %551 = vmatprep.mubr.bf16.mxu0 0
  %552 = vmatmul.mubr.bf16.gmra.mxu0 %v325
  %v553 = vpop.f32.mrf.mxu0
  %v554 = vadd.f32 %v89, %v553
  %v555 = vpop.f32.mrf.mxu0
  %v556 = vpop.f32.mrf.mxu0
  %v557 = vadd.f32 %v89, %v556
  %v558 = vpop.f32.mrf.mxu0
  %559 = vmatprep.mubr.bf16.mxu0 0
  %560 = vmatmul.mubr.bf16.gmra.mxu0 %v328
  %v561 = vpop.f32.mrf.mxu0
  %v562 = vadd.f32 %v89, %v561
  %v563 = vpop.f32.mrf.mxu0
  %v564 = vpop.f32.mrf.mxu0
  %v565 = vadd.f32 %v89, %v564
  %v566 = vpop.f32.mrf.mxu0
  %567 = vmatprep.mubr.bf16.mxu0 0
  %568 = vmatmul.mubr.bf16.gmra.mxu0 %v331
  %v569 = vpop.f32.mrf.mxu0
  %v570 = vadd.f32 %v89, %v569
  %v571 = vpop.f32.mrf.mxu0
  %v572 = vpop.f32.mrf.mxu0
  %v573 = vadd.f32 %v89, %v572
  %v574 = vpop.f32.mrf.mxu0
  %575 = vmatprep.mubr.bf16.mxu0 0
  %576 = vmatmul.mubr.bf16.gmra.mxu0 %v334
  %v577 = vpop.f32.mrf.mxu0
  %v578 = vadd.f32 %v89, %v577
  %v579 = vpop.f32.mrf.mxu0
  %v580 = vpop.f32.mrf.mxu0
  %v581 = vadd.f32 %v89, %v580
  %v582 = vpop.f32.mrf.mxu0
  %583 = vmatprep.mubr.bf16.mxu0 0
  %584 = vmatmul.mubr.bf16.gmra.mxu0 %v337
  %v585 = vpop.f32.mrf.mxu0
  %v586 = vadd.f32 %v89, %v585
  %v587 = vpop.f32.mrf.mxu0
  %v588 = vpop.f32.mrf.mxu0
  %v589 = vadd.f32 %v89, %v588
  %v590 = vpop.f32.mrf.mxu0
  %591 = vmatprep.mubr.bf16.mxu0 0
  %592 = vmatmul.mubr.bf16.gmra.mxu0 %v340
  %v593 = vpop.f32.mrf.mxu0
  %v594 = vadd.f32 %v89, %v593
  %v595 = vpop.f32.mrf.mxu0
  %v596 = vpop.f32.mrf.mxu0
  %v597 = vadd.f32 %v89, %v596
  %v598 = vpop.f32.mrf.mxu0
  %599 = vmatprep.mubr.bf16.mxu0 0
  %600 = vmatmul.mubr.bf16.gmra.mxu0 %v343
  %v601 = vpop.f32.mrf.mxu0
  %v602 = vadd.f32 %v89, %v601
  %v603 = vpop.f32.mrf.mxu0
  %v604 = vpop.f32.mrf.mxu0
  %v605 = vadd.f32 %v89, %v604
  %v606 = vpop.f32.mrf.mxu0
  %607 = vmatprep.mubr.bf16.mxu0 0
  %608 = vmatmul.mubr.bf16.gmra.mxu0 %v346
  %v609 = vpop.f32.mrf.mxu0
  %v610 = vadd.f32 %v89, %v609
  %v611 = vpop.f32.mrf.mxu0
  %v612 = vpop.f32.mrf.mxu0
  %v613 = vadd.f32 %v89, %v612
  %v614 = vpop.f32.mrf.mxu0
  %615 = vmatprep.mubr.bf16.mxu0 0
  %616 = vmatmul.mubr.bf16.gmra.mxu0 %v349
  %v617 = vpop.f32.mrf.mxu0
  %v618 = vadd.f32 %v89, %v617
  %v619 = vpop.f32.mrf.mxu0
  %v620 = vpop.f32.mrf.mxu0
  %v621 = vadd.f32 %v89, %v620
  %v622 = vpop.f32.mrf.mxu0
  %623 = vmatprep.mubr.bf16.mxu0 0
  %624 = vmatmul.mubr.bf16.gmra.mxu0 %v352
  %v625 = vpop.f32.mrf.mxu0
  %v626 = vadd.f32 %v89, %v625
  %v627 = vpop.f32.mrf.mxu0
  %v628 = vpop.f32.mrf.mxu0
  %v629 = vadd.f32 %v89, %v628
  %v630 = vpop.f32.mrf.mxu0
  %631 = vmatprep.mubr.bf16.mxu0 0
  %632 = vmatmul.mubr.bf16.gmra.mxu0 %v355
  %v633 = vpop.f32.mrf.mxu0
  %v634 = vadd.f32 %v89, %v633
  %v635 = vpop.f32.mrf.mxu0
  %v636 = vpop.f32.mrf.mxu0
  %v637 = vadd.f32 %v89, %v636
  %v638 = vpop.f32.mrf.mxu0
  %639 = vmatprep.mubr.bf16.mxu0 0
  %640 = vmatmul.mubr.bf16.gmra.mxu0 %v358
  %v641 = vpop.f32.mrf.mxu0
  %v642 = vadd.f32 %v89, %v641
  %v643 = vpop.f32.mrf.mxu0
  %v644 = vpop.f32.mrf.mxu0
  %v645 = vadd.f32 %v89, %v644
  %v646 = vpop.f32.mrf.mxu0
  %647 = vmatprep.mubr.bf16.mxu0 0
  %648 = vmatmul.mubr.bf16.gmra.mxu0 %v361
  %v649 = vpop.f32.mrf.mxu0
  %v650 = vadd.f32 %v89, %v649
  %v651 = vpop.f32.mrf.mxu0
  %v652 = vpop.f32.mrf.mxu0
  %v653 = vadd.f32 %v89, %v652
  %v654 = vpop.f32.mrf.mxu0
  %655 = vdwg.mxu0
  %656 = vst [vmem:[%s3] sm:$0xff] %v402
  %657 = vst [vmem:[%s3 + $0x8] sm:$0xff] %v405
  %658 = vst [vmem:[%s3 + $0x10] sm:$0xff] %v410
  %659 = vst [vmem:[%s3 + $0x18] sm:$0xff] %v413
  %660 = vst [vmem:[%s3 + $0x20] sm:$0xff] %v418
  %661 = vst [vmem:[%s3 + $0x28] sm:$0xff] %v421
  %662 = vst [vmem:[%s3 + $0x30] sm:$0xff] %v426
  %663 = vst [vmem:[%s3 + $0x38] sm:$0xff] %v429
  %664 = vst [vmem:[%s3 + $0x40] sm:$0xff] %v434
  %665 = vst [vmem:[%s3 + $0x48] sm:$0xff] %v437
  %666 = vst [vmem:[%s3 + $0x50] sm:$0xff] %v442
  %667 = vst [vmem:[%s3 + $0x58] sm:$0xff] %v445
  %668 = vst [vmem:[%s3 + $0x60] sm:$0xff] %v450
  %669 = vst [vmem:[%s3 + $0x68] sm:$0xff] %v453
  %670 = vst [vmem:[%s3 + $0x70] sm:$0xff] %v458
  %671 = vst [vmem:[%s3 + $0x78] sm:$0xff] %v461
  %672 = vst [vmem:[%s3 + $0x80] sm:$0xff] %v466
  %673 = vst [vmem:[%s3 + $0x88] sm:$0xff] %v469
  %674 = vst [vmem:[%s3 + $0x90] sm:$0xff] %v474
  %675 = vst [vmem:[%s3 + $0x98] sm:$0xff] %v477
  %676 = vst [vmem:[%s3 + $0xa0] sm:$0xff] %v482
  %677 = vst [vmem:[%s3 + $0xa8] sm:$0xff] %v485
  %678 = vst [vmem:[%s3 + $0xb0] sm:$0xff] %v490
  %679 = vst [vmem:[%s3 + $0xb8] sm:$0xff] %v493
  %680 = vst [vmem:[%s3 + $0xc0] sm:$0xff] %v498
  %681 = vst [vmem:[%s3 + $0xc8] sm:$0xff] %v501
  %682 = vst [vmem:[%s3 + $0xd0] sm:$0xff] %v506
  %683 = vst [vmem:[%s3 + $0xd8] sm:$0xff] %v509
  %684 = vst [vmem:[%s3 + $0xe0] sm:$0xff] %v514
  %685 = vst [vmem:[%s3 + $0xe8] sm:$0xff] %v517
  %686 = vst [vmem:[%s3 + $0xf0] sm:$0xff] %v522
  %687 = vst [vmem:[%s3 + $0xf8] sm:$0xff] %v525
  %688 = vst [vmem:[%s3 + $0x100] sm:$0xff] %v530
  %689 = vst [vmem:[%s3 + $0x108] sm:$0xff] %v533
  %690 = vst [vmem:[%s3 + $0x110] sm:$0xff] %v538
  %691 = vst [vmem:[%s3 + $0x118] sm:$0xff] %v541
  %692 = vst [vmem:[%s3 + $0x120] sm:$0xff] %v546
  %693 = vst [vmem:[%s3 + $0x128] sm:$0xff] %v549
  %694 = vst [vmem:[%s3 + $0x130] sm:$0xff] %v554
  %695 = vst [vmem:[%s3 + $0x138] sm:$0xff] %v557
  %696 = vst [vmem:[%s3 + $0x140] sm:$0xff] %v562
  %697 = vst [vmem:[%s3 + $0x148] sm:$0xff] %v565
  %698 = vst [vmem:[%s3 + $0x150] sm:$0xff] %v570
  %699 = vst [vmem:[%s3 + $0x158] sm:$0xff] %v573
  %700 = vst [vmem:[%s3 + $0x160] sm:$0xff] %v578
  %701 = vst [vmem:[%s3 + $0x168] sm:$0xff] %v581
  %702 = vst [vmem:[%s3 + $0x170] sm:$0xff] %v586
  %703 = vst [vmem:[%s3 + $0x178] sm:$0xff] %v589
  %704 = vst [vmem:[%s3 + $0x180] sm:$0xff] %v594
  %705 = vst [vmem:[%s3 + $0x188] sm:$0xff] %v597
  %706 = vst [vmem:[%s3 + $0x190] sm:$0xff] %v602
  %707 = vst [vmem:[%s3 + $0x198] sm:$0xff] %v605
  %708 = vst [vmem:[%s3 + $0x1a0] sm:$0xff] %v610
  %709 = vst [vmem:[%s3 + $0x1a8] sm:$0xff] %v613
  %710 = vst [vmem:[%s3 + $0x1b0] sm:$0xff] %v618
  %711 = vst [vmem:[%s3 + $0x1b8] sm:$0xff] %v621
  %712 = vst [vmem:[%s3 + $0x1c0] sm:$0xff] %v626
  %713 = vst [vmem:[%s3 + $0x1c8] sm:$0xff] %v629
  %714 = vst [vmem:[%s3 + $0x1d0] sm:$0xff] %v634
  %715 = vst [vmem:[%s3 + $0x1d8] sm:$0xff] %v637
  %716 = vst [vmem:[%s3 + $0x1e0] sm:$0xff] %v642
  %717 = vst [vmem:[%s3 + $0x1e8] sm:$0xff] %v645
  %718 = vst [vmem:[%s3 + $0x1f0] sm:$0xff] %v650
  %719 = vst [vmem:[%s3 + $0x1f8] sm:$0xff] %v653
  // Predicated region
  $region14: #{relight_net_forward.9} parent=0 // pred_check
    _
  $region15: #{relight_net_forward.9} parent=0 // pred_check_branch
    %721 = sbr.rel (0) target = $region17
  $region16: #{relight_net_forward.9} parent=0 // pred_region
    _
  $region17: #{relight_net_forward.9} parent=0 // pred_fallthru
    _
  // Predicated region
  $region18: #{relight_net_forward.9} parent=0 // pred_check
    _
  $region19: #{relight_net_forward.9} parent=0 // pred_check_branch
    %723 = sbr.rel (0) target = $region21
  $region20: #{relight_net_forward.9} parent=0 // pred_region
    _
  $region21: #{relight_net_forward.9} parent=0 // pred_fallthru
    _

// kernel: relight_net_forward.10
$region0: #{relight_net_forward.10}
  #allocation0 [shape = 'u32[]', space=smem, size = 0x4, offset = 0x4, fixed_abs, tag = 'smem constant byte address 0x4 - core index']
  #allocation1 [shape = 'u32[144,128]{1,0:T(1,128)}', space=vmem, size = 0x12000, scoped, tag = 'internal scratch']
  %s0 = inlined_call_operand.vmem [shape: bf16[128,576], index: 0, kind: input, shape index: {}]
  %s1 = inlined_call_operand.vmem [shape: bf16[576,128], index: 1, kind: input, shape index: {}]
  %s2 = inlined_call_operand.vmem [shape: f32[1,128], index: 2, kind: input, shape index: {}]
  %s3 = inlined_call_operand.vmem [shape: f32[128,128], index: 3, kind: output, shape index: {}]
  %s4 = sld [smem:[#allocation0]]
  $region22: #{relight_net_forward.10} parent=0
    _
  %s6 = ssub.s32 1, %s4
  %s7 = scalar_select 0, %s6, %s4
  // Predicated region
  $region2: #{relight_net_forward.10} parent=0 // pred_check
    _
  $region3: #{relight_net_forward.10} parent=0 // pred_check_branch
    %9 = sbr.rel (0) target = $region5
  $region4: #{relight_net_forward.10} parent=0 // pred_region
    _
  $region5: #{relight_net_forward.10} parent=0 // pred_fallthru
    _
  // Predicated region
  $region6: #{relight_net_forward.10} parent=0 // pred_check
    _
  $region7: #{relight_net_forward.10} parent=0 // pred_check_branch
    %11 = sbr.rel (0) target = $region9
  $region8: #{relight_net_forward.10} parent=0 // pred_region
    _
  $region9: #{relight_net_forward.10} parent=0 // pred_fallthru
    _
  // Predicated region
  $region10: #{relight_net_forward.10} parent=0 // pred_check
    _
  $region11: #{relight_net_forward.10} parent=0 // pred_check_branch
    %13 = sbr.rel (0) target = $region13
  $region12: #{relight_net_forward.10} parent=0 // pred_region
    _
  $region13: #{relight_net_forward.10} parent=0 // pred_fallthru
    _
  %v15 = vld [vmem:[%s0] sm:$0xff]
  %v16 = vld [vmem:[%s0 + $0x8] sm:$0xff]
  %v17 = vld [vmem:[%s0 + $0x10] sm:$0xf]
  %v18 = vld [vmem:[%s0 + $0x14] sm:$0xff]
  %v19 = vld [vmem:[%s0 + $0x1c] sm:$0xff]
  %v20 = vld [vmem:[%s0 + $0x24] sm:$0xf]
  %v21 = vld [vmem:[%s0 + $0x28] sm:$0xff]
  %v22 = vld [vmem:[%s0 + $0x30] sm:$0xff]
  %v23 = vld [vmem:[%s0 + $0x38] sm:$0xf]
  %v24 = vld [vmem:[%s0 + $0x3c] sm:$0xff]
  %v25 = vld [vmem:[%s0 + $0x44] sm:$0xff]
  %v26 = vld [vmem:[%s0 + $0x4c] sm:$0xf]
  %v27 = vld [vmem:[%s0 + $0x50] sm:$0xff]
  %v28 = vld [vmem:[%s0 + $0x58] sm:$0xff]
  %v29 = vld [vmem:[%s0 + $0x60] sm:$0xf]
  %v30 = vld [vmem:[%s0 + $0x64] sm:$0xff]
  %v31 = vld [vmem:[%s0 + $0x6c] sm:$0xff]
  %v32 = vld [vmem:[%s0 + $0x74] sm:$0xf]
  %v33 = vld [vmem:[%s0 + $0x78] sm:$0xff]
  %v34 = vld [vmem:[%s0 + $0x80] sm:$0xff]
  %v35 = vld [vmem:[%s0 + $0x88] sm:$0xf]
  %v36 = vld [vmem:[%s0 + $0x8c] sm:$0xff]
  %v37 = vld [vmem:[%s0 + $0x94] sm:$0xff]
  %v38 = vld [vmem:[%s0 + $0x9c] sm:$0xf]
  %v39 = vld [vmem:[%s0 + $0xa0] sm:$0xff]
  %v40 = vld [vmem:[%s0 + $0xa8] sm:$0xff]
  %v41 = vld [vmem:[%s0 + $0xb0] sm:$0xf]
  %v42 = vld [vmem:[%s0 + $0xb4] sm:$0xff]
  %v43 = vld [vmem:[%s0 + $0xbc] sm:$0xff]
  %v44 = vld [vmem:[%s0 + $0xc4] sm:$0xf]
  %v45 = vld [vmem:[%s0 + $0xc8] sm:$0xff]
  %v46 = vld [vmem:[%s0 + $0xd0] sm:$0xff]
  %v47 = vld [vmem:[%s0 + $0xd8] sm:$0xf]
  %v48 = vld [vmem:[%s0 + $0xdc] sm:$0xff]
  %v49 = vld [vmem:[%s0 + $0xe4] sm:$0xff]
  %v50 = vld [vmem:[%s0 + $0xec] sm:$0xf]
  %v51 = vld [vmem:[%s0 + $0xf0] sm:$0xff]
  %v52 = vld [vmem:[%s0 + $0xf8] sm:$0xff]
  %v53 = vld [vmem:[%s0 + $0x100] sm:$0xf]
  %v54 = vld [vmem:[%s0 + $0x104] sm:$0xff]
  %v55 = vld [vmem:[%s0 + $0x10c] sm:$0xff]
  %v56 = vld [vmem:[%s0 + $0x114] sm:$0xf]
  %v57 = vld [vmem:[%s0 + $0x118] sm:$0xff]
  %v58 = vld [vmem:[%s0 + $0x120] sm:$0xff]
  %v59 = vld [vmem:[%s0 + $0x128] sm:$0xf]
  %v60 = vld [vmem:[%s0 + $0x12c] sm:$0xff]
  %v61 = vld [vmem:[%s0 + $0x134] sm:$0xff]
  %v62 = vld [vmem:[%s0 + $0x13c] sm:$0xf]
  %v63 = vld [vmem:[%s1] sm:$0xf]
  %v64 = vld [vmem:[%s1 + $0x4] sm:$0xf]
  %v65 = vld [vmem:[%s1 + $0x8] sm:$0xf]
  %v66 = vld [vmem:[%s1 + $0xc] sm:$0xf]
  %v67 = vld [vmem:[%s1 + $0x10] sm:$0xf]
  %v68 = vld [vmem:[%s1 + $0x14] sm:$0xf]
  %v69 = vld [vmem:[%s1 + $0x18] sm:$0xf]
  %v70 = vld [vmem:[%s1 + $0x1c] sm:$0xf]
  %v71 = vld [vmem:[%s1 + $0x20] sm:$0xf]
  %v72 = vld [vmem:[%s1 + $0x24] sm:$0xf]
  %v73 = vld [vmem:[%s1 + $0x28] sm:$0xf]
  %v74 = vld [vmem:[%s1 + $0x2c] sm:$0xf]
  %v75 = vld [vmem:[%s1 + $0x30] sm:$0xf]
  %v76 = vld [vmem:[%s1 + $0x34] sm:$0xf]
  %v77 = vld [vmem:[%s1 + $0x38] sm:$0xf]
  %v78 = vld [vmem:[%s1 + $0x3c] sm:$0xf]
  %v79 = vld [vmem:[%s1 + $0x40] sm:$0xf]
  %v80 = vld [vmem:[%s1 + $0x44] sm:$0xf]
  %v81 = vld [vmem:[%s1 + $0x48] sm:$0xf]
  %v82 = vld [vmem:[%s1 + $0x4c] sm:$0xf]
  %v83 = vld [vmem:[%s1 + $0x50] sm:$0xf]
  %v84 = vld [vmem:[%s1 + $0x54] sm:$0xf]
  %v85 = vld [vmem:[%s1 + $0x58] sm:$0xf]
  %v86 = vld [vmem:[%s1 + $0x5c] sm:$0xf]
  %v87 = vld [vmem:[%s1 + $0x60] sm:$0xf]
  %v88 = vld [vmem:[%s1 + $0x64] sm:$0xf]
  %v89 = vld [vmem:[%s1 + $0x68] sm:$0xf]
  %v90 = vld [vmem:[%s1 + $0x6c] sm:$0xf]
  %v91 = vld [vmem:[%s1 + $0x70] sm:$0xf]
  %v92 = vld [vmem:[%s1 + $0x74] sm:$0xf]
  %v93 = vld [vmem:[%s1 + $0x78] sm:$0xf]
  %v94 = vld [vmem:[%s1 + $0x7c] sm:$0xf]
  %v95 = vld [vmem:[%s1 + $0x80] sm:$0xf]
  %v96 = vld [vmem:[%s1 + $0x84] sm:$0xf]
  %v97 = vld [vmem:[%s1 + $0x88] sm:$0xf]
  %v98 = vld [vmem:[%s1 + $0x8c] sm:$0xf]
  %v99 = vld [vmem:[%s1 + $0x90] sm:$0xf]
  %v100 = vld [vmem:[%s1 + $0x94] sm:$0xf]
  %v101 = vld [vmem:[%s1 + $0x98] sm:$0xf]
  %v102 = vld [vmem:[%s1 + $0x9c] sm:$0xf]
  %v103 = vld [vmem:[%s1 + $0xa0] sm:$0xf]
  %v104 = vld [vmem:[%s1 + $0xa4] sm:$0xf]
  %v105 = vld [vmem:[%s1 + $0xa8] sm:$0xf]
  %v106 = vld [vmem:[%s1 + $0xac] sm:$0xf]
  %v107 = vld [vmem:[%s1 + $0xb0] sm:$0xf]
  %v108 = vld [vmem:[%s1 + $0xb4] sm:$0xf]
  %v109 = vld [vmem:[%s1 + $0xb8] sm:$0xf]
  %v110 = vld [vmem:[%s1 + $0xbc] sm:$0xf]
  %v111 = vld [vmem:[%s1 + $0xc0] sm:$0xf]
  %v112 = vld [vmem:[%s1 + $0xc4] sm:$0xf]
  %v113 = vld [vmem:[%s1 + $0xc8] sm:$0xf]
  %v114 = vld [vmem:[%s1 + $0xcc] sm:$0xf]
  %v115 = vld [vmem:[%s1 + $0xd0] sm:$0xf]
  %v116 = vld [vmem:[%s1 + $0xd4] sm:$0xf]
  %v117 = vld [vmem:[%s1 + $0xd8] sm:$0xf]
  %v118 = vld [vmem:[%s1 + $0xdc] sm:$0xf]
  %v119 = vld [vmem:[%s1 + $0xe0] sm:$0xf]
  %v120 = vld [vmem:[%s1 + $0xe4] sm:$0xf]
  %v121 = vld [vmem:[%s1 + $0xe8] sm:$0xf]
  %v122 = vld [vmem:[%s1 + $0xec] sm:$0xf]
  %v123 = vld [vmem:[%s1 + $0xf0] sm:$0xf]
  %v124 = vld [vmem:[%s1 + $0xf4] sm:$0xf]
  %v125 = vld [vmem:[%s1 + $0xf8] sm:$0xf]
  %v126 = vld [vmem:[%s1 + $0xfc] sm:$0xf]
  %v127 = vld [vmem:[%s1 + $0x100] sm:$0xf]
  %v128 = vld [vmem:[%s1 + $0x104] sm:$0xf]
  %v129 = vld [vmem:[%s1 + $0x108] sm:$0xf]
  %v130 = vld [vmem:[%s1 + $0x10c] sm:$0xf]
  %v131 = vld [vmem:[%s1 + $0x110] sm:$0xf]
  %v132 = vld [vmem:[%s1 + $0x114] sm:$0xf]
  %v133 = vld [vmem:[%s1 + $0x118] sm:$0xf]
  %v134 = vld [vmem:[%s1 + $0x11c] sm:$0xf]
  %v135 = vld [vmem:[%s2] sm:$0x1]
  %v137 = vlaneseq
  %v138 = vshrl.u32 %v137, 7
  %v139 = vsub.s32 0, %v138
  %v140 = vrot.slane %v135, %v139
  %v190 = vunpack.c.l.b16 %v15
  %v191 = vunpack.c.h.b16 %v15
  %v192 = vunpack.c.l.b16 %v16
  %v193 = vunpack.c.h.b16 %v16
  %v194 = vunpack.c.l.b16 %v17
  %v195 = vunpack.c.l.b16 %v18
  %v196 = vunpack.c.h.b16 %v18
  %v197 = vunpack.c.l.b16 %v19
  %v198 = vunpack.c.h.b16 %v19
  %v199 = vunpack.c.l.b16 %v20
  %v200 = vunpack.c.l.b16 %v21
  %v201 = vunpack.c.h.b16 %v21
  %v202 = vunpack.c.l.b16 %v22
  %v203 = vunpack.c.h.b16 %v22
  %v204 = vunpack.c.l.b16 %v23
  %v205 = vunpack.c.l.b16 %v24
  %v206 = vunpack.c.h.b16 %v24
  %v207 = vunpack.c.l.b16 %v25
  %v208 = vunpack.c.h.b16 %v25
  %v209 = vunpack.c.l.b16 %v26
  %v210 = vunpack.c.l.b16 %v27
  %v211 = vunpack.c.h.b16 %v27
  %v212 = vunpack.c.l.b16 %v28
  %v213 = vunpack.c.h.b16 %v28
  %v214 = vunpack.c.l.b16 %v29
  %v215 = vunpack.c.l.b16 %v30
  %v216 = vunpack.c.h.b16 %v30
  %v217 = vunpack.c.l.b16 %v31
  %v218 = vunpack.c.h.b16 %v31
  %v219 = vunpack.c.l.b16 %v32
  %v220 = vunpack.c.l.b16 %v33
  %v221 = vunpack.c.h.b16 %v33
  %v222 = vunpack.c.l.b16 %v34
  %v223 = vunpack.c.h.b16 %v34
  %v224 = vunpack.c.l.b16 %v35
  %v225 = vunpack.c.l.b16 %v36
  %v226 = vunpack.c.h.b16 %v36
  %v227 = vunpack.c.l.b16 %v37
  %v228 = vunpack.c.h.b16 %v37
  %v229 = vunpack.c.l.b16 %v38
  %v230 = vunpack.c.l.b16 %v39
  %v231 = vunpack.c.h.b16 %v39
  %v232 = vunpack.c.l.b16 %v40
  %v233 = vunpack.c.h.b16 %v40
  %v234 = vunpack.c.l.b16 %v41
  %v235 = vunpack.c.l.b16 %v42
  %v236 = vunpack.c.h.b16 %v42
  %v237 = vunpack.c.l.b16 %v43
  %v238 = vunpack.c.h.b16 %v43
  %v239 = vunpack.c.l.b16 %v44
  %v240 = vunpack.c.l.b16 %v45
  %v241 = vunpack.c.h.b16 %v45
  %v242 = vunpack.c.l.b16 %v46
  %v243 = vunpack.c.h.b16 %v46
  %v244 = vunpack.c.l.b16 %v47
  %v245 = vunpack.c.l.b16 %v48
  %v246 = vunpack.c.h.b16 %v48
  %v247 = vunpack.c.l.b16 %v49
  %v248 = vunpack.c.h.b16 %v49
  %v249 = vunpack.c.l.b16 %v50
  %v250 = vunpack.c.l.b16 %v51
  %v251 = vunpack.c.h.b16 %v51
  %v252 = vunpack.c.l.b16 %v52
  %v253 = vunpack.c.h.b16 %v52
  %v254 = vunpack.c.l.b16 %v53
  %v255 = vunpack.c.l.b16 %v54
  %v256 = vunpack.c.h.b16 %v54
  %v257 = vunpack.c.l.b16 %v55
  %v258 = vunpack.c.h.b16 %v55
  %v259 = vunpack.c.l.b16 %v56
  %v260 = vunpack.c.l.b16 %v57
  %v261 = vunpack.c.h.b16 %v57
  %v262 = vunpack.c.l.b16 %v58
  %v263 = vunpack.c.h.b16 %v58
  %v264 = vunpack.c.l.b16 %v59
  %v265 = vunpack.c.l.b16 %v60
  %v266 = vunpack.c.h.b16 %v60
  %v267 = vunpack.c.l.b16 %v61
  %v268 = vunpack.c.h.b16 %v61
  %v269 = vunpack.c.l.b16 %v62
  %v270 = vpack.c.b16 %v195, %v190
  %v271 = vpack.c.b16 %v196, %v191
  %v272 = vpack.c.b16 %v197, %v192
  %v273 = vpack.c.b16 %v198, %v193
  %v274 = vpack.c.b16 %v199, %v194
  %v275 = vpack.c.b16 %v205, %v200
  %v276 = vpack.c.b16 %v206, %v201
  %v277 = vpack.c.b16 %v207, %v202
  %v278 = vpack.c.b16 %v208, %v203
  %v279 = vpack.c.b16 %v209, %v204
  %v280 = vpack.c.b16 %v215, %v210
  %v281 = vpack.c.b16 %v216, %v211
  %v282 = vpack.c.b16 %v217, %v212
  %v283 = vpack.c.b16 %v218, %v213
  %v284 = vpack.c.b16 %v219, %v214
  %v285 = vpack.c.b16 %v225, %v220
  %v286 = vpack.c.b16 %v226, %v221
  %v287 = vpack.c.b16 %v227, %v222
  %v288 = vpack.c.b16 %v228, %v223
  %v289 = vpack.c.b16 %v229, %v224
  %v290 = vpack.c.b16 %v235, %v230
  %v291 = vpack.c.b16 %v236, %v231
  %v292 = vpack.c.b16 %v237, %v232
  %v293 = vpack.c.b16 %v238, %v233
  %v294 = vpack.c.b16 %v239, %v234
  %v295 = vpack.c.b16 %v245, %v240
  %v296 = vpack.c.b16 %v246, %v241
  %v297 = vpack.c.b16 %v247, %v242
  %v298 = vpack.c.b16 %v248, %v243
  %v299 = vpack.c.b16 %v249, %v244
  %v300 = vpack.c.b16 %v255, %v250
  %v301 = vpack.c.b16 %v256, %v251
  %v302 = vpack.c.b16 %v257, %v252
  %v303 = vpack.c.b16 %v258, %v253
  %v304 = vpack.c.b16 %v259, %v254
  %v305 = vpack.c.b16 %v265, %v260
  %v306 = vpack.c.b16 %v266, %v261
  %v307 = vpack.c.b16 %v267, %v262
  %v308 = vpack.c.b16 %v268, %v263
  %v309 = vpack.c.b16 %v269, %v264
  %v414 = vunpack.c.l.b16 %v63
  %v415 = vunpack.c.l.b16 %v64
  %v416 = vunpack.c.l.b16 %v65
  %v417 = vunpack.c.l.b16 %v66
  %v418 = vunpack.c.l.b16 %v67
  %v419 = vunpack.c.l.b16 %v68
  %v420 = vunpack.c.l.b16 %v69
  %v421 = vunpack.c.l.b16 %v70
  %v422 = vunpack.c.l.b16 %v71
  %v423 = vunpack.c.l.b16 %v72
  %v424 = vunpack.c.l.b16 %v73
  %v425 = vunpack.c.l.b16 %v74
  %v426 = vunpack.c.l.b16 %v75
  %v427 = vunpack.c.l.b16 %v76
  %v428 = vunpack.c.l.b16 %v77
  %v429 = vunpack.c.l.b16 %v78
  %v430 = vunpack.c.l.b16 %v79
  %v431 = vunpack.c.l.b16 %v80
  %v432 = vunpack.c.l.b16 %v81
  %v433 = vunpack.c.l.b16 %v82
  %v434 = vunpack.c.l.b16 %v83
  %v435 = vunpack.c.l.b16 %v84
  %v436 = vunpack.c.l.b16 %v85
  %v437 = vunpack.c.l.b16 %v86
  %v438 = vunpack.c.l.b16 %v87
  %v439 = vunpack.c.l.b16 %v88
  %v440 = vunpack.c.l.b16 %v89
  %v441 = vunpack.c.l.b16 %v90
  %v442 = vunpack.c.l.b16 %v91
  %v443 = vunpack.c.l.b16 %v92
  %v444 = vunpack.c.l.b16 %v93
  %v445 = vunpack.c.l.b16 %v94
  %v446 = vunpack.c.l.b16 %v95
  %v447 = vunpack.c.l.b16 %v96
  %v448 = vunpack.c.l.b16 %v97
  %v449 = vunpack.c.l.b16 %v98
  %v450 = vunpack.c.l.b16 %v99
  %v451 = vunpack.c.l.b16 %v100
  %v452 = vunpack.c.l.b16 %v101
  %v453 = vunpack.c.l.b16 %v102
  %v454 = vunpack.c.l.b16 %v103
  %v455 = vunpack.c.l.b16 %v104
  %v456 = vunpack.c.l.b16 %v105
  %v457 = vunpack.c.l.b16 %v106
  %v458 = vunpack.c.l.b16 %v107
  %v459 = vunpack.c.l.b16 %v108
  %v460 = vunpack.c.l.b16 %v109
  %v461 = vunpack.c.l.b16 %v110
  %v462 = vunpack.c.l.b16 %v111
  %v463 = vunpack.c.l.b16 %v112
  %v464 = vunpack.c.l.b16 %v113
  %v465 = vunpack.c.l.b16 %v114
  %v466 = vunpack.c.l.b16 %v115
  %v467 = vunpack.c.l.b16 %v116
  %v468 = vunpack.c.l.b16 %v117
  %v469 = vunpack.c.l.b16 %v118
  %v470 = vunpack.c.l.b16 %v119
  %v471 = vunpack.c.l.b16 %v120
  %v472 = vunpack.c.l.b16 %v121
  %v473 = vunpack.c.l.b16 %v122
  %v474 = vunpack.c.l.b16 %v123
  %v475 = vunpack.c.l.b16 %v124
  %v476 = vunpack.c.l.b16 %v125
  %v477 = vunpack.c.l.b16 %v126
  %v478 = vunpack.c.l.b16 %v127
  %v479 = vunpack.c.l.b16 %v128
  %v480 = vunpack.c.l.b16 %v129
  %v481 = vunpack.c.l.b16 %v130
  %v482 = vunpack.c.l.b16 %v131
  %v483 = vunpack.c.l.b16 %v132
  %v484 = vunpack.c.l.b16 %v133
  %v485 = vunpack.c.l.b16 %v134
  %v486 = vpack.c.b16 %v415, %v414
  %v487 = vpack.c.b16 %v417, %v416
  %v488 = vpack.c.b16 %v419, %v418
  %v489 = vpack.c.b16 %v421, %v420
  %v490 = vpack.c.b16 %v423, %v422
  %v491 = vpack.c.b16 %v425, %v424
  %v492 = vpack.c.b16 %v427, %v426
  %v493 = vpack.c.b16 %v429, %v428
  %v494 = vpack.c.b16 %v431, %v430
  %v495 = vpack.c.b16 %v433, %v432
  %v496 = vpack.c.b16 %v435, %v434
  %v497 = vpack.c.b16 %v437, %v436
  %v498 = vpack.c.b16 %v439, %v438
  %v499 = vpack.c.b16 %v441, %v440
  %v500 = vpack.c.b16 %v443, %v442
  %v501 = vpack.c.b16 %v445, %v444
  %v502 = vpack.c.b16 %v447, %v446
  %v503 = vpack.c.b16 %v449, %v448
  %v504 = vpack.c.b16 %v451, %v450
  %v505 = vpack.c.b16 %v453, %v452
  %v506 = vpack.c.b16 %v455, %v454
  %v507 = vpack.c.b16 %v457, %v456
  %v508 = vpack.c.b16 %v459, %v458
  %v509 = vpack.c.b16 %v461, %v460
  %v510 = vpack.c.b16 %v463, %v462
  %v511 = vpack.c.b16 %v465, %v464
  %v512 = vpack.c.b16 %v467, %v466
  %v513 = vpack.c.b16 %v469, %v468
  %v514 = vpack.c.b16 %v471, %v470
  %v515 = vpack.c.b16 %v473, %v472
  %v516 = vpack.c.b16 %v475, %v474
  %v517 = vpack.c.b16 %v477, %v476
  %v518 = vpack.c.b16 %v479, %v478
  %v519 = vpack.c.b16 %v481, %v480
  %v520 = vpack.c.b16 %v483, %v482
  %v521 = vpack.c.b16 %v485, %v484
  %vm558 = vcmask 523264
  %v560 = vsel %vm558, %v274, 0
  %v563 = vsel %vm558, %v279, 0
  %v566 = vsel %vm558, %v284, 0
  %v569 = vsel %vm558, %v289, 0
  %v572 = vsel %vm558, %v294, 0
  %v575 = vsel %vm558, %v299, 0
  %v578 = vsel %vm558, %v304, 0
  %v581 = vsel %vm558, %v309, 0
  %583 = vmatprep.subr.bf16.mxu0 0
  %584 = vmatpush1.bf16.msra.mxu0 %v493
  %585 = vmatprep.subr.bf16.mxu0 0
  %586 = vmatpush1.bf16.msra.mxu0 %v492
  %587 = vmatprep.subr.bf16.mxu0 0
  %588 = vmatpush1.bf16.msra.mxu0 %v491
  %589 = vmatprep.subr.bf16.mxu0 0
  %590 = vmatpush1.bf16.msra.mxu0 %v490
  %591 = vmatprep.subr.bf16.mxu0 0
  %592 = vmatpush1.bf16.msra.mxu0 %v489
  %593 = vmatprep.subr.bf16.mxu0 0
  %594 = vmatpush1.bf16.msra.mxu0 %v488
  %595 = vmatprep.subr.bf16.mxu0 0
  %596 = vmatpush1.bf16.msra.mxu0 %v487
  %597 = vmatprep.subr.bf16.mxu0 0
  %598 = vmatpush1.bf16.msra.mxu0 %v486
  %599 = vmatprep.subr.bf16.mxu0 0
  %600 = vmatpush2.bf16.msra.mxu0 %v501
  %601 = vmatprep.subr.bf16.mxu0 0
  %602 = vmatpush2.bf16.msra.mxu0 %v500
  %603 = vmatprep.subr.bf16.mxu0 0
  %604 = vmatpush2.bf16.msra.mxu0 %v499
  %605 = vmatprep.subr.bf16.mxu0 0
  %606 = vmatpush2.bf16.msra.mxu0 %v498
  %607 = vmatprep.subr.bf16.mxu0 0
  %608 = vmatpush2.bf16.msra.mxu0 %v497
  %609 = vmatprep.subr.bf16.mxu0 0
  %610 = vmatpush2.bf16.msra.mxu0 %v496
  %611 = vmatprep.subr.bf16.mxu0 0
  %612 = vmatpush2.bf16.msra.mxu0 %v495
  %613 = vmatprep.subr.bf16.mxu0 0
  %614 = vmatpush2.bf16.msra.mxu0 %v494
  %615 = vmatprep.mubr.bf16.mxu0 %v271
  %616 = vmatmul.mubr.bf16.gmra.mxu0 %v270
  %v617 = vpop.f32.mrf.mxu0
  %v618 = vadd.f32 %v140, %v617
  %v619 = vpop.f32.mrf.mxu0
  %v620 = vpop.f32.mrf.mxu0
  %v621 = vadd.f32 %v140, %v620
  %v622 = vpop.f32.mrf.mxu0
  %623 = vmatprep.mubr.bf16.mxu0 %v276
  %624 = vmatmul.mubr.bf16.gmra.mxu0 %v275
  %v625 = vpop.f32.mrf.mxu0
  %v626 = vadd.f32 %v140, %v625
  %v627 = vpop.f32.mrf.mxu0
  %v628 = vpop.f32.mrf.mxu0
  %v629 = vadd.f32 %v140, %v628
  %v630 = vpop.f32.mrf.mxu0
  %631 = vmatprep.mubr.bf16.mxu0 %v281
  %632 = vmatmul.mubr.bf16.gmra.mxu0 %v280
  %v633 = vpop.f32.mrf.mxu0
  %v634 = vadd.f32 %v140, %v633
  %v635 = vpop.f32.mrf.mxu0
  %v636 = vpop.f32.mrf.mxu0
  %v637 = vadd.f32 %v140, %v636
  %v638 = vpop.f32.mrf.mxu0
  %639 = vmatprep.mubr.bf16.mxu0 %v286
  %640 = vmatmul.mubr.bf16.gmra.mxu0 %v285
  %v641 = vpop.f32.mrf.mxu0
  %v642 = vadd.f32 %v140, %v641
  %v643 = vpop.f32.mrf.mxu0
  %v644 = vpop.f32.mrf.mxu0
  %v645 = vadd.f32 %v140, %v644
  %v646 = vpop.f32.mrf.mxu0
  %647 = vmatprep.mubr.bf16.mxu0 %v291
  %648 = vmatmul.mubr.bf16.gmra.mxu0 %v290
  %v649 = vpop.f32.mrf.mxu0
  %v650 = vadd.f32 %v140, %v649
  %v651 = vpop.f32.mrf.mxu0
  %v652 = vpop.f32.mrf.mxu0
  %v653 = vadd.f32 %v140, %v652
  %v654 = vpop.f32.mrf.mxu0
  %655 = vmatprep.mubr.bf16.mxu0 %v296
  %656 = vmatmul.mubr.bf16.gmra.mxu0 %v295
  %v657 = vpop.f32.mrf.mxu0
  %v658 = vadd.f32 %v140, %v657
  %v659 = vpop.f32.mrf.mxu0
  %v660 = vpop.f32.mrf.mxu0
  %v661 = vadd.f32 %v140, %v660
  %v662 = vpop.f32.mrf.mxu0
  %663 = vmatprep.mubr.bf16.mxu0 %v301
  %664 = vmatmul.mubr.bf16.gmra.mxu0 %v300
  %v665 = vpop.f32.mrf.mxu0
  %v666 = vadd.f32 %v140, %v665
  %v667 = vpop.f32.mrf.mxu0
  %v668 = vpop.f32.mrf.mxu0
  %v669 = vadd.f32 %v140, %v668
  %v670 = vpop.f32.mrf.mxu0
  %671 = vmatprep.mubr.bf16.mxu0 %v306
  %672 = vmatmul.mubr.bf16.gmra.mxu0 %v305
  %v673 = vpop.f32.mrf.mxu0
  %v674 = vadd.f32 %v140, %v673
  %v675 = vpop.f32.mrf.mxu0
  %v676 = vpop.f32.mrf.mxu0
  %v677 = vadd.f32 %v140, %v676
  %v678 = vpop.f32.mrf.mxu0
  %679 = vdwg.mxu0
  %680 = vmatprep.subr.bf16.mxu0 0
  %681 = vmatpush1.bf16.msra.mxu0 %v509
  %682 = vmatprep.subr.bf16.mxu0 0
  %683 = vmatpush1.bf16.msra.mxu0 %v508
  %684 = vmatprep.subr.bf16.mxu0 0
  %685 = vmatpush1.bf16.msra.mxu0 %v507
  %686 = vmatprep.subr.bf16.mxu0 0
  %687 = vmatpush1.bf16.msra.mxu0 %v506
  %688 = vmatprep.subr.bf16.mxu0 0
  %689 = vmatpush1.bf16.msra.mxu0 %v505
  %690 = vmatprep.subr.bf16.mxu0 0
  %691 = vmatpush1.bf16.msra.mxu0 %v504
  %692 = vmatprep.subr.bf16.mxu0 0
  %693 = vmatpush1.bf16.msra.mxu0 %v503
  %694 = vmatprep.subr.bf16.mxu0 0
  %695 = vmatpush1.bf16.msra.mxu0 %v502
  %696 = vmatprep.subr.bf16.mxu0 0
  %697 = vmatpush2.bf16.msra.mxu0 %v517
  %698 = vmatprep.subr.bf16.mxu0 0
  %699 = vmatpush2.bf16.msra.mxu0 %v516
  %700 = vmatprep.subr.bf16.mxu0 0
  %701 = vmatpush2.bf16.msra.mxu0 %v515
  %702 = vmatprep.subr.bf16.mxu0 0
  %703 = vmatpush2.bf16.msra.mxu0 %v514
  %704 = vmatprep.subr.bf16.mxu0 0
  %705 = vmatpush2.bf16.msra.mxu0 %v513
  %706 = vmatprep.subr.bf16.mxu0 0
  %707 = vmatpush2.bf16.msra.mxu0 %v512
  %708 = vmatprep.subr.bf16.mxu0 0
  %709 = vmatpush2.bf16.msra.mxu0 %v511
  %710 = vmatprep.subr.bf16.mxu0 0
  %711 = vmatpush2.bf16.msra.mxu0 %v510
  %712 = vmatprep.mubr.bf16.mxu0 %v273
  %713 = vmatmul.mubr.bf16.gmra.mxu0 %v272
  %v714 = vpop.f32.mrf.mxu0
  %v715 = vadd.f32 %v618, %v714
  %v716 = vpop.f32.mrf.mxu0
  %v717 = vpop.f32.mrf.mxu0
  %v718 = vadd.f32 %v621, %v717
  %v719 = vpop.f32.mrf.mxu0
  %720 = vmatprep.mubr.bf16.mxu0 %v278
  %721 = vmatmul.mubr.bf16.gmra.mxu0 %v277
  %v722 = vpop.f32.mrf.mxu0
  %v723 = vadd.f32 %v626, %v722
  %v724 = vpop.f32.mrf.mxu0
  %v725 = vpop.f32.mrf.mxu0
  %v726 = vadd.f32 %v629, %v725
  %v727 = vpop.f32.mrf.mxu0
  %728 = vmatprep.mubr.bf16.mxu0 %v283
  %729 = vmatmul.mubr.bf16.gmra.mxu0 %v282
  %v730 = vpop.f32.mrf.mxu0
  %v731 = vadd.f32 %v634, %v730
  %v732 = vpop.f32.mrf.mxu0
  %v733 = vpop.f32.mrf.mxu0
  %v734 = vadd.f32 %v637, %v733
  %v735 = vpop.f32.mrf.mxu0
  %736 = vmatprep.mubr.bf16.mxu0 %v288
  %737 = vmatmul.mubr.bf16.gmra.mxu0 %v287
  %v738 = vpop.f32.mrf.mxu0
  %v739 = vadd.f32 %v642, %v738
  %v740 = vpop.f32.mrf.mxu0
  %v741 = vpop.f32.mrf.mxu0
  %v742 = vadd.f32 %v645, %v741
  %v743 = vpop.f32.mrf.mxu0
  %744 = vmatprep.mubr.bf16.mxu0 %v293
  %745 = vmatmul.mubr.bf16.gmra.mxu0 %v292
  %v746 = vpop.f32.mrf.mxu0
  %v747 = vadd.f32 %v650, %v746
  %v748 = vpop.f32.mrf.mxu0
  %v749 = vpop.f32.mrf.mxu0
  %v750 = vadd.f32 %v653, %v749
  %v751 = vpop.f32.mrf.mxu0
  %752 = vmatprep.mubr.bf16.mxu0 %v298
  %753 = vmatmul.mubr.bf16.gmra.mxu0 %v297
  %v754 = vpop.f32.mrf.mxu0
  %v755 = vadd.f32 %v658, %v754
  %v756 = vpop.f32.mrf.mxu0
  %v757 = vpop.f32.mrf.mxu0
  %v758 = vadd.f32 %v661, %v757
  %v759 = vpop.f32.mrf.mxu0
  %760 = vmatprep.mubr.bf16.mxu0 %v303
  %761 = vmatmul.mubr.bf16.gmra.mxu0 %v302
  %v762 = vpop.f32.mrf.mxu0
  %v763 = vadd.f32 %v666, %v762
  %v764 = vpop.f32.mrf.mxu0
  %v765 = vpop.f32.mrf.mxu0
  %v766 = vadd.f32 %v669, %v765
  %v767 = vpop.f32.mrf.mxu0
  %768 = vmatprep.mubr.bf16.mxu0 %v308
  %769 = vmatmul.mubr.bf16.gmra.mxu0 %v307
  %v770 = vpop.f32.mrf.mxu0
  %v771 = vadd.f32 %v674, %v770
  %v772 = vpop.f32.mrf.mxu0
  %v773 = vpop.f32.mrf.mxu0
  %v774 = vadd.f32 %v677, %v773
  %v775 = vpop.f32.mrf.mxu0
  %776 = vdwg.mxu0
  %777 = vmatprep.subr.bf16.mxu0 0
  %778 = vmatpush1.bf16.msra.mxu0 0
  %779 = vmatprep.subr.bf16.mxu0 0
  %780 = vmatpush1.bf16.msra.mxu0 0
  %781 = vmatprep.subr.bf16.mxu0 0
  %782 = vmatpush1.bf16.msra.mxu0 0
  %783 = vmatprep.subr.bf16.mxu0 0
  %784 = vmatpush1.bf16.msra.mxu0 0
  %785 = vmatprep.subr.bf16.mxu0 0
  %786 = vmatpush1.bf16.msra.mxu0 %v521
  %787 = vmatprep.subr.bf16.mxu0 0
  %788 = vmatpush1.bf16.msra.mxu0 %v520
  %789 = vmatprep.subr.bf16.mxu0 0
  %790 = vmatpush1.bf16.msra.mxu0 %v519
  %791 = vmatprep.subr.bf16.mxu0 0
  %792 = vmatpush1.bf16.msra.mxu0 %v518
  %793 = vmatprep.subr.bf16.mxu0 0
  %794 = vmatpush2.bf16.msra.mxu0 0
  %795 = vmatprep.subr.bf16.mxu0 0
  %796 = vmatpush2.bf16.msra.mxu0 0
  %797 = vmatprep.subr.bf16.mxu0 0
  %798 = vmatpush2.bf16.msra.mxu0 0
  %799 = vmatprep.subr.bf16.mxu0 0
  %800 = vmatpush2.bf16.msra.mxu0 0
  %801 = vmatprep.subr.bf16.mxu0 0
  %802 = vmatpush2.bf16.msra.mxu0 0
  %803 = vmatprep.subr.bf16.mxu0 0
  %804 = vmatpush2.bf16.msra.mxu0 0
  %805 = vmatprep.subr.bf16.mxu0 0
  %806 = vmatpush2.bf16.msra.mxu0 0
  %807 = vmatprep.subr.bf16.mxu0 0
  %808 = vmatpush2.bf16.msra.mxu0 0
  %809 = vmatprep.mubr.bf16.mxu0 0
  %810 = vmatmul.mubr.bf16.gmra.mxu0 %v560
  %v811 = vpop.f32.mrf.mxu0
  %v812 = vadd.f32 %v715, %v811
  %v813 = vpop.f32.mrf.mxu0
  %v814 = vpop.f32.mrf.mxu0
  %v815 = vadd.f32 %v718, %v814
  %v816 = vpop.f32.mrf.mxu0
  %817 = vmatprep.mubr.bf16.mxu0 0
  %818 = vmatmul.mubr.bf16.gmra.mxu0 %v563
  %v819 = vpop.f32.mrf.mxu0
  %v820 = vadd.f32 %v723, %v819
  %v821 = vpop.f32.mrf.mxu0
  %v822 = vpop.f32.mrf.mxu0
  %v823 = vadd.f32 %v726, %v822
  %v824 = vpop.f32.mrf.mxu0
  %825 = vmatprep.mubr.bf16.mxu0 0
  %826 = vmatmul.mubr.bf16.gmra.mxu0 %v566
  %v827 = vpop.f32.mrf.mxu0
  %v828 = vadd.f32 %v731, %v827
  %v829 = vpop.f32.mrf.mxu0
  %v830 = vpop.f32.mrf.mxu0
  %v831 = vadd.f32 %v734, %v830
  %v832 = vpop.f32.mrf.mxu0
  %833 = vmatprep.mubr.bf16.mxu0 0
  %834 = vmatmul.mubr.bf16.gmra.mxu0 %v569
  %v835 = vpop.f32.mrf.mxu0
  %v836 = vadd.f32 %v739, %v835
  %v837 = vpop.f32.mrf.mxu0
  %v838 = vpop.f32.mrf.mxu0
  %v839 = vadd.f32 %v742, %v838
  %v840 = vpop.f32.mrf.mxu0
  %841 = vmatprep.mubr.bf16.mxu0 0
  %842 = vmatmul.mubr.bf16.gmra.mxu0 %v572
  %v843 = vpop.f32.mrf.mxu0
  %v844 = vadd.f32 %v747, %v843
  %v845 = vpop.f32.mrf.mxu0
  %v846 = vpop.f32.mrf.mxu0
  %v847 = vadd.f32 %v750, %v846
  %v848 = vpop.f32.mrf.mxu0
  %849 = vmatprep.mubr.bf16.mxu0 0
  %850 = vmatmul.mubr.bf16.gmra.mxu0 %v575
  %v851 = vpop.f32.mrf.mxu0
  %v852 = vadd.f32 %v755, %v851
  %v853 = vpop.f32.mrf.mxu0
  %v854 = vpop.f32.mrf.mxu0
  %v855 = vadd.f32 %v758, %v854
  %v856 = vpop.f32.mrf.mxu0
  %857 = vmatprep.mubr.bf16.mxu0 0
  %858 = vmatmul.mubr.bf16.gmra.mxu0 %v578
  %v859 = vpop.f32.mrf.mxu0
  %v860 = vadd.f32 %v763, %v859
  %v861 = vpop.f32.mrf.mxu0
  %v862 = vpop.f32.mrf.mxu0
  %v863 = vadd.f32 %v766, %v862
  %v864 = vpop.f32.mrf.mxu0
  %865 = vmatprep.mubr.bf16.mxu0 0
  %866 = vmatmul.mubr.bf16.gmra.mxu0 %v581
  %v867 = vpop.f32.mrf.mxu0
  %v868 = vadd.f32 %v771, %v867
  %v869 = vpop.f32.mrf.mxu0
  %v870 = vpop.f32.mrf.mxu0
  %v871 = vadd.f32 %v774, %v870
  %v872 = vpop.f32.mrf.mxu0
  %873 = vdwg.mxu0
  %v874 = vmax.f32 %v812, 0.0
  %v875 = vmax.f32 %v815, 0.0
  %v876 = vmax.f32 %v820, 0.0
  %v877 = vmax.f32 %v823, 0.0
  %v878 = vmax.f32 %v828, 0.0
  %v879 = vmax.f32 %v831, 0.0
  %v880 = vmax.f32 %v836, 0.0
  %v881 = vmax.f32 %v839, 0.0
  %v882 = vmax.f32 %v844, 0.0
  %v883 = vmax.f32 %v847, 0.0
  %v884 = vmax.f32 %v852, 0.0
  %v885 = vmax.f32 %v855, 0.0
  %v886 = vmax.f32 %v860, 0.0
  %v887 = vmax.f32 %v863, 0.0
  %v888 = vmax.f32 %v868, 0.0
  %v889 = vmax.f32 %v871, 0.0
  %890 = vst [vmem:[%s3] sm:$0xff] %v874
  %891 = vst [vmem:[%s3 + $0x8] sm:$0xff] %v875
  %892 = vst [vmem:[%s3 + $0x10] sm:$0xff] %v876
  %893 = vst [vmem:[%s3 + $0x18] sm:$0xff] %v877
  %894 = vst [vmem:[%s3 + $0x20] sm:$0xff] %v878
  %895 = vst [vmem:[%s3 + $0x28] sm:$0xff] %v879
  %896 = vst [vmem:[%s3 + $0x30] sm:$0xff] %v880
  %897 = vst [vmem:[%s3 + $0x38] sm:$0xff] %v881
  %898 = vst [vmem:[%s3 + $0x40] sm:$0xff] %v882
  %899 = vst [vmem:[%s3 + $0x48] sm:$0xff] %v883
  %900 = vst [vmem:[%s3 + $0x50] sm:$0xff] %v884
  %901 = vst [vmem:[%s3 + $0x58] sm:$0xff] %v885
  %902 = vst [vmem:[%s3 + $0x60] sm:$0xff] %v886
  %903 = vst [vmem:[%s3 + $0x68] sm:$0xff] %v887
  %904 = vst [vmem:[%s3 + $0x70] sm:$0xff] %v888
  %905 = vst [vmem:[%s3 + $0x78] sm:$0xff] %v889
  // Predicated region
  $region14: #{relight_net_forward.10} parent=0 // pred_check
    _
  $region15: #{relight_net_forward.10} parent=0 // pred_check_branch
    %907 = sbr.rel (0) target = $region17
  $region16: #{relight_net_forward.10} parent=0 // pred_region
    _
  $region17: #{relight_net_forward.10} parent=0 // pred_fallthru
    _
  // Predicated region
  $region18: #{relight_net_forward.10} parent=0 // pred_check
    _
  $region19: #{relight_net_forward.10} parent=0 // pred_check_branch
    %909 = sbr.rel (0) target = $region21
  $region20: #{relight_net_forward.10} parent=0 // pred_region
    _
  $region21: #{relight_net_forward.10} parent=0 // pred_fallthru
    _

// kernel: relight_net_forward.11
$region0: #{relight_net_forward.11}
  #allocation0 [shape = 'u32[]', space=smem, size = 0x4, offset = 0x4, fixed_abs, tag = 'smem constant byte address 0x4 - core index']
  #allocation1 [shape = 'u32[144,128]{1,0:T(1,128)}', space=vmem, size = 0x12000, scoped, tag = 'internal scratch']
  %s0 = inlined_call_operand.vmem [shape: bf16[32,576], index: 0, kind: input, shape index: {}]
  %s1 = inlined_call_operand.vmem [shape: bf16[576,128], index: 1, kind: input, shape index: {}]
  %s2 = inlined_call_operand.vmem [shape: f32[1,128], index: 2, kind: input, shape index: {}]
  %s3 = inlined_call_operand.vmem [shape: f32[32,128], index: 3, kind: output, shape index: {}]
  %s4 = sld [smem:[#allocation0]]
  $region22: #{relight_net_forward.11} parent=0
    _
  %s6 = ssub.s32 1, %s4
  %s7 = scalar_select 0, %s6, %s4
  // Predicated region
  $region2: #{relight_net_forward.11} parent=0 // pred_check
    _
  $region3: #{relight_net_forward.11} parent=0 // pred_check_branch
    %9 = sbr.rel (0) target = $region5
  $region4: #{relight_net_forward.11} parent=0 // pred_region
    _
  $region5: #{relight_net_forward.11} parent=0 // pred_fallthru
    _
  // Predicated region
  $region6: #{relight_net_forward.11} parent=0 // pred_check
    _
  $region7: #{relight_net_forward.11} parent=0 // pred_check_branch
    %11 = sbr.rel (0) target = $region9
  $region8: #{relight_net_forward.11} parent=0 // pred_region
    _
  $region9: #{relight_net_forward.11} parent=0 // pred_fallthru
    _
  // Predicated region
  $region10: #{relight_net_forward.11} parent=0 // pred_check
    _
  $region11: #{relight_net_forward.11} parent=0 // pred_check_branch
    %13 = sbr.rel (0) target = $region13
  $region12: #{relight_net_forward.11} parent=0 // pred_region
    _
  $region13: #{relight_net_forward.11} parent=0 // pred_fallthru
    _
  %v15 = vld [vmem:[%s0] sm:$0xff]
  %v16 = vld [vmem:[%s0 + $0x8] sm:$0xff]
  %v17 = vld [vmem:[%s0 + $0x10] sm:$0xf]
  %v18 = vld [vmem:[%s0 + $0x14] sm:$0xff]
  %v19 = vld [vmem:[%s0 + $0x1c] sm:$0xff]
  %v20 = vld [vmem:[%s0 + $0x24] sm:$0xf]
  %v21 = vld [vmem:[%s0 + $0x28] sm:$0xff]
  %v22 = vld [vmem:[%s0 + $0x30] sm:$0xff]
  %v23 = vld [vmem:[%s0 + $0x38] sm:$0xf]
  %v24 = vld [vmem:[%s0 + $0x3c] sm:$0xff]
  %v25 = vld [vmem:[%s0 + $0x44] sm:$0xff]
  %v26 = vld [vmem:[%s0 + $0x4c] sm:$0xf]
  %v27 = vld [vmem:[%s1] sm:$0xf]
  %v28 = vld [vmem:[%s1 + $0x4] sm:$0xf]
  %v29 = vld [vmem:[%s1 + $0x8] sm:$0xf]
  %v30 = vld [vmem:[%s1 + $0xc] sm:$0xf]
  %v31 = vld [vmem:[%s1 + $0x10] sm:$0xf]
  %v32 = vld [vmem:[%s1 + $0x14] sm:$0xf]
  %v33 = vld [vmem:[%s1 + $0x18] sm:$0xf]
  %v34 = vld [vmem:[%s1 + $0x1c] sm:$0xf]
  %v35 = vld [vmem:[%s1 + $0x20] sm:$0xf]
  %v36 = vld [vmem:[%s1 + $0x24] sm:$0xf]
  %v37 = vld [vmem:[%s1 + $0x28] sm:$0xf]
  %v38 = vld [vmem:[%s1 + $0x2c] sm:$0xf]
  %v39 = vld [vmem:[%s1 + $0x30] sm:$0xf]
  %v40 = vld [vmem:[%s1 + $0x34] sm:$0xf]
  %v41 = vld [vmem:[%s1 + $0x38] sm:$0xf]
  %v42 = vld [vmem:[%s1 + $0x3c] sm:$0xf]
  %v43 = vld [vmem:[%s1 + $0x40] sm:$0xf]
  %v44 = vld [vmem:[%s1 + $0x44] sm:$0xf]
  %v45 = vld [vmem:[%s1 + $0x48] sm:$0xf]
  %v46 = vld [vmem:[%s1 + $0x4c] sm:$0xf]
  %v47 = vld [vmem:[%s1 + $0x50] sm:$0xf]
  %v48 = vld [vmem:[%s1 + $0x54] sm:$0xf]
  %v49 = vld [vmem:[%s1 + $0x58] sm:$0xf]
  %v50 = vld [vmem:[%s1 + $0x5c] sm:$0xf]
  %v51 = vld [vmem:[%s1 + $0x60] sm:$0xf]
  %v52 = vld [vmem:[%s1 + $0x64] sm:$0xf]
  %v53 = vld [vmem:[%s1 + $0x68] sm:$0xf]
  %v54 = vld [vmem:[%s1 + $0x6c] sm:$0xf]
  %v55 = vld [vmem:[%s1 + $0x70] sm:$0xf]
  %v56 = vld [vmem:[%s1 + $0x74] sm:$0xf]
  %v57 = vld [vmem:[%s1 + $0x78] sm:$0xf]
  %v58 = vld [vmem:[%s1 + $0x7c] sm:$0xf]
  %v59 = vld [vmem:[%s1 + $0x80] sm:$0xf]
  %v60 = vld [vmem:[%s1 + $0x84] sm:$0xf]
  %v61 = vld [vmem:[%s1 + $0x88] sm:$0xf]
  %v62 = vld [vmem:[%s1 + $0x8c] sm:$0xf]
  %v63 = vld [vmem:[%s1 + $0x90] sm:$0xf]
  %v64 = vld [vmem:[%s1 + $0x94] sm:$0xf]
  %v65 = vld [vmem:[%s1 + $0x98] sm:$0xf]
  %v66 = vld [vmem:[%s1 + $0x9c] sm:$0xf]
  %v67 = vld [vmem:[%s1 + $0xa0] sm:$0xf]
  %v68 = vld [vmem:[%s1 + $0xa4] sm:$0xf]
  %v69 = vld [vmem:[%s1 + $0xa8] sm:$0xf]
  %v70 = vld [vmem:[%s1 + $0xac] sm:$0xf]
  %v71 = vld [vmem:[%s1 + $0xb0] sm:$0xf]
  %v72 = vld [vmem:[%s1 + $0xb4] sm:$0xf]
  %v73 = vld [vmem:[%s1 + $0xb8] sm:$0xf]
  %v74 = vld [vmem:[%s1 + $0xbc] sm:$0xf]
  %v75 = vld [vmem:[%s1 + $0xc0] sm:$0xf]
  %v76 = vld [vmem:[%s1 + $0xc4] sm:$0xf]
  %v77 = vld [vmem:[%s1 + $0xc8] sm:$0xf]
  %v78 = vld [vmem:[%s1 + $0xcc] sm:$0xf]
  %v79 = vld [vmem:[%s1 + $0xd0] sm:$0xf]
  %v80 = vld [vmem:[%s1 + $0xd4] sm:$0xf]
  %v81 = vld [vmem:[%s1 + $0xd8] sm:$0xf]
  %v82 = vld [vmem:[%s1 + $0xdc] sm:$0xf]
  %v83 = vld [vmem:[%s1 + $0xe0] sm:$0xf]
  %v84 = vld [vmem:[%s1 + $0xe4] sm:$0xf]
  %v85 = vld [vmem:[%s1 + $0xe8] sm:$0xf]
  %v86 = vld [vmem:[%s1 + $0xec] sm:$0xf]
  %v87 = vld [vmem:[%s1 + $0xf0] sm:$0xf]
  %v88 = vld [vmem:[%s1 + $0xf4] sm:$0xf]
  %v89 = vld [vmem:[%s1 + $0xf8] sm:$0xf]
  %v90 = vld [vmem:[%s1 + $0xfc] sm:$0xf]
  %v91 = vld [vmem:[%s1 + $0x100] sm:$0xf]
  %v92 = vld [vmem:[%s1 + $0x104] sm:$0xf]
  %v93 = vld [vmem:[%s1 + $0x108] sm:$0xf]
  %v94 = vld [vmem:[%s1 + $0x10c] sm:$0xf]
  %v95 = vld [vmem:[%s1 + $0x110] sm:$0xf]
  %v96 = vld [vmem:[%s1 + $0x114] sm:$0xf]
  %v97 = vld [vmem:[%s1 + $0x118] sm:$0xf]
  %v98 = vld [vmem:[%s1 + $0x11c] sm:$0xf]
  %v99 = vld [vmem:[%s2] sm:$0x1]
  %v101 = vlaneseq
  %v102 = vshrl.u32 %v101, 7
  %v103 = vsub.s32 0, %v102
  %v104 = vrot.slane %v99, %v103
  %v118 = vunpack.c.l.b16 %v15
  %v119 = vunpack.c.h.b16 %v15
  %v120 = vunpack.c.l.b16 %v16
  %v121 = vunpack.c.h.b16 %v16
  %v122 = vunpack.c.l.b16 %v17
  %v123 = vunpack.c.l.b16 %v18
  %v124 = vunpack.c.h.b16 %v18
  %v125 = vunpack.c.l.b16 %v19
  %v126 = vunpack.c.h.b16 %v19
  %v127 = vunpack.c.l.b16 %v20
  %v128 = vunpack.c.l.b16 %v21
  %v129 = vunpack.c.h.b16 %v21
  %v130 = vunpack.c.l.b16 %v22
  %v131 = vunpack.c.h.b16 %v22
  %v132 = vunpack.c.l.b16 %v23
  %v133 = vunpack.c.l.b16 %v24
  %v134 = vunpack.c.h.b16 %v24
  %v135 = vunpack.c.l.b16 %v25
  %v136 = vunpack.c.h.b16 %v25
  %v137 = vunpack.c.l.b16 %v26
  %v138 = vpack.c.b16 %v123, %v118
  %v139 = vpack.c.b16 %v124, %v119
  %v140 = vpack.c.b16 %v125, %v120
  %v141 = vpack.c.b16 %v126, %v121
  %v142 = vpack.c.b16 %v127, %v122
  %v143 = vpack.c.b16 %v133, %v128
  %v144 = vpack.c.b16 %v134, %v129
  %v145 = vpack.c.b16 %v135, %v130
  %v146 = vpack.c.b16 %v136, %v131
  %v147 = vpack.c.b16 %v137, %v132
  %v228 = vunpack.c.l.b16 %v27
  %v229 = vunpack.c.l.b16 %v28
  %v230 = vunpack.c.l.b16 %v29
  %v231 = vunpack.c.l.b16 %v30
  %v232 = vunpack.c.l.b16 %v31
  %v233 = vunpack.c.l.b16 %v32
  %v234 = vunpack.c.l.b16 %v33
  %v235 = vunpack.c.l.b16 %v34
  %v236 = vunpack.c.l.b16 %v35
  %v237 = vunpack.c.l.b16 %v36
  %v238 = vunpack.c.l.b16 %v37
  %v239 = vunpack.c.l.b16 %v38
  %v240 = vunpack.c.l.b16 %v39
  %v241 = vunpack.c.l.b16 %v40
  %v242 = vunpack.c.l.b16 %v41
  %v243 = vunpack.c.l.b16 %v42
  %v244 = vunpack.c.l.b16 %v43
  %v245 = vunpack.c.l.b16 %v44
  %v246 = vunpack.c.l.b16 %v45
  %v247 = vunpack.c.l.b16 %v46
  %v248 = vunpack.c.l.b16 %v47
  %v249 = vunpack.c.l.b16 %v48
  %v250 = vunpack.c.l.b16 %v49
  %v251 = vunpack.c.l.b16 %v50
  %v252 = vunpack.c.l.b16 %v51
  %v253 = vunpack.c.l.b16 %v52
  %v254 = vunpack.c.l.b16 %v53
  %v255 = vunpack.c.l.b16 %v54
  %v256 = vunpack.c.l.b16 %v55
  %v257 = vunpack.c.l.b16 %v56
  %v258 = vunpack.c.l.b16 %v57
  %v259 = vunpack.c.l.b16 %v58
  %v260 = vunpack.c.l.b16 %v59
  %v261 = vunpack.c.l.b16 %v60
  %v262 = vunpack.c.l.b16 %v61
  %v263 = vunpack.c.l.b16 %v62
  %v264 = vunpack.c.l.b16 %v63
  %v265 = vunpack.c.l.b16 %v64
  %v266 = vunpack.c.l.b16 %v65
  %v267 = vunpack.c.l.b16 %v66
  %v268 = vunpack.c.l.b16 %v67
  %v269 = vunpack.c.l.b16 %v68
  %v270 = vunpack.c.l.b16 %v69
  %v271 = vunpack.c.l.b16 %v70
  %v272 = vunpack.c.l.b16 %v71
  %v273 = vunpack.c.l.b16 %v72
  %v274 = vunpack.c.l.b16 %v73
  %v275 = vunpack.c.l.b16 %v74
  %v276 = vunpack.c.l.b16 %v75
  %v277 = vunpack.c.l.b16 %v76
  %v278 = vunpack.c.l.b16 %v77
  %v279 = vunpack.c.l.b16 %v78
  %v280 = vunpack.c.l.b16 %v79
  %v281 = vunpack.c.l.b16 %v80
  %v282 = vunpack.c.l.b16 %v81
  %v283 = vunpack.c.l.b16 %v82
  %v284 = vunpack.c.l.b16 %v83
  %v285 = vunpack.c.l.b16 %v84
  %v286 = vunpack.c.l.b16 %v85
  %v287 = vunpack.c.l.b16 %v86
  %v288 = vunpack.c.l.b16 %v87
  %v289 = vunpack.c.l.b16 %v88
  %v290 = vunpack.c.l.b16 %v89
  %v291 = vunpack.c.l.b16 %v90
  %v292 = vunpack.c.l.b16 %v91
  %v293 = vunpack.c.l.b16 %v92
  %v294 = vunpack.c.l.b16 %v93
  %v295 = vunpack.c.l.b16 %v94
  %v296 = vunpack.c.l.b16 %v95
  %v297 = vunpack.c.l.b16 %v96
  %v298 = vunpack.c.l.b16 %v97
  %v299 = vunpack.c.l.b16 %v98
  %v300 = vpack.c.b16 %v229, %v228
  %v301 = vpack.c.b16 %v231, %v230
  %v302 = vpack.c.b16 %v233, %v232
  %v303 = vpack.c.b16 %v235, %v234
  %v304 = vpack.c.b16 %v237, %v236
  %v305 = vpack.c.b16 %v239, %v238
  %v306 = vpack.c.b16 %v241, %v240
  %v307 = vpack.c.b16 %v243, %v242
  %v308 = vpack.c.b16 %v245, %v244
  %v309 = vpack.c.b16 %v247, %v246
  %v310 = vpack.c.b16 %v249, %v248
  %v311 = vpack.c.b16 %v251, %v250
  %v312 = vpack.c.b16 %v253, %v252
  %v313 = vpack.c.b16 %v255, %v254
  %v314 = vpack.c.b16 %v257, %v256
  %v315 = vpack.c.b16 %v259, %v258
  %v316 = vpack.c.b16 %v261, %v260
  %v317 = vpack.c.b16 %v263, %v262
  %v318 = vpack.c.b16 %v265, %v264
  %v319 = vpack.c.b16 %v267, %v266
  %v320 = vpack.c.b16 %v269, %v268
  %v321 = vpack.c.b16 %v271, %v270
  %v322 = vpack.c.b16 %v273, %v272
  %v323 = vpack.c.b16 %v275, %v274
  %v324 = vpack.c.b16 %v277, %v276
  %v325 = vpack.c.b16 %v279, %v278
  %v326 = vpack.c.b16 %v281, %v280
  %v327 = vpack.c.b16 %v283, %v282
  %v328 = vpack.c.b16 %v285, %v284
  %v329 = vpack.c.b16 %v287, %v286
  %v330 = vpack.c.b16 %v289, %v288
  %v331 = vpack.c.b16 %v291, %v290
  %v332 = vpack.c.b16 %v293, %v292
  %v333 = vpack.c.b16 %v295, %v294
  %v334 = vpack.c.b16 %v297, %v296
  %v335 = vpack.c.b16 %v299, %v298
  %vm372 = vcmask 523264
  %v374 = vsel %vm372, %v142, 0
  %v377 = vsel %vm372, %v147, 0
  %379 = vmatprep.subr.bf16.mxu0 0
  %380 = vmatpush1.bf16.msra.mxu0 %v307
  %381 = vmatprep.subr.bf16.mxu0 0
  %382 = vmatpush1.bf16.msra.mxu0 %v306
  %383 = vmatprep.subr.bf16.mxu0 0
  %384 = vmatpush1.bf16.msra.mxu0 %v305
  %385 = vmatprep.subr.bf16.mxu0 0
  %386 = vmatpush1.bf16.msra.mxu0 %v304
  %387 = vmatprep.subr.bf16.mxu0 0
  %388 = vmatpush1.bf16.msra.mxu0 %v303
  %389 = vmatprep.subr.bf16.mxu0 0
  %390 = vmatpush1.bf16.msra.mxu0 %v302
  %391 = vmatprep.subr.bf16.mxu0 0
  %392 = vmatpush1.bf16.msra.mxu0 %v301
  %393 = vmatprep.subr.bf16.mxu0 0
  %394 = vmatpush1.bf16.msra.mxu0 %v300
  %395 = vmatprep.subr.bf16.mxu0 0
  %396 = vmatpush2.bf16.msra.mxu0 %v315
  %397 = vmatprep.subr.bf16.mxu0 0
  %398 = vmatpush2.bf16.msra.mxu0 %v314
  %399 = vmatprep.subr.bf16.mxu0 0
  %400 = vmatpush2.bf16.msra.mxu0 %v313
  %401 = vmatprep.subr.bf16.mxu0 0
  %402 = vmatpush2.bf16.msra.mxu0 %v312
  %403 = vmatprep.subr.bf16.mxu0 0
  %404 = vmatpush2.bf16.msra.mxu0 %v311
  %405 = vmatprep.subr.bf16.mxu0 0
  %406 = vmatpush2.bf16.msra.mxu0 %v310
  %407 = vmatprep.subr.bf16.mxu0 0
  %408 = vmatpush2.bf16.msra.mxu0 %v309
  %409 = vmatprep.subr.bf16.mxu0 0
  %410 = vmatpush2.bf16.msra.mxu0 %v308
  %411 = vmatprep.mubr.bf16.mxu0 %v139
  %412 = vmatmul.mubr.bf16.gmra.mxu0 %v138
  %v413 = vpop.f32.mrf.mxu0
  %v414 = vadd.f32 %v104, %v413
  %v415 = vpop.f32.mrf.mxu0
  %v416 = vpop.f32.mrf.mxu0
  %v417 = vadd.f32 %v104, %v416
  %v418 = vpop.f32.mrf.mxu0
  %419 = vmatprep.mubr.bf16.mxu0 %v144
  %420 = vmatmul.mubr.bf16.gmra.mxu0 %v143
  %v421 = vpop.f32.mrf.mxu0
  %v422 = vadd.f32 %v104, %v421
  %v423 = vpop.f32.mrf.mxu0
  %v424 = vpop.f32.mrf.mxu0
  %v425 = vadd.f32 %v104, %v424
  %v426 = vpop.f32.mrf.mxu0
  %427 = vdwg.mxu0
  %428 = vmatprep.subr.bf16.mxu0 0
  %429 = vmatpush1.bf16.msra.mxu0 %v323
  %430 = vmatprep.subr.bf16.mxu0 0
  %431 = vmatpush1.bf16.msra.mxu0 %v322
  %432 = vmatprep.subr.bf16.mxu0 0
  %433 = vmatpush1.bf16.msra.mxu0 %v321
  %434 = vmatprep.subr.bf16.mxu0 0
  %435 = vmatpush1.bf16.msra.mxu0 %v320
  %436 = vmatprep.subr.bf16.mxu0 0
  %437 = vmatpush1.bf16.msra.mxu0 %v319
  %438 = vmatprep.subr.bf16.mxu0 0
  %439 = vmatpush1.bf16.msra.mxu0 %v318
  %440 = vmatprep.subr.bf16.mxu0 0
  %441 = vmatpush1.bf16.msra.mxu0 %v317
  %442 = vmatprep.subr.bf16.mxu0 0
  %443 = vmatpush1.bf16.msra.mxu0 %v316
  %444 = vmatprep.subr.bf16.mxu0 0
  %445 = vmatpush2.bf16.msra.mxu0 %v331
  %446 = vmatprep.subr.bf16.mxu0 0
  %447 = vmatpush2.bf16.msra.mxu0 %v330
  %448 = vmatprep.subr.bf16.mxu0 0
  %449 = vmatpush2.bf16.msra.mxu0 %v329
  %450 = vmatprep.subr.bf16.mxu0 0
  %451 = vmatpush2.bf16.msra.mxu0 %v328
  %452 = vmatprep.subr.bf16.mxu0 0
  %453 = vmatpush2.bf16.msra.mxu0 %v327
  %454 = vmatprep.subr.bf16.mxu0 0
  %455 = vmatpush2.bf16.msra.mxu0 %v326
  %456 = vmatprep.subr.bf16.mxu0 0
  %457 = vmatpush2.bf16.msra.mxu0 %v325
  %458 = vmatprep.subr.bf16.mxu0 0
  %459 = vmatpush2.bf16.msra.mxu0 %v324
  %460 = vmatprep.mubr.bf16.mxu0 %v141
  %461 = vmatmul.mubr.bf16.gmra.mxu0 %v140
  %v462 = vpop.f32.mrf.mxu0
  %v463 = vadd.f32 %v414, %v462
  %v464 = vpop.f32.mrf.mxu0
  %v465 = vpop.f32.mrf.mxu0
  %v466 = vadd.f32 %v417, %v465
  %v467 = vpop.f32.mrf.mxu0
  %468 = vmatprep.mubr.bf16.mxu0 %v146
  %469 = vmatmul.mubr.bf16.gmra.mxu0 %v145
  %v470 = vpop.f32.mrf.mxu0
  %v471 = vadd.f32 %v422, %v470
  %v472 = vpop.f32.mrf.mxu0
  %v473 = vpop.f32.mrf.mxu0
  %v474 = vadd.f32 %v425, %v473
  %v475 = vpop.f32.mrf.mxu0
  %476 = vdwg.mxu0
  %477 = vmatprep.subr.bf16.mxu0 0
  %478 = vmatpush1.bf16.msra.mxu0 0
  %479 = vmatprep.subr.bf16.mxu0 0
  %480 = vmatpush1.bf16.msra.mxu0 0
  %481 = vmatprep.subr.bf16.mxu0 0
  %482 = vmatpush1.bf16.msra.mxu0 0
  %483 = vmatprep.subr.bf16.mxu0 0
  %484 = vmatpush1.bf16.msra.mxu0 0
  %485 = vmatprep.subr.bf16.mxu0 0
  %486 = vmatpush1.bf16.msra.mxu0 %v335
  %487 = vmatprep.subr.bf16.mxu0 0
  %488 = vmatpush1.bf16.msra.mxu0 %v334
  %489 = vmatprep.subr.bf16.mxu0 0
  %490 = vmatpush1.bf16.msra.mxu0 %v333
  %491 = vmatprep.subr.bf16.mxu0 0
  %492 = vmatpush1.bf16.msra.mxu0 %v332
  %493 = vmatprep.subr.bf16.mxu0 0
  %494 = vmatpush2.bf16.msra.mxu0 0
  %495 = vmatprep.subr.bf16.mxu0 0
  %496 = vmatpush2.bf16.msra.mxu0 0
  %497 = vmatprep.subr.bf16.mxu0 0
  %498 = vmatpush2.bf16.msra.mxu0 0
  %499 = vmatprep.subr.bf16.mxu0 0
  %500 = vmatpush2.bf16.msra.mxu0 0
  %501 = vmatprep.subr.bf16.mxu0 0
  %502 = vmatpush2.bf16.msra.mxu0 0
  %503 = vmatprep.subr.bf16.mxu0 0
  %504 = vmatpush2.bf16.msra.mxu0 0
  %505 = vmatprep.subr.bf16.mxu0 0
  %506 = vmatpush2.bf16.msra.mxu0 0
  %507 = vmatprep.subr.bf16.mxu0 0
  %508 = vmatpush2.bf16.msra.mxu0 0
  %509 = vmatprep.mubr.bf16.mxu0 0
  %510 = vmatmul.mubr.bf16.gmra.mxu0 %v374
  %v511 = vpop.f32.mrf.mxu0
  %v512 = vadd.f32 %v463, %v511
  %v513 = vpop.f32.mrf.mxu0
  %v514 = vpop.f32.mrf.mxu0
  %v515 = vadd.f32 %v466, %v514
  %v516 = vpop.f32.mrf.mxu0
  %517 = vmatprep.mubr.bf16.mxu0 0
  %518 = vmatmul.mubr.bf16.gmra.mxu0 %v377
  %v519 = vpop.f32.mrf.mxu0
  %v520 = vadd.f32 %v471, %v519
  %v521 = vpop.f32.mrf.mxu0
  %v522 = vpop.f32.mrf.mxu0
  %v523 = vadd.f32 %v474, %v522
  %v524 = vpop.f32.mrf.mxu0
  %525 = vdwg.mxu0
  %v526 = vmax.f32 %v512, 0.0
  %v527 = vmax.f32 %v515, 0.0
  %v528 = vmax.f32 %v520, 0.0
  %v529 = vmax.f32 %v523, 0.0
  %530 = vst [vmem:[%s3] sm:$0xff] %v526
  %531 = vst [vmem:[%s3 + $0x8] sm:$0xff] %v527
  %532 = vst [vmem:[%s3 + $0x10] sm:$0xff] %v528
  %533 = vst [vmem:[%s3 + $0x18] sm:$0xff] %v529
  // Predicated region
  $region14: #{relight_net_forward.11} parent=0 // pred_check
    _
  $region15: #{relight_net_forward.11} parent=0 // pred_check_branch
    %535 = sbr.rel (0) target = $region17
  $region16: #{relight_net_forward.11} parent=0 // pred_region
    _
  $region17: #{relight_net_forward.11} parent=0 // pred_fallthru
    _
  // Predicated region
  $region18: #{relight_net_forward.11} parent=0 // pred_check
    _
  $region19: #{relight_net_forward.11} parent=0 // pred_check_branch
    %537 = sbr.rel (0) target = $region21
  $region20: #{relight_net_forward.11} parent=0 // pred_region
    _
  $region21: #{relight_net_forward.11} parent=0 // pred_fallthru
    _

// kernel: relight_net_forward.12
$region0: #{relight_net_forward.12}
  #allocation0 [shape = 'u32[]', space=smem, size = 0x4, offset = 0x4, fixed_abs, tag = 'smem constant byte address 0x4 - core index']
  #allocation1 [shape = 'u32[144,128]{1,0:T(1,128)}', space=vmem, size = 0x12000, scoped, tag = 'internal scratch']
  %s0 = inlined_call_operand.vmem [shape: bf16[16,576], index: 0, kind: input, shape index: {}]
  %s1 = inlined_call_operand.vmem [shape: bf16[576,128], index: 1, kind: input, shape index: {}]
  %s2 = inlined_call_operand.vmem [shape: f32[1,128], index: 2, kind: input, shape index: {}]
  %s3 = inlined_call_operand.vmem [shape: f32[16,128], index: 3, kind: output, shape index: {}]
  %s4 = sld [smem:[#allocation0]]
  $region22: #{relight_net_forward.12} parent=0
    _
  %s6 = ssub.s32 1, %s4
  %s7 = scalar_select 0, %s6, %s4
  // Predicated region
  $region2: #{relight_net_forward.12} parent=0 // pred_check
    _
  $region3: #{relight_net_forward.12} parent=0 // pred_check_branch
    %9 = sbr.rel (0) target = $region5
  $region4: #{relight_net_forward.12} parent=0 // pred_region
    _
  $region5: #{relight_net_forward.12} parent=0 // pred_fallthru
    _
  // Predicated region
  $region6: #{relight_net_forward.12} parent=0 // pred_check
    _
  $region7: #{relight_net_forward.12} parent=0 // pred_check_branch
    %11 = sbr.rel (0) target = $region9
  $region8: #{relight_net_forward.12} parent=0 // pred_region
    _
  $region9: #{relight_net_forward.12} parent=0 // pred_fallthru
    _
  // Predicated region
  $region10: #{relight_net_forward.12} parent=0 // pred_check
    _
  $region11: #{relight_net_forward.12} parent=0 // pred_check_branch
    %13 = sbr.rel (0) target = $region13
  $region12: #{relight_net_forward.12} parent=0 // pred_region
    _
  $region13: #{relight_net_forward.12} parent=0 // pred_fallthru
    _
  %v15 = vld [vmem:[%s0] sm:$0xff]
  %v16 = vld [vmem:[%s0 + $0x8] sm:$0xff]
  %v17 = vld [vmem:[%s0 + $0x10] sm:$0xf]
  %v18 = vld [vmem:[%s0 + $0x14] sm:$0xff]
  %v19 = vld [vmem:[%s0 + $0x1c] sm:$0xff]
  %v20 = vld [vmem:[%s0 + $0x24] sm:$0xf]
  %v21 = vld [vmem:[%s1] sm:$0xf]
  %v22 = vld [vmem:[%s1 + $0x4] sm:$0xf]
  %v23 = vld [vmem:[%s1 + $0x8] sm:$0xf]
  %v24 = vld [vmem:[%s1 + $0xc] sm:$0xf]
  %v25 = vld [vmem:[%s1 + $0x10] sm:$0xf]
  %v26 = vld [vmem:[%s1 + $0x14] sm:$0xf]
  %v27 = vld [vmem:[%s1 + $0x18] sm:$0xf]
  %v28 = vld [vmem:[%s1 + $0x1c] sm:$0xf]
  %v29 = vld [vmem:[%s1 + $0x20] sm:$0xf]
  %v30 = vld [vmem:[%s1 + $0x24] sm:$0xf]
  %v31 = vld [vmem:[%s1 + $0x28] sm:$0xf]
  %v32 = vld [vmem:[%s1 + $0x2c] sm:$0xf]
  %v33 = vld [vmem:[%s1 + $0x30] sm:$0xf]
  %v34 = vld [vmem:[%s1 + $0x34] sm:$0xf]
  %v35 = vld [vmem:[%s1 + $0x38] sm:$0xf]
  %v36 = vld [vmem:[%s1 + $0x3c] sm:$0xf]
  %v37 = vld [vmem:[%s1 + $0x40] sm:$0xf]
  %v38 = vld [vmem:[%s1 + $0x44] sm:$0xf]
  %v39 = vld [vmem:[%s1 + $0x48] sm:$0xf]
  %v40 = vld [vmem:[%s1 + $0x4c] sm:$0xf]
  %v41 = vld [vmem:[%s1 + $0x50] sm:$0xf]
  %v42 = vld [vmem:[%s1 + $0x54] sm:$0xf]
  %v43 = vld [vmem:[%s1 + $0x58] sm:$0xf]
  %v44 = vld [vmem:[%s1 + $0x5c] sm:$0xf]
  %v45 = vld [vmem:[%s1 + $0x60] sm:$0xf]
  %v46 = vld [vmem:[%s1 + $0x64] sm:$0xf]
  %v47 = vld [vmem:[%s1 + $0x68] sm:$0xf]
  %v48 = vld [vmem:[%s1 + $0x6c] sm:$0xf]
  %v49 = vld [vmem:[%s1 + $0x70] sm:$0xf]
  %v50 = vld [vmem:[%s1 + $0x74] sm:$0xf]
  %v51 = vld [vmem:[%s1 + $0x78] sm:$0xf]
  %v52 = vld [vmem:[%s1 + $0x7c] sm:$0xf]
  %v53 = vld [vmem:[%s1 + $0x80] sm:$0xf]
  %v54 = vld [vmem:[%s1 + $0x84] sm:$0xf]
  %v55 = vld [vmem:[%s1 + $0x88] sm:$0xf]
  %v56 = vld [vmem:[%s1 + $0x8c] sm:$0xf]
  %v57 = vld [vmem:[%s1 + $0x90] sm:$0xf]
  %v58 = vld [vmem:[%s1 + $0x94] sm:$0xf]
  %v59 = vld [vmem:[%s1 + $0x98] sm:$0xf]
  %v60 = vld [vmem:[%s1 + $0x9c] sm:$0xf]
  %v61 = vld [vmem:[%s1 + $0xa0] sm:$0xf]
  %v62 = vld [vmem:[%s1 + $0xa4] sm:$0xf]
  %v63 = vld [vmem:[%s1 + $0xa8] sm:$0xf]
  %v64 = vld [vmem:[%s1 + $0xac] sm:$0xf]
  %v65 = vld [vmem:[%s1 + $0xb0] sm:$0xf]
  %v66 = vld [vmem:[%s1 + $0xb4] sm:$0xf]
  %v67 = vld [vmem:[%s1 + $0xb8] sm:$0xf]
  %v68 = vld [vmem:[%s1 + $0xbc] sm:$0xf]
  %v69 = vld [vmem:[%s1 + $0xc0] sm:$0xf]
  %v70 = vld [vmem:[%s1 + $0xc4] sm:$0xf]
  %v71 = vld [vmem:[%s1 + $0xc8] sm:$0xf]
  %v72 = vld [vmem:[%s1 + $0xcc] sm:$0xf]
  %v73 = vld [vmem:[%s1 + $0xd0] sm:$0xf]
  %v74 = vld [vmem:[%s1 + $0xd4] sm:$0xf]
  %v75 = vld [vmem:[%s1 + $0xd8] sm:$0xf]
  %v76 = vld [vmem:[%s1 + $0xdc] sm:$0xf]
  %v77 = vld [vmem:[%s1 + $0xe0] sm:$0xf]
  %v78 = vld [vmem:[%s1 + $0xe4] sm:$0xf]
  %v79 = vld [vmem:[%s1 + $0xe8] sm:$0xf]
  %v80 = vld [vmem:[%s1 + $0xec] sm:$0xf]
  %v81 = vld [vmem:[%s1 + $0xf0] sm:$0xf]
  %v82 = vld [vmem:[%s1 + $0xf4] sm:$0xf]
  %v83 = vld [vmem:[%s1 + $0xf8] sm:$0xf]
  %v84 = vld [vmem:[%s1 + $0xfc] sm:$0xf]
  %v85 = vld [vmem:[%s1 + $0x100] sm:$0xf]
  %v86 = vld [vmem:[%s1 + $0x104] sm:$0xf]
  %v87 = vld [vmem:[%s1 + $0x108] sm:$0xf]
  %v88 = vld [vmem:[%s1 + $0x10c] sm:$0xf]
  %v89 = vld [vmem:[%s1 + $0x110] sm:$0xf]
  %v90 = vld [vmem:[%s1 + $0x114] sm:$0xf]
  %v91 = vld [vmem:[%s1 + $0x118] sm:$0xf]
  %v92 = vld [vmem:[%s1 + $0x11c] sm:$0xf]
  %v93 = vld [vmem:[%s2] sm:$0x1]
  %v95 = vlaneseq
  %v96 = vshrl.u32 %v95, 7
  %v97 = vsub.s32 0, %v96
  %v98 = vrot.slane %v93, %v97
  %v106 = vunpack.c.l.b16 %v15
  %v107 = vunpack.c.h.b16 %v15
  %v108 = vunpack.c.l.b16 %v16
  %v109 = vunpack.c.h.b16 %v16
  %v110 = vunpack.c.l.b16 %v17
  %v111 = vunpack.c.l.b16 %v18
  %v112 = vunpack.c.h.b16 %v18
  %v113 = vunpack.c.l.b16 %v19
  %v114 = vunpack.c.h.b16 %v19
  %v115 = vunpack.c.l.b16 %v20
  %v116 = vpack.c.b16 %v111, %v106
  %v117 = vpack.c.b16 %v112, %v107
  %v118 = vpack.c.b16 %v113, %v108
  %v119 = vpack.c.b16 %v114, %v109
  %v120 = vpack.c.b16 %v115, %v110
  %v197 = vunpack.c.l.b16 %v21
  %v198 = vunpack.c.l.b16 %v22
  %v199 = vunpack.c.l.b16 %v23
  %v200 = vunpack.c.l.b16 %v24
  %v201 = vunpack.c.l.b16 %v25
  %v202 = vunpack.c.l.b16 %v26
  %v203 = vunpack.c.l.b16 %v27
  %v204 = vunpack.c.l.b16 %v28
  %v205 = vunpack.c.l.b16 %v29
  %v206 = vunpack.c.l.b16 %v30
  %v207 = vunpack.c.l.b16 %v31
  %v208 = vunpack.c.l.b16 %v32
  %v209 = vunpack.c.l.b16 %v33
  %v210 = vunpack.c.l.b16 %v34
  %v211 = vunpack.c.l.b16 %v35
  %v212 = vunpack.c.l.b16 %v36
  %v213 = vunpack.c.l.b16 %v37
  %v214 = vunpack.c.l.b16 %v38
  %v215 = vunpack.c.l.b16 %v39
  %v216 = vunpack.c.l.b16 %v40
  %v217 = vunpack.c.l.b16 %v41
  %v218 = vunpack.c.l.b16 %v42
  %v219 = vunpack.c.l.b16 %v43
  %v220 = vunpack.c.l.b16 %v44
  %v221 = vunpack.c.l.b16 %v45
  %v222 = vunpack.c.l.b16 %v46
  %v223 = vunpack.c.l.b16 %v47
  %v224 = vunpack.c.l.b16 %v48
  %v225 = vunpack.c.l.b16 %v49
  %v226 = vunpack.c.l.b16 %v50
  %v227 = vunpack.c.l.b16 %v51
  %v228 = vunpack.c.l.b16 %v52
  %v229 = vunpack.c.l.b16 %v53
  %v230 = vunpack.c.l.b16 %v54
  %v231 = vunpack.c.l.b16 %v55
  %v232 = vunpack.c.l.b16 %v56
  %v233 = vunpack.c.l.b16 %v57
  %v234 = vunpack.c.l.b16 %v58
  %v235 = vunpack.c.l.b16 %v59
  %v236 = vunpack.c.l.b16 %v60
  %v237 = vunpack.c.l.b16 %v61
  %v238 = vunpack.c.l.b16 %v62
  %v239 = vunpack.c.l.b16 %v63
  %v240 = vunpack.c.l.b16 %v64
  %v241 = vunpack.c.l.b16 %v65
  %v242 = vunpack.c.l.b16 %v66
  %v243 = vunpack.c.l.b16 %v67
  %v244 = vunpack.c.l.b16 %v68
  %v245 = vunpack.c.l.b16 %v69
  %v246 = vunpack.c.l.b16 %v70
  %v247 = vunpack.c.l.b16 %v71
  %v248 = vunpack.c.l.b16 %v72
  %v249 = vunpack.c.l.b16 %v73
  %v250 = vunpack.c.l.b16 %v74
  %v251 = vunpack.c.l.b16 %v75
  %v252 = vunpack.c.l.b16 %v76
  %v253 = vunpack.c.l.b16 %v77
  %v254 = vunpack.c.l.b16 %v78
  %v255 = vunpack.c.l.b16 %v79
  %v256 = vunpack.c.l.b16 %v80
  %v257 = vunpack.c.l.b16 %v81
  %v258 = vunpack.c.l.b16 %v82
  %v259 = vunpack.c.l.b16 %v83
  %v260 = vunpack.c.l.b16 %v84
  %v261 = vunpack.c.l.b16 %v85
  %v262 = vunpack.c.l.b16 %v86
  %v263 = vunpack.c.l.b16 %v87
  %v264 = vunpack.c.l.b16 %v88
  %v265 = vunpack.c.l.b16 %v89
  %v266 = vunpack.c.l.b16 %v90
  %v267 = vunpack.c.l.b16 %v91
  %v268 = vunpack.c.l.b16 %v92
  %v269 = vpack.c.b16 %v198, %v197
  %v270 = vpack.c.b16 %v200, %v199
  %v271 = vpack.c.b16 %v202, %v201
  %v272 = vpack.c.b16 %v204, %v203
  %v273 = vpack.c.b16 %v206, %v205
  %v274 = vpack.c.b16 %v208, %v207
  %v275 = vpack.c.b16 %v210, %v209
  %v276 = vpack.c.b16 %v212, %v211
  %v277 = vpack.c.b16 %v214, %v213
  %v278 = vpack.c.b16 %v216, %v215
  %v279 = vpack.c.b16 %v218, %v217
  %v280 = vpack.c.b16 %v220, %v219
  %v281 = vpack.c.b16 %v222, %v221
  %v282 = vpack.c.b16 %v224, %v223
  %v283 = vpack.c.b16 %v226, %v225
  %v284 = vpack.c.b16 %v228, %v227
  %v285 = vpack.c.b16 %v230, %v229
  %v286 = vpack.c.b16 %v232, %v231
  %v287 = vpack.c.b16 %v234, %v233
  %v288 = vpack.c.b16 %v236, %v235
  %v289 = vpack.c.b16 %v238, %v237
  %v290 = vpack.c.b16 %v240, %v239
  %v291 = vpack.c.b16 %v242, %v241
  %v292 = vpack.c.b16 %v244, %v243
  %v293 = vpack.c.b16 %v246, %v245
  %v294 = vpack.c.b16 %v248, %v247
  %v295 = vpack.c.b16 %v250, %v249
  %v296 = vpack.c.b16 %v252, %v251
  %v297 = vpack.c.b16 %v254, %v253
  %v298 = vpack.c.b16 %v256, %v255
  %v299 = vpack.c.b16 %v258, %v257
  %v300 = vpack.c.b16 %v260, %v259
  %v301 = vpack.c.b16 %v262, %v261
  %v302 = vpack.c.b16 %v264, %v263
  %v303 = vpack.c.b16 %v266, %v265
  %v304 = vpack.c.b16 %v268, %v267
  %vm341 = vcmask 523264
  %v343 = vsel %vm341, %v120, 0
  %345 = vmatprep.subr.bf16.mxu0 0
  %346 = vmatpush1.bf16.msra.mxu0 %v276
  %347 = vmatprep.subr.bf16.mxu0 0
  %348 = vmatpush1.bf16.msra.mxu0 %v275
  %349 = vmatprep.subr.bf16.mxu0 0
  %350 = vmatpush1.bf16.msra.mxu0 %v274
  %351 = vmatprep.subr.bf16.mxu0 0
  %352 = vmatpush1.bf16.msra.mxu0 %v273
  %353 = vmatprep.subr.bf16.mxu0 0
  %354 = vmatpush1.bf16.msra.mxu0 %v272
  %355 = vmatprep.subr.bf16.mxu0 0
  %356 = vmatpush1.bf16.msra.mxu0 %v271
  %357 = vmatprep.subr.bf16.mxu0 0
  %358 = vmatpush1.bf16.msra.mxu0 %v270
  %359 = vmatprep.subr.bf16.mxu0 0
  %360 = vmatpush1.bf16.msra.mxu0 %v269
  %361 = vmatprep.subr.bf16.mxu0 0
  %362 = vmatpush2.bf16.msra.mxu0 %v284
  %363 = vmatprep.subr.bf16.mxu0 0
  %364 = vmatpush2.bf16.msra.mxu0 %v283
  %365 = vmatprep.subr.bf16.mxu0 0
  %366 = vmatpush2.bf16.msra.mxu0 %v282
  %367 = vmatprep.subr.bf16.mxu0 0
  %368 = vmatpush2.bf16.msra.mxu0 %v281
  %369 = vmatprep.subr.bf16.mxu0 0
  %370 = vmatpush2.bf16.msra.mxu0 %v280
  %371 = vmatprep.subr.bf16.mxu0 0
  %372 = vmatpush2.bf16.msra.mxu0 %v279
  %373 = vmatprep.subr.bf16.mxu0 0
  %374 = vmatpush2.bf16.msra.mxu0 %v278
  %375 = vmatprep.subr.bf16.mxu0 0
  %376 = vmatpush2.bf16.msra.mxu0 %v277
  %377 = vmatprep.mubr.bf16.mxu0 %v117
  %378 = vmatmul.mubr.bf16.gmra.mxu0 %v116
  %v379 = vpop.f32.mrf.mxu0
  %v380 = vadd.f32 %v98, %v379
  %v381 = vpop.f32.mrf.mxu0
  %v382 = vpop.f32.mrf.mxu0
  %v383 = vadd.f32 %v98, %v382
  %v384 = vpop.f32.mrf.mxu0
  %385 = vdwg.mxu0
  %386 = vmatprep.subr.bf16.mxu0 0
  %387 = vmatpush1.bf16.msra.mxu0 %v292
  %388 = vmatprep.subr.bf16.mxu0 0
  %389 = vmatpush1.bf16.msra.mxu0 %v291
  %390 = vmatprep.subr.bf16.mxu0 0
  %391 = vmatpush1.bf16.msra.mxu0 %v290
  %392 = vmatprep.subr.bf16.mxu0 0
  %393 = vmatpush1.bf16.msra.mxu0 %v289
  %394 = vmatprep.subr.bf16.mxu0 0
  %395 = vmatpush1.bf16.msra.mxu0 %v288
  %396 = vmatprep.subr.bf16.mxu0 0
  %397 = vmatpush1.bf16.msra.mxu0 %v287
  %398 = vmatprep.subr.bf16.mxu0 0
  %399 = vmatpush1.bf16.msra.mxu0 %v286
  %400 = vmatprep.subr.bf16.mxu0 0
  %401 = vmatpush1.bf16.msra.mxu0 %v285
  %402 = vmatprep.subr.bf16.mxu0 0
  %403 = vmatpush2.bf16.msra.mxu0 %v300
  %404 = vmatprep.subr.bf16.mxu0 0
  %405 = vmatpush2.bf16.msra.mxu0 %v299
  %406 = vmatprep.subr.bf16.mxu0 0
  %407 = vmatpush2.bf16.msra.mxu0 %v298
  %408 = vmatprep.subr.bf16.mxu0 0
  %409 = vmatpush2.bf16.msra.mxu0 %v297
  %410 = vmatprep.subr.bf16.mxu0 0
  %411 = vmatpush2.bf16.msra.mxu0 %v296
  %412 = vmatprep.subr.bf16.mxu0 0
  %413 = vmatpush2.bf16.msra.mxu0 %v295
  %414 = vmatprep.subr.bf16.mxu0 0
  %415 = vmatpush2.bf16.msra.mxu0 %v294
  %416 = vmatprep.subr.bf16.mxu0 0
  %417 = vmatpush2.bf16.msra.mxu0 %v293
  %418 = vmatprep.mubr.bf16.mxu0 %v119
  %419 = vmatmul.mubr.bf16.gmra.mxu0 %v118
  %v420 = vpop.f32.mrf.mxu0
  %v421 = vadd.f32 %v380, %v420
  %v422 = vpop.f32.mrf.mxu0
  %v423 = vpop.f32.mrf.mxu0
  %v424 = vadd.f32 %v383, %v423
  %v425 = vpop.f32.mrf.mxu0
  %426 = vdwg.mxu0
  %427 = vmatprep.subr.bf16.mxu0 0
  %428 = vmatpush1.bf16.msra.mxu0 0
  %429 = vmatprep.subr.bf16.mxu0 0
  %430 = vmatpush1.bf16.msra.mxu0 0
  %431 = vmatprep.subr.bf16.mxu0 0
  %432 = vmatpush1.bf16.msra.mxu0 0
  %433 = vmatprep.subr.bf16.mxu0 0
  %434 = vmatpush1.bf16.msra.mxu0 0
  %435 = vmatprep.subr.bf16.mxu0 0
  %436 = vmatpush1.bf16.msra.mxu0 %v304
  %437 = vmatprep.subr.bf16.mxu0 0
  %438 = vmatpush1.bf16.msra.mxu0 %v303
  %439 = vmatprep.subr.bf16.mxu0 0
  %440 = vmatpush1.bf16.msra.mxu0 %v302
  %441 = vmatprep.subr.bf16.mxu0 0
  %442 = vmatpush1.bf16.msra.mxu0 %v301
  %443 = vmatprep.subr.bf16.mxu0 0
  %444 = vmatpush2.bf16.msra.mxu0 0
  %445 = vmatprep.subr.bf16.mxu0 0
  %446 = vmatpush2.bf16.msra.mxu0 0
  %447 = vmatprep.subr.bf16.mxu0 0
  %448 = vmatpush2.bf16.msra.mxu0 0
  %449 = vmatprep.subr.bf16.mxu0 0
  %450 = vmatpush2.bf16.msra.mxu0 0
  %451 = vmatprep.subr.bf16.mxu0 0
  %452 = vmatpush2.bf16.msra.mxu0 0
  %453 = vmatprep.subr.bf16.mxu0 0
  %454 = vmatpush2.bf16.msra.mxu0 0
  %455 = vmatprep.subr.bf16.mxu0 0
  %456 = vmatpush2.bf16.msra.mxu0 0
  %457 = vmatprep.subr.bf16.mxu0 0
  %458 = vmatpush2.bf16.msra.mxu0 0
  %459 = vmatprep.mubr.bf16.mxu0 0
  %460 = vmatmul.mubr.bf16.gmra.mxu0 %v343
  %v461 = vpop.f32.mrf.mxu0
  %v462 = vadd.f32 %v421, %v461
  %v463 = vpop.f32.mrf.mxu0
  %v464 = vpop.f32.mrf.mxu0
  %v465 = vadd.f32 %v424, %v464
  %v466 = vpop.f32.mrf.mxu0
  %467 = vdwg.mxu0
  %v468 = vmax.f32 %v462, 0.0
  %v469 = vmax.f32 %v465, 0.0
  %470 = vst [vmem:[%s3] sm:$0xff] %v468
  %471 = vst [vmem:[%s3 + $0x8] sm:$0xff] %v469
  // Predicated region
  $region14: #{relight_net_forward.12} parent=0 // pred_check
    _
  $region15: #{relight_net_forward.12} parent=0 // pred_check_branch
    %473 = sbr.rel (0) target = $region17
  $region16: #{relight_net_forward.12} parent=0 // pred_region
    _
  $region17: #{relight_net_forward.12} parent=0 // pred_fallthru
    _
  // Predicated region
  $region18: #{relight_net_forward.12} parent=0 // pred_check
    _
  $region19: #{relight_net_forward.12} parent=0 // pred_check_branch
    %475 = sbr.rel (0) target = $region21
  $region20: #{relight_net_forward.12} parent=0 // pred_region
    _
  $region21: #{relight_net_forward.12} parent=0 // pred_fallthru
    _

// kernel: relight_net_forward.13
$region0: #{relight_net_forward.13}
  #allocation0 [shape = 'u32[]', space=smem, size = 0x4, offset = 0x4, fixed_abs, tag = 'smem constant byte address 0x4 - core index']
  #allocation1 [shape = 'u32[144,128]{1,0:T(1,128)}', space=vmem, size = 0x12000, scoped, tag = 'internal scratch']
  %s0 = inlined_call_operand.vmem [shape: bf16[32,1152], index: 0, kind: input, shape index: {}]
  %s1 = inlined_call_operand.vmem [shape: bf16[1152,128], index: 1, kind: input, shape index: {}]
  %s2 = inlined_call_operand.vmem [shape: f32[1,128], index: 2, kind: input, shape index: {}]
  %s3 = inlined_call_operand.vmem [shape: f32[32,128], index: 3, kind: output, shape index: {}]
  %s4 = sld [smem:[#allocation0]]
  $region22: #{relight_net_forward.13} parent=0
    _
  %s6 = ssub.s32 1, %s4
  %s7 = scalar_select 0, %s6, %s4
  // Predicated region
  $region2: #{relight_net_forward.13} parent=0 // pred_check
    _
  $region3: #{relight_net_forward.13} parent=0 // pred_check_branch
    %9 = sbr.rel (0) target = $region5
  $region4: #{relight_net_forward.13} parent=0 // pred_region
    _
  $region5: #{relight_net_forward.13} parent=0 // pred_fallthru
    _
  // Predicated region
  $region6: #{relight_net_forward.13} parent=0 // pred_check
    _
  $region7: #{relight_net_forward.13} parent=0 // pred_check_branch
    %11 = sbr.rel (0) target = $region9
  $region8: #{relight_net_forward.13} parent=0 // pred_region
    _
  $region9: #{relight_net_forward.13} parent=0 // pred_fallthru
    _
  // Predicated region
  $region10: #{relight_net_forward.13} parent=0 // pred_check
    _
  $region11: #{relight_net_forward.13} parent=0 // pred_check_branch
    %13 = sbr.rel (0) target = $region13
  $region12: #{relight_net_forward.13} parent=0 // pred_region
    _
  $region13: #{relight_net_forward.13} parent=0 // pred_fallthru
    _
  %v15 = vld [vmem:[%s0] sm:$0xff]
  %v16 = vld [vmem:[%s0 + $0x8] sm:$0xff]
  %v17 = vld [vmem:[%s0 + $0x10] sm:$0xff]
  %v18 = vld [vmem:[%s0 + $0x18] sm:$0xff]
  %v19 = vld [vmem:[%s0 + $0x20] sm:$0xf]
  %v20 = vld [vmem:[%s0 + $0x24] sm:$0xff]
  %v21 = vld [vmem:[%s0 + $0x2c] sm:$0xff]
  %v22 = vld [vmem:[%s0 + $0x34] sm:$0xff]
  %v23 = vld [vmem:[%s0 + $0x3c] sm:$0xff]
  %v24 = vld [vmem:[%s0 + $0x44] sm:$0xf]
  %v25 = vld [vmem:[%s0 + $0x48] sm:$0xff]
  %v26 = vld [vmem:[%s0 + $0x50] sm:$0xff]
  %v27 = vld [vmem:[%s0 + $0x58] sm:$0xff]
  %v28 = vld [vmem:[%s0 + $0x60] sm:$0xff]
  %v29 = vld [vmem:[%s0 + $0x68] sm:$0xf]
  %v30 = vld [vmem:[%s0 + $0x6c] sm:$0xff]
  %v31 = vld [vmem:[%s0 + $0x74] sm:$0xff]
  %v32 = vld [vmem:[%s0 + $0x7c] sm:$0xff]
  %v33 = vld [vmem:[%s0 + $0x84] sm:$0xff]
  %v34 = vld [vmem:[%s0 + $0x8c] sm:$0xf]
  %v35 = vld [vmem:[%s1] sm:$0xf]
  %v36 = vld [vmem:[%s1 + $0x4] sm:$0xf]
  %v37 = vld [vmem:[%s1 + $0x8] sm:$0xf]
  %v38 = vld [vmem:[%s1 + $0xc] sm:$0xf]
  %v39 = vld [vmem:[%s1 + $0x10] sm:$0xf]
  %v40 = vld [vmem:[%s1 + $0x14] sm:$0xf]
  %v41 = vld [vmem:[%s1 + $0x18] sm:$0xf]
  %v42 = vld [vmem:[%s1 + $0x1c] sm:$0xf]
  %v43 = vld [vmem:[%s1 + $0x20] sm:$0xf]
  %v44 = vld [vmem:[%s1 + $0x24] sm:$0xf]
  %v45 = vld [vmem:[%s1 + $0x28] sm:$0xf]
  %v46 = vld [vmem:[%s1 + $0x2c] sm:$0xf]
  %v47 = vld [vmem:[%s1 + $0x30] sm:$0xf]
  %v48 = vld [vmem:[%s1 + $0x34] sm:$0xf]
  %v49 = vld [vmem:[%s1 + $0x38] sm:$0xf]
  %v50 = vld [vmem:[%s1 + $0x3c] sm:$0xf]
  %v51 = vld [vmem:[%s1 + $0x40] sm:$0xf]
  %v52 = vld [vmem:[%s1 + $0x44] sm:$0xf]
  %v53 = vld [vmem:[%s1 + $0x48] sm:$0xf]
  %v54 = vld [vmem:[%s1 + $0x4c] sm:$0xf]
  %v55 = vld [vmem:[%s1 + $0x50] sm:$0xf]
  %v56 = vld [vmem:[%s1 + $0x54] sm:$0xf]
  %v57 = vld [vmem:[%s1 + $0x58] sm:$0xf]
  %v58 = vld [vmem:[%s1 + $0x5c] sm:$0xf]
  %v59 = vld [vmem:[%s1 + $0x60] sm:$0xf]
  %v60 = vld [vmem:[%s1 + $0x64] sm:$0xf]
  %v61 = vld [vmem:[%s1 + $0x68] sm:$0xf]
  %v62 = vld [vmem:[%s1 + $0x6c] sm:$0xf]
  %v63 = vld [vmem:[%s1 + $0x70] sm:$0xf]
  %v64 = vld [vmem:[%s1 + $0x74] sm:$0xf]
  %v65 = vld [vmem:[%s1 + $0x78] sm:$0xf]
  %v66 = vld [vmem:[%s1 + $0x7c] sm:$0xf]
  %v67 = vld [vmem:[%s1 + $0x80] sm:$0xf]
  %v68 = vld [vmem:[%s1 + $0x84] sm:$0xf]
  %v69 = vld [vmem:[%s1 + $0x88] sm:$0xf]
  %v70 = vld [vmem:[%s1 + $0x8c] sm:$0xf]
  %v71 = vld [vmem:[%s1 + $0x90] sm:$0xf]
  %v72 = vld [vmem:[%s1 + $0x94] sm:$0xf]
  %v73 = vld [vmem:[%s1 + $0x98] sm:$0xf]
  %v74 = vld [vmem:[%s1 + $0x9c] sm:$0xf]
  %v75 = vld [vmem:[%s1 + $0xa0] sm:$0xf]
  %v76 = vld [vmem:[%s1 + $0xa4] sm:$0xf]
  %v77 = vld [vmem:[%s1 + $0xa8] sm:$0xf]
  %v78 = vld [vmem:[%s1 + $0xac] sm:$0xf]
  %v79 = vld [vmem:[%s1 + $0xb0] sm:$0xf]
  %v80 = vld [vmem:[%s1 + $0xb4] sm:$0xf]
  %v81 = vld [vmem:[%s1 + $0xb8] sm:$0xf]
  %v82 = vld [vmem:[%s1 + $0xbc] sm:$0xf]
  %v83 = vld [vmem:[%s1 + $0xc0] sm:$0xf]
  %v84 = vld [vmem:[%s1 + $0xc4] sm:$0xf]
  %v85 = vld [vmem:[%s1 + $0xc8] sm:$0xf]
  %v86 = vld [vmem:[%s1 + $0xcc] sm:$0xf]
  %v87 = vld [vmem:[%s1 + $0xd0] sm:$0xf]
  %v88 = vld [vmem:[%s1 + $0xd4] sm:$0xf]
  %v89 = vld [vmem:[%s1 + $0xd8] sm:$0xf]
  %v90 = vld [vmem:[%s1 + $0xdc] sm:$0xf]
  %v91 = vld [vmem:[%s1 + $0xe0] sm:$0xf]
  %v92 = vld [vmem:[%s1 + $0xe4] sm:$0xf]
  %v93 = vld [vmem:[%s1 + $0xe8] sm:$0xf]
  %v94 = vld [vmem:[%s1 + $0xec] sm:$0xf]
  %v95 = vld [vmem:[%s1 + $0xf0] sm:$0xf]
  %v96 = vld [vmem:[%s1 + $0xf4] sm:$0xf]
  %v97 = vld [vmem:[%s1 + $0xf8] sm:$0xf]
  %v98 = vld [vmem:[%s1 + $0xfc] sm:$0xf]
  %v99 = vld [vmem:[%s1 + $0x100] sm:$0xf]
  %v100 = vld [vmem:[%s1 + $0x104] sm:$0xf]
  %v101 = vld [vmem:[%s1 + $0x108] sm:$0xf]
  %v102 = vld [vmem:[%s1 + $0x10c] sm:$0xf]
  %v103 = vld [vmem:[%s1 + $0x110] sm:$0xf]
  %v104 = vld [vmem:[%s1 + $0x114] sm:$0xf]
  %v105 = vld [vmem:[%s1 + $0x118] sm:$0xf]
  %v106 = vld [vmem:[%s1 + $0x11c] sm:$0xf]
  %v107 = vld [vmem:[%s1 + $0x120] sm:$0xf]
  %v108 = vld [vmem:[%s1 + $0x124] sm:$0xf]
  %v109 = vld [vmem:[%s1 + $0x128] sm:$0xf]
  %v110 = vld [vmem:[%s1 + $0x12c] sm:$0xf]
  %v111 = vld [vmem:[%s1 + $0x130] sm:$0xf]
  %v112 = vld [vmem:[%s1 + $0x134] sm:$0xf]
  %v113 = vld [vmem:[%s1 + $0x138] sm:$0xf]
  %v114 = vld [vmem:[%s1 + $0x13c] sm:$0xf]
  %v115 = vld [vmem:[%s1 + $0x140] sm:$0xf]
  %v116 = vld [vmem:[%s1 + $0x144] sm:$0xf]
  %v117 = vld [vmem:[%s1 + $0x148] sm:$0xf]
  %v118 = vld [vmem:[%s1 + $0x14c] sm:$0xf]
  %v119 = vld [vmem:[%s1 + $0x150] sm:$0xf]
  %v120 = vld [vmem:[%s1 + $0x154] sm:$0xf]
  %v121 = vld [vmem:[%s1 + $0x158] sm:$0xf]
  %v122 = vld [vmem:[%s1 + $0x15c] sm:$0xf]
  %v123 = vld [vmem:[%s1 + $0x160] sm:$0xf]
  %v124 = vld [vmem:[%s1 + $0x164] sm:$0xf]
  %v125 = vld [vmem:[%s1 + $0x168] sm:$0xf]
  %v126 = vld [vmem:[%s1 + $0x16c] sm:$0xf]
  %v127 = vld [vmem:[%s1 + $0x170] sm:$0xf]
  %v128 = vld [vmem:[%s1 + $0x174] sm:$0xf]
  %v129 = vld [vmem:[%s1 + $0x178] sm:$0xf]
  %v130 = vld [vmem:[%s1 + $0x17c] sm:$0xf]
  %v131 = vld [vmem:[%s1 + $0x180] sm:$0xf]
  %v132 = vld [vmem:[%s1 + $0x184] sm:$0xf]
  %v133 = vld [vmem:[%s1 + $0x188] sm:$0xf]
  %v134 = vld [vmem:[%s1 + $0x18c] sm:$0xf]
  %v135 = vld [vmem:[%s1 + $0x190] sm:$0xf]
  %v136 = vld [vmem:[%s1 + $0x194] sm:$0xf]
  %v137 = vld [vmem:[%s1 + $0x198] sm:$0xf]
  %v138 = vld [vmem:[%s1 + $0x19c] sm:$0xf]
  %v139 = vld [vmem:[%s1 + $0x1a0] sm:$0xf]
  %v140 = vld [vmem:[%s1 + $0x1a4] sm:$0xf]
  %v141 = vld [vmem:[%s1 + $0x1a8] sm:$0xf]
  %v142 = vld [vmem:[%s1 + $0x1ac] sm:$0xf]
  %v143 = vld [vmem:[%s1 + $0x1b0] sm:$0xf]
  %v144 = vld [vmem:[%s1 + $0x1b4] sm:$0xf]
  %v145 = vld [vmem:[%s1 + $0x1b8] sm:$0xf]
  %v146 = vld [vmem:[%s1 + $0x1bc] sm:$0xf]
  %v147 = vld [vmem:[%s1 + $0x1c0] sm:$0xf]
  %v148 = vld [vmem:[%s1 + $0x1c4] sm:$0xf]
  %v149 = vld [vmem:[%s1 + $0x1c8] sm:$0xf]
  %v150 = vld [vmem:[%s1 + $0x1cc] sm:$0xf]
  %v151 = vld [vmem:[%s1 + $0x1d0] sm:$0xf]
  %v152 = vld [vmem:[%s1 + $0x1d4] sm:$0xf]
  %v153 = vld [vmem:[%s1 + $0x1d8] sm:$0xf]
  %v154 = vld [vmem:[%s1 + $0x1dc] sm:$0xf]
  %v155 = vld [vmem:[%s1 + $0x1e0] sm:$0xf]
  %v156 = vld [vmem:[%s1 + $0x1e4] sm:$0xf]
  %v157 = vld [vmem:[%s1 + $0x1e8] sm:$0xf]
  %v158 = vld [vmem:[%s1 + $0x1ec] sm:$0xf]
  %v159 = vld [vmem:[%s1 + $0x1f0] sm:$0xf]
  %v160 = vld [vmem:[%s1 + $0x1f4] sm:$0xf]
  %v161 = vld [vmem:[%s1 + $0x1f8] sm:$0xf]
  %v162 = vld [vmem:[%s1 + $0x1fc] sm:$0xf]
  %v163 = vld [vmem:[%s1 + $0x200] sm:$0xf]
  %v164 = vld [vmem:[%s1 + $0x204] sm:$0xf]
  %v165 = vld [vmem:[%s1 + $0x208] sm:$0xf]
  %v166 = vld [vmem:[%s1 + $0x20c] sm:$0xf]
  %v167 = vld [vmem:[%s1 + $0x210] sm:$0xf]
  %v168 = vld [vmem:[%s1 + $0x214] sm:$0xf]
  %v169 = vld [vmem:[%s1 + $0x218] sm:$0xf]
  %v170 = vld [vmem:[%s1 + $0x21c] sm:$0xf]
  %v171 = vld [vmem:[%s1 + $0x220] sm:$0xf]
  %v172 = vld [vmem:[%s1 + $0x224] sm:$0xf]
  %v173 = vld [vmem:[%s1 + $0x228] sm:$0xf]
  %v174 = vld [vmem:[%s1 + $0x22c] sm:$0xf]
  %v175 = vld [vmem:[%s1 + $0x230] sm:$0xf]
  %v176 = vld [vmem:[%s1 + $0x234] sm:$0xf]
  %v177 = vld [vmem:[%s1 + $0x238] sm:$0xf]
  %v178 = vld [vmem:[%s1 + $0x23c] sm:$0xf]
  %v179 = vld [vmem:[%s2] sm:$0x1]
  %v181 = vlaneseq
  %v182 = vshrl.u32 %v181, 7
  %v183 = vsub.s32 0, %v182
  %v184 = vrot.slane %v179, %v183
  %v206 = vunpack.c.l.b16 %v15
  %v207 = vunpack.c.h.b16 %v15
  %v208 = vunpack.c.l.b16 %v16
  %v209 = vunpack.c.h.b16 %v16
  %v210 = vunpack.c.l.b16 %v17
  %v211 = vunpack.c.h.b16 %v17
  %v212 = vunpack.c.l.b16 %v18
  %v213 = vunpack.c.h.b16 %v18
  %v214 = vunpack.c.l.b16 %v19
  %v215 = vunpack.c.l.b16 %v20
  %v216 = vunpack.c.h.b16 %v20
  %v217 = vunpack.c.l.b16 %v21
  %v218 = vunpack.c.h.b16 %v21
  %v219 = vunpack.c.l.b16 %v22
  %v220 = vunpack.c.h.b16 %v22
  %v221 = vunpack.c.l.b16 %v23
  %v222 = vunpack.c.h.b16 %v23
  %v223 = vunpack.c.l.b16 %v24
  %v224 = vunpack.c.l.b16 %v25
  %v225 = vunpack.c.h.b16 %v25
  %v226 = vunpack.c.l.b16 %v26
  %v227 = vunpack.c.h.b16 %v26
  %v228 = vunpack.c.l.b16 %v27
  %v229 = vunpack.c.h.b16 %v27
  %v230 = vunpack.c.l.b16 %v28
  %v231 = vunpack.c.h.b16 %v28
  %v232 = vunpack.c.l.b16 %v29
  %v233 = vunpack.c.l.b16 %v30
  %v234 = vunpack.c.h.b16 %v30
  %v235 = vunpack.c.l.b16 %v31
  %v236 = vunpack.c.h.b16 %v31
  %v237 = vunpack.c.l.b16 %v32
  %v238 = vunpack.c.h.b16 %v32
  %v239 = vunpack.c.l.b16 %v33
  %v240 = vunpack.c.h.b16 %v33
  %v241 = vunpack.c.l.b16 %v34
  %v242 = vpack.c.b16 %v215, %v206
  %v243 = vpack.c.b16 %v216, %v207
  %v244 = vpack.c.b16 %v217, %v208
  %v245 = vpack.c.b16 %v218, %v209
  %v246 = vpack.c.b16 %v219, %v210
  %v247 = vpack.c.b16 %v220, %v211
  %v248 = vpack.c.b16 %v221, %v212
  %v249 = vpack.c.b16 %v222, %v213
  %v250 = vpack.c.b16 %v223, %v214
  %v251 = vpack.c.b16 %v233, %v224
  %v252 = vpack.c.b16 %v234, %v225
  %v253 = vpack.c.b16 %v235, %v226
  %v254 = vpack.c.b16 %v236, %v227
  %v255 = vpack.c.b16 %v237, %v228
  %v256 = vpack.c.b16 %v238, %v229
  %v257 = vpack.c.b16 %v239, %v230
  %v258 = vpack.c.b16 %v240, %v231
  %v259 = vpack.c.b16 %v241, %v232
  %v422 = vunpack.c.l.b16 %v35
  %v423 = vunpack.c.l.b16 %v36
  %v424 = vunpack.c.l.b16 %v37
  %v425 = vunpack.c.l.b16 %v38
  %v426 = vunpack.c.l.b16 %v39
  %v427 = vunpack.c.l.b16 %v40
  %v428 = vunpack.c.l.b16 %v41
  %v429 = vunpack.c.l.b16 %v42
  %v430 = vunpack.c.l.b16 %v43
  %v431 = vunpack.c.l.b16 %v44
  %v432 = vunpack.c.l.b16 %v45
  %v433 = vunpack.c.l.b16 %v46
  %v434 = vunpack.c.l.b16 %v47
  %v435 = vunpack.c.l.b16 %v48
  %v436 = vunpack.c.l.b16 %v49
  %v437 = vunpack.c.l.b16 %v50
  %v438 = vunpack.c.l.b16 %v51
  %v439 = vunpack.c.l.b16 %v52
  %v440 = vunpack.c.l.b16 %v53
  %v441 = vunpack.c.l.b16 %v54
  %v442 = vunpack.c.l.b16 %v55
  %v443 = vunpack.c.l.b16 %v56
  %v444 = vunpack.c.l.b16 %v57
  %v445 = vunpack.c.l.b16 %v58
  %v446 = vunpack.c.l.b16 %v59
  %v447 = vunpack.c.l.b16 %v60
  %v448 = vunpack.c.l.b16 %v61
  %v449 = vunpack.c.l.b16 %v62
  %v450 = vunpack.c.l.b16 %v63
  %v451 = vunpack.c.l.b16 %v64
  %v452 = vunpack.c.l.b16 %v65
  %v453 = vunpack.c.l.b16 %v66
  %v454 = vunpack.c.l.b16 %v67
  %v455 = vunpack.c.l.b16 %v68
  %v456 = vunpack.c.l.b16 %v69
  %v457 = vunpack.c.l.b16 %v70
  %v458 = vunpack.c.l.b16 %v71
  %v459 = vunpack.c.l.b16 %v72
  %v460 = vunpack.c.l.b16 %v73
  %v461 = vunpack.c.l.b16 %v74
  %v462 = vunpack.c.l.b16 %v75
  %v463 = vunpack.c.l.b16 %v76
  %v464 = vunpack.c.l.b16 %v77
  %v465 = vunpack.c.l.b16 %v78
  %v466 = vunpack.c.l.b16 %v79
  %v467 = vunpack.c.l.b16 %v80
  %v468 = vunpack.c.l.b16 %v81
  %v469 = vunpack.c.l.b16 %v82
  %v470 = vunpack.c.l.b16 %v83
  %v471 = vunpack.c.l.b16 %v84
  %v472 = vunpack.c.l.b16 %v85
  %v473 = vunpack.c.l.b16 %v86
  %v474 = vunpack.c.l.b16 %v87
  %v475 = vunpack.c.l.b16 %v88
  %v476 = vunpack.c.l.b16 %v89
  %v477 = vunpack.c.l.b16 %v90
  %v478 = vunpack.c.l.b16 %v91
  %v479 = vunpack.c.l.b16 %v92
  %v480 = vunpack.c.l.b16 %v93
  %v481 = vunpack.c.l.b16 %v94
  %v482 = vunpack.c.l.b16 %v95
  %v483 = vunpack.c.l.b16 %v96
  %v484 = vunpack.c.l.b16 %v97
  %v485 = vunpack.c.l.b16 %v98
  %v486 = vunpack.c.l.b16 %v99
  %v487 = vunpack.c.l.b16 %v100
  %v488 = vunpack.c.l.b16 %v101
  %v489 = vunpack.c.l.b16 %v102
  %v490 = vunpack.c.l.b16 %v103
  %v491 = vunpack.c.l.b16 %v104
  %v492 = vunpack.c.l.b16 %v105
  %v493 = vunpack.c.l.b16 %v106
  %v494 = vunpack.c.l.b16 %v107
  %v495 = vunpack.c.l.b16 %v108
  %v496 = vunpack.c.l.b16 %v109
  %v497 = vunpack.c.l.b16 %v110
  %v498 = vunpack.c.l.b16 %v111
  %v499 = vunpack.c.l.b16 %v112
  %v500 = vunpack.c.l.b16 %v113
  %v501 = vunpack.c.l.b16 %v114
  %v502 = vunpack.c.l.b16 %v115
  %v503 = vunpack.c.l.b16 %v116
  %v504 = vunpack.c.l.b16 %v117
  %v505 = vunpack.c.l.b16 %v118
  %v506 = vunpack.c.l.b16 %v119
  %v507 = vunpack.c.l.b16 %v120
  %v508 = vunpack.c.l.b16 %v121
  %v509 = vunpack.c.l.b16 %v122
  %v510 = vunpack.c.l.b16 %v123
  %v511 = vunpack.c.l.b16 %v124
  %v512 = vunpack.c.l.b16 %v125
  %v513 = vunpack.c.l.b16 %v126
  %v514 = vunpack.c.l.b16 %v127
  %v515 = vunpack.c.l.b16 %v128
  %v516 = vunpack.c.l.b16 %v129
  %v517 = vunpack.c.l.b16 %v130
  %v518 = vunpack.c.l.b16 %v131
  %v519 = vunpack.c.l.b16 %v132
  %v520 = vunpack.c.l.b16 %v133
  %v521 = vunpack.c.l.b16 %v134
  %v522 = vunpack.c.l.b16 %v135
  %v523 = vunpack.c.l.b16 %v136
  %v524 = vunpack.c.l.b16 %v137
  %v525 = vunpack.c.l.b16 %v138
  %v526 = vunpack.c.l.b16 %v139
  %v527 = vunpack.c.l.b16 %v140
  %v528 = vunpack.c.l.b16 %v141
  %v529 = vunpack.c.l.b16 %v142
  %v530 = vunpack.c.l.b16 %v143
  %v531 = vunpack.c.l.b16 %v144
  %v532 = vunpack.c.l.b16 %v145
  %v533 = vunpack.c.l.b16 %v146
  %v534 = vunpack.c.l.b16 %v147
  %v535 = vunpack.c.l.b16 %v148
  %v536 = vunpack.c.l.b16 %v149
  %v537 = vunpack.c.l.b16 %v150
  %v538 = vunpack.c.l.b16 %v151
  %v539 = vunpack.c.l.b16 %v152
  %v540 = vunpack.c.l.b16 %v153
  %v541 = vunpack.c.l.b16 %v154
  %v542 = vunpack.c.l.b16 %v155
  %v543 = vunpack.c.l.b16 %v156
  %v544 = vunpack.c.l.b16 %v157
  %v545 = vunpack.c.l.b16 %v158
  %v546 = vunpack.c.l.b16 %v159
  %v547 = vunpack.c.l.b16 %v160
  %v548 = vunpack.c.l.b16 %v161
  %v549 = vunpack.c.l.b16 %v162
  %v550 = vunpack.c.l.b16 %v163
  %v551 = vunpack.c.l.b16 %v164
  %v552 = vunpack.c.l.b16 %v165
  %v553 = vunpack.c.l.b16 %v166
  %v554 = vunpack.c.l.b16 %v167
  %v555 = vunpack.c.l.b16 %v168
  %v556 = vunpack.c.l.b16 %v169
  %v557 = vunpack.c.l.b16 %v170
  %v558 = vunpack.c.l.b16 %v171
  %v559 = vunpack.c.l.b16 %v172
  %v560 = vunpack.c.l.b16 %v173
  %v561 = vunpack.c.l.b16 %v174
  %v562 = vunpack.c.l.b16 %v175
  %v563 = vunpack.c.l.b16 %v176
  %v564 = vunpack.c.l.b16 %v177
  %v565 = vunpack.c.l.b16 %v178
  %v566 = vpack.c.b16 %v423, %v422
  %v567 = vpack.c.b16 %v425, %v424
  %v568 = vpack.c.b16 %v427, %v426
  %v569 = vpack.c.b16 %v429, %v428
  %v570 = vpack.c.b16 %v431, %v430
  %v571 = vpack.c.b16 %v433, %v432
  %v572 = vpack.c.b16 %v435, %v434
  %v573 = vpack.c.b16 %v437, %v436
  %v574 = vpack.c.b16 %v439, %v438
  %v575 = vpack.c.b16 %v441, %v440
  %v576 = vpack.c.b16 %v443, %v442
  %v577 = vpack.c.b16 %v445, %v444
  %v578 = vpack.c.b16 %v447, %v446
  %v579 = vpack.c.b16 %v449, %v448
  %v580 = vpack.c.b16 %v451, %v450
  %v581 = vpack.c.b16 %v453, %v452
  %v582 = vpack.c.b16 %v455, %v454
  %v583 = vpack.c.b16 %v457, %v456
  %v584 = vpack.c.b16 %v459, %v458
  %v585 = vpack.c.b16 %v461, %v460
  %v586 = vpack.c.b16 %v463, %v462
  %v587 = vpack.c.b16 %v465, %v464
  %v588 = vpack.c.b16 %v467, %v466
  %v589 = vpack.c.b16 %v469, %v468
  %v590 = vpack.c.b16 %v471, %v470
  %v591 = vpack.c.b16 %v473, %v472
  %v592 = vpack.c.b16 %v475, %v474
  %v593 = vpack.c.b16 %v477, %v476
  %v594 = vpack.c.b16 %v479, %v478
  %v595 = vpack.c.b16 %v481, %v480
  %v596 = vpack.c.b16 %v483, %v482
  %v597 = vpack.c.b16 %v485, %v484
  %v598 = vpack.c.b16 %v487, %v486
  %v599 = vpack.c.b16 %v489, %v488
  %v600 = vpack.c.b16 %v491, %v490
  %v601 = vpack.c.b16 %v493, %v492
  %v602 = vpack.c.b16 %v495, %v494
  %v603 = vpack.c.b16 %v497, %v496
  %v604 = vpack.c.b16 %v499, %v498
  %v605 = vpack.c.b16 %v501, %v500
  %v606 = vpack.c.b16 %v503, %v502
  %v607 = vpack.c.b16 %v505, %v504
  %v608 = vpack.c.b16 %v507, %v506
  %v609 = vpack.c.b16 %v509, %v508
  %v610 = vpack.c.b16 %v511, %v510
  %v611 = vpack.c.b16 %v513, %v512
  %v612 = vpack.c.b16 %v515, %v514
  %v613 = vpack.c.b16 %v517, %v516
  %v614 = vpack.c.b16 %v519, %v518
  %v615 = vpack.c.b16 %v521, %v520
  %v616 = vpack.c.b16 %v523, %v522
  %v617 = vpack.c.b16 %v525, %v524
  %v618 = vpack.c.b16 %v527, %v526
  %v619 = vpack.c.b16 %v529, %v528
  %v620 = vpack.c.b16 %v531, %v530
  %v621 = vpack.c.b16 %v533, %v532
  %v622 = vpack.c.b16 %v535, %v534
  %v623 = vpack.c.b16 %v537, %v536
  %v624 = vpack.c.b16 %v539, %v538
  %v625 = vpack.c.b16 %v541, %v540
  %v626 = vpack.c.b16 %v543, %v542
  %v627 = vpack.c.b16 %v545, %v544
  %v628 = vpack.c.b16 %v547, %v546
  %v629 = vpack.c.b16 %v549, %v548
  %v630 = vpack.c.b16 %v551, %v550
  %v631 = vpack.c.b16 %v553, %v552
  %v632 = vpack.c.b16 %v555, %v554
  %v633 = vpack.c.b16 %v557, %v556
  %v634 = vpack.c.b16 %v559, %v558
  %v635 = vpack.c.b16 %v561, %v560
  %v636 = vpack.c.b16 %v563, %v562
  %v637 = vpack.c.b16 %v565, %v564
  %710 = vmatprep.subr.bf16.mxu0 0
  %711 = vmatpush1.bf16.msra.mxu0 %v573
  %712 = vmatprep.subr.bf16.mxu0 0
  %713 = vmatpush1.bf16.msra.mxu0 %v572
  %714 = vmatprep.subr.bf16.mxu0 0
  %715 = vmatpush1.bf16.msra.mxu0 %v571
  %716 = vmatprep.subr.bf16.mxu0 0
  %717 = vmatpush1.bf16.msra.mxu0 %v570
  %718 = vmatprep.subr.bf16.mxu0 0
  %719 = vmatpush1.bf16.msra.mxu0 %v569
  %720 = vmatprep.subr.bf16.mxu0 0
  %721 = vmatpush1.bf16.msra.mxu0 %v568
  %722 = vmatprep.subr.bf16.mxu0 0
  %723 = vmatpush1.bf16.msra.mxu0 %v567
  %724 = vmatprep.subr.bf16.mxu0 0
  %725 = vmatpush1.bf16.msra.mxu0 %v566
  %726 = vmatprep.subr.bf16.mxu0 0
  %727 = vmatpush2.bf16.msra.mxu0 %v581
  %728 = vmatprep.subr.bf16.mxu0 0
  %729 = vmatpush2.bf16.msra.mxu0 %v580
  %730 = vmatprep.subr.bf16.mxu0 0
  %731 = vmatpush2.bf16.msra.mxu0 %v579
  %732 = vmatprep.subr.bf16.mxu0 0
  %733 = vmatpush2.bf16.msra.mxu0 %v578
  %734 = vmatprep.subr.bf16.mxu0 0
  %735 = vmatpush2.bf16.msra.mxu0 %v577
  %736 = vmatprep.subr.bf16.mxu0 0
  %737 = vmatpush2.bf16.msra.mxu0 %v576
  %738 = vmatprep.subr.bf16.mxu0 0
  %739 = vmatpush2.bf16.msra.mxu0 %v575
  %740 = vmatprep.subr.bf16.mxu0 0
  %741 = vmatpush2.bf16.msra.mxu0 %v574
  %742 = vmatprep.mubr.bf16.mxu0 %v243
  %743 = vmatmul.mubr.bf16.gmra.mxu0 %v242
  %v744 = vpop.f32.mrf.mxu0
  %v745 = vadd.f32 %v184, %v744
  %v746 = vpop.f32.mrf.mxu0
  %v747 = vpop.f32.mrf.mxu0
  %v748 = vadd.f32 %v184, %v747
  %v749 = vpop.f32.mrf.mxu0
  %750 = vmatprep.mubr.bf16.mxu0 %v252
  %751 = vmatmul.mubr.bf16.gmra.mxu0 %v251
  %v752 = vpop.f32.mrf.mxu0
  %v753 = vadd.f32 %v184, %v752
  %v754 = vpop.f32.mrf.mxu0
  %v755 = vpop.f32.mrf.mxu0
  %v756 = vadd.f32 %v184, %v755
  %v757 = vpop.f32.mrf.mxu0
  %758 = vdwg.mxu0
  %759 = vmatprep.subr.bf16.mxu0 0
  %760 = vmatpush1.bf16.msra.mxu0 %v589
  %761 = vmatprep.subr.bf16.mxu0 0
  %762 = vmatpush1.bf16.msra.mxu0 %v588
  %763 = vmatprep.subr.bf16.mxu0 0
  %764 = vmatpush1.bf16.msra.mxu0 %v587
  %765 = vmatprep.subr.bf16.mxu0 0
  %766 = vmatpush1.bf16.msra.mxu0 %v586
  %767 = vmatprep.subr.bf16.mxu0 0
  %768 = vmatpush1.bf16.msra.mxu0 %v585
  %769 = vmatprep.subr.bf16.mxu0 0
  %770 = vmatpush1.bf16.msra.mxu0 %v584
  %771 = vmatprep.subr.bf16.mxu0 0
  %772 = vmatpush1.bf16.msra.mxu0 %v583
  %773 = vmatprep.subr.bf16.mxu0 0
  %774 = vmatpush1.bf16.msra.mxu0 %v582
  %775 = vmatprep.subr.bf16.mxu0 0
  %776 = vmatpush2.bf16.msra.mxu0 %v597
  %777 = vmatprep.subr.bf16.mxu0 0
  %778 = vmatpush2.bf16.msra.mxu0 %v596
  %779 = vmatprep.subr.bf16.mxu0 0
  %780 = vmatpush2.bf16.msra.mxu0 %v595
  %781 = vmatprep.subr.bf16.mxu0 0
  %782 = vmatpush2.bf16.msra.mxu0 %v594
  %783 = vmatprep.subr.bf16.mxu0 0
  %784 = vmatpush2.bf16.msra.mxu0 %v593
  %785 = vmatprep.subr.bf16.mxu0 0
  %786 = vmatpush2.bf16.msra.mxu0 %v592
  %787 = vmatprep.subr.bf16.mxu0 0
  %788 = vmatpush2.bf16.msra.mxu0 %v591
  %789 = vmatprep.subr.bf16.mxu0 0
  %790 = vmatpush2.bf16.msra.mxu0 %v590
  %791 = vmatprep.mubr.bf16.mxu0 %v245
  %792 = vmatmul.mubr.bf16.gmra.mxu0 %v244
  %v793 = vpop.f32.mrf.mxu0
  %v794 = vadd.f32 %v745, %v793
  %v795 = vpop.f32.mrf.mxu0
  %v796 = vpop.f32.mrf.mxu0
  %v797 = vadd.f32 %v748, %v796
  %v798 = vpop.f32.mrf.mxu0
  %799 = vmatprep.mubr.bf16.mxu0 %v254
  %800 = vmatmul.mubr.bf16.gmra.mxu0 %v253
  %v801 = vpop.f32.mrf.mxu0
  %v802 = vadd.f32 %v753, %v801
  %v803 = vpop.f32.mrf.mxu0
  %v804 = vpop.f32.mrf.mxu0
  %v805 = vadd.f32 %v756, %v804
  %v806 = vpop.f32.mrf.mxu0
  %807 = vdwg.mxu0
  %808 = vmatprep.subr.bf16.mxu0 0
  %809 = vmatpush1.bf16.msra.mxu0 %v605
  %810 = vmatprep.subr.bf16.mxu0 0
  %811 = vmatpush1.bf16.msra.mxu0 %v604
  %812 = vmatprep.subr.bf16.mxu0 0
  %813 = vmatpush1.bf16.msra.mxu0 %v603
  %814 = vmatprep.subr.bf16.mxu0 0
  %815 = vmatpush1.bf16.msra.mxu0 %v602
  %816 = vmatprep.subr.bf16.mxu0 0
  %817 = vmatpush1.bf16.msra.mxu0 %v601
  %818 = vmatprep.subr.bf16.mxu0 0
  %819 = vmatpush1.bf16.msra.mxu0 %v600
  %820 = vmatprep.subr.bf16.mxu0 0
  %821 = vmatpush1.bf16.msra.mxu0 %v599
  %822 = vmatprep.subr.bf16.mxu0 0
  %823 = vmatpush1.bf16.msra.mxu0 %v598
  %824 = vmatprep.subr.bf16.mxu0 0
  %825 = vmatpush2.bf16.msra.mxu0 %v613
  %826 = vmatprep.subr.bf16.mxu0 0
  %827 = vmatpush2.bf16.msra.mxu0 %v612
  %828 = vmatprep.subr.bf16.mxu0 0
  %829 = vmatpush2.bf16.msra.mxu0 %v611
  %830 = vmatprep.subr.bf16.mxu0 0
  %831 = vmatpush2.bf16.msra.mxu0 %v610
  %832 = vmatprep.subr.bf16.mxu0 0
  %833 = vmatpush2.bf16.msra.mxu0 %v609
  %834 = vmatprep.subr.bf16.mxu0 0
  %835 = vmatpush2.bf16.msra.mxu0 %v608
  %836 = vmatprep.subr.bf16.mxu0 0
  %837 = vmatpush2.bf16.msra.mxu0 %v607
  %838 = vmatprep.subr.bf16.mxu0 0
  %839 = vmatpush2.bf16.msra.mxu0 %v606
  %840 = vmatprep.mubr.bf16.mxu0 %v247
  %841 = vmatmul.mubr.bf16.gmra.mxu0 %v246
  %v842 = vpop.f32.mrf.mxu0
  %v843 = vadd.f32 %v794, %v842
  %v844 = vpop.f32.mrf.mxu0
  %v845 = vpop.f32.mrf.mxu0
  %v846 = vadd.f32 %v797, %v845
  %v847 = vpop.f32.mrf.mxu0
  %848 = vmatprep.mubr.bf16.mxu0 %v256
  %849 = vmatmul.mubr.bf16.gmra.mxu0 %v255
  %v850 = vpop.f32.mrf.mxu0
  %v851 = vadd.f32 %v802, %v850
  %v852 = vpop.f32.mrf.mxu0
  %v853 = vpop.f32.mrf.mxu0
  %v854 = vadd.f32 %v805, %v853
  %v855 = vpop.f32.mrf.mxu0
  %856 = vdwg.mxu0
  %857 = vmatprep.subr.bf16.mxu0 0
  %858 = vmatpush1.bf16.msra.mxu0 %v621
  %859 = vmatprep.subr.bf16.mxu0 0
  %860 = vmatpush1.bf16.msra.mxu0 %v620
  %861 = vmatprep.subr.bf16.mxu0 0
  %862 = vmatpush1.bf16.msra.mxu0 %v619
  %863 = vmatprep.subr.bf16.mxu0 0
  %864 = vmatpush1.bf16.msra.mxu0 %v618
  %865 = vmatprep.subr.bf16.mxu0 0
  %866 = vmatpush1.bf16.msra.mxu0 %v617
  %867 = vmatprep.subr.bf16.mxu0 0
  %868 = vmatpush1.bf16.msra.mxu0 %v616
  %869 = vmatprep.subr.bf16.mxu0 0
  %870 = vmatpush1.bf16.msra.mxu0 %v615
  %871 = vmatprep.subr.bf16.mxu0 0
  %872 = vmatpush1.bf16.msra.mxu0 %v614
  %873 = vmatprep.subr.bf16.mxu0 0
  %874 = vmatpush2.bf16.msra.mxu0 %v629
  %875 = vmatprep.subr.bf16.mxu0 0
  %876 = vmatpush2.bf16.msra.mxu0 %v628
  %877 = vmatprep.subr.bf16.mxu0 0
  %878 = vmatpush2.bf16.msra.mxu0 %v627
  %879 = vmatprep.subr.bf16.mxu0 0
  %880 = vmatpush2.bf16.msra.mxu0 %v626
  %881 = vmatprep.subr.bf16.mxu0 0
  %882 = vmatpush2.bf16.msra.mxu0 %v625
  %883 = vmatprep.subr.bf16.mxu0 0
  %884 = vmatpush2.bf16.msra.mxu0 %v624
  %885 = vmatprep.subr.bf16.mxu0 0
  %886 = vmatpush2.bf16.msra.mxu0 %v623
  %887 = vmatprep.subr.bf16.mxu0 0
  %888 = vmatpush2.bf16.msra.mxu0 %v622
  %889 = vmatprep.mubr.bf16.mxu0 %v249
  %890 = vmatmul.mubr.bf16.gmra.mxu0 %v248
  %v891 = vpop.f32.mrf.mxu0
  %v892 = vadd.f32 %v843, %v891
  %v893 = vpop.f32.mrf.mxu0
  %v894 = vpop.f32.mrf.mxu0
  %v895 = vadd.f32 %v846, %v894
  %v896 = vpop.f32.mrf.mxu0
  %897 = vmatprep.mubr.bf16.mxu0 %v258
  %898 = vmatmul.mubr.bf16.gmra.mxu0 %v257
  %v899 = vpop.f32.mrf.mxu0
  %v900 = vadd.f32 %v851, %v899
  %v901 = vpop.f32.mrf.mxu0
  %v902 = vpop.f32.mrf.mxu0
  %v903 = vadd.f32 %v854, %v902
  %v904 = vpop.f32.mrf.mxu0
  %905 = vdwg.mxu0
  %906 = vmatprep.subr.bf16.mxu0 0
  %907 = vmatpush1.bf16.msra.mxu0 %v637
  %908 = vmatprep.subr.bf16.mxu0 0
  %909 = vmatpush1.bf16.msra.mxu0 %v636
  %910 = vmatprep.subr.bf16.mxu0 0
  %911 = vmatpush1.bf16.msra.mxu0 %v635
  %912 = vmatprep.subr.bf16.mxu0 0
  %913 = vmatpush1.bf16.msra.mxu0 %v634
  %914 = vmatprep.subr.bf16.mxu0 0
  %915 = vmatpush1.bf16.msra.mxu0 %v633
  %916 = vmatprep.subr.bf16.mxu0 0
  %917 = vmatpush1.bf16.msra.mxu0 %v632
  %918 = vmatprep.subr.bf16.mxu0 0
  %919 = vmatpush1.bf16.msra.mxu0 %v631
  %920 = vmatprep.subr.bf16.mxu0 0
  %921 = vmatpush1.bf16.msra.mxu0 %v630
  %922 = vmatprep.subr.bf16.mxu0 0
  %923 = vmatpush2.bf16.msra.mxu0 0
  %924 = vmatprep.subr.bf16.mxu0 0
  %925 = vmatpush2.bf16.msra.mxu0 0
  %926 = vmatprep.subr.bf16.mxu0 0
  %927 = vmatpush2.bf16.msra.mxu0 0
  %928 = vmatprep.subr.bf16.mxu0 0
  %929 = vmatpush2.bf16.msra.mxu0 0
  %930 = vmatprep.subr.bf16.mxu0 0
  %931 = vmatpush2.bf16.msra.mxu0 0
  %932 = vmatprep.subr.bf16.mxu0 0
  %933 = vmatpush2.bf16.msra.mxu0 0
  %934 = vmatprep.subr.bf16.mxu0 0
  %935 = vmatpush2.bf16.msra.mxu0 0
  %936 = vmatprep.subr.bf16.mxu0 0
  %937 = vmatpush2.bf16.msra.mxu0 0
  %938 = vmatprep.mubr.bf16.mxu0 0
  %939 = vmatmul.mubr.bf16.gmra.mxu0 %v250
  %v940 = vpop.f32.mrf.mxu0
  %v941 = vadd.f32 %v892, %v940
  %v942 = vpop.f32.mrf.mxu0
  %v943 = vpop.f32.mrf.mxu0
  %v944 = vadd.f32 %v895, %v943
  %v945 = vpop.f32.mrf.mxu0
  %946 = vmatprep.mubr.bf16.mxu0 0
  %947 = vmatmul.mubr.bf16.gmra.mxu0 %v259
  %v948 = vpop.f32.mrf.mxu0
  %v949 = vadd.f32 %v900, %v948
  %v950 = vpop.f32.mrf.mxu0
  %v951 = vpop.f32.mrf.mxu0
  %v952 = vadd.f32 %v903, %v951
  %v953 = vpop.f32.mrf.mxu0
  %954 = vdwg.mxu0
  %v955 = vmax.f32 %v941, 0.0
  %v956 = vmax.f32 %v944, 0.0
  %v957 = vmax.f32 %v949, 0.0
  %v958 = vmax.f32 %v952, 0.0
  %959 = vst [vmem:[%s3] sm:$0xff] %v955
  %960 = vst [vmem:[%s3 + $0x8] sm:$0xff] %v956
  %961 = vst [vmem:[%s3 + $0x10] sm:$0xff] %v957
  %962 = vst [vmem:[%s3 + $0x18] sm:$0xff] %v958
  // Predicated region
  $region14: #{relight_net_forward.13} parent=0 // pred_check
    _
  $region15: #{relight_net_forward.13} parent=0 // pred_check_branch
    %964 = sbr.rel (0) target = $region17
  $region16: #{relight_net_forward.13} parent=0 // pred_region
    _
  $region17: #{relight_net_forward.13} parent=0 // pred_fallthru
    _
  // Predicated region
  $region18: #{relight_net_forward.13} parent=0 // pred_check
    _
  $region19: #{relight_net_forward.13} parent=0 // pred_check_branch
    %966 = sbr.rel (0) target = $region21
  $region20: #{relight_net_forward.13} parent=0 // pred_region
    _
  $region21: #{relight_net_forward.13} parent=0 // pred_fallthru
    _

// kernel: relight_net_forward.14
$region0: #{relight_net_forward.14}
  #allocation0 [shape = 'u32[]', space=smem, size = 0x4, offset = 0x4, fixed_abs, tag = 'smem constant byte address 0x4 - core index']
  #allocation1 [shape = 'u32[144,128]{1,0:T(1,128)}', space=vmem, size = 0x12000, scoped, tag = 'internal scratch']
  %s0 = inlined_call_operand.vmem [shape: bf16[128,1152], index: 0, kind: input, shape index: {}]
  %s1 = inlined_call_operand.vmem [shape: bf16[1152,128], index: 1, kind: input, shape index: {}]
  %s2 = inlined_call_operand.vmem [shape: f32[1,128], index: 2, kind: input, shape index: {}]
  %s3 = inlined_call_operand.vmem [shape: f32[128,128], index: 3, kind: output, shape index: {}]
  %s4 = sld [smem:[#allocation0]]
  $region22: #{relight_net_forward.14} parent=0
    _
  %s6 = ssub.s32 1, %s4
  %s7 = scalar_select 0, %s6, %s4
  // Predicated region
  $region2: #{relight_net_forward.14} parent=0 // pred_check
    _
  $region3: #{relight_net_forward.14} parent=0 // pred_check_branch
    %9 = sbr.rel (0) target = $region5
  $region4: #{relight_net_forward.14} parent=0 // pred_region
    _
  $region5: #{relight_net_forward.14} parent=0 // pred_fallthru
    _
  // Predicated region
  $region6: #{relight_net_forward.14} parent=0 // pred_check
    _
  $region7: #{relight_net_forward.14} parent=0 // pred_check_branch
    %11 = sbr.rel (0) target = $region9
  $region8: #{relight_net_forward.14} parent=0 // pred_region
    _
  $region9: #{relight_net_forward.14} parent=0 // pred_fallthru
    _
  // Predicated region
  $region10: #{relight_net_forward.14} parent=0 // pred_check
    _
  $region11: #{relight_net_forward.14} parent=0 // pred_check_branch
    %13 = sbr.rel (0) target = $region13
  $region12: #{relight_net_forward.14} parent=0 // pred_region
    _
  $region13: #{relight_net_forward.14} parent=0 // pred_fallthru
    _
  %v15 = vld [vmem:[%s0] sm:$0xff]
  %v16 = vld [vmem:[%s0 + $0x8] sm:$0xff]
  %v17 = vld [vmem:[%s0 + $0x10] sm:$0xff]
  %v18 = vld [vmem:[%s0 + $0x18] sm:$0xff]
  %v19 = vld [vmem:[%s0 + $0x20] sm:$0xf]
  %v20 = vld [vmem:[%s0 + $0x24] sm:$0xff]
  %v21 = vld [vmem:[%s0 + $0x2c] sm:$0xff]
  %v22 = vld [vmem:[%s0 + $0x34] sm:$0xff]
  %v23 = vld [vmem:[%s0 + $0x3c] sm:$0xff]
  %v24 = vld [vmem:[%s0 + $0x44] sm:$0xf]
  %v25 = vld [vmem:[%s0 + $0x48] sm:$0xff]
  %v26 = vld [vmem:[%s0 + $0x50] sm:$0xff]
  %v27 = vld [vmem:[%s0 + $0x58] sm:$0xff]
  %v28 = vld [vmem:[%s0 + $0x60] sm:$0xff]
  %v29 = vld [vmem:[%s0 + $0x68] sm:$0xf]
  %v30 = vld [vmem:[%s0 + $0x6c] sm:$0xff]
  %v31 = vld [vmem:[%s0 + $0x74] sm:$0xff]
  %v32 = vld [vmem:[%s0 + $0x7c] sm:$0xff]
  %v33 = vld [vmem:[%s0 + $0x84] sm:$0xff]
  %v34 = vld [vmem:[%s0 + $0x8c] sm:$0xf]
  %v35 = vld [vmem:[%s0 + $0x90] sm:$0xff]
  %v36 = vld [vmem:[%s0 + $0x98] sm:$0xff]
  %v37 = vld [vmem:[%s0 + $0xa0] sm:$0xff]
  %v38 = vld [vmem:[%s0 + $0xa8] sm:$0xff]
  %v39 = vld [vmem:[%s0 + $0xb0] sm:$0xf]
  %v40 = vld [vmem:[%s0 + $0xb4] sm:$0xff]
  %v41 = vld [vmem:[%s0 + $0xbc] sm:$0xff]
  %v42 = vld [vmem:[%s0 + $0xc4] sm:$0xff]
  %v43 = vld [vmem:[%s0 + $0xcc] sm:$0xff]
  %v44 = vld [vmem:[%s0 + $0xd4] sm:$0xf]
  %v45 = vld [vmem:[%s0 + $0xd8] sm:$0xff]
  %v46 = vld [vmem:[%s0 + $0xe0] sm:$0xff]
  %v47 = vld [vmem:[%s0 + $0xe8] sm:$0xff]
  %v48 = vld [vmem:[%s0 + $0xf0] sm:$0xff]
  %v49 = vld [vmem:[%s0 + $0xf8] sm:$0xf]
  %v50 = vld [vmem:[%s0 + $0xfc] sm:$0xff]
  %v51 = vld [vmem:[%s0 + $0x104] sm:$0xff]
  %v52 = vld [vmem:[%s0 + $0x10c] sm:$0xff]
  %v53 = vld [vmem:[%s0 + $0x114] sm:$0xff]
  %v54 = vld [vmem:[%s0 + $0x11c] sm:$0xf]
  %v55 = vld [vmem:[%s0 + $0x120] sm:$0xff]
  %v56 = vld [vmem:[%s0 + $0x128] sm:$0xff]
  %v57 = vld [vmem:[%s0 + $0x130] sm:$0xff]
  %v58 = vld [vmem:[%s0 + $0x138] sm:$0xff]
  %v59 = vld [vmem:[%s0 + $0x140] sm:$0xf]
  %v60 = vld [vmem:[%s0 + $0x144] sm:$0xff]
  %v61 = vld [vmem:[%s0 + $0x14c] sm:$0xff]
  %v62 = vld [vmem:[%s0 + $0x154] sm:$0xff]
  %v63 = vld [vmem:[%s0 + $0x15c] sm:$0xff]
  %v64 = vld [vmem:[%s0 + $0x164] sm:$0xf]
  %v65 = vld [vmem:[%s0 + $0x168] sm:$0xff]
  %v66 = vld [vmem:[%s0 + $0x170] sm:$0xff]
  %v67 = vld [vmem:[%s0 + $0x178] sm:$0xff]
  %v68 = vld [vmem:[%s0 + $0x180] sm:$0xff]
  %v69 = vld [vmem:[%s0 + $0x188] sm:$0xf]
  %v70 = vld [vmem:[%s0 + $0x18c] sm:$0xff]
  %v71 = vld [vmem:[%s0 + $0x194] sm:$0xff]
  %v72 = vld [vmem:[%s0 + $0x19c] sm:$0xff]
  %v73 = vld [vmem:[%s0 + $0x1a4] sm:$0xff]
  %v74 = vld [vmem:[%s0 + $0x1ac] sm:$0xf]
  %v75 = vld [vmem:[%s0 + $0x1b0] sm:$0xff]
  %v76 = vld [vmem:[%s0 + $0x1b8] sm:$0xff]
  %v77 = vld [vmem:[%s0 + $0x1c0] sm:$0xff]
  %v78 = vld [vmem:[%s0 + $0x1c8] sm:$0xff]
  %v79 = vld [vmem:[%s0 + $0x1d0] sm:$0xf]
  %v80 = vld [vmem:[%s0 + $0x1d4] sm:$0xff]
  %v81 = vld [vmem:[%s0 + $0x1dc] sm:$0xff]
  %v82 = vld [vmem:[%s0 + $0x1e4] sm:$0xff]
  %v83 = vld [vmem:[%s0 + $0x1ec] sm:$0xff]
  %v84 = vld [vmem:[%s0 + $0x1f4] sm:$0xf]
  %v85 = vld [vmem:[%s0 + $0x1f8] sm:$0xff]
  %v86 = vld [vmem:[%s0 + $0x200] sm:$0xff]
  %v87 = vld [vmem:[%s0 + $0x208] sm:$0xff]
  %v88 = vld [vmem:[%s0 + $0x210] sm:$0xff]
  %v89 = vld [vmem:[%s0 + $0x218] sm:$0xf]
  %v90 = vld [vmem:[%s0 + $0x21c] sm:$0xff]
  %v91 = vld [vmem:[%s0 + $0x224] sm:$0xff]
  %v92 = vld [vmem:[%s0 + $0x22c] sm:$0xff]
  %v93 = vld [vmem:[%s0 + $0x234] sm:$0xff]
  %v94 = vld [vmem:[%s0 + $0x23c] sm:$0xf]
  %v95 = vld [vmem:[%s1] sm:$0xf]
  %v96 = vld [vmem:[%s1 + $0x4] sm:$0xf]
  %v97 = vld [vmem:[%s1 + $0x8] sm:$0xf]
  %v98 = vld [vmem:[%s1 + $0xc] sm:$0xf]
  %v99 = vld [vmem:[%s1 + $0x10] sm:$0xf]
  %v100 = vld [vmem:[%s1 + $0x14] sm:$0xf]
  %v101 = vld [vmem:[%s1 + $0x18] sm:$0xf]
  %v102 = vld [vmem:[%s1 + $0x1c] sm:$0xf]
  %v103 = vld [vmem:[%s1 + $0x20] sm:$0xf]
  %v104 = vld [vmem:[%s1 + $0x24] sm:$0xf]
  %v105 = vld [vmem:[%s1 + $0x28] sm:$0xf]
  %v106 = vld [vmem:[%s1 + $0x2c] sm:$0xf]
  %v107 = vld [vmem:[%s1 + $0x30] sm:$0xf]
  %v108 = vld [vmem:[%s1 + $0x34] sm:$0xf]
  %v109 = vld [vmem:[%s1 + $0x38] sm:$0xf]
  %v110 = vld [vmem:[%s1 + $0x3c] sm:$0xf]
  %v111 = vld [vmem:[%s1 + $0x40] sm:$0xf]
  %v112 = vld [vmem:[%s1 + $0x44] sm:$0xf]
  %v113 = vld [vmem:[%s1 + $0x48] sm:$0xf]
  %v114 = vld [vmem:[%s1 + $0x4c] sm:$0xf]
  %v115 = vld [vmem:[%s1 + $0x50] sm:$0xf]
  %v116 = vld [vmem:[%s1 + $0x54] sm:$0xf]
  %v117 = vld [vmem:[%s1 + $0x58] sm:$0xf]
  %v118 = vld [vmem:[%s1 + $0x5c] sm:$0xf]
  %v119 = vld [vmem:[%s1 + $0x60] sm:$0xf]
  %v120 = vld [vmem:[%s1 + $0x64] sm:$0xf]
  %v121 = vld [vmem:[%s1 + $0x68] sm:$0xf]
  %v122 = vld [vmem:[%s1 + $0x6c] sm:$0xf]
  %v123 = vld [vmem:[%s1 + $0x70] sm:$0xf]
  %v124 = vld [vmem:[%s1 + $0x74] sm:$0xf]
  %v125 = vld [vmem:[%s1 + $0x78] sm:$0xf]
  %v126 = vld [vmem:[%s1 + $0x7c] sm:$0xf]
  %v127 = vld [vmem:[%s1 + $0x80] sm:$0xf]
  %v128 = vld [vmem:[%s1 + $0x84] sm:$0xf]
  %v129 = vld [vmem:[%s1 + $0x88] sm:$0xf]
  %v130 = vld [vmem:[%s1 + $0x8c] sm:$0xf]
  %v131 = vld [vmem:[%s1 + $0x90] sm:$0xf]
  %v132 = vld [vmem:[%s1 + $0x94] sm:$0xf]
  %v133 = vld [vmem:[%s1 + $0x98] sm:$0xf]
  %v134 = vld [vmem:[%s1 + $0x9c] sm:$0xf]
  %v135 = vld [vmem:[%s1 + $0xa0] sm:$0xf]
  %v136 = vld [vmem:[%s1 + $0xa4] sm:$0xf]
  %v137 = vld [vmem:[%s1 + $0xa8] sm:$0xf]
  %v138 = vld [vmem:[%s1 + $0xac] sm:$0xf]
  %v139 = vld [vmem:[%s1 + $0xb0] sm:$0xf]
  %v140 = vld [vmem:[%s1 + $0xb4] sm:$0xf]
  %v141 = vld [vmem:[%s1 + $0xb8] sm:$0xf]
  %v142 = vld [vmem:[%s1 + $0xbc] sm:$0xf]
  %v143 = vld [vmem:[%s1 + $0xc0] sm:$0xf]
  %v144 = vld [vmem:[%s1 + $0xc4] sm:$0xf]
  %v145 = vld [vmem:[%s1 + $0xc8] sm:$0xf]
  %v146 = vld [vmem:[%s1 + $0xcc] sm:$0xf]
  %v147 = vld [vmem:[%s1 + $0xd0] sm:$0xf]
  %v148 = vld [vmem:[%s1 + $0xd4] sm:$0xf]
  %v149 = vld [vmem:[%s1 + $0xd8] sm:$0xf]
  %v150 = vld [vmem:[%s1 + $0xdc] sm:$0xf]
  %v151 = vld [vmem:[%s1 + $0xe0] sm:$0xf]
  %v152 = vld [vmem:[%s1 + $0xe4] sm:$0xf]
  %v153 = vld [vmem:[%s1 + $0xe8] sm:$0xf]
  %v154 = vld [vmem:[%s1 + $0xec] sm:$0xf]
  %v155 = vld [vmem:[%s1 + $0xf0] sm:$0xf]
  %v156 = vld [vmem:[%s1 + $0xf4] sm:$0xf]
  %v157 = vld [vmem:[%s1 + $0xf8] sm:$0xf]
  %v158 = vld [vmem:[%s1 + $0xfc] sm:$0xf]
  %v159 = vld [vmem:[%s1 + $0x100] sm:$0xf]
  %v160 = vld [vmem:[%s1 + $0x104] sm:$0xf]
  %v161 = vld [vmem:[%s1 + $0x108] sm:$0xf]
  %v162 = vld [vmem:[%s1 + $0x10c] sm:$0xf]
  %v163 = vld [vmem:[%s1 + $0x110] sm:$0xf]
  %v164 = vld [vmem:[%s1 + $0x114] sm:$0xf]
  %v165 = vld [vmem:[%s1 + $0x118] sm:$0xf]
  %v166 = vld [vmem:[%s1 + $0x11c] sm:$0xf]
  %v167 = vld [vmem:[%s1 + $0x120] sm:$0xf]
  %v168 = vld [vmem:[%s1 + $0x124] sm:$0xf]
  %v169 = vld [vmem:[%s1 + $0x128] sm:$0xf]
  %v170 = vld [vmem:[%s1 + $0x12c] sm:$0xf]
  %v171 = vld [vmem:[%s1 + $0x130] sm:$0xf]
  %v172 = vld [vmem:[%s1 + $0x134] sm:$0xf]
  %v173 = vld [vmem:[%s1 + $0x138] sm:$0xf]
  %v174 = vld [vmem:[%s1 + $0x13c] sm:$0xf]
  %v175 = vld [vmem:[%s1 + $0x140] sm:$0xf]
  %v176 = vld [vmem:[%s1 + $0x144] sm:$0xf]
  %v177 = vld [vmem:[%s1 + $0x148] sm:$0xf]
  %v178 = vld [vmem:[%s1 + $0x14c] sm:$0xf]
  %v179 = vld [vmem:[%s1 + $0x150] sm:$0xf]
  %v180 = vld [vmem:[%s1 + $0x154] sm:$0xf]
  %v181 = vld [vmem:[%s1 + $0x158] sm:$0xf]
  %v182 = vld [vmem:[%s1 + $0x15c] sm:$0xf]
  %v183 = vld [vmem:[%s1 + $0x160] sm:$0xf]
  %v184 = vld [vmem:[%s1 + $0x164] sm:$0xf]
  %v185 = vld [vmem:[%s1 + $0x168] sm:$0xf]
  %v186 = vld [vmem:[%s1 + $0x16c] sm:$0xf]
  %v187 = vld [vmem:[%s1 + $0x170] sm:$0xf]
  %v188 = vld [vmem:[%s1 + $0x174] sm:$0xf]
  %v189 = vld [vmem:[%s1 + $0x178] sm:$0xf]
  %v190 = vld [vmem:[%s1 + $0x17c] sm:$0xf]
  %v191 = vld [vmem:[%s1 + $0x180] sm:$0xf]
  %v192 = vld [vmem:[%s1 + $0x184] sm:$0xf]
  %v193 = vld [vmem:[%s1 + $0x188] sm:$0xf]
  %v194 = vld [vmem:[%s1 + $0x18c] sm:$0xf]
  %v195 = vld [vmem:[%s1 + $0x190] sm:$0xf]
  %v196 = vld [vmem:[%s1 + $0x194] sm:$0xf]
  %v197 = vld [vmem:[%s1 + $0x198] sm:$0xf]
  %v198 = vld [vmem:[%s1 + $0x19c] sm:$0xf]
  %v199 = vld [vmem:[%s1 + $0x1a0] sm:$0xf]
  %v200 = vld [vmem:[%s1 + $0x1a4] sm:$0xf]
  %v201 = vld [vmem:[%s1 + $0x1a8] sm:$0xf]
  %v202 = vld [vmem:[%s1 + $0x1ac] sm:$0xf]
  %v203 = vld [vmem:[%s1 + $0x1b0] sm:$0xf]
  %v204 = vld [vmem:[%s1 + $0x1b4] sm:$0xf]
  %v205 = vld [vmem:[%s1 + $0x1b8] sm:$0xf]
  %v206 = vld [vmem:[%s1 + $0x1bc] sm:$0xf]
  %v207 = vld [vmem:[%s1 + $0x1c0] sm:$0xf]
  %v208 = vld [vmem:[%s1 + $0x1c4] sm:$0xf]
  %v209 = vld [vmem:[%s1 + $0x1c8] sm:$0xf]
  %v210 = vld [vmem:[%s1 + $0x1cc] sm:$0xf]
  %v211 = vld [vmem:[%s1 + $0x1d0] sm:$0xf]
  %v212 = vld [vmem:[%s1 + $0x1d4] sm:$0xf]
  %v213 = vld [vmem:[%s1 + $0x1d8] sm:$0xf]
  %v214 = vld [vmem:[%s1 + $0x1dc] sm:$0xf]
  %v215 = vld [vmem:[%s1 + $0x1e0] sm:$0xf]
  %v216 = vld [vmem:[%s1 + $0x1e4] sm:$0xf]
  %v217 = vld [vmem:[%s1 + $0x1e8] sm:$0xf]
  %v218 = vld [vmem:[%s1 + $0x1ec] sm:$0xf]
  %v219 = vld [vmem:[%s1 + $0x1f0] sm:$0xf]
  %v220 = vld [vmem:[%s1 + $0x1f4] sm:$0xf]
  %v221 = vld [vmem:[%s1 + $0x1f8] sm:$0xf]
  %v222 = vld [vmem:[%s1 + $0x1fc] sm:$0xf]
  %v223 = vld [vmem:[%s1 + $0x200] sm:$0xf]
  %v224 = vld [vmem:[%s1 + $0x204] sm:$0xf]
  %v225 = vld [vmem:[%s1 + $0x208] sm:$0xf]
  %v226 = vld [vmem:[%s1 + $0x20c] sm:$0xf]
  %v227 = vld [vmem:[%s1 + $0x210] sm:$0xf]
  %v228 = vld [vmem:[%s1 + $0x214] sm:$0xf]
  %v229 = vld [vmem:[%s1 + $0x218] sm:$0xf]
  %v230 = vld [vmem:[%s1 + $0x21c] sm:$0xf]
  %v231 = vld [vmem:[%s1 + $0x220] sm:$0xf]
  %v232 = vld [vmem:[%s1 + $0x224] sm:$0xf]
  %v233 = vld [vmem:[%s1 + $0x228] sm:$0xf]
  %v234 = vld [vmem:[%s1 + $0x22c] sm:$0xf]
  %v235 = vld [vmem:[%s1 + $0x230] sm:$0xf]
  %v236 = vld [vmem:[%s1 + $0x234] sm:$0xf]
  %v237 = vld [vmem:[%s1 + $0x238] sm:$0xf]
  %v238 = vld [vmem:[%s1 + $0x23c] sm:$0xf]
  %v239 = vld [vmem:[%s2] sm:$0x1]
  %v241 = vlaneseq
  %v242 = vshrl.u32 %v241, 7
  %v243 = vsub.s32 0, %v242
  %v244 = vrot.slane %v239, %v243
  %v326 = vunpack.c.l.b16 %v15
  %v327 = vunpack.c.h.b16 %v15
  %v328 = vunpack.c.l.b16 %v16
  %v329 = vunpack.c.h.b16 %v16
  %v330 = vunpack.c.l.b16 %v17
  %v331 = vunpack.c.h.b16 %v17
  %v332 = vunpack.c.l.b16 %v18
  %v333 = vunpack.c.h.b16 %v18
  %v334 = vunpack.c.l.b16 %v19
  %v335 = vunpack.c.l.b16 %v20
  %v336 = vunpack.c.h.b16 %v20
  %v337 = vunpack.c.l.b16 %v21
  %v338 = vunpack.c.h.b16 %v21
  %v339 = vunpack.c.l.b16 %v22
  %v340 = vunpack.c.h.b16 %v22
  %v341 = vunpack.c.l.b16 %v23
  %v342 = vunpack.c.h.b16 %v23
  %v343 = vunpack.c.l.b16 %v24
  %v344 = vunpack.c.l.b16 %v25
  %v345 = vunpack.c.h.b16 %v25
  %v346 = vunpack.c.l.b16 %v26
  %v347 = vunpack.c.h.b16 %v26
  %v348 = vunpack.c.l.b16 %v27
  %v349 = vunpack.c.h.b16 %v27
  %v350 = vunpack.c.l.b16 %v28
  %v351 = vunpack.c.h.b16 %v28
  %v352 = vunpack.c.l.b16 %v29
  %v353 = vunpack.c.l.b16 %v30
  %v354 = vunpack.c.h.b16 %v30
  %v355 = vunpack.c.l.b16 %v31
  %v356 = vunpack.c.h.b16 %v31
  %v357 = vunpack.c.l.b16 %v32
  %v358 = vunpack.c.h.b16 %v32
  %v359 = vunpack.c.l.b16 %v33
  %v360 = vunpack.c.h.b16 %v33
  %v361 = vunpack.c.l.b16 %v34
  %v362 = vunpack.c.l.b16 %v35
  %v363 = vunpack.c.h.b16 %v35
  %v364 = vunpack.c.l.b16 %v36
  %v365 = vunpack.c.h.b16 %v36
  %v366 = vunpack.c.l.b16 %v37
  %v367 = vunpack.c.h.b16 %v37
  %v368 = vunpack.c.l.b16 %v38
  %v369 = vunpack.c.h.b16 %v38
  %v370 = vunpack.c.l.b16 %v39
  %v371 = vunpack.c.l.b16 %v40
  %v372 = vunpack.c.h.b16 %v40
  %v373 = vunpack.c.l.b16 %v41
  %v374 = vunpack.c.h.b16 %v41
  %v375 = vunpack.c.l.b16 %v42
  %v376 = vunpack.c.h.b16 %v42
  %v377 = vunpack.c.l.b16 %v43
  %v378 = vunpack.c.h.b16 %v43
  %v379 = vunpack.c.l.b16 %v44
  %v380 = vunpack.c.l.b16 %v45
  %v381 = vunpack.c.h.b16 %v45
  %v382 = vunpack.c.l.b16 %v46
  %v383 = vunpack.c.h.b16 %v46
  %v384 = vunpack.c.l.b16 %v47
  %v385 = vunpack.c.h.b16 %v47
  %v386 = vunpack.c.l.b16 %v48
  %v387 = vunpack.c.h.b16 %v48
  %v388 = vunpack.c.l.b16 %v49
  %v389 = vunpack.c.l.b16 %v50
  %v390 = vunpack.c.h.b16 %v50
  %v391 = vunpack.c.l.b16 %v51
  %v392 = vunpack.c.h.b16 %v51
  %v393 = vunpack.c.l.b16 %v52
  %v394 = vunpack.c.h.b16 %v52
  %v395 = vunpack.c.l.b16 %v53
  %v396 = vunpack.c.h.b16 %v53
  %v397 = vunpack.c.l.b16 %v54
  %v398 = vunpack.c.l.b16 %v55
  %v399 = vunpack.c.h.b16 %v55
  %v400 = vunpack.c.l.b16 %v56
  %v401 = vunpack.c.h.b16 %v56
  %v402 = vunpack.c.l.b16 %v57
  %v403 = vunpack.c.h.b16 %v57
  %v404 = vunpack.c.l.b16 %v58
  %v405 = vunpack.c.h.b16 %v58
  %v406 = vunpack.c.l.b16 %v59
  %v407 = vunpack.c.l.b16 %v60
  %v408 = vunpack.c.h.b16 %v60
  %v409 = vunpack.c.l.b16 %v61
  %v410 = vunpack.c.h.b16 %v61
  %v411 = vunpack.c.l.b16 %v62
  %v412 = vunpack.c.h.b16 %v62
  %v413 = vunpack.c.l.b16 %v63
  %v414 = vunpack.c.h.b16 %v63
  %v415 = vunpack.c.l.b16 %v64
  %v416 = vunpack.c.l.b16 %v65
  %v417 = vunpack.c.h.b16 %v65
  %v418 = vunpack.c.l.b16 %v66
  %v419 = vunpack.c.h.b16 %v66
  %v420 = vunpack.c.l.b16 %v67
  %v421 = vunpack.c.h.b16 %v67
  %v422 = vunpack.c.l.b16 %v68
  %v423 = vunpack.c.h.b16 %v68
  %v424 = vunpack.c.l.b16 %v69
  %v425 = vunpack.c.l.b16 %v70
  %v426 = vunpack.c.h.b16 %v70
  %v427 = vunpack.c.l.b16 %v71
  %v428 = vunpack.c.h.b16 %v71
  %v429 = vunpack.c.l.b16 %v72
  %v430 = vunpack.c.h.b16 %v72
  %v431 = vunpack.c.l.b16 %v73
  %v432 = vunpack.c.h.b16 %v73
  %v433 = vunpack.c.l.b16 %v74
  %v434 = vunpack.c.l.b16 %v75
  %v435 = vunpack.c.h.b16 %v75
  %v436 = vunpack.c.l.b16 %v76
  %v437 = vunpack.c.h.b16 %v76
  %v438 = vunpack.c.l.b16 %v77
  %v439 = vunpack.c.h.b16 %v77
  %v440 = vunpack.c.l.b16 %v78
  %v441 = vunpack.c.h.b16 %v78
  %v442 = vunpack.c.l.b16 %v79
  %v443 = vunpack.c.l.b16 %v80
  %v444 = vunpack.c.h.b16 %v80
  %v445 = vunpack.c.l.b16 %v81
  %v446 = vunpack.c.h.b16 %v81
  %v447 = vunpack.c.l.b16 %v82
  %v448 = vunpack.c.h.b16 %v82
  %v449 = vunpack.c.l.b16 %v83
  %v450 = vunpack.c.h.b16 %v83
  %v451 = vunpack.c.l.b16 %v84
  %v452 = vunpack.c.l.b16 %v85
  %v453 = vunpack.c.h.b16 %v85
  %v454 = vunpack.c.l.b16 %v86
  %v455 = vunpack.c.h.b16 %v86
  %v456 = vunpack.c.l.b16 %v87
  %v457 = vunpack.c.h.b16 %v87
  %v458 = vunpack.c.l.b16 %v88
  %v459 = vunpack.c.h.b16 %v88
  %v460 = vunpack.c.l.b16 %v89
  %v461 = vunpack.c.l.b16 %v90
  %v462 = vunpack.c.h.b16 %v90
  %v463 = vunpack.c.l.b16 %v91
  %v464 = vunpack.c.h.b16 %v91
  %v465 = vunpack.c.l.b16 %v92
  %v466 = vunpack.c.h.b16 %v92
  %v467 = vunpack.c.l.b16 %v93
  %v468 = vunpack.c.h.b16 %v93
  %v469 = vunpack.c.l.b16 %v94
  %v470 = vpack.c.b16 %v335, %v326
  %v471 = vpack.c.b16 %v336, %v327
  %v472 = vpack.c.b16 %v337, %v328
  %v473 = vpack.c.b16 %v338, %v329
  %v474 = vpack.c.b16 %v339, %v330
  %v475 = vpack.c.b16 %v340, %v331
  %v476 = vpack.c.b16 %v341, %v332
  %v477 = vpack.c.b16 %v342, %v333
  %v478 = vpack.c.b16 %v343, %v334
  %v479 = vpack.c.b16 %v353, %v344
  %v480 = vpack.c.b16 %v354, %v345
  %v481 = vpack.c.b16 %v355, %v346
  %v482 = vpack.c.b16 %v356, %v347
  %v483 = vpack.c.b16 %v357, %v348
  %v484 = vpack.c.b16 %v358, %v349
  %v485 = vpack.c.b16 %v359, %v350
  %v486 = vpack.c.b16 %v360, %v351
  %v487 = vpack.c.b16 %v361, %v352
  %v488 = vpack.c.b16 %v371, %v362
  %v489 = vpack.c.b16 %v372, %v363
  %v490 = vpack.c.b16 %v373, %v364
  %v491 = vpack.c.b16 %v374, %v365
  %v492 = vpack.c.b16 %v375, %v366
  %v493 = vpack.c.b16 %v376, %v367
  %v494 = vpack.c.b16 %v377, %v368
  %v495 = vpack.c.b16 %v378, %v369
  %v496 = vpack.c.b16 %v379, %v370
  %v497 = vpack.c.b16 %v389, %v380
  %v498 = vpack.c.b16 %v390, %v381
  %v499 = vpack.c.b16 %v391, %v382
  %v500 = vpack.c.b16 %v392, %v383
  %v501 = vpack.c.b16 %v393, %v384
  %v502 = vpack.c.b16 %v394, %v385
  %v503 = vpack.c.b16 %v395, %v386
  %v504 = vpack.c.b16 %v396, %v387
  %v505 = vpack.c.b16 %v397, %v388
  %v506 = vpack.c.b16 %v407, %v398
  %v507 = vpack.c.b16 %v408, %v399
  %v508 = vpack.c.b16 %v409, %v400
  %v509 = vpack.c.b16 %v410, %v401
  %v510 = vpack.c.b16 %v411, %v402
  %v511 = vpack.c.b16 %v412, %v403
  %v512 = vpack.c.b16 %v413, %v404
  %v513 = vpack.c.b16 %v414, %v405
  %v514 = vpack.c.b16 %v415, %v406
  %v515 = vpack.c.b16 %v425, %v416
  %v516 = vpack.c.b16 %v426, %v417
  %v517 = vpack.c.b16 %v427, %v418
  %v518 = vpack.c.b16 %v428, %v419
  %v519 = vpack.c.b16 %v429, %v420
  %v520 = vpack.c.b16 %v430, %v421
  %v521 = vpack.c.b16 %v431, %v422
  %v522 = vpack.c.b16 %v432, %v423
  %v523 = vpack.c.b16 %v433, %v424
  %v524 = vpack.c.b16 %v443, %v434
  %v525 = vpack.c.b16 %v444, %v435
  %v526 = vpack.c.b16 %v445, %v436
  %v527 = vpack.c.b16 %v446, %v437
  %v528 = vpack.c.b16 %v447, %v438
  %v529 = vpack.c.b16 %v448, %v439
  %v530 = vpack.c.b16 %v449, %v440
  %v531 = vpack.c.b16 %v450, %v441
  %v532 = vpack.c.b16 %v451, %v442
  %v533 = vpack.c.b16 %v461, %v452
  %v534 = vpack.c.b16 %v462, %v453
  %v535 = vpack.c.b16 %v463, %v454
  %v536 = vpack.c.b16 %v464, %v455
  %v537 = vpack.c.b16 %v465, %v456
  %v538 = vpack.c.b16 %v466, %v457
  %v539 = vpack.c.b16 %v467, %v458
  %v540 = vpack.c.b16 %v468, %v459
  %v541 = vpack.c.b16 %v469, %v460
  %v758 = vunpack.c.l.b16 %v95
  %v759 = vunpack.c.l.b16 %v96
  %v760 = vunpack.c.l.b16 %v97
  %v761 = vunpack.c.l.b16 %v98
  %v762 = vunpack.c.l.b16 %v99
  %v763 = vunpack.c.l.b16 %v100
  %v764 = vunpack.c.l.b16 %v101
  %v765 = vunpack.c.l.b16 %v102
  %v766 = vunpack.c.l.b16 %v103
  %v767 = vunpack.c.l.b16 %v104
  %v768 = vunpack.c.l.b16 %v105
  %v769 = vunpack.c.l.b16 %v106
  %v770 = vunpack.c.l.b16 %v107
  %v771 = vunpack.c.l.b16 %v108
  %v772 = vunpack.c.l.b16 %v109
  %v773 = vunpack.c.l.b16 %v110
  %v774 = vunpack.c.l.b16 %v111
  %v775 = vunpack.c.l.b16 %v112
  %v776 = vunpack.c.l.b16 %v113
  %v777 = vunpack.c.l.b16 %v114
  %v778 = vunpack.c.l.b16 %v115
  %v779 = vunpack.c.l.b16 %v116
  %v780 = vunpack.c.l.b16 %v117
  %v781 = vunpack.c.l.b16 %v118
  %v782 = vunpack.c.l.b16 %v119
  %v783 = vunpack.c.l.b16 %v120
  %v784 = vunpack.c.l.b16 %v121
  %v785 = vunpack.c.l.b16 %v122
  %v786 = vunpack.c.l.b16 %v123
  %v787 = vunpack.c.l.b16 %v124
  %v788 = vunpack.c.l.b16 %v125
  %v789 = vunpack.c.l.b16 %v126
  %v790 = vunpack.c.l.b16 %v127
  %v791 = vunpack.c.l.b16 %v128
  %v792 = vunpack.c.l.b16 %v129
  %v793 = vunpack.c.l.b16 %v130
  %v794 = vunpack.c.l.b16 %v131
  %v795 = vunpack.c.l.b16 %v132
  %v796 = vunpack.c.l.b16 %v133
  %v797 = vunpack.c.l.b16 %v134
  %v798 = vunpack.c.l.b16 %v135
  %v799 = vunpack.c.l.b16 %v136
  %v800 = vunpack.c.l.b16 %v137
  %v801 = vunpack.c.l.b16 %v138
  %v802 = vunpack.c.l.b16 %v139
  %v803 = vunpack.c.l.b16 %v140
  %v804 = vunpack.c.l.b16 %v141
  %v805 = vunpack.c.l.b16 %v142
  %v806 = vunpack.c.l.b16 %v143
  %v807 = vunpack.c.l.b16 %v144
  %v808 = vunpack.c.l.b16 %v145
  %v809 = vunpack.c.l.b16 %v146
  %v810 = vunpack.c.l.b16 %v147
  %v811 = vunpack.c.l.b16 %v148
  %v812 = vunpack.c.l.b16 %v149
  %v813 = vunpack.c.l.b16 %v150
  %v814 = vunpack.c.l.b16 %v151
  %v815 = vunpack.c.l.b16 %v152
  %v816 = vunpack.c.l.b16 %v153
  %v817 = vunpack.c.l.b16 %v154
  %v818 = vunpack.c.l.b16 %v155
  %v819 = vunpack.c.l.b16 %v156
  %v820 = vunpack.c.l.b16 %v157
  %v821 = vunpack.c.l.b16 %v158
  %v822 = vunpack.c.l.b16 %v159
  %v823 = vunpack.c.l.b16 %v160
  %v824 = vunpack.c.l.b16 %v161
  %v825 = vunpack.c.l.b16 %v162
  %v826 = vunpack.c.l.b16 %v163
  %v827 = vunpack.c.l.b16 %v164
  %v828 = vunpack.c.l.b16 %v165
  %v829 = vunpack.c.l.b16 %v166
  %v830 = vunpack.c.l.b16 %v167
  %v831 = vunpack.c.l.b16 %v168
  %v832 = vunpack.c.l.b16 %v169
  %v833 = vunpack.c.l.b16 %v170
  %v834 = vunpack.c.l.b16 %v171
  %v835 = vunpack.c.l.b16 %v172
  %v836 = vunpack.c.l.b16 %v173
  %v837 = vunpack.c.l.b16 %v174
  %v838 = vunpack.c.l.b16 %v175
  %v839 = vunpack.c.l.b16 %v176
  %v840 = vunpack.c.l.b16 %v177
  %v841 = vunpack.c.l.b16 %v178
  %v842 = vunpack.c.l.b16 %v179
  %v843 = vunpack.c.l.b16 %v180
  %v844 = vunpack.c.l.b16 %v181
  %v845 = vunpack.c.l.b16 %v182
  %v846 = vunpack.c.l.b16 %v183
  %v847 = vunpack.c.l.b16 %v184
  %v848 = vunpack.c.l.b16 %v185
  %v849 = vunpack.c.l.b16 %v186
  %v850 = vunpack.c.l.b16 %v187
  %v851 = vunpack.c.l.b16 %v188
  %v852 = vunpack.c.l.b16 %v189
  %v853 = vunpack.c.l.b16 %v190
  %v854 = vunpack.c.l.b16 %v191
  %v855 = vunpack.c.l.b16 %v192
  %v856 = vunpack.c.l.b16 %v193
  %v857 = vunpack.c.l.b16 %v194
  %v858 = vunpack.c.l.b16 %v195
  %v859 = vunpack.c.l.b16 %v196
  %v860 = vunpack.c.l.b16 %v197
  %v861 = vunpack.c.l.b16 %v198
  %v862 = vunpack.c.l.b16 %v199
  %v863 = vunpack.c.l.b16 %v200
  %v864 = vunpack.c.l.b16 %v201
  %v865 = vunpack.c.l.b16 %v202
  %v866 = vunpack.c.l.b16 %v203
  %v867 = vunpack.c.l.b16 %v204
  %v868 = vunpack.c.l.b16 %v205
  %v869 = vunpack.c.l.b16 %v206
  %v870 = vunpack.c.l.b16 %v207
  %v871 = vunpack.c.l.b16 %v208
  %v872 = vunpack.c.l.b16 %v209
  %v873 = vunpack.c.l.b16 %v210
  %v874 = vunpack.c.l.b16 %v211
  %v875 = vunpack.c.l.b16 %v212
  %v876 = vunpack.c.l.b16 %v213
  %v877 = vunpack.c.l.b16 %v214
  %v878 = vunpack.c.l.b16 %v215
  %v879 = vunpack.c.l.b16 %v216
  %v880 = vunpack.c.l.b16 %v217
  %v881 = vunpack.c.l.b16 %v218
  %v882 = vunpack.c.l.b16 %v219
  %v883 = vunpack.c.l.b16 %v220
  %v884 = vunpack.c.l.b16 %v221
  %v885 = vunpack.c.l.b16 %v222
  %v886 = vunpack.c.l.b16 %v223
  %v887 = vunpack.c.l.b16 %v224
  %v888 = vunpack.c.l.b16 %v225
  %v889 = vunpack.c.l.b16 %v226
  %v890 = vunpack.c.l.b16 %v227
  %v891 = vunpack.c.l.b16 %v228
  %v892 = vunpack.c.l.b16 %v229
  %v893 = vunpack.c.l.b16 %v230
  %v894 = vunpack.c.l.b16 %v231
  %v895 = vunpack.c.l.b16 %v232
  %v896 = vunpack.c.l.b16 %v233
  %v897 = vunpack.c.l.b16 %v234
  %v898 = vunpack.c.l.b16 %v235
  %v899 = vunpack.c.l.b16 %v236
  %v900 = vunpack.c.l.b16 %v237
  %v901 = vunpack.c.l.b16 %v238
  %v902 = vpack.c.b16 %v759, %v758
  %v903 = vpack.c.b16 %v761, %v760
  %v904 = vpack.c.b16 %v763, %v762
  %v905 = vpack.c.b16 %v765, %v764
  %v906 = vpack.c.b16 %v767, %v766
  %v907 = vpack.c.b16 %v769, %v768
  %v908 = vpack.c.b16 %v771, %v770
  %v909 = vpack.c.b16 %v773, %v772
  %v910 = vpack.c.b16 %v775, %v774
  %v911 = vpack.c.b16 %v777, %v776
  %v912 = vpack.c.b16 %v779, %v778
  %v913 = vpack.c.b16 %v781, %v780
  %v914 = vpack.c.b16 %v783, %v782
  %v915 = vpack.c.b16 %v785, %v784
  %v916 = vpack.c.b16 %v787, %v786
  %v917 = vpack.c.b16 %v789, %v788
  %v918 = vpack.c.b16 %v791, %v790
  %v919 = vpack.c.b16 %v793, %v792
  %v920 = vpack.c.b16 %v795, %v794
  %v921 = vpack.c.b16 %v797, %v796
  %v922 = vpack.c.b16 %v799, %v798
  %v923 = vpack.c.b16 %v801, %v800
  %v924 = vpack.c.b16 %v803, %v802
  %v925 = vpack.c.b16 %v805, %v804
  %v926 = vpack.c.b16 %v807, %v806
  %v927 = vpack.c.b16 %v809, %v808
  %v928 = vpack.c.b16 %v811, %v810
  %v929 = vpack.c.b16 %v813, %v812
  %v930 = vpack.c.b16 %v815, %v814
  %v931 = vpack.c.b16 %v817, %v816
  %v932 = vpack.c.b16 %v819, %v818
  %v933 = vpack.c.b16 %v821, %v820
  %v934 = vpack.c.b16 %v823, %v822
  %v935 = vpack.c.b16 %v825, %v824
  %v936 = vpack.c.b16 %v827, %v826
  %v937 = vpack.c.b16 %v829, %v828
  %v938 = vpack.c.b16 %v831, %v830
  %v939 = vpack.c.b16 %v833, %v832
  %v940 = vpack.c.b16 %v835, %v834
  %v941 = vpack.c.b16 %v837, %v836
  %v942 = vpack.c.b16 %v839, %v838
  %v943 = vpack.c.b16 %v841, %v840
  %v944 = vpack.c.b16 %v843, %v842
  %v945 = vpack.c.b16 %v845, %v844
  %v946 = vpack.c.b16 %v847, %v846
  %v947 = vpack.c.b16 %v849, %v848
  %v948 = vpack.c.b16 %v851, %v850
  %v949 = vpack.c.b16 %v853, %v852
  %v950 = vpack.c.b16 %v855, %v854
  %v951 = vpack.c.b16 %v857, %v856
  %v952 = vpack.c.b16 %v859, %v858
  %v953 = vpack.c.b16 %v861, %v860
  %v954 = vpack.c.b16 %v863, %v862
  %v955 = vpack.c.b16 %v865, %v864
  %v956 = vpack.c.b16 %v867, %v866
  %v957 = vpack.c.b16 %v869, %v868
  %v958 = vpack.c.b16 %v871, %v870
  %v959 = vpack.c.b16 %v873, %v872
  %v960 = vpack.c.b16 %v875, %v874
  %v961 = vpack.c.b16 %v877, %v876
  %v962 = vpack.c.b16 %v879, %v878
  %v963 = vpack.c.b16 %v881, %v880
  %v964 = vpack.c.b16 %v883, %v882
  %v965 = vpack.c.b16 %v885, %v884
  %v966 = vpack.c.b16 %v887, %v886
  %v967 = vpack.c.b16 %v889, %v888
  %v968 = vpack.c.b16 %v891, %v890
  %v969 = vpack.c.b16 %v893, %v892
  %v970 = vpack.c.b16 %v895, %v894
  %v971 = vpack.c.b16 %v897, %v896
  %v972 = vpack.c.b16 %v899, %v898
  %v973 = vpack.c.b16 %v901, %v900
  %1046 = vmatprep.subr.bf16.mxu0 0
  %1047 = vmatpush1.bf16.msra.mxu0 %v909
  %1048 = vmatprep.subr.bf16.mxu0 0
  %1049 = vmatpush1.bf16.msra.mxu0 %v908
  %1050 = vmatprep.subr.bf16.mxu0 0
  %1051 = vmatpush1.bf16.msra.mxu0 %v907
  %1052 = vmatprep.subr.bf16.mxu0 0
  %1053 = vmatpush1.bf16.msra.mxu0 %v906
  %1054 = vmatprep.subr.bf16.mxu0 0
  %1055 = vmatpush1.bf16.msra.mxu0 %v905
  %1056 = vmatprep.subr.bf16.mxu0 0
  %1057 = vmatpush1.bf16.msra.mxu0 %v904
  %1058 = vmatprep.subr.bf16.mxu0 0
  %1059 = vmatpush1.bf16.msra.mxu0 %v903
  %1060 = vmatprep.subr.bf16.mxu0 0
  %1061 = vmatpush1.bf16.msra.mxu0 %v902
  %1062 = vmatprep.subr.bf16.mxu0 0
  %1063 = vmatpush2.bf16.msra.mxu0 %v917
  %1064 = vmatprep.subr.bf16.mxu0 0
  %1065 = vmatpush2.bf16.msra.mxu0 %v916
  %1066 = vmatprep.subr.bf16.mxu0 0
  %1067 = vmatpush2.bf16.msra.mxu0 %v915
  %1068 = vmatprep.subr.bf16.mxu0 0
  %1069 = vmatpush2.bf16.msra.mxu0 %v914
  %1070 = vmatprep.subr.bf16.mxu0 0
  %1071 = vmatpush2.bf16.msra.mxu0 %v913
  %1072 = vmatprep.subr.bf16.mxu0 0
  %1073 = vmatpush2.bf16.msra.mxu0 %v912
  %1074 = vmatprep.subr.bf16.mxu0 0
  %1075 = vmatpush2.bf16.msra.mxu0 %v911
  %1076 = vmatprep.subr.bf16.mxu0 0
  %1077 = vmatpush2.bf16.msra.mxu0 %v910
  %1078 = vmatprep.mubr.bf16.mxu0 %v471
  %1079 = vmatmul.mubr.bf16.gmra.mxu0 %v470
  %v1080 = vpop.f32.mrf.mxu0
  %v1081 = vadd.f32 %v244, %v1080
  %v1082 = vpop.f32.mrf.mxu0
  %v1083 = vpop.f32.mrf.mxu0
  %v1084 = vadd.f32 %v244, %v1083
  %v1085 = vpop.f32.mrf.mxu0
  %1086 = vmatprep.mubr.bf16.mxu0 %v480
  %1087 = vmatmul.mubr.bf16.gmra.mxu0 %v479
  %v1088 = vpop.f32.mrf.mxu0
  %v1089 = vadd.f32 %v244, %v1088
  %v1090 = vpop.f32.mrf.mxu0
  %v1091 = vpop.f32.mrf.mxu0
  %v1092 = vadd.f32 %v244, %v1091
  %v1093 = vpop.f32.mrf.mxu0
  %1094 = vmatprep.mubr.bf16.mxu0 %v489
  %1095 = vmatmul.mubr.bf16.gmra.mxu0 %v488
  %v1096 = vpop.f32.mrf.mxu0
  %v1097 = vadd.f32 %v244, %v1096
  %v1098 = vpop.f32.mrf.mxu0
  %v1099 = vpop.f32.mrf.mxu0
  %v1100 = vadd.f32 %v244, %v1099
  %v1101 = vpop.f32.mrf.mxu0
  %1102 = vmatprep.mubr.bf16.mxu0 %v498
  %1103 = vmatmul.mubr.bf16.gmra.mxu0 %v497
  %v1104 = vpop.f32.mrf.mxu0
  %v1105 = vadd.f32 %v244, %v1104
  %v1106 = vpop.f32.mrf.mxu0
  %v1107 = vpop.f32.mrf.mxu0
  %v1108 = vadd.f32 %v244, %v1107
  %v1109 = vpop.f32.mrf.mxu0
  %1110 = vmatprep.mubr.bf16.mxu0 %v507
  %1111 = vmatmul.mubr.bf16.gmra.mxu0 %v506
  %v1112 = vpop.f32.mrf.mxu0
  %v1113 = vadd.f32 %v244, %v1112
  %v1114 = vpop.f32.mrf.mxu0
  %v1115 = vpop.f32.mrf.mxu0
  %v1116 = vadd.f32 %v244, %v1115
  %v1117 = vpop.f32.mrf.mxu0
  %1118 = vmatprep.mubr.bf16.mxu0 %v516
  %1119 = vmatmul.mubr.bf16.gmra.mxu0 %v515
  %v1120 = vpop.f32.mrf.mxu0
  %v1121 = vadd.f32 %v244, %v1120
  %v1122 = vpop.f32.mrf.mxu0
  %v1123 = vpop.f32.mrf.mxu0
  %v1124 = vadd.f32 %v244, %v1123
  %v1125 = vpop.f32.mrf.mxu0
  %1126 = vmatprep.mubr.bf16.mxu0 %v525
  %1127 = vmatmul.mubr.bf16.gmra.mxu0 %v524
  %v1128 = vpop.f32.mrf.mxu0
  %v1129 = vadd.f32 %v244, %v1128
  %v1130 = vpop.f32.mrf.mxu0
  %v1131 = vpop.f32.mrf.mxu0
  %v1132 = vadd.f32 %v244, %v1131
  %v1133 = vpop.f32.mrf.mxu0
  %1134 = vmatprep.mubr.bf16.mxu0 %v534
  %1135 = vmatmul.mubr.bf16.gmra.mxu0 %v533
  %v1136 = vpop.f32.mrf.mxu0
  %v1137 = vadd.f32 %v244, %v1136
  %v1138 = vpop.f32.mrf.mxu0
  %v1139 = vpop.f32.mrf.mxu0
  %v1140 = vadd.f32 %v244, %v1139
  %v1141 = vpop.f32.mrf.mxu0
  %1142 = vdwg.mxu0
  %1143 = vmatprep.subr.bf16.mxu0 0
  %1144 = vmatpush1.bf16.msra.mxu0 %v925
  %1145 = vmatprep.subr.bf16.mxu0 0
  %1146 = vmatpush1.bf16.msra.mxu0 %v924
  %1147 = vmatprep.subr.bf16.mxu0 0
  %1148 = vmatpush1.bf16.msra.mxu0 %v923
  %1149 = vmatprep.subr.bf16.mxu0 0
  %1150 = vmatpush1.bf16.msra.mxu0 %v922
  %1151 = vmatprep.subr.bf16.mxu0 0
  %1152 = vmatpush1.bf16.msra.mxu0 %v921
  %1153 = vmatprep.subr.bf16.mxu0 0
  %1154 = vmatpush1.bf16.msra.mxu0 %v920
  %1155 = vmatprep.subr.bf16.mxu0 0
  %1156 = vmatpush1.bf16.msra.mxu0 %v919
  %1157 = vmatprep.subr.bf16.mxu0 0
  %1158 = vmatpush1.bf16.msra.mxu0 %v918
  %1159 = vmatprep.subr.bf16.mxu0 0
  %1160 = vmatpush2.bf16.msra.mxu0 %v933
  %1161 = vmatprep.subr.bf16.mxu0 0
  %1162 = vmatpush2.bf16.msra.mxu0 %v932
  %1163 = vmatprep.subr.bf16.mxu0 0
  %1164 = vmatpush2.bf16.msra.mxu0 %v931
  %1165 = vmatprep.subr.bf16.mxu0 0
  %1166 = vmatpush2.bf16.msra.mxu0 %v930
  %1167 = vmatprep.subr.bf16.mxu0 0
  %1168 = vmatpush2.bf16.msra.mxu0 %v929
  %1169 = vmatprep.subr.bf16.mxu0 0
  %1170 = vmatpush2.bf16.msra.mxu0 %v928
  %1171 = vmatprep.subr.bf16.mxu0 0
  %1172 = vmatpush2.bf16.msra.mxu0 %v927
  %1173 = vmatprep.subr.bf16.mxu0 0
  %1174 = vmatpush2.bf16.msra.mxu0 %v926
  %1175 = vmatprep.mubr.bf16.mxu0 %v473
  %1176 = vmatmul.mubr.bf16.gmra.mxu0 %v472
  %v1177 = vpop.f32.mrf.mxu0
  %v1178 = vadd.f32 %v1081, %v1177
  %v1179 = vpop.f32.mrf.mxu0
  %v1180 = vpop.f32.mrf.mxu0
  %v1181 = vadd.f32 %v1084, %v1180
  %v1182 = vpop.f32.mrf.mxu0
  %1183 = vmatprep.mubr.bf16.mxu0 %v482
  %1184 = vmatmul.mubr.bf16.gmra.mxu0 %v481
  %v1185 = vpop.f32.mrf.mxu0
  %v1186 = vadd.f32 %v1089, %v1185
  %v1187 = vpop.f32.mrf.mxu0
  %v1188 = vpop.f32.mrf.mxu0
  %v1189 = vadd.f32 %v1092, %v1188
  %v1190 = vpop.f32.mrf.mxu0
  %1191 = vmatprep.mubr.bf16.mxu0 %v491
  %1192 = vmatmul.mubr.bf16.gmra.mxu0 %v490
  %v1193 = vpop.f32.mrf.mxu0
  %v1194 = vadd.f32 %v1097, %v1193
  %v1195 = vpop.f32.mrf.mxu0
  %v1196 = vpop.f32.mrf.mxu0
  %v1197 = vadd.f32 %v1100, %v1196
  %v1198 = vpop.f32.mrf.mxu0
  %1199 = vmatprep.mubr.bf16.mxu0 %v500
  %1200 = vmatmul.mubr.bf16.gmra.mxu0 %v499
  %v1201 = vpop.f32.mrf.mxu0
  %v1202 = vadd.f32 %v1105, %v1201
  %v1203 = vpop.f32.mrf.mxu0
  %v1204 = vpop.f32.mrf.mxu0
  %v1205 = vadd.f32 %v1108, %v1204
  %v1206 = vpop.f32.mrf.mxu0
  %1207 = vmatprep.mubr.bf16.mxu0 %v509
  %1208 = vmatmul.mubr.bf16.gmra.mxu0 %v508
  %v1209 = vpop.f32.mrf.mxu0
  %v1210 = vadd.f32 %v1113, %v1209
  %v1211 = vpop.f32.mrf.mxu0
  %v1212 = vpop.f32.mrf.mxu0
  %v1213 = vadd.f32 %v1116, %v1212
  %v1214 = vpop.f32.mrf.mxu0
  %1215 = vmatprep.mubr.bf16.mxu0 %v518
  %1216 = vmatmul.mubr.bf16.gmra.mxu0 %v517
  %v1217 = vpop.f32.mrf.mxu0
  %v1218 = vadd.f32 %v1121, %v1217
  %v1219 = vpop.f32.mrf.mxu0
  %v1220 = vpop.f32.mrf.mxu0
  %v1221 = vadd.f32 %v1124, %v1220
  %v1222 = vpop.f32.mrf.mxu0
  %1223 = vmatprep.mubr.bf16.mxu0 %v527
  %1224 = vmatmul.mubr.bf16.gmra.mxu0 %v526
  %v1225 = vpop.f32.mrf.mxu0
  %v1226 = vadd.f32 %v1129, %v1225
  %v1227 = vpop.f32.mrf.mxu0
  %v1228 = vpop.f32.mrf.mxu0
  %v1229 = vadd.f32 %v1132, %v1228
  %v1230 = vpop.f32.mrf.mxu0
  %1231 = vmatprep.mubr.bf16.mxu0 %v536
  %1232 = vmatmul.mubr.bf16.gmra.mxu0 %v535
  %v1233 = vpop.f32.mrf.mxu0
  %v1234 = vadd.f32 %v1137, %v1233
  %v1235 = vpop.f32.mrf.mxu0
  %v1236 = vpop.f32.mrf.mxu0
  %v1237 = vadd.f32 %v1140, %v1236
  %v1238 = vpop.f32.mrf.mxu0
  %1239 = vdwg.mxu0
  %1240 = vmatprep.subr.bf16.mxu0 0
  %1241 = vmatpush1.bf16.msra.mxu0 %v941
  %1242 = vmatprep.subr.bf16.mxu0 0
  %1243 = vmatpush1.bf16.msra.mxu0 %v940
  %1244 = vmatprep.subr.bf16.mxu0 0
  %1245 = vmatpush1.bf16.msra.mxu0 %v939
  %1246 = vmatprep.subr.bf16.mxu0 0
  %1247 = vmatpush1.bf16.msra.mxu0 %v938
  %1248 = vmatprep.subr.bf16.mxu0 0
  %1249 = vmatpush1.bf16.msra.mxu0 %v937
  %1250 = vmatprep.subr.bf16.mxu0 0
  %1251 = vmatpush1.bf16.msra.mxu0 %v936
  %1252 = vmatprep.subr.bf16.mxu0 0
  %1253 = vmatpush1.bf16.msra.mxu0 %v935
  %1254 = vmatprep.subr.bf16.mxu0 0
  %1255 = vmatpush1.bf16.msra.mxu0 %v934
  %1256 = vmatprep.subr.bf16.mxu0 0
  %1257 = vmatpush2.bf16.msra.mxu0 %v949
  %1258 = vmatprep.subr.bf16.mxu0 0
  %1259 = vmatpush2.bf16.msra.mxu0 %v948
  %1260 = vmatprep.subr.bf16.mxu0 0
  %1261 = vmatpush2.bf16.msra.mxu0 %v947
  %1262 = vmatprep.subr.bf16.mxu0 0
  %1263 = vmatpush2.bf16.msra.mxu0 %v946
  %1264 = vmatprep.subr.bf16.mxu0 0
  %1265 = vmatpush2.bf16.msra.mxu0 %v945
  %1266 = vmatprep.subr.bf16.mxu0 0
  %1267 = vmatpush2.bf16.msra.mxu0 %v944
  %1268 = vmatprep.subr.bf16.mxu0 0
  %1269 = vmatpush2.bf16.msra.mxu0 %v943
  %1270 = vmatprep.subr.bf16.mxu0 0
  %1271 = vmatpush2.bf16.msra.mxu0 %v942
  %1272 = vmatprep.mubr.bf16.mxu0 %v475
  %1273 = vmatmul.mubr.bf16.gmra.mxu0 %v474
  %v1274 = vpop.f32.mrf.mxu0
  %v1275 = vadd.f32 %v1178, %v1274
  %v1276 = vpop.f32.mrf.mxu0
  %v1277 = vpop.f32.mrf.mxu0
  %v1278 = vadd.f32 %v1181, %v1277
  %v1279 = vpop.f32.mrf.mxu0
  %1280 = vmatprep.mubr.bf16.mxu0 %v484
  %1281 = vmatmul.mubr.bf16.gmra.mxu0 %v483
  %v1282 = vpop.f32.mrf.mxu0
  %v1283 = vadd.f32 %v1186, %v1282
  %v1284 = vpop.f32.mrf.mxu0
  %v1285 = vpop.f32.mrf.mxu0
  %v1286 = vadd.f32 %v1189, %v1285
  %v1287 = vpop.f32.mrf.mxu0
  %1288 = vmatprep.mubr.bf16.mxu0 %v493
  %1289 = vmatmul.mubr.bf16.gmra.mxu0 %v492
  %v1290 = vpop.f32.mrf.mxu0
  %v1291 = vadd.f32 %v1194, %v1290
  %v1292 = vpop.f32.mrf.mxu0
  %v1293 = vpop.f32.mrf.mxu0
  %v1294 = vadd.f32 %v1197, %v1293
  %v1295 = vpop.f32.mrf.mxu0
  %1296 = vmatprep.mubr.bf16.mxu0 %v502
  %1297 = vmatmul.mubr.bf16.gmra.mxu0 %v501
  %v1298 = vpop.f32.mrf.mxu0
  %v1299 = vadd.f32 %v1202, %v1298
  %v1300 = vpop.f32.mrf.mxu0
  %v1301 = vpop.f32.mrf.mxu0
  %v1302 = vadd.f32 %v1205, %v1301
  %v1303 = vpop.f32.mrf.mxu0
  %1304 = vmatprep.mubr.bf16.mxu0 %v511
  %1305 = vmatmul.mubr.bf16.gmra.mxu0 %v510
  %v1306 = vpop.f32.mrf.mxu0
  %v1307 = vadd.f32 %v1210, %v1306
  %v1308 = vpop.f32.mrf.mxu0
  %v1309 = vpop.f32.mrf.mxu0
  %v1310 = vadd.f32 %v1213, %v1309
  %v1311 = vpop.f32.mrf.mxu0
  %1312 = vmatprep.mubr.bf16.mxu0 %v520
  %1313 = vmatmul.mubr.bf16.gmra.mxu0 %v519
  %v1314 = vpop.f32.mrf.mxu0
  %v1315 = vadd.f32 %v1218, %v1314
  %v1316 = vpop.f32.mrf.mxu0
  %v1317 = vpop.f32.mrf.mxu0
  %v1318 = vadd.f32 %v1221, %v1317
  %v1319 = vpop.f32.mrf.mxu0
  %1320 = vmatprep.mubr.bf16.mxu0 %v529
  %1321 = vmatmul.mubr.bf16.gmra.mxu0 %v528
  %v1322 = vpop.f32.mrf.mxu0
  %v1323 = vadd.f32 %v1226, %v1322
  %v1324 = vpop.f32.mrf.mxu0
  %v1325 = vpop.f32.mrf.mxu0
  %v1326 = vadd.f32 %v1229, %v1325
  %v1327 = vpop.f32.mrf.mxu0
  %1328 = vmatprep.mubr.bf16.mxu0 %v538
  %1329 = vmatmul.mubr.bf16.gmra.mxu0 %v537
  %v1330 = vpop.f32.mrf.mxu0
  %v1331 = vadd.f32 %v1234, %v1330
  %v1332 = vpop.f32.mrf.mxu0
  %v1333 = vpop.f32.mrf.mxu0
  %v1334 = vadd.f32 %v1237, %v1333
  %v1335 = vpop.f32.mrf.mxu0
  %1336 = vdwg.mxu0
  %1337 = vmatprep.subr.bf16.mxu0 0
  %1338 = vmatpush1.bf16.msra.mxu0 %v957
  %1339 = vmatprep.subr.bf16.mxu0 0
  %1340 = vmatpush1.bf16.msra.mxu0 %v956
  %1341 = vmatprep.subr.bf16.mxu0 0
  %1342 = vmatpush1.bf16.msra.mxu0 %v955
  %1343 = vmatprep.subr.bf16.mxu0 0
  %1344 = vmatpush1.bf16.msra.mxu0 %v954
  %1345 = vmatprep.subr.bf16.mxu0 0
  %1346 = vmatpush1.bf16.msra.mxu0 %v953
  %1347 = vmatprep.subr.bf16.mxu0 0
  %1348 = vmatpush1.bf16.msra.mxu0 %v952
  %1349 = vmatprep.subr.bf16.mxu0 0
  %1350 = vmatpush1.bf16.msra.mxu0 %v951
  %1351 = vmatprep.subr.bf16.mxu0 0
  %1352 = vmatpush1.bf16.msra.mxu0 %v950
  %1353 = vmatprep.subr.bf16.mxu0 0
  %1354 = vmatpush2.bf16.msra.mxu0 %v965
  %1355 = vmatprep.subr.bf16.mxu0 0
  %1356 = vmatpush2.bf16.msra.mxu0 %v964
  %1357 = vmatprep.subr.bf16.mxu0 0
  %1358 = vmatpush2.bf16.msra.mxu0 %v963
  %1359 = vmatprep.subr.bf16.mxu0 0
  %1360 = vmatpush2.bf16.msra.mxu0 %v962
  %1361 = vmatprep.subr.bf16.mxu0 0
  %1362 = vmatpush2.bf16.msra.mxu0 %v961
  %1363 = vmatprep.subr.bf16.mxu0 0
  %1364 = vmatpush2.bf16.msra.mxu0 %v960
  %1365 = vmatprep.subr.bf16.mxu0 0
  %1366 = vmatpush2.bf16.msra.mxu0 %v959
  %1367 = vmatprep.subr.bf16.mxu0 0
  %1368 = vmatpush2.bf16.msra.mxu0 %v958
  %1369 = vmatprep.mubr.bf16.mxu0 %v477
  %1370 = vmatmul.mubr.bf16.gmra.mxu0 %v476
  %v1371 = vpop.f32.mrf.mxu0
  %v1372 = vadd.f32 %v1275, %v1371
  %v1373 = vpop.f32.mrf.mxu0
  %v1374 = vpop.f32.mrf.mxu0
  %v1375 = vadd.f32 %v1278, %v1374
  %v1376 = vpop.f32.mrf.mxu0
  %1377 = vmatprep.mubr.bf16.mxu0 %v486
  %1378 = vmatmul.mubr.bf16.gmra.mxu0 %v485
  %v1379 = vpop.f32.mrf.mxu0
  %v1380 = vadd.f32 %v1283, %v1379
  %v1381 = vpop.f32.mrf.mxu0
  %v1382 = vpop.f32.mrf.mxu0
  %v1383 = vadd.f32 %v1286, %v1382
  %v1384 = vpop.f32.mrf.mxu0
  %1385 = vmatprep.mubr.bf16.mxu0 %v495
  %1386 = vmatmul.mubr.bf16.gmra.mxu0 %v494
  %v1387 = vpop.f32.mrf.mxu0
  %v1388 = vadd.f32 %v1291, %v1387
  %v1389 = vpop.f32.mrf.mxu0
  %v1390 = vpop.f32.mrf.mxu0
  %v1391 = vadd.f32 %v1294, %v1390
  %v1392 = vpop.f32.mrf.mxu0
  %1393 = vmatprep.mubr.bf16.mxu0 %v504
  %1394 = vmatmul.mubr.bf16.gmra.mxu0 %v503
  %v1395 = vpop.f32.mrf.mxu0
  %v1396 = vadd.f32 %v1299, %v1395
  %v1397 = vpop.f32.mrf.mxu0
  %v1398 = vpop.f32.mrf.mxu0
  %v1399 = vadd.f32 %v1302, %v1398
  %v1400 = vpop.f32.mrf.mxu0
  %1401 = vmatprep.mubr.bf16.mxu0 %v513
  %1402 = vmatmul.mubr.bf16.gmra.mxu0 %v512
  %v1403 = vpop.f32.mrf.mxu0
  %v1404 = vadd.f32 %v1307, %v1403
  %v1405 = vpop.f32.mrf.mxu0
  %v1406 = vpop.f32.mrf.mxu0
  %v1407 = vadd.f32 %v1310, %v1406
  %v1408 = vpop.f32.mrf.mxu0
  %1409 = vmatprep.mubr.bf16.mxu0 %v522
  %1410 = vmatmul.mubr.bf16.gmra.mxu0 %v521
  %v1411 = vpop.f32.mrf.mxu0
  %v1412 = vadd.f32 %v1315, %v1411
  %v1413 = vpop.f32.mrf.mxu0
  %v1414 = vpop.f32.mrf.mxu0
  %v1415 = vadd.f32 %v1318, %v1414
  %v1416 = vpop.f32.mrf.mxu0
  %1417 = vmatprep.mubr.bf16.mxu0 %v531
  %1418 = vmatmul.mubr.bf16.gmra.mxu0 %v530
  %v1419 = vpop.f32.mrf.mxu0
  %v1420 = vadd.f32 %v1323, %v1419
  %v1421 = vpop.f32.mrf.mxu0
  %v1422 = vpop.f32.mrf.mxu0
  %v1423 = vadd.f32 %v1326, %v1422
  %v1424 = vpop.f32.mrf.mxu0
  %1425 = vmatprep.mubr.bf16.mxu0 %v540
  %1426 = vmatmul.mubr.bf16.gmra.mxu0 %v539
  %v1427 = vpop.f32.mrf.mxu0
  %v1428 = vadd.f32 %v1331, %v1427
  %v1429 = vpop.f32.mrf.mxu0
  %v1430 = vpop.f32.mrf.mxu0
  %v1431 = vadd.f32 %v1334, %v1430
  %v1432 = vpop.f32.mrf.mxu0
  %1433 = vdwg.mxu0
  %1434 = vmatprep.subr.bf16.mxu0 0
  %1435 = vmatpush1.bf16.msra.mxu0 %v973
  %1436 = vmatprep.subr.bf16.mxu0 0
  %1437 = vmatpush1.bf16.msra.mxu0 %v972
  %1438 = vmatprep.subr.bf16.mxu0 0
  %1439 = vmatpush1.bf16.msra.mxu0 %v971
  %1440 = vmatprep.subr.bf16.mxu0 0
  %1441 = vmatpush1.bf16.msra.mxu0 %v970
  %1442 = vmatprep.subr.bf16.mxu0 0
  %1443 = vmatpush1.bf16.msra.mxu0 %v969
  %1444 = vmatprep.subr.bf16.mxu0 0
  %1445 = vmatpush1.bf16.msra.mxu0 %v968
  %1446 = vmatprep.subr.bf16.mxu0 0
  %1447 = vmatpush1.bf16.msra.mxu0 %v967
  %1448 = vmatprep.subr.bf16.mxu0 0
  %1449 = vmatpush1.bf16.msra.mxu0 %v966
  %1450 = vmatprep.subr.bf16.mxu0 0
  %1451 = vmatpush2.bf16.msra.mxu0 0
  %1452 = vmatprep.subr.bf16.mxu0 0
  %1453 = vmatpush2.bf16.msra.mxu0 0
  %1454 = vmatprep.subr.bf16.mxu0 0
  %1455 = vmatpush2.bf16.msra.mxu0 0
  %1456 = vmatprep.subr.bf16.mxu0 0
  %1457 = vmatpush2.bf16.msra.mxu0 0
  %1458 = vmatprep.subr.bf16.mxu0 0
  %1459 = vmatpush2.bf16.msra.mxu0 0
  %1460 = vmatprep.subr.bf16.mxu0 0
  %1461 = vmatpush2.bf16.msra.mxu0 0
  %1462 = vmatprep.subr.bf16.mxu0 0
  %1463 = vmatpush2.bf16.msra.mxu0 0
  %1464 = vmatprep.subr.bf16.mxu0 0
  %1465 = vmatpush2.bf16.msra.mxu0 0
  %1466 = vmatprep.mubr.bf16.mxu0 0
  %1467 = vmatmul.mubr.bf16.gmra.mxu0 %v478
  %v1468 = vpop.f32.mrf.mxu0
  %v1469 = vadd.f32 %v1372, %v1468
  %v1470 = vpop.f32.mrf.mxu0
  %v1471 = vpop.f32.mrf.mxu0
  %v1472 = vadd.f32 %v1375, %v1471
  %v1473 = vpop.f32.mrf.mxu0
  %1474 = vmatprep.mubr.bf16.mxu0 0
  %1475 = vmatmul.mubr.bf16.gmra.mxu0 %v487
  %v1476 = vpop.f32.mrf.mxu0
  %v1477 = vadd.f32 %v1380, %v1476
  %v1478 = vpop.f32.mrf.mxu0
  %v1479 = vpop.f32.mrf.mxu0
  %v1480 = vadd.f32 %v1383, %v1479
  %v1481 = vpop.f32.mrf.mxu0
  %1482 = vmatprep.mubr.bf16.mxu0 0
  %1483 = vmatmul.mubr.bf16.gmra.mxu0 %v496
  %v1484 = vpop.f32.mrf.mxu0
  %v1485 = vadd.f32 %v1388, %v1484
  %v1486 = vpop.f32.mrf.mxu0
  %v1487 = vpop.f32.mrf.mxu0
  %v1488 = vadd.f32 %v1391, %v1487
  %v1489 = vpop.f32.mrf.mxu0
  %1490 = vmatprep.mubr.bf16.mxu0 0
  %1491 = vmatmul.mubr.bf16.gmra.mxu0 %v505
  %v1492 = vpop.f32.mrf.mxu0
  %v1493 = vadd.f32 %v1396, %v1492
  %v1494 = vpop.f32.mrf.mxu0
  %v1495 = vpop.f32.mrf.mxu0
  %v1496 = vadd.f32 %v1399, %v1495
  %v1497 = vpop.f32.mrf.mxu0
  %1498 = vmatprep.mubr.bf16.mxu0 0
  %1499 = vmatmul.mubr.bf16.gmra.mxu0 %v514
  %v1500 = vpop.f32.mrf.mxu0
  %v1501 = vadd.f32 %v1404, %v1500
  %v1502 = vpop.f32.mrf.mxu0
  %v1503 = vpop.f32.mrf.mxu0
  %v1504 = vadd.f32 %v1407, %v1503
  %v1505 = vpop.f32.mrf.mxu0
  %1506 = vmatprep.mubr.bf16.mxu0 0
  %1507 = vmatmul.mubr.bf16.gmra.mxu0 %v523
  %v1508 = vpop.f32.mrf.mxu0
  %v1509 = vadd.f32 %v1412, %v1508
  %v1510 = vpop.f32.mrf.mxu0
  %v1511 = vpop.f32.mrf.mxu0
  %v1512 = vadd.f32 %v1415, %v1511
  %v1513 = vpop.f32.mrf.mxu0
  %1514 = vmatprep.mubr.bf16.mxu0 0
  %1515 = vmatmul.mubr.bf16.gmra.mxu0 %v532
  %v1516 = vpop.f32.mrf.mxu0
  %v1517 = vadd.f32 %v1420, %v1516
  %v1518 = vpop.f32.mrf.mxu0
  %v1519 = vpop.f32.mrf.mxu0
  %v1520 = vadd.f32 %v1423, %v1519
  %v1521 = vpop.f32.mrf.mxu0
  %1522 = vmatprep.mubr.bf16.mxu0 0
  %1523 = vmatmul.mubr.bf16.gmra.mxu0 %v541
  %v1524 = vpop.f32.mrf.mxu0
  %v1525 = vadd.f32 %v1428, %v1524
  %v1526 = vpop.f32.mrf.mxu0
  %v1527 = vpop.f32.mrf.mxu0
  %v1528 = vadd.f32 %v1431, %v1527
  %v1529 = vpop.f32.mrf.mxu0
  %1530 = vdwg.mxu0
  %v1531 = vmax.f32 %v1469, 0.0
  %v1532 = vmax.f32 %v1472, 0.0
  %v1533 = vmax.f32 %v1477, 0.0
  %v1534 = vmax.f32 %v1480, 0.0
  %v1535 = vmax.f32 %v1485, 0.0
  %v1536 = vmax.f32 %v1488, 0.0
  %v1537 = vmax.f32 %v1493, 0.0
  %v1538 = vmax.f32 %v1496, 0.0
  %v1539 = vmax.f32 %v1501, 0.0
  %v1540 = vmax.f32 %v1504, 0.0
  %v1541 = vmax.f32 %v1509, 0.0
  %v1542 = vmax.f32 %v1512, 0.0
  %v1543 = vmax.f32 %v1517, 0.0
  %v1544 = vmax.f32 %v1520, 0.0
  %v1545 = vmax.f32 %v1525, 0.0
  %v1546 = vmax.f32 %v1528, 0.0
  %1547 = vst [vmem:[%s3] sm:$0xff] %v1531
  %1548 = vst [vmem:[%s3 + $0x8] sm:$0xff] %v1532
  %1549 = vst [vmem:[%s3 + $0x10] sm:$0xff] %v1533
  %1550 = vst [vmem:[%s3 + $0x18] sm:$0xff] %v1534
  %1551 = vst [vmem:[%s3 + $0x20] sm:$0xff] %v1535
  %1552 = vst [vmem:[%s3 + $0x28] sm:$0xff] %v1536
  %1553 = vst [vmem:[%s3 + $0x30] sm:$0xff] %v1537
  %1554 = vst [vmem:[%s3 + $0x38] sm:$0xff] %v1538
  %1555 = vst [vmem:[%s3 + $0x40] sm:$0xff] %v1539
  %1556 = vst [vmem:[%s3 + $0x48] sm:$0xff] %v1540
  %1557 = vst [vmem:[%s3 + $0x50] sm:$0xff] %v1541
  %1558 = vst [vmem:[%s3 + $0x58] sm:$0xff] %v1542
  %1559 = vst [vmem:[%s3 + $0x60] sm:$0xff] %v1543
  %1560 = vst [vmem:[%s3 + $0x68] sm:$0xff] %v1544
  %1561 = vst [vmem:[%s3 + $0x70] sm:$0xff] %v1545
  %1562 = vst [vmem:[%s3 + $0x78] sm:$0xff] %v1546
  // Predicated region
  $region14: #{relight_net_forward.14} parent=0 // pred_check
    _
  $region15: #{relight_net_forward.14} parent=0 // pred_check_branch
    %1564 = sbr.rel (0) target = $region17
  $region16: #{relight_net_forward.14} parent=0 // pred_region
    _
  $region17: #{relight_net_forward.14} parent=0 // pred_fallthru
    _
  // Predicated region
  $region18: #{relight_net_forward.14} parent=0 // pred_check
    _
  $region19: #{relight_net_forward.14} parent=0 // pred_check_branch
    %1566 = sbr.rel (0) target = $region21
  $region20: #{relight_net_forward.14} parent=0 // pred_region
    _
  $region21: #{relight_net_forward.14} parent=0 // pred_fallthru
    _

// kernel: relight_net_forward.15
$region0: #{relight_net_forward.15}
  #allocation0 [shape = 'u32[]', space=smem, size = 0x4, offset = 0x4, fixed_abs, tag = 'smem constant byte address 0x4 - core index']
  #allocation1 [shape = 'u32[144,128]{1,0:T(1,128)}', space=vmem, size = 0x12000, scoped, tag = 'internal scratch']
  %s0 = inlined_call_operand.vmem [shape: bf16[512,1152], index: 0, kind: input, shape index: {}]
  %s1 = inlined_call_operand.vmem [shape: bf16[1152,128], index: 1, kind: input, shape index: {}]
  %s2 = inlined_call_operand.vmem [shape: f32[1,128], index: 2, kind: input, shape index: {}]
  %s3 = inlined_call_operand.vmem [shape: f32[512,128], index: 3, kind: output, shape index: {}]
  %s4 = sld [smem:[#allocation0]]
  $region22: #{relight_net_forward.15} parent=0
    _
  %s6 = ssub.s32 1, %s4
  %s7 = scalar_select 0, %s6, %s4
  // Predicated region
  $region2: #{relight_net_forward.15} parent=0 // pred_check
    _
  $region3: #{relight_net_forward.15} parent=0 // pred_check_branch
    %9 = sbr.rel (0) target = $region5
  $region4: #{relight_net_forward.15} parent=0 // pred_region
    _
  $region5: #{relight_net_forward.15} parent=0 // pred_fallthru
    _
  // Predicated region
  $region6: #{relight_net_forward.15} parent=0 // pred_check
    _
  $region7: #{relight_net_forward.15} parent=0 // pred_check_branch
    %11 = sbr.rel (0) target = $region9
  $region8: #{relight_net_forward.15} parent=0 // pred_region
    _
  $region9: #{relight_net_forward.15} parent=0 // pred_fallthru
    _
  // Predicated region
  $region10: #{relight_net_forward.15} parent=0 // pred_check
    _
  $region11: #{relight_net_forward.15} parent=0 // pred_check_branch
    %13 = sbr.rel (0) target = $region13
  $region12: #{relight_net_forward.15} parent=0 // pred_region
    _
  $region13: #{relight_net_forward.15} parent=0 // pred_fallthru
    _
  %v15 = vld [vmem:[%s0] sm:$0xff]
  %v16 = vld [vmem:[%s0 + $0x8] sm:$0xff]
  %v17 = vld [vmem:[%s0 + $0x10] sm:$0xff]
  %v18 = vld [vmem:[%s0 + $0x18] sm:$0xff]
  %v19 = vld [vmem:[%s0 + $0x20] sm:$0xf]
  %v20 = vld [vmem:[%s0 + $0x24] sm:$0xff]
  %v21 = vld [vmem:[%s0 + $0x2c] sm:$0xff]
  %v22 = vld [vmem:[%s0 + $0x34] sm:$0xff]
  %v23 = vld [vmem:[%s0 + $0x3c] sm:$0xff]
  %v24 = vld [vmem:[%s0 + $0x44] sm:$0xf]
  %v25 = vld [vmem:[%s0 + $0x48] sm:$0xff]
  %v26 = vld [vmem:[%s0 + $0x50] sm:$0xff]
  %v27 = vld [vmem:[%s0 + $0x58] sm:$0xff]
  %v28 = vld [vmem:[%s0 + $0x60] sm:$0xff]
  %v29 = vld [vmem:[%s0 + $0x68] sm:$0xf]
  %v30 = vld [vmem:[%s0 + $0x6c] sm:$0xff]
  %v31 = vld [vmem:[%s0 + $0x74] sm:$0xff]
  %v32 = vld [vmem:[%s0 + $0x7c] sm:$0xff]
  %v33 = vld [vmem:[%s0 + $0x84] sm:$0xff]
  %v34 = vld [vmem:[%s0 + $0x8c] sm:$0xf]
  %v35 = vld [vmem:[%s0 + $0x90] sm:$0xff]
  %v36 = vld [vmem:[%s0 + $0x98] sm:$0xff]
  %v37 = vld [vmem:[%s0 + $0xa0] sm:$0xff]
  %v38 = vld [vmem:[%s0 + $0xa8] sm:$0xff]
  %v39 = vld [vmem:[%s0 + $0xb0] sm:$0xf]
  %v40 = vld [vmem:[%s0 + $0xb4] sm:$0xff]
  %v41 = vld [vmem:[%s0 + $0xbc] sm:$0xff]
  %v42 = vld [vmem:[%s0 + $0xc4] sm:$0xff]
  %v43 = vld [vmem:[%s0 + $0xcc] sm:$0xff]
  %v44 = vld [vmem:[%s0 + $0xd4] sm:$0xf]
  %v45 = vld [vmem:[%s0 + $0xd8] sm:$0xff]
  %v46 = vld [vmem:[%s0 + $0xe0] sm:$0xff]
  %v47 = vld [vmem:[%s0 + $0xe8] sm:$0xff]
  %v48 = vld [vmem:[%s0 + $0xf0] sm:$0xff]
  %v49 = vld [vmem:[%s0 + $0xf8] sm:$0xf]
  %v50 = vld [vmem:[%s0 + $0xfc] sm:$0xff]
  %v51 = vld [vmem:[%s0 + $0x104] sm:$0xff]
  %v52 = vld [vmem:[%s0 + $0x10c] sm:$0xff]
  %v53 = vld [vmem:[%s0 + $0x114] sm:$0xff]
  %v54 = vld [vmem:[%s0 + $0x11c] sm:$0xf]
  %v55 = vld [vmem:[%s0 + $0x120] sm:$0xff]
  %v56 = vld [vmem:[%s0 + $0x128] sm:$0xff]
  %v57 = vld [vmem:[%s0 + $0x130] sm:$0xff]
  %v58 = vld [vmem:[%s0 + $0x138] sm:$0xff]
  %v59 = vld [vmem:[%s0 + $0x140] sm:$0xf]
  %v60 = vld [vmem:[%s0 + $0x144] sm:$0xff]
  %v61 = vld [vmem:[%s0 + $0x14c] sm:$0xff]
  %v62 = vld [vmem:[%s0 + $0x154] sm:$0xff]
  %v63 = vld [vmem:[%s0 + $0x15c] sm:$0xff]
  %v64 = vld [vmem:[%s0 + $0x164] sm:$0xf]
  %v65 = vld [vmem:[%s0 + $0x168] sm:$0xff]
  %v66 = vld [vmem:[%s0 + $0x170] sm:$0xff]
  %v67 = vld [vmem:[%s0 + $0x178] sm:$0xff]
  %v68 = vld [vmem:[%s0 + $0x180] sm:$0xff]
  %v69 = vld [vmem:[%s0 + $0x188] sm:$0xf]
  %v70 = vld [vmem:[%s0 + $0x18c] sm:$0xff]
  %v71 = vld [vmem:[%s0 + $0x194] sm:$0xff]
  %v72 = vld [vmem:[%s0 + $0x19c] sm:$0xff]
  %v73 = vld [vmem:[%s0 + $0x1a4] sm:$0xff]
  %v74 = vld [vmem:[%s0 + $0x1ac] sm:$0xf]
  %v75 = vld [vmem:[%s0 + $0x1b0] sm:$0xff]
  %v76 = vld [vmem:[%s0 + $0x1b8] sm:$0xff]
  %v77 = vld [vmem:[%s0 + $0x1c0] sm:$0xff]
  %v78 = vld [vmem:[%s0 + $0x1c8] sm:$0xff]
  %v79 = vld [vmem:[%s0 + $0x1d0] sm:$0xf]
  %v80 = vld [vmem:[%s0 + $0x1d4] sm:$0xff]
  %v81 = vld [vmem:[%s0 + $0x1dc] sm:$0xff]
  %v82 = vld [vmem:[%s0 + $0x1e4] sm:$0xff]
  %v83 = vld [vmem:[%s0 + $0x1ec] sm:$0xff]
  %v84 = vld [vmem:[%s0 + $0x1f4] sm:$0xf]
  %v85 = vld [vmem:[%s0 + $0x1f8] sm:$0xff]
  %v86 = vld [vmem:[%s0 + $0x200] sm:$0xff]
  %v87 = vld [vmem:[%s0 + $0x208] sm:$0xff]
  %v88 = vld [vmem:[%s0 + $0x210] sm:$0xff]
  %v89 = vld [vmem:[%s0 + $0x218] sm:$0xf]
  %v90 = vld [vmem:[%s0 + $0x21c] sm:$0xff]
  %v91 = vld [vmem:[%s0 + $0x224] sm:$0xff]
  %v92 = vld [vmem:[%s0 + $0x22c] sm:$0xff]
  %v93 = vld [vmem:[%s0 + $0x234] sm:$0xff]
  %v94 = vld [vmem:[%s0 + $0x23c] sm:$0xf]
  %v95 = vld [vmem:[%s0 + $0x240] sm:$0xff]
  %v96 = vld [vmem:[%s0 + $0x248] sm:$0xff]
  %v97 = vld [vmem:[%s0 + $0x250] sm:$0xff]
  %v98 = vld [vmem:[%s0 + $0x258] sm:$0xff]
  %v99 = vld [vmem:[%s0 + $0x260] sm:$0xf]
  %v100 = vld [vmem:[%s0 + $0x264] sm:$0xff]
  %v101 = vld [vmem:[%s0 + $0x26c] sm:$0xff]
  %v102 = vld [vmem:[%s0 + $0x274] sm:$0xff]
  %v103 = vld [vmem:[%s0 + $0x27c] sm:$0xff]
  %v104 = vld [vmem:[%s0 + $0x284] sm:$0xf]
  %v105 = vld [vmem:[%s0 + $0x288] sm:$0xff]
  %v106 = vld [vmem:[%s0 + $0x290] sm:$0xff]
  %v107 = vld [vmem:[%s0 + $0x298] sm:$0xff]
  %v108 = vld [vmem:[%s0 + $0x2a0] sm:$0xff]
  %v109 = vld [vmem:[%s0 + $0x2a8] sm:$0xf]
  %v110 = vld [vmem:[%s0 + $0x2ac] sm:$0xff]
  %v111 = vld [vmem:[%s0 + $0x2b4] sm:$0xff]
  %v112 = vld [vmem:[%s0 + $0x2bc] sm:$0xff]
  %v113 = vld [vmem:[%s0 + $0x2c4] sm:$0xff]
  %v114 = vld [vmem:[%s0 + $0x2cc] sm:$0xf]
  %v115 = vld [vmem:[%s0 + $0x2d0] sm:$0xff]
  %v116 = vld [vmem:[%s0 + $0x2d8] sm:$0xff]
  %v117 = vld [vmem:[%s0 + $0x2e0] sm:$0xff]
  %v118 = vld [vmem:[%s0 + $0x2e8] sm:$0xff]
  %v119 = vld [vmem:[%s0 + $0x2f0] sm:$0xf]
  %v120 = vld [vmem:[%s0 + $0x2f4] sm:$0xff]
  %v121 = vld [vmem:[%s0 + $0x2fc] sm:$0xff]
  %v122 = vld [vmem:[%s0 + $0x304] sm:$0xff]
  %v123 = vld [vmem:[%s0 + $0x30c] sm:$0xff]
  %v124 = vld [vmem:[%s0 + $0x314] sm:$0xf]
  %v125 = vld [vmem:[%s0 + $0x318] sm:$0xff]
  %v126 = vld [vmem:[%s0 + $0x320] sm:$0xff]
  %v127 = vld [vmem:[%s0 + $0x328] sm:$0xff]
  %v128 = vld [vmem:[%s0 + $0x330] sm:$0xff]
  %v129 = vld [vmem:[%s0 + $0x338] sm:$0xf]
  %v130 = vld [vmem:[%s0 + $0x33c] sm:$0xff]
  %v131 = vld [vmem:[%s0 + $0x344] sm:$0xff]
  %v132 = vld [vmem:[%s0 + $0x34c] sm:$0xff]
  %v133 = vld [vmem:[%s0 + $0x354] sm:$0xff]
  %v134 = vld [vmem:[%s0 + $0x35c] sm:$0xf]
  %v135 = vld [vmem:[%s0 + $0x360] sm:$0xff]
  %v136 = vld [vmem:[%s0 + $0x368] sm:$0xff]
  %v137 = vld [vmem:[%s0 + $0x370] sm:$0xff]
  %v138 = vld [vmem:[%s0 + $0x378] sm:$0xff]
  %v139 = vld [vmem:[%s0 + $0x380] sm:$0xf]
  %v140 = vld [vmem:[%s0 + $0x384] sm:$0xff]
  %v141 = vld [vmem:[%s0 + $0x38c] sm:$0xff]
  %v142 = vld [vmem:[%s0 + $0x394] sm:$0xff]
  %v143 = vld [vmem:[%s0 + $0x39c] sm:$0xff]
  %v144 = vld [vmem:[%s0 + $0x3a4] sm:$0xf]
  %v145 = vld [vmem:[%s0 + $0x3a8] sm:$0xff]
  %v146 = vld [vmem:[%s0 + $0x3b0] sm:$0xff]
  %v147 = vld [vmem:[%s0 + $0x3b8] sm:$0xff]
  %v148 = vld [vmem:[%s0 + $0x3c0] sm:$0xff]
  %v149 = vld [vmem:[%s0 + $0x3c8] sm:$0xf]
  %v150 = vld [vmem:[%s0 + $0x3cc] sm:$0xff]
  %v151 = vld [vmem:[%s0 + $0x3d4] sm:$0xff]
  %v152 = vld [vmem:[%s0 + $0x3dc] sm:$0xff]
  %v153 = vld [vmem:[%s0 + $0x3e4] sm:$0xff]
  %v154 = vld [vmem:[%s0 + $0x3ec] sm:$0xf]
  %v155 = vld [vmem:[%s0 + $0x3f0] sm:$0xff]
  %v156 = vld [vmem:[%s0 + $0x3f8] sm:$0xff]
  %v157 = vld [vmem:[%s0 + $0x400] sm:$0xff]
  %v158 = vld [vmem:[%s0 + $0x408] sm:$0xff]
  %v159 = vld [vmem:[%s0 + $0x410] sm:$0xf]
  %v160 = vld [vmem:[%s0 + $0x414] sm:$0xff]
  %v161 = vld [vmem:[%s0 + $0x41c] sm:$0xff]
  %v162 = vld [vmem:[%s0 + $0x424] sm:$0xff]
  %v163 = vld [vmem:[%s0 + $0x42c] sm:$0xff]
  %v164 = vld [vmem:[%s0 + $0x434] sm:$0xf]
  %v165 = vld [vmem:[%s0 + $0x438] sm:$0xff]
  %v166 = vld [vmem:[%s0 + $0x440] sm:$0xff]
  %v167 = vld [vmem:[%s0 + $0x448] sm:$0xff]
  %v168 = vld [vmem:[%s0 + $0x450] sm:$0xff]
  %v169 = vld [vmem:[%s0 + $0x458] sm:$0xf]
  %v170 = vld [vmem:[%s0 + $0x45c] sm:$0xff]
  %v171 = vld [vmem:[%s0 + $0x464] sm:$0xff]
  %v172 = vld [vmem:[%s0 + $0x46c] sm:$0xff]
  %v173 = vld [vmem:[%s0 + $0x474] sm:$0xff]
  %v174 = vld [vmem:[%s0 + $0x47c] sm:$0xf]
  %v175 = vld [vmem:[%s0 + $0x480] sm:$0xff]
  %v176 = vld [vmem:[%s0 + $0x488] sm:$0xff]
  %v177 = vld [vmem:[%s0 + $0x490] sm:$0xff]
  %v178 = vld [vmem:[%s0 + $0x498] sm:$0xff]
  %v179 = vld [vmem:[%s0 + $0x4a0] sm:$0xf]
  %v180 = vld [vmem:[%s0 + $0x4a4] sm:$0xff]
  %v181 = vld [vmem:[%s0 + $0x4ac] sm:$0xff]
  %v182 = vld [vmem:[%s0 + $0x4b4] sm:$0xff]
  %v183 = vld [vmem:[%s0 + $0x4bc] sm:$0xff]
  %v184 = vld [vmem:[%s0 + $0x4c4] sm:$0xf]
  %v185 = vld [vmem:[%s0 + $0x4c8] sm:$0xff]
  %v186 = vld [vmem:[%s0 + $0x4d0] sm:$0xff]
  %v187 = vld [vmem:[%s0 + $0x4d8] sm:$0xff]
  %v188 = vld [vmem:[%s0 + $0x4e0] sm:$0xff]
  %v189 = vld [vmem:[%s0 + $0x4e8] sm:$0xf]
  %v190 = vld [vmem:[%s0 + $0x4ec] sm:$0xff]
  %v191 = vld [vmem:[%s0 + $0x4f4] sm:$0xff]
  %v192 = vld [vmem:[%s0 + $0x4fc] sm:$0xff]
  %v193 = vld [vmem:[%s0 + $0x504] sm:$0xff]
  %v194 = vld [vmem:[%s0 + $0x50c] sm:$0xf]
  %v195 = vld [vmem:[%s0 + $0x510] sm:$0xff]
  %v196 = vld [vmem:[%s0 + $0x518] sm:$0xff]
  %v197 = vld [vmem:[%s0 + $0x520] sm:$0xff]
  %v198 = vld [vmem:[%s0 + $0x528] sm:$0xff]
  %v199 = vld [vmem:[%s0 + $0x530] sm:$0xf]
  %v200 = vld [vmem:[%s0 + $0x534] sm:$0xff]
  %v201 = vld [vmem:[%s0 + $0x53c] sm:$0xff]
  %v202 = vld [vmem:[%s0 + $0x544] sm:$0xff]
  %v203 = vld [vmem:[%s0 + $0x54c] sm:$0xff]
  %v204 = vld [vmem:[%s0 + $0x554] sm:$0xf]
  %v205 = vld [vmem:[%s0 + $0x558] sm:$0xff]
  %v206 = vld [vmem:[%s0 + $0x560] sm:$0xff]
  %v207 = vld [vmem:[%s0 + $0x568] sm:$0xff]
  %v208 = vld [vmem:[%s0 + $0x570] sm:$0xff]
  %v209 = vld [vmem:[%s0 + $0x578] sm:$0xf]
  %v210 = vld [vmem:[%s0 + $0x57c] sm:$0xff]
  %v211 = vld [vmem:[%s0 + $0x584] sm:$0xff]
  %v212 = vld [vmem:[%s0 + $0x58c] sm:$0xff]
  %v213 = vld [vmem:[%s0 + $0x594] sm:$0xff]
  %v214 = vld [vmem:[%s0 + $0x59c] sm:$0xf]
  %v215 = vld [vmem:[%s0 + $0x5a0] sm:$0xff]
  %v216 = vld [vmem:[%s0 + $0x5a8] sm:$0xff]
  %v217 = vld [vmem:[%s0 + $0x5b0] sm:$0xff]
  %v218 = vld [vmem:[%s0 + $0x5b8] sm:$0xff]
  %v219 = vld [vmem:[%s0 + $0x5c0] sm:$0xf]
  %v220 = vld [vmem:[%s0 + $0x5c4] sm:$0xff]
  %v221 = vld [vmem:[%s0 + $0x5cc] sm:$0xff]
  %v222 = vld [vmem:[%s0 + $0x5d4] sm:$0xff]
  %v223 = vld [vmem:[%s0 + $0x5dc] sm:$0xff]
  %v224 = vld [vmem:[%s0 + $0x5e4] sm:$0xf]
  %v225 = vld [vmem:[%s0 + $0x5e8] sm:$0xff]
  %v226 = vld [vmem:[%s0 + $0x5f0] sm:$0xff]
  %v227 = vld [vmem:[%s0 + $0x5f8] sm:$0xff]
  %v228 = vld [vmem:[%s0 + $0x600] sm:$0xff]
  %v229 = vld [vmem:[%s0 + $0x608] sm:$0xf]
  %v230 = vld [vmem:[%s0 + $0x60c] sm:$0xff]
  %v231 = vld [vmem:[%s0 + $0x614] sm:$0xff]
  %v232 = vld [vmem:[%s0 + $0x61c] sm:$0xff]
  %v233 = vld [vmem:[%s0 + $0x624] sm:$0xff]
  %v234 = vld [vmem:[%s0 + $0x62c] sm:$0xf]
  %v235 = vld [vmem:[%s0 + $0x630] sm:$0xff]
  %v236 = vld [vmem:[%s0 + $0x638] sm:$0xff]
  %v237 = vld [vmem:[%s0 + $0x640] sm:$0xff]
  %v238 = vld [vmem:[%s0 + $0x648] sm:$0xff]
  %v239 = vld [vmem:[%s0 + $0x650] sm:$0xf]
  %v240 = vld [vmem:[%s0 + $0x654] sm:$0xff]
  %v241 = vld [vmem:[%s0 + $0x65c] sm:$0xff]
  %v242 = vld [vmem:[%s0 + $0x664] sm:$0xff]
  %v243 = vld [vmem:[%s0 + $0x66c] sm:$0xff]
  %v244 = vld [vmem:[%s0 + $0x674] sm:$0xf]
  %v245 = vld [vmem:[%s0 + $0x678] sm:$0xff]
  %v246 = vld [vmem:[%s0 + $0x680] sm:$0xff]
  %v247 = vld [vmem:[%s0 + $0x688] sm:$0xff]
  %v248 = vld [vmem:[%s0 + $0x690] sm:$0xff]
  %v249 = vld [vmem:[%s0 + $0x698] sm:$0xf]
  %v250 = vld [vmem:[%s0 + $0x69c] sm:$0xff]
  %v251 = vld [vmem:[%s0 + $0x6a4] sm:$0xff]
  %v252 = vld [vmem:[%s0 + $0x6ac] sm:$0xff]
  %v253 = vld [vmem:[%s0 + $0x6b4] sm:$0xff]
  %v254 = vld [vmem:[%s0 + $0x6bc] sm:$0xf]
  %v255 = vld [vmem:[%s0 + $0x6c0] sm:$0xff]
  %v256 = vld [vmem:[%s0 + $0x6c8] sm:$0xff]
  %v257 = vld [vmem:[%s0 + $0x6d0] sm:$0xff]
  %v258 = vld [vmem:[%s0 + $0x6d8] sm:$0xff]
  %v259 = vld [vmem:[%s0 + $0x6e0] sm:$0xf]
  %v260 = vld [vmem:[%s0 + $0x6e4] sm:$0xff]
  %v261 = vld [vmem:[%s0 + $0x6ec] sm:$0xff]
  %v262 = vld [vmem:[%s0 + $0x6f4] sm:$0xff]
  %v263 = vld [vmem:[%s0 + $0x6fc] sm:$0xff]
  %v264 = vld [vmem:[%s0 + $0x704] sm:$0xf]
  %v265 = vld [vmem:[%s0 + $0x708] sm:$0xff]
  %v266 = vld [vmem:[%s0 + $0x710] sm:$0xff]
  %v267 = vld [vmem:[%s0 + $0x718] sm:$0xff]
  %v268 = vld [vmem:[%s0 + $0x720] sm:$0xff]
  %v269 = vld [vmem:[%s0 + $0x728] sm:$0xf]
  %v270 = vld [vmem:[%s0 + $0x72c] sm:$0xff]
  %v271 = vld [vmem:[%s0 + $0x734] sm:$0xff]
  %v272 = vld [vmem:[%s0 + $0x73c] sm:$0xff]
  %v273 = vld [vmem:[%s0 + $0x744] sm:$0xff]
  %v274 = vld [vmem:[%s0 + $0x74c] sm:$0xf]
  %v275 = vld [vmem:[%s0 + $0x750] sm:$0xff]
  %v276 = vld [vmem:[%s0 + $0x758] sm:$0xff]
  %v277 = vld [vmem:[%s0 + $0x760] sm:$0xff]
  %v278 = vld [vmem:[%s0 + $0x768] sm:$0xff]
  %v279 = vld [vmem:[%s0 + $0x770] sm:$0xf]
  %v280 = vld [vmem:[%s0 + $0x774] sm:$0xff]
  %v281 = vld [vmem:[%s0 + $0x77c] sm:$0xff]
  %v282 = vld [vmem:[%s0 + $0x784] sm:$0xff]
  %v283 = vld [vmem:[%s0 + $0x78c] sm:$0xff]
  %v284 = vld [vmem:[%s0 + $0x794] sm:$0xf]
  %v285 = vld [vmem:[%s0 + $0x798] sm:$0xff]
  %v286 = vld [vmem:[%s0 + $0x7a0] sm:$0xff]
  %v287 = vld [vmem:[%s0 + $0x7a8] sm:$0xff]
  %v288 = vld [vmem:[%s0 + $0x7b0] sm:$0xff]
  %v289 = vld [vmem:[%s0 + $0x7b8] sm:$0xf]
  %v290 = vld [vmem:[%s0 + $0x7bc] sm:$0xff]
  %v291 = vld [vmem:[%s0 + $0x7c4] sm:$0xff]
  %v292 = vld [vmem:[%s0 + $0x7cc] sm:$0xff]
  %v293 = vld [vmem:[%s0 + $0x7d4] sm:$0xff]
  %v294 = vld [vmem:[%s0 + $0x7dc] sm:$0xf]
  %v295 = vld [vmem:[%s0 + $0x7e0] sm:$0xff]
  %v296 = vld [vmem:[%s0 + $0x7e8] sm:$0xff]
  %v297 = vld [vmem:[%s0 + $0x7f0] sm:$0xff]
  %v298 = vld [vmem:[%s0 + $0x7f8] sm:$0xff]
  %v299 = vld [vmem:[%s0 + $0x800] sm:$0xf]
  %v300 = vld [vmem:[%s0 + $0x804] sm:$0xff]
  %v301 = vld [vmem:[%s0 + $0x80c] sm:$0xff]
  %v302 = vld [vmem:[%s0 + $0x814] sm:$0xff]
  %v303 = vld [vmem:[%s0 + $0x81c] sm:$0xff]
  %v304 = vld [vmem:[%s0 + $0x824] sm:$0xf]
  %v305 = vld [vmem:[%s0 + $0x828] sm:$0xff]
  %v306 = vld [vmem:[%s0 + $0x830] sm:$0xff]
  %v307 = vld [vmem:[%s0 + $0x838] sm:$0xff]
  %v308 = vld [vmem:[%s0 + $0x840] sm:$0xff]
  %v309 = vld [vmem:[%s0 + $0x848] sm:$0xf]
  %v310 = vld [vmem:[%s0 + $0x84c] sm:$0xff]
  %v311 = vld [vmem:[%s0 + $0x854] sm:$0xff]
  %v312 = vld [vmem:[%s0 + $0x85c] sm:$0xff]
  %v313 = vld [vmem:[%s0 + $0x864] sm:$0xff]
  %v314 = vld [vmem:[%s0 + $0x86c] sm:$0xf]
  %v315 = vld [vmem:[%s0 + $0x870] sm:$0xff]
  %v316 = vld [vmem:[%s0 + $0x878] sm:$0xff]
  %v317 = vld [vmem:[%s0 + $0x880] sm:$0xff]
  %v318 = vld [vmem:[%s0 + $0x888] sm:$0xff]
  %v319 = vld [vmem:[%s0 + $0x890] sm:$0xf]
  %v320 = vld [vmem:[%s0 + $0x894] sm:$0xff]
  %v321 = vld [vmem:[%s0 + $0x89c] sm:$0xff]
  %v322 = vld [vmem:[%s0 + $0x8a4] sm:$0xff]
  %v323 = vld [vmem:[%s0 + $0x8ac] sm:$0xff]
  %v324 = vld [vmem:[%s0 + $0x8b4] sm:$0xf]
  %v325 = vld [vmem:[%s0 + $0x8b8] sm:$0xff]
  %v326 = vld [vmem:[%s0 + $0x8c0] sm:$0xff]
  %v327 = vld [vmem:[%s0 + $0x8c8] sm:$0xff]
  %v328 = vld [vmem:[%s0 + $0x8d0] sm:$0xff]
  %v329 = vld [vmem:[%s0 + $0x8d8] sm:$0xf]
  %v330 = vld [vmem:[%s0 + $0x8dc] sm:$0xff]
  %v331 = vld [vmem:[%s0 + $0x8e4] sm:$0xff]
  %v332 = vld [vmem:[%s0 + $0x8ec] sm:$0xff]
  %v333 = vld [vmem:[%s0 + $0x8f4] sm:$0xff]
  %v334 = vld [vmem:[%s0 + $0x8fc] sm:$0xf]
  %v335 = vld [vmem:[%s1] sm:$0xf]
  %v336 = vld [vmem:[%s1 + $0x4] sm:$0xf]
  %v337 = vld [vmem:[%s1 + $0x8] sm:$0xf]
  %v338 = vld [vmem:[%s1 + $0xc] sm:$0xf]
  %v339 = vld [vmem:[%s1 + $0x10] sm:$0xf]
  %v340 = vld [vmem:[%s1 + $0x14] sm:$0xf]
  %v341 = vld [vmem:[%s1 + $0x18] sm:$0xf]
  %v342 = vld [vmem:[%s1 + $0x1c] sm:$0xf]
  %v343 = vld [vmem:[%s1 + $0x20] sm:$0xf]
  %v344 = vld [vmem:[%s1 + $0x24] sm:$0xf]
  %v345 = vld [vmem:[%s1 + $0x28] sm:$0xf]
  %v346 = vld [vmem:[%s1 + $0x2c] sm:$0xf]
  %v347 = vld [vmem:[%s1 + $0x30] sm:$0xf]
  %v348 = vld [vmem:[%s1 + $0x34] sm:$0xf]
  %v349 = vld [vmem:[%s1 + $0x38] sm:$0xf]
  %v350 = vld [vmem:[%s1 + $0x3c] sm:$0xf]
  %v351 = vld [vmem:[%s1 + $0x40] sm:$0xf]
  %v352 = vld [vmem:[%s1 + $0x44] sm:$0xf]
  %v353 = vld [vmem:[%s1 + $0x48] sm:$0xf]
  %v354 = vld [vmem:[%s1 + $0x4c] sm:$0xf]
  %v355 = vld [vmem:[%s1 + $0x50] sm:$0xf]
  %v356 = vld [vmem:[%s1 + $0x54] sm:$0xf]
  %v357 = vld [vmem:[%s1 + $0x58] sm:$0xf]
  %v358 = vld [vmem:[%s1 + $0x5c] sm:$0xf]
  %v359 = vld [vmem:[%s1 + $0x60] sm:$0xf]
  %v360 = vld [vmem:[%s1 + $0x64] sm:$0xf]
  %v361 = vld [vmem:[%s1 + $0x68] sm:$0xf]
  %v362 = vld [vmem:[%s1 + $0x6c] sm:$0xf]
  %v363 = vld [vmem:[%s1 + $0x70] sm:$0xf]
  %v364 = vld [vmem:[%s1 + $0x74] sm:$0xf]
  %v365 = vld [vmem:[%s1 + $0x78] sm:$0xf]
  %v366 = vld [vmem:[%s1 + $0x7c] sm:$0xf]
  %v367 = vld [vmem:[%s1 + $0x80] sm:$0xf]
  %v368 = vld [vmem:[%s1 + $0x84] sm:$0xf]
  %v369 = vld [vmem:[%s1 + $0x88] sm:$0xf]
  %v370 = vld [vmem:[%s1 + $0x8c] sm:$0xf]
  %v371 = vld [vmem:[%s1 + $0x90] sm:$0xf]
  %v372 = vld [vmem:[%s1 + $0x94] sm:$0xf]
  %v373 = vld [vmem:[%s1 + $0x98] sm:$0xf]
  %v374 = vld [vmem:[%s1 + $0x9c] sm:$0xf]
  %v375 = vld [vmem:[%s1 + $0xa0] sm:$0xf]
  %v376 = vld [vmem:[%s1 + $0xa4] sm:$0xf]
  %v377 = vld [vmem:[%s1 + $0xa8] sm:$0xf]
  %v378 = vld [vmem:[%s1 + $0xac] sm:$0xf]
  %v379 = vld [vmem:[%s1 + $0xb0] sm:$0xf]
  %v380 = vld [vmem:[%s1 + $0xb4] sm:$0xf]
  %v381 = vld [vmem:[%s1 + $0xb8] sm:$0xf]
  %v382 = vld [vmem:[%s1 + $0xbc] sm:$0xf]
  %v383 = vld [vmem:[%s1 + $0xc0] sm:$0xf]
  %v384 = vld [vmem:[%s1 + $0xc4] sm:$0xf]
  %v385 = vld [vmem:[%s1 + $0xc8] sm:$0xf]
  %v386 = vld [vmem:[%s1 + $0xcc] sm:$0xf]
  %v387 = vld [vmem:[%s1 + $0xd0] sm:$0xf]
  %v388 = vld [vmem:[%s1 + $0xd4] sm:$0xf]
  %v389 = vld [vmem:[%s1 + $0xd8] sm:$0xf]
  %v390 = vld [vmem:[%s1 + $0xdc] sm:$0xf]
  %v391 = vld [vmem:[%s1 + $0xe0] sm:$0xf]
  %v392 = vld [vmem:[%s1 + $0xe4] sm:$0xf]
  %v393 = vld [vmem:[%s1 + $0xe8] sm:$0xf]
  %v394 = vld [vmem:[%s1 + $0xec] sm:$0xf]
  %v395 = vld [vmem:[%s1 + $0xf0] sm:$0xf]
  %v396 = vld [vmem:[%s1 + $0xf4] sm:$0xf]
  %v397 = vld [vmem:[%s1 + $0xf8] sm:$0xf]
  %v398 = vld [vmem:[%s1 + $0xfc] sm:$0xf]
  %v399 = vld [vmem:[%s1 + $0x100] sm:$0xf]
  %v400 = vld [vmem:[%s1 + $0x104] sm:$0xf]
  %v401 = vld [vmem:[%s1 + $0x108] sm:$0xf]
  %v402 = vld [vmem:[%s1 + $0x10c] sm:$0xf]
  %v403 = vld [vmem:[%s1 + $0x110] sm:$0xf]
  %v404 = vld [vmem:[%s1 + $0x114] sm:$0xf]
  %v405 = vld [vmem:[%s1 + $0x118] sm:$0xf]
  %v406 = vld [vmem:[%s1 + $0x11c] sm:$0xf]
  %v407 = vld [vmem:[%s1 + $0x120] sm:$0xf]
  %v408 = vld [vmem:[%s1 + $0x124] sm:$0xf]
  %v409 = vld [vmem:[%s1 + $0x128] sm:$0xf]
  %v410 = vld [vmem:[%s1 + $0x12c] sm:$0xf]
  %v411 = vld [vmem:[%s1 + $0x130] sm:$0xf]
  %v412 = vld [vmem:[%s1 + $0x134] sm:$0xf]
  %v413 = vld [vmem:[%s1 + $0x138] sm:$0xf]
  %v414 = vld [vmem:[%s1 + $0x13c] sm:$0xf]
  %v415 = vld [vmem:[%s1 + $0x140] sm:$0xf]
  %v416 = vld [vmem:[%s1 + $0x144] sm:$0xf]
  %v417 = vld [vmem:[%s1 + $0x148] sm:$0xf]
  %v418 = vld [vmem:[%s1 + $0x14c] sm:$0xf]
  %v419 = vld [vmem:[%s1 + $0x150] sm:$0xf]
  %v420 = vld [vmem:[%s1 + $0x154] sm:$0xf]
  %v421 = vld [vmem:[%s1 + $0x158] sm:$0xf]
  %v422 = vld [vmem:[%s1 + $0x15c] sm:$0xf]
  %v423 = vld [vmem:[%s1 + $0x160] sm:$0xf]
  %v424 = vld [vmem:[%s1 + $0x164] sm:$0xf]
  %v425 = vld [vmem:[%s1 + $0x168] sm:$0xf]
  %v426 = vld [vmem:[%s1 + $0x16c] sm:$0xf]
  %v427 = vld [vmem:[%s1 + $0x170] sm:$0xf]
  %v428 = vld [vmem:[%s1 + $0x174] sm:$0xf]
  %v429 = vld [vmem:[%s1 + $0x178] sm:$0xf]
  %v430 = vld [vmem:[%s1 + $0x17c] sm:$0xf]
  %v431 = vld [vmem:[%s1 + $0x180] sm:$0xf]
  %v432 = vld [vmem:[%s1 + $0x184] sm:$0xf]
  %v433 = vld [vmem:[%s1 + $0x188] sm:$0xf]
  %v434 = vld [vmem:[%s1 + $0x18c] sm:$0xf]
  %v435 = vld [vmem:[%s1 + $0x190] sm:$0xf]
  %v436 = vld [vmem:[%s1 + $0x194] sm:$0xf]
  %v437 = vld [vmem:[%s1 + $0x198] sm:$0xf]
  %v438 = vld [vmem:[%s1 + $0x19c] sm:$0xf]
  %v439 = vld [vmem:[%s1 + $0x1a0] sm:$0xf]
  %v440 = vld [vmem:[%s1 + $0x1a4] sm:$0xf]
  %v441 = vld [vmem:[%s1 + $0x1a8] sm:$0xf]
  %v442 = vld [vmem:[%s1 + $0x1ac] sm:$0xf]
  %v443 = vld [vmem:[%s1 + $0x1b0] sm:$0xf]
  %v444 = vld [vmem:[%s1 + $0x1b4] sm:$0xf]
  %v445 = vld [vmem:[%s1 + $0x1b8] sm:$0xf]
  %v446 = vld [vmem:[%s1 + $0x1bc] sm:$0xf]
  %v447 = vld [vmem:[%s1 + $0x1c0] sm:$0xf]
  %v448 = vld [vmem:[%s1 + $0x1c4] sm:$0xf]
  %v449 = vld [vmem:[%s1 + $0x1c8] sm:$0xf]
  %v450 = vld [vmem:[%s1 + $0x1cc] sm:$0xf]
  %v451 = vld [vmem:[%s1 + $0x1d0] sm:$0xf]
  %v452 = vld [vmem:[%s1 + $0x1d4] sm:$0xf]
  %v453 = vld [vmem:[%s1 + $0x1d8] sm:$0xf]
  %v454 = vld [vmem:[%s1 + $0x1dc] sm:$0xf]
  %v455 = vld [vmem:[%s1 + $0x1e0] sm:$0xf]
  %v456 = vld [vmem:[%s1 + $0x1e4] sm:$0xf]
  %v457 = vld [vmem:[%s1 + $0x1e8] sm:$0xf]
  %v458 = vld [vmem:[%s1 + $0x1ec] sm:$0xf]
  %v459 = vld [vmem:[%s1 + $0x1f0] sm:$0xf]
  %v460 = vld [vmem:[%s1 + $0x1f4] sm:$0xf]
  %v461 = vld [vmem:[%s1 + $0x1f8] sm:$0xf]
  %v462 = vld [vmem:[%s1 + $0x1fc] sm:$0xf]
  %v463 = vld [vmem:[%s1 + $0x200] sm:$0xf]
  %v464 = vld [vmem:[%s1 + $0x204] sm:$0xf]
  %v465 = vld [vmem:[%s1 + $0x208] sm:$0xf]
  %v466 = vld [vmem:[%s1 + $0x20c] sm:$0xf]
  %v467 = vld [vmem:[%s1 + $0x210] sm:$0xf]
  %v468 = vld [vmem:[%s1 + $0x214] sm:$0xf]
  %v469 = vld [vmem:[%s1 + $0x218] sm:$0xf]
  %v470 = vld [vmem:[%s1 + $0x21c] sm:$0xf]
  %v471 = vld [vmem:[%s1 + $0x220] sm:$0xf]
  %v472 = vld [vmem:[%s1 + $0x224] sm:$0xf]
  %v473 = vld [vmem:[%s1 + $0x228] sm:$0xf]
  %v474 = vld [vmem:[%s1 + $0x22c] sm:$0xf]
  %v475 = vld [vmem:[%s1 + $0x230] sm:$0xf]
  %v476 = vld [vmem:[%s1 + $0x234] sm:$0xf]
  %v477 = vld [vmem:[%s1 + $0x238] sm:$0xf]
  %v478 = vld [vmem:[%s1 + $0x23c] sm:$0xf]
  %v479 = vld [vmem:[%s2] sm:$0x1]
  %v481 = vlaneseq
  %v482 = vshrl.u32 %v481, 7
  %v483 = vsub.s32 0, %v482
  %v484 = vrot.slane %v479, %v483
  %v806 = vunpack.c.l.b16 %v15
  %v807 = vunpack.c.h.b16 %v15
  %v808 = vunpack.c.l.b16 %v16
  %v809 = vunpack.c.h.b16 %v16
  %v810 = vunpack.c.l.b16 %v17
  %v811 = vunpack.c.h.b16 %v17
  %v812 = vunpack.c.l.b16 %v18
  %v813 = vunpack.c.h.b16 %v18
  %v814 = vunpack.c.l.b16 %v19
  %v815 = vunpack.c.l.b16 %v20
  %v816 = vunpack.c.h.b16 %v20
  %v817 = vunpack.c.l.b16 %v21
  %v818 = vunpack.c.h.b16 %v21
  %v819 = vunpack.c.l.b16 %v22
  %v820 = vunpack.c.h.b16 %v22
  %v821 = vunpack.c.l.b16 %v23
  %v822 = vunpack.c.h.b16 %v23
  %v823 = vunpack.c.l.b16 %v24
  %v824 = vunpack.c.l.b16 %v25
  %v825 = vunpack.c.h.b16 %v25
  %v826 = vunpack.c.l.b16 %v26
  %v827 = vunpack.c.h.b16 %v26
  %v828 = vunpack.c.l.b16 %v27
  %v829 = vunpack.c.h.b16 %v27
  %v830 = vunpack.c.l.b16 %v28
  %v831 = vunpack.c.h.b16 %v28
  %v832 = vunpack.c.l.b16 %v29
  %v833 = vunpack.c.l.b16 %v30
  %v834 = vunpack.c.h.b16 %v30
  %v835 = vunpack.c.l.b16 %v31
  %v836 = vunpack.c.h.b16 %v31
  %v837 = vunpack.c.l.b16 %v32
  %v838 = vunpack.c.h.b16 %v32
  %v839 = vunpack.c.l.b16 %v33
  %v840 = vunpack.c.h.b16 %v33
  %v841 = vunpack.c.l.b16 %v34
  %v842 = vunpack.c.l.b16 %v35
  %v843 = vunpack.c.h.b16 %v35
  %v844 = vunpack.c.l.b16 %v36
  %v845 = vunpack.c.h.b16 %v36
  %v846 = vunpack.c.l.b16 %v37
  %v847 = vunpack.c.h.b16 %v37
  %v848 = vunpack.c.l.b16 %v38
  %v849 = vunpack.c.h.b16 %v38
  %v850 = vunpack.c.l.b16 %v39
  %v851 = vunpack.c.l.b16 %v40
  %v852 = vunpack.c.h.b16 %v40
  %v853 = vunpack.c.l.b16 %v41
  %v854 = vunpack.c.h.b16 %v41
  %v855 = vunpack.c.l.b16 %v42
  %v856 = vunpack.c.h.b16 %v42
  %v857 = vunpack.c.l.b16 %v43
  %v858 = vunpack.c.h.b16 %v43
  %v859 = vunpack.c.l.b16 %v44
  %v860 = vunpack.c.l.b16 %v45
  %v861 = vunpack.c.h.b16 %v45
  %v862 = vunpack.c.l.b16 %v46
  %v863 = vunpack.c.h.b16 %v46
  %v864 = vunpack.c.l.b16 %v47
  %v865 = vunpack.c.h.b16 %v47
  %v866 = vunpack.c.l.b16 %v48
  %v867 = vunpack.c.h.b16 %v48
  %v868 = vunpack.c.l.b16 %v49
  %v869 = vunpack.c.l.b16 %v50
  %v870 = vunpack.c.h.b16 %v50
  %v871 = vunpack.c.l.b16 %v51
  %v872 = vunpack.c.h.b16 %v51
  %v873 = vunpack.c.l.b16 %v52
  %v874 = vunpack.c.h.b16 %v52
  %v875 = vunpack.c.l.b16 %v53
  %v876 = vunpack.c.h.b16 %v53
  %v877 = vunpack.c.l.b16 %v54
  %v878 = vunpack.c.l.b16 %v55
  %v879 = vunpack.c.h.b16 %v55
  %v880 = vunpack.c.l.b16 %v56
  %v881 = vunpack.c.h.b16 %v56
  %v882 = vunpack.c.l.b16 %v57
  %v883 = vunpack.c.h.b16 %v57
  %v884 = vunpack.c.l.b16 %v58
  %v885 = vunpack.c.h.b16 %v58
  %v886 = vunpack.c.l.b16 %v59
  %v887 = vunpack.c.l.b16 %v60
  %v888 = vunpack.c.h.b16 %v60
  %v889 = vunpack.c.l.b16 %v61
  %v890 = vunpack.c.h.b16 %v61
  %v891 = vunpack.c.l.b16 %v62
  %v892 = vunpack.c.h.b16 %v62
  %v893 = vunpack.c.l.b16 %v63
  %v894 = vunpack.c.h.b16 %v63
  %v895 = vunpack.c.l.b16 %v64
  %v896 = vunpack.c.l.b16 %v65
  %v897 = vunpack.c.h.b16 %v65
  %v898 = vunpack.c.l.b16 %v66
  %v899 = vunpack.c.h.b16 %v66
  %v900 = vunpack.c.l.b16 %v67
  %v901 = vunpack.c.h.b16 %v67
  %v902 = vunpack.c.l.b16 %v68
  %v903 = vunpack.c.h.b16 %v68
  %v904 = vunpack.c.l.b16 %v69
  %v905 = vunpack.c.l.b16 %v70
  %v906 = vunpack.c.h.b16 %v70
  %v907 = vunpack.c.l.b16 %v71
  %v908 = vunpack.c.h.b16 %v71
  %v909 = vunpack.c.l.b16 %v72
  %v910 = vunpack.c.h.b16 %v72
  %v911 = vunpack.c.l.b16 %v73
  %v912 = vunpack.c.h.b16 %v73
  %v913 = vunpack.c.l.b16 %v74
  %v914 = vunpack.c.l.b16 %v75
  %v915 = vunpack.c.h.b16 %v75
  %v916 = vunpack.c.l.b16 %v76
  %v917 = vunpack.c.h.b16 %v76
  %v918 = vunpack.c.l.b16 %v77
  %v919 = vunpack.c.h.b16 %v77
  %v920 = vunpack.c.l.b16 %v78
  %v921 = vunpack.c.h.b16 %v78
  %v922 = vunpack.c.l.b16 %v79
  %v923 = vunpack.c.l.b16 %v80
  %v924 = vunpack.c.h.b16 %v80
  %v925 = vunpack.c.l.b16 %v81
  %v926 = vunpack.c.h.b16 %v81
  %v927 = vunpack.c.l.b16 %v82
  %v928 = vunpack.c.h.b16 %v82
  %v929 = vunpack.c.l.b16 %v83
  %v930 = vunpack.c.h.b16 %v83
  %v931 = vunpack.c.l.b16 %v84
  %v932 = vunpack.c.l.b16 %v85
  %v933 = vunpack.c.h.b16 %v85
  %v934 = vunpack.c.l.b16 %v86
  %v935 = vunpack.c.h.b16 %v86
  %v936 = vunpack.c.l.b16 %v87
  %v937 = vunpack.c.h.b16 %v87
  %v938 = vunpack.c.l.b16 %v88
  %v939 = vunpack.c.h.b16 %v88
  %v940 = vunpack.c.l.b16 %v89
  %v941 = vunpack.c.l.b16 %v90
  %v942 = vunpack.c.h.b16 %v90
  %v943 = vunpack.c.l.b16 %v91
  %v944 = vunpack.c.h.b16 %v91
  %v945 = vunpack.c.l.b16 %v92
  %v946 = vunpack.c.h.b16 %v92
  %v947 = vunpack.c.l.b16 %v93
  %v948 = vunpack.c.h.b16 %v93
  %v949 = vunpack.c.l.b16 %v94
  %v950 = vunpack.c.l.b16 %v95
  %v951 = vunpack.c.h.b16 %v95
  %v952 = vunpack.c.l.b16 %v96
  %v953 = vunpack.c.h.b16 %v96
  %v954 = vunpack.c.l.b16 %v97
  %v955 = vunpack.c.h.b16 %v97
  %v956 = vunpack.c.l.b16 %v98
  %v957 = vunpack.c.h.b16 %v98
  %v958 = vunpack.c.l.b16 %v99
  %v959 = vunpack.c.l.b16 %v100
  %v960 = vunpack.c.h.b16 %v100
  %v961 = vunpack.c.l.b16 %v101
  %v962 = vunpack.c.h.b16 %v101
  %v963 = vunpack.c.l.b16 %v102
  %v964 = vunpack.c.h.b16 %v102
  %v965 = vunpack.c.l.b16 %v103
  %v966 = vunpack.c.h.b16 %v103
  %v967 = vunpack.c.l.b16 %v104
  %v968 = vunpack.c.l.b16 %v105
  %v969 = vunpack.c.h.b16 %v105
  %v970 = vunpack.c.l.b16 %v106
  %v971 = vunpack.c.h.b16 %v106
  %v972 = vunpack.c.l.b16 %v107
  %v973 = vunpack.c.h.b16 %v107
  %v974 = vunpack.c.l.b16 %v108
  %v975 = vunpack.c.h.b16 %v108
  %v976 = vunpack.c.l.b16 %v109
  %v977 = vunpack.c.l.b16 %v110
  %v978 = vunpack.c.h.b16 %v110
  %v979 = vunpack.c.l.b16 %v111
  %v980 = vunpack.c.h.b16 %v111
  %v981 = vunpack.c.l.b16 %v112
  %v982 = vunpack.c.h.b16 %v112
  %v983 = vunpack.c.l.b16 %v113
  %v984 = vunpack.c.h.b16 %v113
  %v985 = vunpack.c.l.b16 %v114
  %v986 = vunpack.c.l.b16 %v115
  %v987 = vunpack.c.h.b16 %v115
  %v988 = vunpack.c.l.b16 %v116
  %v989 = vunpack.c.h.b16 %v116
  %v990 = vunpack.c.l.b16 %v117
  %v991 = vunpack.c.h.b16 %v117
  %v992 = vunpack.c.l.b16 %v118
  %v993 = vunpack.c.h.b16 %v118
  %v994 = vunpack.c.l.b16 %v119
  %v995 = vunpack.c.l.b16 %v120
  %v996 = vunpack.c.h.b16 %v120
  %v997 = vunpack.c.l.b16 %v121
  %v998 = vunpack.c.h.b16 %v121
  %v999 = vunpack.c.l.b16 %v122
  %v1000 = vunpack.c.h.b16 %v122
  %v1001 = vunpack.c.l.b16 %v123
  %v1002 = vunpack.c.h.b16 %v123
  %v1003 = vunpack.c.l.b16 %v124
  %v1004 = vunpack.c.l.b16 %v125
  %v1005 = vunpack.c.h.b16 %v125
  %v1006 = vunpack.c.l.b16 %v126
  %v1007 = vunpack.c.h.b16 %v126
  %v1008 = vunpack.c.l.b16 %v127
  %v1009 = vunpack.c.h.b16 %v127
  %v1010 = vunpack.c.l.b16 %v128
  %v1011 = vunpack.c.h.b16 %v128
  %v1012 = vunpack.c.l.b16 %v129
  %v1013 = vunpack.c.l.b16 %v130
  %v1014 = vunpack.c.h.b16 %v130
  %v1015 = vunpack.c.l.b16 %v131
  %v1016 = vunpack.c.h.b16 %v131
  %v1017 = vunpack.c.l.b16 %v132
  %v1018 = vunpack.c.h.b16 %v132
  %v1019 = vunpack.c.l.b16 %v133
  %v1020 = vunpack.c.h.b16 %v133
  %v1021 = vunpack.c.l.b16 %v134
  %v1022 = vunpack.c.l.b16 %v135
  %v1023 = vunpack.c.h.b16 %v135
  %v1024 = vunpack.c.l.b16 %v136
  %v1025 = vunpack.c.h.b16 %v136
  %v1026 = vunpack.c.l.b16 %v137
  %v1027 = vunpack.c.h.b16 %v137
  %v1028 = vunpack.c.l.b16 %v138
  %v1029 = vunpack.c.h.b16 %v138
  %v1030 = vunpack.c.l.b16 %v139
  %v1031 = vunpack.c.l.b16 %v140
  %v1032 = vunpack.c.h.b16 %v140
  %v1033 = vunpack.c.l.b16 %v141
  %v1034 = vunpack.c.h.b16 %v141
  %v1035 = vunpack.c.l.b16 %v142
  %v1036 = vunpack.c.h.b16 %v142
  %v1037 = vunpack.c.l.b16 %v143
  %v1038 = vunpack.c.h.b16 %v143
  %v1039 = vunpack.c.l.b16 %v144
  %v1040 = vunpack.c.l.b16 %v145
  %v1041 = vunpack.c.h.b16 %v145
  %v1042 = vunpack.c.l.b16 %v146
  %v1043 = vunpack.c.h.b16 %v146
  %v1044 = vunpack.c.l.b16 %v147
  %v1045 = vunpack.c.h.b16 %v147
  %v1046 = vunpack.c.l.b16 %v148
  %v1047 = vunpack.c.h.b16 %v148
  %v1048 = vunpack.c.l.b16 %v149
  %v1049 = vunpack.c.l.b16 %v150
  %v1050 = vunpack.c.h.b16 %v150
  %v1051 = vunpack.c.l.b16 %v151
  %v1052 = vunpack.c.h.b16 %v151
  %v1053 = vunpack.c.l.b16 %v152
  %v1054 = vunpack.c.h.b16 %v152
  %v1055 = vunpack.c.l.b16 %v153
  %v1056 = vunpack.c.h.b16 %v153
  %v1057 = vunpack.c.l.b16 %v154
  %v1058 = vunpack.c.l.b16 %v155
  %v1059 = vunpack.c.h.b16 %v155
  %v1060 = vunpack.c.l.b16 %v156
  %v1061 = vunpack.c.h.b16 %v156
  %v1062 = vunpack.c.l.b16 %v157
  %v1063 = vunpack.c.h.b16 %v157
  %v1064 = vunpack.c.l.b16 %v158
  %v1065 = vunpack.c.h.b16 %v158
  %v1066 = vunpack.c.l.b16 %v159
  %v1067 = vunpack.c.l.b16 %v160
  %v1068 = vunpack.c.h.b16 %v160
  %v1069 = vunpack.c.l.b16 %v161
  %v1070 = vunpack.c.h.b16 %v161
  %v1071 = vunpack.c.l.b16 %v162
  %v1072 = vunpack.c.h.b16 %v162
  %v1073 = vunpack.c.l.b16 %v163
  %v1074 = vunpack.c.h.b16 %v163
  %v1075 = vunpack.c.l.b16 %v164
  %v1076 = vunpack.c.l.b16 %v165
  %v1077 = vunpack.c.h.b16 %v165
  %v1078 = vunpack.c.l.b16 %v166
  %v1079 = vunpack.c.h.b16 %v166
  %v1080 = vunpack.c.l.b16 %v167
  %v1081 = vunpack.c.h.b16 %v167
  %v1082 = vunpack.c.l.b16 %v168
  %v1083 = vunpack.c.h.b16 %v168
  %v1084 = vunpack.c.l.b16 %v169
  %v1085 = vunpack.c.l.b16 %v170
  %v1086 = vunpack.c.h.b16 %v170
  %v1087 = vunpack.c.l.b16 %v171
  %v1088 = vunpack.c.h.b16 %v171
  %v1089 = vunpack.c.l.b16 %v172
  %v1090 = vunpack.c.h.b16 %v172
  %v1091 = vunpack.c.l.b16 %v173
  %v1092 = vunpack.c.h.b16 %v173
  %v1093 = vunpack.c.l.b16 %v174
  %v1094 = vunpack.c.l.b16 %v175
  %v1095 = vunpack.c.h.b16 %v175
  %v1096 = vunpack.c.l.b16 %v176
  %v1097 = vunpack.c.h.b16 %v176
  %v1098 = vunpack.c.l.b16 %v177
  %v1099 = vunpack.c.h.b16 %v177
  %v1100 = vunpack.c.l.b16 %v178
  %v1101 = vunpack.c.h.b16 %v178
  %v1102 = vunpack.c.l.b16 %v179
  %v1103 = vunpack.c.l.b16 %v180
  %v1104 = vunpack.c.h.b16 %v180
  %v1105 = vunpack.c.l.b16 %v181
  %v1106 = vunpack.c.h.b16 %v181
  %v1107 = vunpack.c.l.b16 %v182
  %v1108 = vunpack.c.h.b16 %v182
  %v1109 = vunpack.c.l.b16 %v183
  %v1110 = vunpack.c.h.b16 %v183
  %v1111 = vunpack.c.l.b16 %v184
  %v1112 = vunpack.c.l.b16 %v185
  %v1113 = vunpack.c.h.b16 %v185
  %v1114 = vunpack.c.l.b16 %v186
  %v1115 = vunpack.c.h.b16 %v186
  %v1116 = vunpack.c.l.b16 %v187
  %v1117 = vunpack.c.h.b16 %v187
  %v1118 = vunpack.c.l.b16 %v188
  %v1119 = vunpack.c.h.b16 %v188
  %v1120 = vunpack.c.l.b16 %v189
  %v1121 = vunpack.c.l.b16 %v190
  %v1122 = vunpack.c.h.b16 %v190
  %v1123 = vunpack.c.l.b16 %v191
  %v1124 = vunpack.c.h.b16 %v191
  %v1125 = vunpack.c.l.b16 %v192
  %v1126 = vunpack.c.h.b16 %v192
  %v1127 = vunpack.c.l.b16 %v193
  %v1128 = vunpack.c.h.b16 %v193
  %v1129 = vunpack.c.l.b16 %v194
  %v1130 = vunpack.c.l.b16 %v195
  %v1131 = vunpack.c.h.b16 %v195
  %v1132 = vunpack.c.l.b16 %v196
  %v1133 = vunpack.c.h.b16 %v196
  %v1134 = vunpack.c.l.b16 %v197
  %v1135 = vunpack.c.h.b16 %v197
  %v1136 = vunpack.c.l.b16 %v198
  %v1137 = vunpack.c.h.b16 %v198
  %v1138 = vunpack.c.l.b16 %v199
  %v1139 = vunpack.c.l.b16 %v200
  %v1140 = vunpack.c.h.b16 %v200
  %v1141 = vunpack.c.l.b16 %v201
  %v1142 = vunpack.c.h.b16 %v201
  %v1143 = vunpack.c.l.b16 %v202
  %v1144 = vunpack.c.h.b16 %v202
  %v1145 = vunpack.c.l.b16 %v203
  %v1146 = vunpack.c.h.b16 %v203
  %v1147 = vunpack.c.l.b16 %v204
  %v1148 = vunpack.c.l.b16 %v205
  %v1149 = vunpack.c.h.b16 %v205
  %v1150 = vunpack.c.l.b16 %v206
  %v1151 = vunpack.c.h.b16 %v206
  %v1152 = vunpack.c.l.b16 %v207
  %v1153 = vunpack.c.h.b16 %v207
  %v1154 = vunpack.c.l.b16 %v208
  %v1155 = vunpack.c.h.b16 %v208
  %v1156 = vunpack.c.l.b16 %v209
  %v1157 = vunpack.c.l.b16 %v210
  %v1158 = vunpack.c.h.b16 %v210
  %v1159 = vunpack.c.l.b16 %v211
  %v1160 = vunpack.c.h.b16 %v211
  %v1161 = vunpack.c.l.b16 %v212
  %v1162 = vunpack.c.h.b16 %v212
  %v1163 = vunpack.c.l.b16 %v213
  %v1164 = vunpack.c.h.b16 %v213
  %v1165 = vunpack.c.l.b16 %v214
  %v1166 = vunpack.c.l.b16 %v215
  %v1167 = vunpack.c.h.b16 %v215
  %v1168 = vunpack.c.l.b16 %v216
  %v1169 = vunpack.c.h.b16 %v216
  %v1170 = vunpack.c.l.b16 %v217
  %v1171 = vunpack.c.h.b16 %v217
  %v1172 = vunpack.c.l.b16 %v218
  %v1173 = vunpack.c.h.b16 %v218
  %v1174 = vunpack.c.l.b16 %v219
  %v1175 = vunpack.c.l.b16 %v220
  %v1176 = vunpack.c.h.b16 %v220
  %v1177 = vunpack.c.l.b16 %v221
  %v1178 = vunpack.c.h.b16 %v221
  %v1179 = vunpack.c.l.b16 %v222
  %v1180 = vunpack.c.h.b16 %v222
  %v1181 = vunpack.c.l.b16 %v223
  %v1182 = vunpack.c.h.b16 %v223
  %v1183 = vunpack.c.l.b16 %v224
  %v1184 = vunpack.c.l.b16 %v225
  %v1185 = vunpack.c.h.b16 %v225
  %v1186 = vunpack.c.l.b16 %v226
  %v1187 = vunpack.c.h.b16 %v226
  %v1188 = vunpack.c.l.b16 %v227
  %v1189 = vunpack.c.h.b16 %v227
  %v1190 = vunpack.c.l.b16 %v228
  %v1191 = vunpack.c.h.b16 %v228
  %v1192 = vunpack.c.l.b16 %v229
  %v1193 = vunpack.c.l.b16 %v230
  %v1194 = vunpack.c.h.b16 %v230
  %v1195 = vunpack.c.l.b16 %v231
  %v1196 = vunpack.c.h.b16 %v231
  %v1197 = vunpack.c.l.b16 %v232
  %v1198 = vunpack.c.h.b16 %v232
  %v1199 = vunpack.c.l.b16 %v233
  %v1200 = vunpack.c.h.b16 %v233
  %v1201 = vunpack.c.l.b16 %v234
  %v1202 = vunpack.c.l.b16 %v235
  %v1203 = vunpack.c.h.b16 %v235
  %v1204 = vunpack.c.l.b16 %v236
  %v1205 = vunpack.c.h.b16 %v236
  %v1206 = vunpack.c.l.b16 %v237
  %v1207 = vunpack.c.h.b16 %v237
  %v1208 = vunpack.c.l.b16 %v238
  %v1209 = vunpack.c.h.b16 %v238
  %v1210 = vunpack.c.l.b16 %v239
  %v1211 = vunpack.c.l.b16 %v240
  %v1212 = vunpack.c.h.b16 %v240
  %v1213 = vunpack.c.l.b16 %v241
  %v1214 = vunpack.c.h.b16 %v241
  %v1215 = vunpack.c.l.b16 %v242
  %v1216 = vunpack.c.h.b16 %v242
  %v1217 = vunpack.c.l.b16 %v243
  %v1218 = vunpack.c.h.b16 %v243
  %v1219 = vunpack.c.l.b16 %v244
  %v1220 = vunpack.c.l.b16 %v245
  %v1221 = vunpack.c.h.b16 %v245
  %v1222 = vunpack.c.l.b16 %v246
  %v1223 = vunpack.c.h.b16 %v246
  %v1224 = vunpack.c.l.b16 %v247
  %v1225 = vunpack.c.h.b16 %v247
  %v1226 = vunpack.c.l.b16 %v248
  %v1227 = vunpack.c.h.b16 %v248
  %v1228 = vunpack.c.l.b16 %v249
  %v1229 = vunpack.c.l.b16 %v250
  %v1230 = vunpack.c.h.b16 %v250
  %v1231 = vunpack.c.l.b16 %v251
  %v1232 = vunpack.c.h.b16 %v251
  %v1233 = vunpack.c.l.b16 %v252
  %v1234 = vunpack.c.h.b16 %v252
  %v1235 = vunpack.c.l.b16 %v253
  %v1236 = vunpack.c.h.b16 %v253
  %v1237 = vunpack.c.l.b16 %v254
  %v1238 = vunpack.c.l.b16 %v255
  %v1239 = vunpack.c.h.b16 %v255
  %v1240 = vunpack.c.l.b16 %v256
  %v1241 = vunpack.c.h.b16 %v256
  %v1242 = vunpack.c.l.b16 %v257
  %v1243 = vunpack.c.h.b16 %v257
  %v1244 = vunpack.c.l.b16 %v258
  %v1245 = vunpack.c.h.b16 %v258
  %v1246 = vunpack.c.l.b16 %v259
  %v1247 = vunpack.c.l.b16 %v260
  %v1248 = vunpack.c.h.b16 %v260
  %v1249 = vunpack.c.l.b16 %v261
  %v1250 = vunpack.c.h.b16 %v261
  %v1251 = vunpack.c.l.b16 %v262
  %v1252 = vunpack.c.h.b16 %v262
  %v1253 = vunpack.c.l.b16 %v263
  %v1254 = vunpack.c.h.b16 %v263
  %v1255 = vunpack.c.l.b16 %v264
  %v1256 = vunpack.c.l.b16 %v265
  %v1257 = vunpack.c.h.b16 %v265
  %v1258 = vunpack.c.l.b16 %v266
  %v1259 = vunpack.c.h.b16 %v266
  %v1260 = vunpack.c.l.b16 %v267
  %v1261 = vunpack.c.h.b16 %v267
  %v1262 = vunpack.c.l.b16 %v268
  %v1263 = vunpack.c.h.b16 %v268
  %v1264 = vunpack.c.l.b16 %v269
  %v1265 = vunpack.c.l.b16 %v270
  %v1266 = vunpack.c.h.b16 %v270
  %v1267 = vunpack.c.l.b16 %v271
  %v1268 = vunpack.c.h.b16 %v271
  %v1269 = vunpack.c.l.b16 %v272
  %v1270 = vunpack.c.h.b16 %v272
  %v1271 = vunpack.c.l.b16 %v273
  %v1272 = vunpack.c.h.b16 %v273
  %v1273 = vunpack.c.l.b16 %v274
  %v1274 = vunpack.c.l.b16 %v275
  %v1275 = vunpack.c.h.b16 %v275
  %v1276 = vunpack.c.l.b16 %v276
  %v1277 = vunpack.c.h.b16 %v276
  %v1278 = vunpack.c.l.b16 %v277
  %v1279 = vunpack.c.h.b16 %v277
  %v1280 = vunpack.c.l.b16 %v278
  %v1281 = vunpack.c.h.b16 %v278
  %v1282 = vunpack.c.l.b16 %v279
  %v1283 = vunpack.c.l.b16 %v280
  %v1284 = vunpack.c.h.b16 %v280
  %v1285 = vunpack.c.l.b16 %v281
  %v1286 = vunpack.c.h.b16 %v281
  %v1287 = vunpack.c.l.b16 %v282
  %v1288 = vunpack.c.h.b16 %v282
  %v1289 = vunpack.c.l.b16 %v283
  %v1290 = vunpack.c.h.b16 %v283
  %v1291 = vunpack.c.l.b16 %v284
  %v1292 = vunpack.c.l.b16 %v285
  %v1293 = vunpack.c.h.b16 %v285
  %v1294 = vunpack.c.l.b16 %v286
  %v1295 = vunpack.c.h.b16 %v286
  %v1296 = vunpack.c.l.b16 %v287
  %v1297 = vunpack.c.h.b16 %v287
  %v1298 = vunpack.c.l.b16 %v288
  %v1299 = vunpack.c.h.b16 %v288
  %v1300 = vunpack.c.l.b16 %v289
  %v1301 = vunpack.c.l.b16 %v290
  %v1302 = vunpack.c.h.b16 %v290
  %v1303 = vunpack.c.l.b16 %v291
  %v1304 = vunpack.c.h.b16 %v291
  %v1305 = vunpack.c.l.b16 %v292
  %v1306 = vunpack.c.h.b16 %v292
  %v1307 = vunpack.c.l.b16 %v293
  %v1308 = vunpack.c.h.b16 %v293
  %v1309 = vunpack.c.l.b16 %v294
  %v1310 = vunpack.c.l.b16 %v295
  %v1311 = vunpack.c.h.b16 %v295
  %v1312 = vunpack.c.l.b16 %v296
  %v1313 = vunpack.c.h.b16 %v296
  %v1314 = vunpack.c.l.b16 %v297
  %v1315 = vunpack.c.h.b16 %v297
  %v1316 = vunpack.c.l.b16 %v298
  %v1317 = vunpack.c.h.b16 %v298
  %v1318 = vunpack.c.l.b16 %v299
  %v1319 = vunpack.c.l.b16 %v300
  %v1320 = vunpack.c.h.b16 %v300
  %v1321 = vunpack.c.l.b16 %v301
  %v1322 = vunpack.c.h.b16 %v301
  %v1323 = vunpack.c.l.b16 %v302
  %v1324 = vunpack.c.h.b16 %v302
  %v1325 = vunpack.c.l.b16 %v303
  %v1326 = vunpack.c.h.b16 %v303
  %v1327 = vunpack.c.l.b16 %v304
  %v1328 = vunpack.c.l.b16 %v305
  %v1329 = vunpack.c.h.b16 %v305
  %v1330 = vunpack.c.l.b16 %v306
  %v1331 = vunpack.c.h.b16 %v306
  %v1332 = vunpack.c.l.b16 %v307
  %v1333 = vunpack.c.h.b16 %v307
  %v1334 = vunpack.c.l.b16 %v308
  %v1335 = vunpack.c.h.b16 %v308
  %v1336 = vunpack.c.l.b16 %v309
  %v1337 = vunpack.c.l.b16 %v310
  %v1338 = vunpack.c.h.b16 %v310
  %v1339 = vunpack.c.l.b16 %v311
  %v1340 = vunpack.c.h.b16 %v311
  %v1341 = vunpack.c.l.b16 %v312
  %v1342 = vunpack.c.h.b16 %v312
  %v1343 = vunpack.c.l.b16 %v313
  %v1344 = vunpack.c.h.b16 %v313
  %v1345 = vunpack.c.l.b16 %v314
  %v1346 = vunpack.c.l.b16 %v315
  %v1347 = vunpack.c.h.b16 %v315
  %v1348 = vunpack.c.l.b16 %v316
  %v1349 = vunpack.c.h.b16 %v316
  %v1350 = vunpack.c.l.b16 %v317
  %v1351 = vunpack.c.h.b16 %v317
  %v1352 = vunpack.c.l.b16 %v318
  %v1353 = vunpack.c.h.b16 %v318
  %v1354 = vunpack.c.l.b16 %v319
  %v1355 = vunpack.c.l.b16 %v320
  %v1356 = vunpack.c.h.b16 %v320
  %v1357 = vunpack.c.l.b16 %v321
  %v1358 = vunpack.c.h.b16 %v321
  %v1359 = vunpack.c.l.b16 %v322
  %v1360 = vunpack.c.h.b16 %v322
  %v1361 = vunpack.c.l.b16 %v323
  %v1362 = vunpack.c.h.b16 %v323
  %v1363 = vunpack.c.l.b16 %v324
  %v1364 = vunpack.c.l.b16 %v325
  %v1365 = vunpack.c.h.b16 %v325
  %v1366 = vunpack.c.l.b16 %v326
  %v1367 = vunpack.c.h.b16 %v326
  %v1368 = vunpack.c.l.b16 %v327
  %v1369 = vunpack.c.h.b16 %v327
  %v1370 = vunpack.c.l.b16 %v328
  %v1371 = vunpack.c.h.b16 %v328
  %v1372 = vunpack.c.l.b16 %v329
  %v1373 = vunpack.c.l.b16 %v330
  %v1374 = vunpack.c.h.b16 %v330
  %v1375 = vunpack.c.l.b16 %v331
  %v1376 = vunpack.c.h.b16 %v331
  %v1377 = vunpack.c.l.b16 %v332
  %v1378 = vunpack.c.h.b16 %v332
  %v1379 = vunpack.c.l.b16 %v333
  %v1380 = vunpack.c.h.b16 %v333
  %v1381 = vunpack.c.l.b16 %v334
  %v1382 = vpack.c.b16 %v815, %v806
  %v1383 = vpack.c.b16 %v816, %v807
  %v1384 = vpack.c.b16 %v817, %v808
  %v1385 = vpack.c.b16 %v818, %v809
  %v1386 = vpack.c.b16 %v819, %v810
  %v1387 = vpack.c.b16 %v820, %v811
  %v1388 = vpack.c.b16 %v821, %v812
  %v1389 = vpack.c.b16 %v822, %v813
  %v1390 = vpack.c.b16 %v823, %v814
  %v1391 = vpack.c.b16 %v833, %v824
  %v1392 = vpack.c.b16 %v834, %v825
  %v1393 = vpack.c.b16 %v835, %v826
  %v1394 = vpack.c.b16 %v836, %v827
  %v1395 = vpack.c.b16 %v837, %v828
  %v1396 = vpack.c.b16 %v838, %v829
  %v1397 = vpack.c.b16 %v839, %v830
  %v1398 = vpack.c.b16 %v840, %v831
  %v1399 = vpack.c.b16 %v841, %v832
  %v1400 = vpack.c.b16 %v851, %v842
  %v1401 = vpack.c.b16 %v852, %v843
  %v1402 = vpack.c.b16 %v853, %v844
  %v1403 = vpack.c.b16 %v854, %v845
  %v1404 = vpack.c.b16 %v855, %v846
  %v1405 = vpack.c.b16 %v856, %v847
  %v1406 = vpack.c.b16 %v857, %v848
  %v1407 = vpack.c.b16 %v858, %v849
  %v1408 = vpack.c.b16 %v859, %v850
  %v1409 = vpack.c.b16 %v869, %v860
  %v1410 = vpack.c.b16 %v870, %v861
  %v1411 = vpack.c.b16 %v871, %v862
  %v1412 = vpack.c.b16 %v872, %v863
  %v1413 = vpack.c.b16 %v873, %v864
  %v1414 = vpack.c.b16 %v874, %v865
  %v1415 = vpack.c.b16 %v875, %v866
  %v1416 = vpack.c.b16 %v876, %v867
  %v1417 = vpack.c.b16 %v877, %v868
  %v1418 = vpack.c.b16 %v887, %v878
  %v1419 = vpack.c.b16 %v888, %v879
  %v1420 = vpack.c.b16 %v889, %v880
  %v1421 = vpack.c.b16 %v890, %v881
  %v1422 = vpack.c.b16 %v891, %v882
  %v1423 = vpack.c.b16 %v892, %v883
  %v1424 = vpack.c.b16 %v893, %v884
  %v1425 = vpack.c.b16 %v894, %v885
  %v1426 = vpack.c.b16 %v895, %v886
  %v1427 = vpack.c.b16 %v905, %v896
  %v1428 = vpack.c.b16 %v906, %v897
  %v1429 = vpack.c.b16 %v907, %v898
  %v1430 = vpack.c.b16 %v908, %v899
  %v1431 = vpack.c.b16 %v909, %v900
  %v1432 = vpack.c.b16 %v910, %v901
  %v1433 = vpack.c.b16 %v911, %v902
  %v1434 = vpack.c.b16 %v912, %v903
  %v1435 = vpack.c.b16 %v913, %v904
  %v1436 = vpack.c.b16 %v923, %v914
  %v1437 = vpack.c.b16 %v924, %v915
  %v1438 = vpack.c.b16 %v925, %v916
  %v1439 = vpack.c.b16 %v926, %v917
  %v1440 = vpack.c.b16 %v927, %v918
  %v1441 = vpack.c.b16 %v928, %v919
  %v1442 = vpack.c.b16 %v929, %v920
  %v1443 = vpack.c.b16 %v930, %v921
  %v1444 = vpack.c.b16 %v931, %v922
  %v1445 = vpack.c.b16 %v941, %v932
  %v1446 = vpack.c.b16 %v942, %v933
  %v1447 = vpack.c.b16 %v943, %v934
  %v1448 = vpack.c.b16 %v944, %v935
  %v1449 = vpack.c.b16 %v945, %v936
  %v1450 = vpack.c.b16 %v946, %v937
  %v1451 = vpack.c.b16 %v947, %v938
  %v1452 = vpack.c.b16 %v948, %v939
  %v1453 = vpack.c.b16 %v949, %v940
  %v1454 = vpack.c.b16 %v959, %v950
  %v1455 = vpack.c.b16 %v960, %v951
  %v1456 = vpack.c.b16 %v961, %v952
  %v1457 = vpack.c.b16 %v962, %v953
  %v1458 = vpack.c.b16 %v963, %v954
  %v1459 = vpack.c.b16 %v964, %v955
  %v1460 = vpack.c.b16 %v965, %v956
  %v1461 = vpack.c.b16 %v966, %v957
  %v1462 = vpack.c.b16 %v967, %v958
  %v1463 = vpack.c.b16 %v977, %v968
  %v1464 = vpack.c.b16 %v978, %v969
  %v1465 = vpack.c.b16 %v979, %v970
  %v1466 = vpack.c.b16 %v980, %v971
  %v1467 = vpack.c.b16 %v981, %v972
  %v1468 = vpack.c.b16 %v982, %v973
  %v1469 = vpack.c.b16 %v983, %v974
  %v1470 = vpack.c.b16 %v984, %v975
  %v1471 = vpack.c.b16 %v985, %v976
  %v1472 = vpack.c.b16 %v995, %v986
  %v1473 = vpack.c.b16 %v996, %v987
  %v1474 = vpack.c.b16 %v997, %v988
  %v1475 = vpack.c.b16 %v998, %v989
  %v1476 = vpack.c.b16 %v999, %v990
  %v1477 = vpack.c.b16 %v1000, %v991
  %v1478 = vpack.c.b16 %v1001, %v992
  %v1479 = vpack.c.b16 %v1002, %v993
  %v1480 = vpack.c.b16 %v1003, %v994
  %v1481 = vpack.c.b16 %v1013, %v1004
  %v1482 = vpack.c.b16 %v1014, %v1005
  %v1483 = vpack.c.b16 %v1015, %v1006
  %v1484 = vpack.c.b16 %v1016, %v1007
  %v1485 = vpack.c.b16 %v1017, %v1008
  %v1486 = vpack.c.b16 %v1018, %v1009
  %v1487 = vpack.c.b16 %v1019, %v1010
  %v1488 = vpack.c.b16 %v1020, %v1011
  %v1489 = vpack.c.b16 %v1021, %v1012
  %v1490 = vpack.c.b16 %v1031, %v1022
  %v1491 = vpack.c.b16 %v1032, %v1023
  %v1492 = vpack.c.b16 %v1033, %v1024
  %v1493 = vpack.c.b16 %v1034, %v1025
  %v1494 = vpack.c.b16 %v1035, %v1026
  %v1495 = vpack.c.b16 %v1036, %v1027
  %v1496 = vpack.c.b16 %v1037, %v1028
  %v1497 = vpack.c.b16 %v1038, %v1029
  %v1498 = vpack.c.b16 %v1039, %v1030
  %v1499 = vpack.c.b16 %v1049, %v1040
  %v1500 = vpack.c.b16 %v1050, %v1041
  %v1501 = vpack.c.b16 %v1051, %v1042
  %v1502 = vpack.c.b16 %v1052, %v1043
  %v1503 = vpack.c.b16 %v1053, %v1044
  %v1504 = vpack.c.b16 %v1054, %v1045
  %v1505 = vpack.c.b16 %v1055, %v1046
  %v1506 = vpack.c.b16 %v1056, %v1047
  %v1507 = vpack.c.b16 %v1057, %v1048
  %v1508 = vpack.c.b16 %v1067, %v1058
  %v1509 = vpack.c.b16 %v1068, %v1059
  %v1510 = vpack.c.b16 %v1069, %v1060
  %v1511 = vpack.c.b16 %v1070, %v1061
  %v1512 = vpack.c.b16 %v1071, %v1062
  %v1513 = vpack.c.b16 %v1072, %v1063
  %v1514 = vpack.c.b16 %v1073, %v1064
  %v1515 = vpack.c.b16 %v1074, %v1065
  %v1516 = vpack.c.b16 %v1075, %v1066
  %v1517 = vpack.c.b16 %v1085, %v1076
  %v1518 = vpack.c.b16 %v1086, %v1077
  %v1519 = vpack.c.b16 %v1087, %v1078
  %v1520 = vpack.c.b16 %v1088, %v1079
  %v1521 = vpack.c.b16 %v1089, %v1080
  %v1522 = vpack.c.b16 %v1090, %v1081
  %v1523 = vpack.c.b16 %v1091, %v1082
  %v1524 = vpack.c.b16 %v1092, %v1083
  %v1525 = vpack.c.b16 %v1093, %v1084
  %v1526 = vpack.c.b16 %v1103, %v1094
  %v1527 = vpack.c.b16 %v1104, %v1095
  %v1528 = vpack.c.b16 %v1105, %v1096
  %v1529 = vpack.c.b16 %v1106, %v1097
  %v1530 = vpack.c.b16 %v1107, %v1098
  %v1531 = vpack.c.b16 %v1108, %v1099
  %v1532 = vpack.c.b16 %v1109, %v1100
  %v1533 = vpack.c.b16 %v1110, %v1101
  %v1534 = vpack.c.b16 %v1111, %v1102
  %v1535 = vpack.c.b16 %v1121, %v1112
  %v1536 = vpack.c.b16 %v1122, %v1113
  %v1537 = vpack.c.b16 %v1123, %v1114
  %v1538 = vpack.c.b16 %v1124, %v1115
  %v1539 = vpack.c.b16 %v1125, %v1116
  %v1540 = vpack.c.b16 %v1126, %v1117
  %v1541 = vpack.c.b16 %v1127, %v1118
  %v1542 = vpack.c.b16 %v1128, %v1119
  %v1543 = vpack.c.b16 %v1129, %v1120
  %v1544 = vpack.c.b16 %v1139, %v1130
  %v1545 = vpack.c.b16 %v1140, %v1131
  %v1546 = vpack.c.b16 %v1141, %v1132
  %v1547 = vpack.c.b16 %v1142, %v1133
  %v1548 = vpack.c.b16 %v1143, %v1134
  %v1549 = vpack.c.b16 %v1144, %v1135
  %v1550 = vpack.c.b16 %v1145, %v1136
  %v1551 = vpack.c.b16 %v1146, %v1137
  %v1552 = vpack.c.b16 %v1147, %v1138
  %v1553 = vpack.c.b16 %v1157, %v1148
  %v1554 = vpack.c.b16 %v1158, %v1149
  %v1555 = vpack.c.b16 %v1159, %v1150
  %v1556 = vpack.c.b16 %v1160, %v1151
  %v1557 = vpack.c.b16 %v1161, %v1152
  %v1558 = vpack.c.b16 %v1162, %v1153
  %v1559 = vpack.c.b16 %v1163, %v1154
  %v1560 = vpack.c.b16 %v1164, %v1155
  %v1561 = vpack.c.b16 %v1165, %v1156
  %v1562 = vpack.c.b16 %v1175, %v1166
  %v1563 = vpack.c.b16 %v1176, %v1167
  %v1564 = vpack.c.b16 %v1177, %v1168
  %v1565 = vpack.c.b16 %v1178, %v1169
  %v1566 = vpack.c.b16 %v1179, %v1170
  %v1567 = vpack.c.b16 %v1180, %v1171
  %v1568 = vpack.c.b16 %v1181, %v1172
  %v1569 = vpack.c.b16 %v1182, %v1173
  %v1570 = vpack.c.b16 %v1183, %v1174
  %v1571 = vpack.c.b16 %v1193, %v1184
  %v1572 = vpack.c.b16 %v1194, %v1185
  %v1573 = vpack.c.b16 %v1195, %v1186
  %v1574 = vpack.c.b16 %v1196, %v1187
  %v1575 = vpack.c.b16 %v1197, %v1188
  %v1576 = vpack.c.b16 %v1198, %v1189
  %v1577 = vpack.c.b16 %v1199, %v1190
  %v1578 = vpack.c.b16 %v1200, %v1191
  %v1579 = vpack.c.b16 %v1201, %v1192
  %v1580 = vpack.c.b16 %v1211, %v1202
  %v1581 = vpack.c.b16 %v1212, %v1203
  %v1582 = vpack.c.b16 %v1213, %v1204
  %v1583 = vpack.c.b16 %v1214, %v1205
  %v1584 = vpack.c.b16 %v1215, %v1206
  %v1585 = vpack.c.b16 %v1216, %v1207
  %v1586 = vpack.c.b16 %v1217, %v1208
  %v1587 = vpack.c.b16 %v1218, %v1209
  %v1588 = vpack.c.b16 %v1219, %v1210
  %v1589 = vpack.c.b16 %v1229, %v1220
  %v1590 = vpack.c.b16 %v1230, %v1221
  %v1591 = vpack.c.b16 %v1231, %v1222
  %v1592 = vpack.c.b16 %v1232, %v1223
  %v1593 = vpack.c.b16 %v1233, %v1224
  %v1594 = vpack.c.b16 %v1234, %v1225
  %v1595 = vpack.c.b16 %v1235, %v1226
  %v1596 = vpack.c.b16 %v1236, %v1227
  %v1597 = vpack.c.b16 %v1237, %v1228
  %v1598 = vpack.c.b16 %v1247, %v1238
  %v1599 = vpack.c.b16 %v1248, %v1239
  %v1600 = vpack.c.b16 %v1249, %v1240
  %v1601 = vpack.c.b16 %v1250, %v1241
  %v1602 = vpack.c.b16 %v1251, %v1242
  %v1603 = vpack.c.b16 %v1252, %v1243
  %v1604 = vpack.c.b16 %v1253, %v1244
  %v1605 = vpack.c.b16 %v1254, %v1245
  %v1606 = vpack.c.b16 %v1255, %v1246
  %v1607 = vpack.c.b16 %v1265, %v1256
  %v1608 = vpack.c.b16 %v1266, %v1257
  %v1609 = vpack.c.b16 %v1267, %v1258
  %v1610 = vpack.c.b16 %v1268, %v1259
  %v1611 = vpack.c.b16 %v1269, %v1260
  %v1612 = vpack.c.b16 %v1270, %v1261
  %v1613 = vpack.c.b16 %v1271, %v1262
  %v1614 = vpack.c.b16 %v1272, %v1263
  %v1615 = vpack.c.b16 %v1273, %v1264
  %v1616 = vpack.c.b16 %v1283, %v1274
  %v1617 = vpack.c.b16 %v1284, %v1275
  %v1618 = vpack.c.b16 %v1285, %v1276
  %v1619 = vpack.c.b16 %v1286, %v1277
  %v1620 = vpack.c.b16 %v1287, %v1278
  %v1621 = vpack.c.b16 %v1288, %v1279
  %v1622 = vpack.c.b16 %v1289, %v1280
  %v1623 = vpack.c.b16 %v1290, %v1281
  %v1624 = vpack.c.b16 %v1291, %v1282
  %v1625 = vpack.c.b16 %v1301, %v1292
  %v1626 = vpack.c.b16 %v1302, %v1293
  %v1627 = vpack.c.b16 %v1303, %v1294
  %v1628 = vpack.c.b16 %v1304, %v1295
  %v1629 = vpack.c.b16 %v1305, %v1296
  %v1630 = vpack.c.b16 %v1306, %v1297
  %v1631 = vpack.c.b16 %v1307, %v1298
  %v1632 = vpack.c.b16 %v1308, %v1299
  %v1633 = vpack.c.b16 %v1309, %v1300
  %v1634 = vpack.c.b16 %v1319, %v1310
  %v1635 = vpack.c.b16 %v1320, %v1311
  %v1636 = vpack.c.b16 %v1321, %v1312
  %v1637 = vpack.c.b16 %v1322, %v1313
  %v1638 = vpack.c.b16 %v1323, %v1314
  %v1639 = vpack.c.b16 %v1324, %v1315
  %v1640 = vpack.c.b16 %v1325, %v1316
  %v1641 = vpack.c.b16 %v1326, %v1317
  %v1642 = vpack.c.b16 %v1327, %v1318
  %v1643 = vpack.c.b16 %v1337, %v1328
  %v1644 = vpack.c.b16 %v1338, %v1329
  %v1645 = vpack.c.b16 %v1339, %v1330
  %v1646 = vpack.c.b16 %v1340, %v1331
  %v1647 = vpack.c.b16 %v1341, %v1332
  %v1648 = vpack.c.b16 %v1342, %v1333
  %v1649 = vpack.c.b16 %v1343, %v1334
  %v1650 = vpack.c.b16 %v1344, %v1335
  %v1651 = vpack.c.b16 %v1345, %v1336
  %v1652 = vpack.c.b16 %v1355, %v1346
  %v1653 = vpack.c.b16 %v1356, %v1347
  %v1654 = vpack.c.b16 %v1357, %v1348
  %v1655 = vpack.c.b16 %v1358, %v1349
  %v1656 = vpack.c.b16 %v1359, %v1350
  %v1657 = vpack.c.b16 %v1360, %v1351
  %v1658 = vpack.c.b16 %v1361, %v1352
  %v1659 = vpack.c.b16 %v1362, %v1353
  %v1660 = vpack.c.b16 %v1363, %v1354
  %v1661 = vpack.c.b16 %v1373, %v1364
  %v1662 = vpack.c.b16 %v1374, %v1365
  %v1663 = vpack.c.b16 %v1375, %v1366
  %v1664 = vpack.c.b16 %v1376, %v1367
  %v1665 = vpack.c.b16 %v1377, %v1368
  %v1666 = vpack.c.b16 %v1378, %v1369
  %v1667 = vpack.c.b16 %v1379, %v1370
  %v1668 = vpack.c.b16 %v1380, %v1371
  %v1669 = vpack.c.b16 %v1381, %v1372
  %v2102 = vunpack.c.l.b16 %v335
  %v2103 = vunpack.c.l.b16 %v336
  %v2104 = vunpack.c.l.b16 %v337
  %v2105 = vunpack.c.l.b16 %v338
  %v2106 = vunpack.c.l.b16 %v339
  %v2107 = vunpack.c.l.b16 %v340
  %v2108 = vunpack.c.l.b16 %v341
  %v2109 = vunpack.c.l.b16 %v342
  %v2110 = vunpack.c.l.b16 %v343
  %v2111 = vunpack.c.l.b16 %v344
  %v2112 = vunpack.c.l.b16 %v345
  %v2113 = vunpack.c.l.b16 %v346
  %v2114 = vunpack.c.l.b16 %v347
  %v2115 = vunpack.c.l.b16 %v348
  %v2116 = vunpack.c.l.b16 %v349
  %v2117 = vunpack.c.l.b16 %v350
  %v2118 = vunpack.c.l.b16 %v351
  %v2119 = vunpack.c.l.b16 %v352
  %v2120 = vunpack.c.l.b16 %v353
  %v2121 = vunpack.c.l.b16 %v354
  %v2122 = vunpack.c.l.b16 %v355
  %v2123 = vunpack.c.l.b16 %v356
  %v2124 = vunpack.c.l.b16 %v357
  %v2125 = vunpack.c.l.b16 %v358
  %v2126 = vunpack.c.l.b16 %v359
  %v2127 = vunpack.c.l.b16 %v360
  %v2128 = vunpack.c.l.b16 %v361
  %v2129 = vunpack.c.l.b16 %v362
  %v2130 = vunpack.c.l.b16 %v363
  %v2131 = vunpack.c.l.b16 %v364
  %v2132 = vunpack.c.l.b16 %v365
  %v2133 = vunpack.c.l.b16 %v366
  %v2134 = vunpack.c.l.b16 %v367
  %v2135 = vunpack.c.l.b16 %v368
  %v2136 = vunpack.c.l.b16 %v369
  %v2137 = vunpack.c.l.b16 %v370
  %v2138 = vunpack.c.l.b16 %v371
  %v2139 = vunpack.c.l.b16 %v372
  %v2140 = vunpack.c.l.b16 %v373
  %v2141 = vunpack.c.l.b16 %v374
  %v2142 = vunpack.c.l.b16 %v375
  %v2143 = vunpack.c.l.b16 %v376
  %v2144 = vunpack.c.l.b16 %v377
  %v2145 = vunpack.c.l.b16 %v378
  %v2146 = vunpack.c.l.b16 %v379
  %v2147 = vunpack.c.l.b16 %v380
  %v2148 = vunpack.c.l.b16 %v381
  %v2149 = vunpack.c.l.b16 %v382
  %v2150 = vunpack.c.l.b16 %v383
  %v2151 = vunpack.c.l.b16 %v384
  %v2152 = vunpack.c.l.b16 %v385
  %v2153 = vunpack.c.l.b16 %v386
  %v2154 = vunpack.c.l.b16 %v387
  %v2155 = vunpack.c.l.b16 %v388
  %v2156 = vunpack.c.l.b16 %v389
  %v2157 = vunpack.c.l.b16 %v390
  %v2158 = vunpack.c.l.b16 %v391
  %v2159 = vunpack.c.l.b16 %v392
  %v2160 = vunpack.c.l.b16 %v393
  %v2161 = vunpack.c.l.b16 %v394
  %v2162 = vunpack.c.l.b16 %v395
  %v2163 = vunpack.c.l.b16 %v396
  %v2164 = vunpack.c.l.b16 %v397
  %v2165 = vunpack.c.l.b16 %v398
  %v2166 = vunpack.c.l.b16 %v399
  %v2167 = vunpack.c.l.b16 %v400
  %v2168 = vunpack.c.l.b16 %v401
  %v2169 = vunpack.c.l.b16 %v402
  %v2170 = vunpack.c.l.b16 %v403
  %v2171 = vunpack.c.l.b16 %v404
  %v2172 = vunpack.c.l.b16 %v405
  %v2173 = vunpack.c.l.b16 %v406
  %v2174 = vunpack.c.l.b16 %v407
  %v2175 = vunpack.c.l.b16 %v408
  %v2176 = vunpack.c.l.b16 %v409
  %v2177 = vunpack.c.l.b16 %v410
  %v2178 = vunpack.c.l.b16 %v411
  %v2179 = vunpack.c.l.b16 %v412
  %v2180 = vunpack.c.l.b16 %v413
  %v2181 = vunpack.c.l.b16 %v414
  %v2182 = vunpack.c.l.b16 %v415
  %v2183 = vunpack.c.l.b16 %v416
  %v2184 = vunpack.c.l.b16 %v417
  %v2185 = vunpack.c.l.b16 %v418
  %v2186 = vunpack.c.l.b16 %v419
  %v2187 = vunpack.c.l.b16 %v420
  %v2188 = vunpack.c.l.b16 %v421
  %v2189 = vunpack.c.l.b16 %v422
  %v2190 = vunpack.c.l.b16 %v423
  %v2191 = vunpack.c.l.b16 %v424
  %v2192 = vunpack.c.l.b16 %v425
  %v2193 = vunpack.c.l.b16 %v426
  %v2194 = vunpack.c.l.b16 %v427
  %v2195 = vunpack.c.l.b16 %v428
  %v2196 = vunpack.c.l.b16 %v429
  %v2197 = vunpack.c.l.b16 %v430
  %v2198 = vunpack.c.l.b16 %v431
  %v2199 = vunpack.c.l.b16 %v432
  %v2200 = vunpack.c.l.b16 %v433
  %v2201 = vunpack.c.l.b16 %v434
  %v2202 = vunpack.c.l.b16 %v435
  %v2203 = vunpack.c.l.b16 %v436
  %v2204 = vunpack.c.l.b16 %v437
  %v2205 = vunpack.c.l.b16 %v438
  %v2206 = vunpack.c.l.b16 %v439
  %v2207 = vunpack.c.l.b16 %v440
  %v2208 = vunpack.c.l.b16 %v441
  %v2209 = vunpack.c.l.b16 %v442
  %v2210 = vunpack.c.l.b16 %v443
  %v2211 = vunpack.c.l.b16 %v444
  %v2212 = vunpack.c.l.b16 %v445
  %v2213 = vunpack.c.l.b16 %v446
  %v2214 = vunpack.c.l.b16 %v447
  %v2215 = vunpack.c.l.b16 %v448
  %v2216 = vunpack.c.l.b16 %v449
  %v2217 = vunpack.c.l.b16 %v450
  %v2218 = vunpack.c.l.b16 %v451
  %v2219 = vunpack.c.l.b16 %v452
  %v2220 = vunpack.c.l.b16 %v453
  %v2221 = vunpack.c.l.b16 %v454
  %v2222 = vunpack.c.l.b16 %v455
  %v2223 = vunpack.c.l.b16 %v456
  %v2224 = vunpack.c.l.b16 %v457
  %v2225 = vunpack.c.l.b16 %v458
  %v2226 = vunpack.c.l.b16 %v459
  %v2227 = vunpack.c.l.b16 %v460
  %v2228 = vunpack.c.l.b16 %v461
  %v2229 = vunpack.c.l.b16 %v462
  %v2230 = vunpack.c.l.b16 %v463
  %v2231 = vunpack.c.l.b16 %v464
  %v2232 = vunpack.c.l.b16 %v465
  %v2233 = vunpack.c.l.b16 %v466
  %v2234 = vunpack.c.l.b16 %v467
  %v2235 = vunpack.c.l.b16 %v468
  %v2236 = vunpack.c.l.b16 %v469
  %v2237 = vunpack.c.l.b16 %v470
  %v2238 = vunpack.c.l.b16 %v471
  %v2239 = vunpack.c.l.b16 %v472
  %v2240 = vunpack.c.l.b16 %v473
  %v2241 = vunpack.c.l.b16 %v474
  %v2242 = vunpack.c.l.b16 %v475
  %v2243 = vunpack.c.l.b16 %v476
  %v2244 = vunpack.c.l.b16 %v477
  %v2245 = vunpack.c.l.b16 %v478
  %v2246 = vpack.c.b16 %v2103, %v2102
  %v2247 = vpack.c.b16 %v2105, %v2104
  %v2248 = vpack.c.b16 %v2107, %v2106
  %v2249 = vpack.c.b16 %v2109, %v2108
  %v2250 = vpack.c.b16 %v2111, %v2110
  %v2251 = vpack.c.b16 %v2113, %v2112
  %v2252 = vpack.c.b16 %v2115, %v2114
  %v2253 = vpack.c.b16 %v2117, %v2116
  %v2254 = vpack.c.b16 %v2119, %v2118
  %v2255 = vpack.c.b16 %v2121, %v2120
  %v2256 = vpack.c.b16 %v2123, %v2122
  %v2257 = vpack.c.b16 %v2125, %v2124
  %v2258 = vpack.c.b16 %v2127, %v2126
  %v2259 = vpack.c.b16 %v2129, %v2128
  %v2260 = vpack.c.b16 %v2131, %v2130
  %v2261 = vpack.c.b16 %v2133, %v2132
  %v2262 = vpack.c.b16 %v2135, %v2134
  %v2263 = vpack.c.b16 %v2137, %v2136
  %v2264 = vpack.c.b16 %v2139, %v2138
  %v2265 = vpack.c.b16 %v2141, %v2140
  %v2266 = vpack.c.b16 %v2143, %v2142
  %v2267 = vpack.c.b16 %v2145, %v2144
  %v2268 = vpack.c.b16 %v2147, %v2146
  %v2269 = vpack.c.b16 %v2149, %v2148
  %v2270 = vpack.c.b16 %v2151, %v2150
  %v2271 = vpack.c.b16 %v2153, %v2152
  %v2272 = vpack.c.b16 %v2155, %v2154
  %v2273 = vpack.c.b16 %v2157, %v2156
  %v2274 = vpack.c.b16 %v2159, %v2158
  %v2275 = vpack.c.b16 %v2161, %v2160
  %v2276 = vpack.c.b16 %v2163, %v2162
  %v2277 = vpack.c.b16 %v2165, %v2164
  %v2278 = vpack.c.b16 %v2167, %v2166
  %v2279 = vpack.c.b16 %v2169, %v2168
  %v2280 = vpack.c.b16 %v2171, %v2170
  %v2281 = vpack.c.b16 %v2173, %v2172
  %v2282 = vpack.c.b16 %v2175, %v2174
  %v2283 = vpack.c.b16 %v2177, %v2176
  %v2284 = vpack.c.b16 %v2179, %v2178
  %v2285 = vpack.c.b16 %v2181, %v2180
  %v2286 = vpack.c.b16 %v2183, %v2182
  %v2287 = vpack.c.b16 %v2185, %v2184
  %v2288 = vpack.c.b16 %v2187, %v2186
  %v2289 = vpack.c.b16 %v2189, %v2188
  %v2290 = vpack.c.b16 %v2191, %v2190
  %v2291 = vpack.c.b16 %v2193, %v2192
  %v2292 = vpack.c.b16 %v2195, %v2194
  %v2293 = vpack.c.b16 %v2197, %v2196
  %v2294 = vpack.c.b16 %v2199, %v2198
  %v2295 = vpack.c.b16 %v2201, %v2200
  %v2296 = vpack.c.b16 %v2203, %v2202
  %v2297 = vpack.c.b16 %v2205, %v2204
  %v2298 = vpack.c.b16 %v2207, %v2206
  %v2299 = vpack.c.b16 %v2209, %v2208
  %v2300 = vpack.c.b16 %v2211, %v2210
  %v2301 = vpack.c.b16 %v2213, %v2212
  %v2302 = vpack.c.b16 %v2215, %v2214
  %v2303 = vpack.c.b16 %v2217, %v2216
  %v2304 = vpack.c.b16 %v2219, %v2218
  %v2305 = vpack.c.b16 %v2221, %v2220
  %v2306 = vpack.c.b16 %v2223, %v2222
  %v2307 = vpack.c.b16 %v2225, %v2224
  %v2308 = vpack.c.b16 %v2227, %v2226
  %v2309 = vpack.c.b16 %v2229, %v2228
  %v2310 = vpack.c.b16 %v2231, %v2230
  %v2311 = vpack.c.b16 %v2233, %v2232
  %v2312 = vpack.c.b16 %v2235, %v2234
  %v2313 = vpack.c.b16 %v2237, %v2236
  %v2314 = vpack.c.b16 %v2239, %v2238
  %v2315 = vpack.c.b16 %v2241, %v2240
  %v2316 = vpack.c.b16 %v2243, %v2242
  %v2317 = vpack.c.b16 %v2245, %v2244
  %2390 = vmatprep.subr.bf16.mxu0 0
  %2391 = vmatpush1.bf16.msra.mxu0 %v2253
  %2392 = vmatprep.subr.bf16.mxu0 0
  %2393 = vmatpush1.bf16.msra.mxu0 %v2252
  %2394 = vmatprep.subr.bf16.mxu0 0
  %2395 = vmatpush1.bf16.msra.mxu0 %v2251
  %2396 = vmatprep.subr.bf16.mxu0 0
  %2397 = vmatpush1.bf16.msra.mxu0 %v2250
  %2398 = vmatprep.subr.bf16.mxu0 0
  %2399 = vmatpush1.bf16.msra.mxu0 %v2249
  %2400 = vmatprep.subr.bf16.mxu0 0
  %2401 = vmatpush1.bf16.msra.mxu0 %v2248
  %2402 = vmatprep.subr.bf16.mxu0 0
  %2403 = vmatpush1.bf16.msra.mxu0 %v2247
  %2404 = vmatprep.subr.bf16.mxu0 0
  %2405 = vmatpush1.bf16.msra.mxu0 %v2246
  %2406 = vmatprep.subr.bf16.mxu0 0
  %2407 = vmatpush2.bf16.msra.mxu0 %v2261
  %2408 = vmatprep.subr.bf16.mxu0 0
  %2409 = vmatpush2.bf16.msra.mxu0 %v2260
  %2410 = vmatprep.subr.bf16.mxu0 0
  %2411 = vmatpush2.bf16.msra.mxu0 %v2259
  %2412 = vmatprep.subr.bf16.mxu0 0
  %2413 = vmatpush2.bf16.msra.mxu0 %v2258
  %2414 = vmatprep.subr.bf16.mxu0 0
  %2415 = vmatpush2.bf16.msra.mxu0 %v2257
  %2416 = vmatprep.subr.bf16.mxu0 0
  %2417 = vmatpush2.bf16.msra.mxu0 %v2256
  %2418 = vmatprep.subr.bf16.mxu0 0
  %2419 = vmatpush2.bf16.msra.mxu0 %v2255
  %2420 = vmatprep.subr.bf16.mxu0 0
  %2421 = vmatpush2.bf16.msra.mxu0 %v2254
  %2422 = vmatprep.mubr.bf16.mxu0 %v1383
  %2423 = vmatmul.mubr.bf16.gmra.mxu0 %v1382
  %v2424 = vpop.f32.mrf.mxu0
  %v2425 = vadd.f32 %v484, %v2424
  %v2426 = vpop.f32.mrf.mxu0
  %v2427 = vpop.f32.mrf.mxu0
  %v2428 = vadd.f32 %v484, %v2427
  %v2429 = vpop.f32.mrf.mxu0
  %2430 = vmatprep.mubr.bf16.mxu0 %v1392
  %2431 = vmatmul.mubr.bf16.gmra.mxu0 %v1391
  %v2432 = vpop.f32.mrf.mxu0
  %v2433 = vadd.f32 %v484, %v2432
  %v2434 = vpop.f32.mrf.mxu0
  %v2435 = vpop.f32.mrf.mxu0
  %v2436 = vadd.f32 %v484, %v2435
  %v2437 = vpop.f32.mrf.mxu0
  %2438 = vmatprep.mubr.bf16.mxu0 %v1401
  %2439 = vmatmul.mubr.bf16.gmra.mxu0 %v1400
  %v2440 = vpop.f32.mrf.mxu0
  %v2441 = vadd.f32 %v484, %v2440
  %v2442 = vpop.f32.mrf.mxu0
  %v2443 = vpop.f32.mrf.mxu0
  %v2444 = vadd.f32 %v484, %v2443
  %v2445 = vpop.f32.mrf.mxu0
  %2446 = vmatprep.mubr.bf16.mxu0 %v1410
  %2447 = vmatmul.mubr.bf16.gmra.mxu0 %v1409
  %v2448 = vpop.f32.mrf.mxu0
  %v2449 = vadd.f32 %v484, %v2448
  %v2450 = vpop.f32.mrf.mxu0
  %v2451 = vpop.f32.mrf.mxu0
  %v2452 = vadd.f32 %v484, %v2451
  %v2453 = vpop.f32.mrf.mxu0
  %2454 = vmatprep.mubr.bf16.mxu0 %v1419
  %2455 = vmatmul.mubr.bf16.gmra.mxu0 %v1418
  %v2456 = vpop.f32.mrf.mxu0
  %v2457 = vadd.f32 %v484, %v2456
  %v2458 = vpop.f32.mrf.mxu0
  %v2459 = vpop.f32.mrf.mxu0
  %v2460 = vadd.f32 %v484, %v2459
  %v2461 = vpop.f32.mrf.mxu0
  %2462 = vmatprep.mubr.bf16.mxu0 %v1428
  %2463 = vmatmul.mubr.bf16.gmra.mxu0 %v1427
  %v2464 = vpop.f32.mrf.mxu0
  %v2465 = vadd.f32 %v484, %v2464
  %v2466 = vpop.f32.mrf.mxu0
  %v2467 = vpop.f32.mrf.mxu0
  %v2468 = vadd.f32 %v484, %v2467
  %v2469 = vpop.f32.mrf.mxu0
  %2470 = vmatprep.mubr.bf16.mxu0 %v1437
  %2471 = vmatmul.mubr.bf16.gmra.mxu0 %v1436
  %v2472 = vpop.f32.mrf.mxu0
  %v2473 = vadd.f32 %v484, %v2472
  %v2474 = vpop.f32.mrf.mxu0
  %v2475 = vpop.f32.mrf.mxu0
  %v2476 = vadd.f32 %v484, %v2475
  %v2477 = vpop.f32.mrf.mxu0
  %2478 = vmatprep.mubr.bf16.mxu0 %v1446
  %2479 = vmatmul.mubr.bf16.gmra.mxu0 %v1445
  %v2480 = vpop.f32.mrf.mxu0
  %v2481 = vadd.f32 %v484, %v2480
  %v2482 = vpop.f32.mrf.mxu0
  %v2483 = vpop.f32.mrf.mxu0
  %v2484 = vadd.f32 %v484, %v2483
  %v2485 = vpop.f32.mrf.mxu0
  %2486 = vmatprep.mubr.bf16.mxu0 %v1455
  %2487 = vmatmul.mubr.bf16.gmra.mxu0 %v1454
  %v2488 = vpop.f32.mrf.mxu0
  %v2489 = vadd.f32 %v484, %v2488
  %v2490 = vpop.f32.mrf.mxu0
  %v2491 = vpop.f32.mrf.mxu0
  %v2492 = vadd.f32 %v484, %v2491
  %v2493 = vpop.f32.mrf.mxu0
  %2494 = vmatprep.mubr.bf16.mxu0 %v1464
  %2495 = vmatmul.mubr.bf16.gmra.mxu0 %v1463
  %v2496 = vpop.f32.mrf.mxu0
  %v2497 = vadd.f32 %v484, %v2496
  %v2498 = vpop.f32.mrf.mxu0
  %v2499 = vpop.f32.mrf.mxu0
  %v2500 = vadd.f32 %v484, %v2499
  %v2501 = vpop.f32.mrf.mxu0
  %2502 = vmatprep.mubr.bf16.mxu0 %v1473
  %2503 = vmatmul.mubr.bf16.gmra.mxu0 %v1472
  %v2504 = vpop.f32.mrf.mxu0
  %v2505 = vadd.f32 %v484, %v2504
  %v2506 = vpop.f32.mrf.mxu0
  %v2507 = vpop.f32.mrf.mxu0
  %v2508 = vadd.f32 %v484, %v2507
  %v2509 = vpop.f32.mrf.mxu0
  %2510 = vmatprep.mubr.bf16.mxu0 %v1482
  %2511 = vmatmul.mubr.bf16.gmra.mxu0 %v1481
  %v2512 = vpop.f32.mrf.mxu0
  %v2513 = vadd.f32 %v484, %v2512
  %v2514 = vpop.f32.mrf.mxu0
  %v2515 = vpop.f32.mrf.mxu0
  %v2516 = vadd.f32 %v484, %v2515
  %v2517 = vpop.f32.mrf.mxu0
  %2518 = vmatprep.mubr.bf16.mxu0 %v1491
  %2519 = vmatmul.mubr.bf16.gmra.mxu0 %v1490
  %v2520 = vpop.f32.mrf.mxu0
  %v2521 = vadd.f32 %v484, %v2520
  %v2522 = vpop.f32.mrf.mxu0
  %v2523 = vpop.f32.mrf.mxu0
  %v2524 = vadd.f32 %v484, %v2523
  %v2525 = vpop.f32.mrf.mxu0
  %2526 = vmatprep.mubr.bf16.mxu0 %v1500
  %2527 = vmatmul.mubr.bf16.gmra.mxu0 %v1499
  %v2528 = vpop.f32.mrf.mxu0
  %v2529 = vadd.f32 %v484, %v2528
  %v2530 = vpop.f32.mrf.mxu0
  %v2531 = vpop.f32.mrf.mxu0
  %v2532 = vadd.f32 %v484, %v2531
  %v2533 = vpop.f32.mrf.mxu0
  %2534 = vmatprep.mubr.bf16.mxu0 %v1509
  %2535 = vmatmul.mubr.bf16.gmra.mxu0 %v1508
  %v2536 = vpop.f32.mrf.mxu0
  %v2537 = vadd.f32 %v484, %v2536
  %v2538 = vpop.f32.mrf.mxu0
  %v2539 = vpop.f32.mrf.mxu0
  %v2540 = vadd.f32 %v484, %v2539
  %v2541 = vpop.f32.mrf.mxu0
  %2542 = vmatprep.mubr.bf16.mxu0 %v1518
  %2543 = vmatmul.mubr.bf16.gmra.mxu0 %v1517
  %v2544 = vpop.f32.mrf.mxu0
  %v2545 = vadd.f32 %v484, %v2544
  %v2546 = vpop.f32.mrf.mxu0
  %v2547 = vpop.f32.mrf.mxu0
  %v2548 = vadd.f32 %v484, %v2547
  %v2549 = vpop.f32.mrf.mxu0
  %2550 = vmatprep.mubr.bf16.mxu0 %v1527
  %2551 = vmatmul.mubr.bf16.gmra.mxu0 %v1526
  %v2552 = vpop.f32.mrf.mxu0
  %v2553 = vadd.f32 %v484, %v2552
  %v2554 = vpop.f32.mrf.mxu0
  %v2555 = vpop.f32.mrf.mxu0
  %v2556 = vadd.f32 %v484, %v2555
  %v2557 = vpop.f32.mrf.mxu0
  %2558 = vmatprep.mubr.bf16.mxu0 %v1536
  %2559 = vmatmul.mubr.bf16.gmra.mxu0 %v1535
  %v2560 = vpop.f32.mrf.mxu0
  %v2561 = vadd.f32 %v484, %v2560
  %v2562 = vpop.f32.mrf.mxu0
  %v2563 = vpop.f32.mrf.mxu0
  %v2564 = vadd.f32 %v484, %v2563
  %v2565 = vpop.f32.mrf.mxu0
  %2566 = vmatprep.mubr.bf16.mxu0 %v1545
  %2567 = vmatmul.mubr.bf16.gmra.mxu0 %v1544
  %v2568 = vpop.f32.mrf.mxu0
  %v2569 = vadd.f32 %v484, %v2568
  %v2570 = vpop.f32.mrf.mxu0
  %v2571 = vpop.f32.mrf.mxu0
  %v2572 = vadd.f32 %v484, %v2571
  %v2573 = vpop.f32.mrf.mxu0
  %2574 = vmatprep.mubr.bf16.mxu0 %v1554
  %2575 = vmatmul.mubr.bf16.gmra.mxu0 %v1553
  %v2576 = vpop.f32.mrf.mxu0
  %v2577 = vadd.f32 %v484, %v2576
  %v2578 = vpop.f32.mrf.mxu0
  %v2579 = vpop.f32.mrf.mxu0
  %v2580 = vadd.f32 %v484, %v2579
  %v2581 = vpop.f32.mrf.mxu0
  %2582 = vmatprep.mubr.bf16.mxu0 %v1563
  %2583 = vmatmul.mubr.bf16.gmra.mxu0 %v1562
  %v2584 = vpop.f32.mrf.mxu0
  %v2585 = vadd.f32 %v484, %v2584
  %v2586 = vpop.f32.mrf.mxu0
  %v2587 = vpop.f32.mrf.mxu0
  %v2588 = vadd.f32 %v484, %v2587
  %v2589 = vpop.f32.mrf.mxu0
  %2590 = vmatprep.mubr.bf16.mxu0 %v1572
  %2591 = vmatmul.mubr.bf16.gmra.mxu0 %v1571
  %v2592 = vpop.f32.mrf.mxu0
  %v2593 = vadd.f32 %v484, %v2592
  %v2594 = vpop.f32.mrf.mxu0
  %v2595 = vpop.f32.mrf.mxu0
  %v2596 = vadd.f32 %v484, %v2595
  %v2597 = vpop.f32.mrf.mxu0
  %2598 = vmatprep.mubr.bf16.mxu0 %v1581
  %2599 = vmatmul.mubr.bf16.gmra.mxu0 %v1580
  %v2600 = vpop.f32.mrf.mxu0
  %v2601 = vadd.f32 %v484, %v2600
  %v2602 = vpop.f32.mrf.mxu0
  %v2603 = vpop.f32.mrf.mxu0
  %v2604 = vadd.f32 %v484, %v2603
  %v2605 = vpop.f32.mrf.mxu0
  %2606 = vmatprep.mubr.bf16.mxu0 %v1590
  %2607 = vmatmul.mubr.bf16.gmra.mxu0 %v1589
  %v2608 = vpop.f32.mrf.mxu0
  %v2609 = vadd.f32 %v484, %v2608
  %v2610 = vpop.f32.mrf.mxu0
  %v2611 = vpop.f32.mrf.mxu0
  %v2612 = vadd.f32 %v484, %v2611
  %v2613 = vpop.f32.mrf.mxu0
  %2614 = vmatprep.mubr.bf16.mxu0 %v1599
  %2615 = vmatmul.mubr.bf16.gmra.mxu0 %v1598
  %v2616 = vpop.f32.mrf.mxu0
  %v2617 = vadd.f32 %v484, %v2616
  %v2618 = vpop.f32.mrf.mxu0
  %v2619 = vpop.f32.mrf.mxu0
  %v2620 = vadd.f32 %v484, %v2619
  %v2621 = vpop.f32.mrf.mxu0
  %2622 = vmatprep.mubr.bf16.mxu0 %v1608
  %2623 = vmatmul.mubr.bf16.gmra.mxu0 %v1607
  %v2624 = vpop.f32.mrf.mxu0
  %v2625 = vadd.f32 %v484, %v2624
  %v2626 = vpop.f32.mrf.mxu0
  %v2627 = vpop.f32.mrf.mxu0
  %v2628 = vadd.f32 %v484, %v2627
  %v2629 = vpop.f32.mrf.mxu0
  %2630 = vmatprep.mubr.bf16.mxu0 %v1617
  %2631 = vmatmul.mubr.bf16.gmra.mxu0 %v1616
  %v2632 = vpop.f32.mrf.mxu0
  %v2633 = vadd.f32 %v484, %v2632
  %v2634 = vpop.f32.mrf.mxu0
  %v2635 = vpop.f32.mrf.mxu0
  %v2636 = vadd.f32 %v484, %v2635
  %v2637 = vpop.f32.mrf.mxu0
  %2638 = vmatprep.mubr.bf16.mxu0 %v1626
  %2639 = vmatmul.mubr.bf16.gmra.mxu0 %v1625
  %v2640 = vpop.f32.mrf.mxu0
  %v2641 = vadd.f32 %v484, %v2640
  %v2642 = vpop.f32.mrf.mxu0
  %v2643 = vpop.f32.mrf.mxu0
  %v2644 = vadd.f32 %v484, %v2643
  %v2645 = vpop.f32.mrf.mxu0
  %2646 = vmatprep.mubr.bf16.mxu0 %v1635
  %2647 = vmatmul.mubr.bf16.gmra.mxu0 %v1634
  %v2648 = vpop.f32.mrf.mxu0
  %v2649 = vadd.f32 %v484, %v2648
  %v2650 = vpop.f32.mrf.mxu0
  %v2651 = vpop.f32.mrf.mxu0
  %v2652 = vadd.f32 %v484, %v2651
  %v2653 = vpop.f32.mrf.mxu0
  %2654 = vmatprep.mubr.bf16.mxu0 %v1644
  %2655 = vmatmul.mubr.bf16.gmra.mxu0 %v1643
  %v2656 = vpop.f32.mrf.mxu0
  %v2657 = vadd.f32 %v484, %v2656
  %v2658 = vpop.f32.mrf.mxu0
  %v2659 = vpop.f32.mrf.mxu0
  %v2660 = vadd.f32 %v484, %v2659
  %v2661 = vpop.f32.mrf.mxu0
  %2662 = vmatprep.mubr.bf16.mxu0 %v1653
  %2663 = vmatmul.mubr.bf16.gmra.mxu0 %v1652
  %v2664 = vpop.f32.mrf.mxu0
  %v2665 = vadd.f32 %v484, %v2664
  %v2666 = vpop.f32.mrf.mxu0
  %v2667 = vpop.f32.mrf.mxu0
  %v2668 = vadd.f32 %v484, %v2667
  %v2669 = vpop.f32.mrf.mxu0
  %2670 = vmatprep.mubr.bf16.mxu0 %v1662
  %2671 = vmatmul.mubr.bf16.gmra.mxu0 %v1661
  %v2672 = vpop.f32.mrf.mxu0
  %v2673 = vadd.f32 %v484, %v2672
  %v2674 = vpop.f32.mrf.mxu0
  %v2675 = vpop.f32.mrf.mxu0
  %v2676 = vadd.f32 %v484, %v2675
  %v2677 = vpop.f32.mrf.mxu0
  %2678 = vdwg.mxu0
  %2679 = vmatprep.subr.bf16.mxu0 0
  %2680 = vmatpush1.bf16.msra.mxu0 %v2269
  %2681 = vmatprep.subr.bf16.mxu0 0
  %2682 = vmatpush1.bf16.msra.mxu0 %v2268
  %2683 = vmatprep.subr.bf16.mxu0 0
  %2684 = vmatpush1.bf16.msra.mxu0 %v2267
  %2685 = vmatprep.subr.bf16.mxu0 0
  %2686 = vmatpush1.bf16.msra.mxu0 %v2266
  %2687 = vmatprep.subr.bf16.mxu0 0
  %2688 = vmatpush1.bf16.msra.mxu0 %v2265
  %2689 = vmatprep.subr.bf16.mxu0 0
  %2690 = vmatpush1.bf16.msra.mxu0 %v2264
  %2691 = vmatprep.subr.bf16.mxu0 0
  %2692 = vmatpush1.bf16.msra.mxu0 %v2263
  %2693 = vmatprep.subr.bf16.mxu0 0
  %2694 = vmatpush1.bf16.msra.mxu0 %v2262
  %2695 = vmatprep.subr.bf16.mxu0 0
  %2696 = vmatpush2.bf16.msra.mxu0 %v2277
  %2697 = vmatprep.subr.bf16.mxu0 0
  %2698 = vmatpush2.bf16.msra.mxu0 %v2276
  %2699 = vmatprep.subr.bf16.mxu0 0
  %2700 = vmatpush2.bf16.msra.mxu0 %v2275
  %2701 = vmatprep.subr.bf16.mxu0 0
  %2702 = vmatpush2.bf16.msra.mxu0 %v2274
  %2703 = vmatprep.subr.bf16.mxu0 0
  %2704 = vmatpush2.bf16.msra.mxu0 %v2273
  %2705 = vmatprep.subr.bf16.mxu0 0
  %2706 = vmatpush2.bf16.msra.mxu0 %v2272
  %2707 = vmatprep.subr.bf16.mxu0 0
  %2708 = vmatpush2.bf16.msra.mxu0 %v2271
  %2709 = vmatprep.subr.bf16.mxu0 0
  %2710 = vmatpush2.bf16.msra.mxu0 %v2270
  %2711 = vmatprep.mubr.bf16.mxu0 %v1385
  %2712 = vmatmul.mubr.bf16.gmra.mxu0 %v1384
  %v2713 = vpop.f32.mrf.mxu0
  %v2714 = vadd.f32 %v2425, %v2713
  %v2715 = vpop.f32.mrf.mxu0
  %v2716 = vpop.f32.mrf.mxu0
  %v2717 = vadd.f32 %v2428, %v2716
  %v2718 = vpop.f32.mrf.mxu0
  %2719 = vmatprep.mubr.bf16.mxu0 %v1394
  %2720 = vmatmul.mubr.bf16.gmra.mxu0 %v1393
  %v2721 = vpop.f32.mrf.mxu0
  %v2722 = vadd.f32 %v2433, %v2721
  %v2723 = vpop.f32.mrf.mxu0
  %v2724 = vpop.f32.mrf.mxu0
  %v2725 = vadd.f32 %v2436, %v2724
  %v2726 = vpop.f32.mrf.mxu0
  %2727 = vmatprep.mubr.bf16.mxu0 %v1403
  %2728 = vmatmul.mubr.bf16.gmra.mxu0 %v1402
  %v2729 = vpop.f32.mrf.mxu0
  %v2730 = vadd.f32 %v2441, %v2729
  %v2731 = vpop.f32.mrf.mxu0
  %v2732 = vpop.f32.mrf.mxu0
  %v2733 = vadd.f32 %v2444, %v2732
  %v2734 = vpop.f32.mrf.mxu0
  %2735 = vmatprep.mubr.bf16.mxu0 %v1412
  %2736 = vmatmul.mubr.bf16.gmra.mxu0 %v1411
  %v2737 = vpop.f32.mrf.mxu0
  %v2738 = vadd.f32 %v2449, %v2737
  %v2739 = vpop.f32.mrf.mxu0
  %v2740 = vpop.f32.mrf.mxu0
  %v2741 = vadd.f32 %v2452, %v2740
  %v2742 = vpop.f32.mrf.mxu0
  %2743 = vmatprep.mubr.bf16.mxu0 %v1421
  %2744 = vmatmul.mubr.bf16.gmra.mxu0 %v1420
  %v2745 = vpop.f32.mrf.mxu0
  %v2746 = vadd.f32 %v2457, %v2745
  %v2747 = vpop.f32.mrf.mxu0
  %v2748 = vpop.f32.mrf.mxu0
  %v2749 = vadd.f32 %v2460, %v2748
  %v2750 = vpop.f32.mrf.mxu0
  %2751 = vmatprep.mubr.bf16.mxu0 %v1430
  %2752 = vmatmul.mubr.bf16.gmra.mxu0 %v1429
  %v2753 = vpop.f32.mrf.mxu0
  %v2754 = vadd.f32 %v2465, %v2753
  %v2755 = vpop.f32.mrf.mxu0
  %v2756 = vpop.f32.mrf.mxu0
  %v2757 = vadd.f32 %v2468, %v2756
  %v2758 = vpop.f32.mrf.mxu0
  %2759 = vmatprep.mubr.bf16.mxu0 %v1439
  %2760 = vmatmul.mubr.bf16.gmra.mxu0 %v1438
  %v2761 = vpop.f32.mrf.mxu0
  %v2762 = vadd.f32 %v2473, %v2761
  %v2763 = vpop.f32.mrf.mxu0
  %v2764 = vpop.f32.mrf.mxu0
  %v2765 = vadd.f32 %v2476, %v2764
  %v2766 = vpop.f32.mrf.mxu0
  %2767 = vmatprep.mubr.bf16.mxu0 %v1448
  %2768 = vmatmul.mubr.bf16.gmra.mxu0 %v1447
  %v2769 = vpop.f32.mrf.mxu0
  %v2770 = vadd.f32 %v2481, %v2769
  %v2771 = vpop.f32.mrf.mxu0
  %v2772 = vpop.f32.mrf.mxu0
  %v2773 = vadd.f32 %v2484, %v2772
  %v2774 = vpop.f32.mrf.mxu0
  %2775 = vmatprep.mubr.bf16.mxu0 %v1457
  %2776 = vmatmul.mubr.bf16.gmra.mxu0 %v1456
  %v2777 = vpop.f32.mrf.mxu0
  %v2778 = vadd.f32 %v2489, %v2777
  %v2779 = vpop.f32.mrf.mxu0
  %v2780 = vpop.f32.mrf.mxu0
  %v2781 = vadd.f32 %v2492, %v2780
  %v2782 = vpop.f32.mrf.mxu0
  %2783 = vmatprep.mubr.bf16.mxu0 %v1466
  %2784 = vmatmul.mubr.bf16.gmra.mxu0 %v1465
  %v2785 = vpop.f32.mrf.mxu0
  %v2786 = vadd.f32 %v2497, %v2785
  %v2787 = vpop.f32.mrf.mxu0
  %v2788 = vpop.f32.mrf.mxu0
  %v2789 = vadd.f32 %v2500, %v2788
  %v2790 = vpop.f32.mrf.mxu0
  %2791 = vmatprep.mubr.bf16.mxu0 %v1475
  %2792 = vmatmul.mubr.bf16.gmra.mxu0 %v1474
  %v2793 = vpop.f32.mrf.mxu0
  %v2794 = vadd.f32 %v2505, %v2793
  %v2795 = vpop.f32.mrf.mxu0
  %v2796 = vpop.f32.mrf.mxu0
  %v2797 = vadd.f32 %v2508, %v2796
  %v2798 = vpop.f32.mrf.mxu0
  %2799 = vmatprep.mubr.bf16.mxu0 %v1484
  %2800 = vmatmul.mubr.bf16.gmra.mxu0 %v1483
  %v2801 = vpop.f32.mrf.mxu0
  %v2802 = vadd.f32 %v2513, %v2801
  %v2803 = vpop.f32.mrf.mxu0
  %v2804 = vpop.f32.mrf.mxu0
  %v2805 = vadd.f32 %v2516, %v2804
  %v2806 = vpop.f32.mrf.mxu0
  %2807 = vmatprep.mubr.bf16.mxu0 %v1493
  %2808 = vmatmul.mubr.bf16.gmra.mxu0 %v1492
  %v2809 = vpop.f32.mrf.mxu0
  %v2810 = vadd.f32 %v2521, %v2809
  %v2811 = vpop.f32.mrf.mxu0
  %v2812 = vpop.f32.mrf.mxu0
  %v2813 = vadd.f32 %v2524, %v2812
  %v2814 = vpop.f32.mrf.mxu0
  %2815 = vmatprep.mubr.bf16.mxu0 %v1502
  %2816 = vmatmul.mubr.bf16.gmra.mxu0 %v1501
  %v2817 = vpop.f32.mrf.mxu0
  %v2818 = vadd.f32 %v2529, %v2817
  %v2819 = vpop.f32.mrf.mxu0
  %v2820 = vpop.f32.mrf.mxu0
  %v2821 = vadd.f32 %v2532, %v2820
  %v2822 = vpop.f32.mrf.mxu0
  %2823 = vmatprep.mubr.bf16.mxu0 %v1511
  %2824 = vmatmul.mubr.bf16.gmra.mxu0 %v1510
  %v2825 = vpop.f32.mrf.mxu0
  %v2826 = vadd.f32 %v2537, %v2825
  %v2827 = vpop.f32.mrf.mxu0
  %v2828 = vpop.f32.mrf.mxu0
  %v2829 = vadd.f32 %v2540, %v2828
  %v2830 = vpop.f32.mrf.mxu0
  %2831 = vmatprep.mubr.bf16.mxu0 %v1520
  %2832 = vmatmul.mubr.bf16.gmra.mxu0 %v1519
  %v2833 = vpop.f32.mrf.mxu0
  %v2834 = vadd.f32 %v2545, %v2833
  %v2835 = vpop.f32.mrf.mxu0
  %v2836 = vpop.f32.mrf.mxu0
  %v2837 = vadd.f32 %v2548, %v2836
  %v2838 = vpop.f32.mrf.mxu0
  %2839 = vmatprep.mubr.bf16.mxu0 %v1529
  %2840 = vmatmul.mubr.bf16.gmra.mxu0 %v1528
  %v2841 = vpop.f32.mrf.mxu0
  %v2842 = vadd.f32 %v2553, %v2841
  %v2843 = vpop.f32.mrf.mxu0
  %v2844 = vpop.f32.mrf.mxu0
  %v2845 = vadd.f32 %v2556, %v2844
  %v2846 = vpop.f32.mrf.mxu0
  %2847 = vmatprep.mubr.bf16.mxu0 %v1538
  %2848 = vmatmul.mubr.bf16.gmra.mxu0 %v1537
  %v2849 = vpop.f32.mrf.mxu0
  %v2850 = vadd.f32 %v2561, %v2849
  %v2851 = vpop.f32.mrf.mxu0
  %v2852 = vpop.f32.mrf.mxu0
  %v2853 = vadd.f32 %v2564, %v2852
  %v2854 = vpop.f32.mrf.mxu0
  %2855 = vmatprep.mubr.bf16.mxu0 %v1547
  %2856 = vmatmul.mubr.bf16.gmra.mxu0 %v1546
  %v2857 = vpop.f32.mrf.mxu0
  %v2858 = vadd.f32 %v2569, %v2857
  %v2859 = vpop.f32.mrf.mxu0
  %v2860 = vpop.f32.mrf.mxu0
  %v2861 = vadd.f32 %v2572, %v2860
  %v2862 = vpop.f32.mrf.mxu0
  %2863 = vmatprep.mubr.bf16.mxu0 %v1556
  %2864 = vmatmul.mubr.bf16.gmra.mxu0 %v1555
  %v2865 = vpop.f32.mrf.mxu0
  %v2866 = vadd.f32 %v2577, %v2865
  %v2867 = vpop.f32.mrf.mxu0
  %v2868 = vpop.f32.mrf.mxu0
  %v2869 = vadd.f32 %v2580, %v2868
  %v2870 = vpop.f32.mrf.mxu0
  %2871 = vmatprep.mubr.bf16.mxu0 %v1565
  %2872 = vmatmul.mubr.bf16.gmra.mxu0 %v1564
  %v2873 = vpop.f32.mrf.mxu0
  %v2874 = vadd.f32 %v2585, %v2873
  %v2875 = vpop.f32.mrf.mxu0
  %v2876 = vpop.f32.mrf.mxu0
  %v2877 = vadd.f32 %v2588, %v2876
  %v2878 = vpop.f32.mrf.mxu0
  %2879 = vmatprep.mubr.bf16.mxu0 %v1574
  %2880 = vmatmul.mubr.bf16.gmra.mxu0 %v1573
  %v2881 = vpop.f32.mrf.mxu0
  %v2882 = vadd.f32 %v2593, %v2881
  %v2883 = vpop.f32.mrf.mxu0
  %v2884 = vpop.f32.mrf.mxu0
  %v2885 = vadd.f32 %v2596, %v2884
  %v2886 = vpop.f32.mrf.mxu0
  %2887 = vmatprep.mubr.bf16.mxu0 %v1583
  %2888 = vmatmul.mubr.bf16.gmra.mxu0 %v1582
  %v2889 = vpop.f32.mrf.mxu0
  %v2890 = vadd.f32 %v2601, %v2889
  %v2891 = vpop.f32.mrf.mxu0
  %v2892 = vpop.f32.mrf.mxu0
  %v2893 = vadd.f32 %v2604, %v2892
  %v2894 = vpop.f32.mrf.mxu0
  %2895 = vmatprep.mubr.bf16.mxu0 %v1592
  %2896 = vmatmul.mubr.bf16.gmra.mxu0 %v1591
  %v2897 = vpop.f32.mrf.mxu0
  %v2898 = vadd.f32 %v2609, %v2897
  %v2899 = vpop.f32.mrf.mxu0
  %v2900 = vpop.f32.mrf.mxu0
  %v2901 = vadd.f32 %v2612, %v2900
  %v2902 = vpop.f32.mrf.mxu0
  %2903 = vmatprep.mubr.bf16.mxu0 %v1601
  %2904 = vmatmul.mubr.bf16.gmra.mxu0 %v1600
  %v2905 = vpop.f32.mrf.mxu0
  %v2906 = vadd.f32 %v2617, %v2905
  %v2907 = vpop.f32.mrf.mxu0
  %v2908 = vpop.f32.mrf.mxu0
  %v2909 = vadd.f32 %v2620, %v2908
  %v2910 = vpop.f32.mrf.mxu0
  %2911 = vmatprep.mubr.bf16.mxu0 %v1610
  %2912 = vmatmul.mubr.bf16.gmra.mxu0 %v1609
  %v2913 = vpop.f32.mrf.mxu0
  %v2914 = vadd.f32 %v2625, %v2913
  %v2915 = vpop.f32.mrf.mxu0
  %v2916 = vpop.f32.mrf.mxu0
  %v2917 = vadd.f32 %v2628, %v2916
  %v2918 = vpop.f32.mrf.mxu0
  %2919 = vmatprep.mubr.bf16.mxu0 %v1619
  %2920 = vmatmul.mubr.bf16.gmra.mxu0 %v1618
  %v2921 = vpop.f32.mrf.mxu0
  %v2922 = vadd.f32 %v2633, %v2921
  %v2923 = vpop.f32.mrf.mxu0
  %v2924 = vpop.f32.mrf.mxu0
  %v2925 = vadd.f32 %v2636, %v2924
  %v2926 = vpop.f32.mrf.mxu0
  %2927 = vmatprep.mubr.bf16.mxu0 %v1628
  %2928 = vmatmul.mubr.bf16.gmra.mxu0 %v1627
  %v2929 = vpop.f32.mrf.mxu0
  %v2930 = vadd.f32 %v2641, %v2929
  %v2931 = vpop.f32.mrf.mxu0
  %v2932 = vpop.f32.mrf.mxu0
  %v2933 = vadd.f32 %v2644, %v2932
  %v2934 = vpop.f32.mrf.mxu0
  %2935 = vmatprep.mubr.bf16.mxu0 %v1637
  %2936 = vmatmul.mubr.bf16.gmra.mxu0 %v1636
  %v2937 = vpop.f32.mrf.mxu0
  %v2938 = vadd.f32 %v2649, %v2937
  %v2939 = vpop.f32.mrf.mxu0
  %v2940 = vpop.f32.mrf.mxu0
  %v2941 = vadd.f32 %v2652, %v2940
  %v2942 = vpop.f32.mrf.mxu0
  %2943 = vmatprep.mubr.bf16.mxu0 %v1646
  %2944 = vmatmul.mubr.bf16.gmra.mxu0 %v1645
  %v2945 = vpop.f32.mrf.mxu0
  %v2946 = vadd.f32 %v2657, %v2945
  %v2947 = vpop.f32.mrf.mxu0
  %v2948 = vpop.f32.mrf.mxu0
  %v2949 = vadd.f32 %v2660, %v2948
  %v2950 = vpop.f32.mrf.mxu0
  %2951 = vmatprep.mubr.bf16.mxu0 %v1655
  %2952 = vmatmul.mubr.bf16.gmra.mxu0 %v1654
  %v2953 = vpop.f32.mrf.mxu0
  %v2954 = vadd.f32 %v2665, %v2953
  %v2955 = vpop.f32.mrf.mxu0
  %v2956 = vpop.f32.mrf.mxu0
  %v2957 = vadd.f32 %v2668, %v2956
  %v2958 = vpop.f32.mrf.mxu0
  %2959 = vmatprep.mubr.bf16.mxu0 %v1664
  %2960 = vmatmul.mubr.bf16.gmra.mxu0 %v1663
  %v2961 = vpop.f32.mrf.mxu0
  %v2962 = vadd.f32 %v2673, %v2961
  %v2963 = vpop.f32.mrf.mxu0
  %v2964 = vpop.f32.mrf.mxu0
  %v2965 = vadd.f32 %v2676, %v2964
  %v2966 = vpop.f32.mrf.mxu0
  %2967 = vdwg.mxu0
  %2968 = vmatprep.subr.bf16.mxu0 0
  %2969 = vmatpush1.bf16.msra.mxu0 %v2285
  %2970 = vmatprep.subr.bf16.mxu0 0
  %2971 = vmatpush1.bf16.msra.mxu0 %v2284
  %2972 = vmatprep.subr.bf16.mxu0 0
  %2973 = vmatpush1.bf16.msra.mxu0 %v2283
  %2974 = vmatprep.subr.bf16.mxu0 0
  %2975 = vmatpush1.bf16.msra.mxu0 %v2282
  %2976 = vmatprep.subr.bf16.mxu0 0
  %2977 = vmatpush1.bf16.msra.mxu0 %v2281
  %2978 = vmatprep.subr.bf16.mxu0 0
  %2979 = vmatpush1.bf16.msra.mxu0 %v2280
  %2980 = vmatprep.subr.bf16.mxu0 0
  %2981 = vmatpush1.bf16.msra.mxu0 %v2279
  %2982 = vmatprep.subr.bf16.mxu0 0
  %2983 = vmatpush1.bf16.msra.mxu0 %v2278
  %2984 = vmatprep.subr.bf16.mxu0 0
  %2985 = vmatpush2.bf16.msra.mxu0 %v2293
  %2986 = vmatprep.subr.bf16.mxu0 0
  %2987 = vmatpush2.bf16.msra.mxu0 %v2292
  %2988 = vmatprep.subr.bf16.mxu0 0
  %2989 = vmatpush2.bf16.msra.mxu0 %v2291
  %2990 = vmatprep.subr.bf16.mxu0 0
  %2991 = vmatpush2.bf16.msra.mxu0 %v2290
  %2992 = vmatprep.subr.bf16.mxu0 0
  %2993 = vmatpush2.bf16.msra.mxu0 %v2289
  %2994 = vmatprep.subr.bf16.mxu0 0
  %2995 = vmatpush2.bf16.msra.mxu0 %v2288
  %2996 = vmatprep.subr.bf16.mxu0 0
  %2997 = vmatpush2.bf16.msra.mxu0 %v2287
  %2998 = vmatprep.subr.bf16.mxu0 0
  %2999 = vmatpush2.bf16.msra.mxu0 %v2286
  %3000 = vmatprep.mubr.bf16.mxu0 %v1387
  %3001 = vmatmul.mubr.bf16.gmra.mxu0 %v1386
  %v3002 = vpop.f32.mrf.mxu0
  %v3003 = vadd.f32 %v2714, %v3002
  %v3004 = vpop.f32.mrf.mxu0
  %v3005 = vpop.f32.mrf.mxu0
  %v3006 = vadd.f32 %v2717, %v3005
  %v3007 = vpop.f32.mrf.mxu0
  %3008 = vmatprep.mubr.bf16.mxu0 %v1396
  %3009 = vmatmul.mubr.bf16.gmra.mxu0 %v1395
  %v3010 = vpop.f32.mrf.mxu0
  %v3011 = vadd.f32 %v2722, %v3010
  %v3012 = vpop.f32.mrf.mxu0
  %v3013 = vpop.f32.mrf.mxu0
  %v3014 = vadd.f32 %v2725, %v3013
  %v3015 = vpop.f32.mrf.mxu0
  %3016 = vmatprep.mubr.bf16.mxu0 %v1405
  %3017 = vmatmul.mubr.bf16.gmra.mxu0 %v1404
  %v3018 = vpop.f32.mrf.mxu0
  %v3019 = vadd.f32 %v2730, %v3018
  %v3020 = vpop.f32.mrf.mxu0
  %v3021 = vpop.f32.mrf.mxu0
  %v3022 = vadd.f32 %v2733, %v3021
  %v3023 = vpop.f32.mrf.mxu0
  %3024 = vmatprep.mubr.bf16.mxu0 %v1414
  %3025 = vmatmul.mubr.bf16.gmra.mxu0 %v1413
  %v3026 = vpop.f32.mrf.mxu0
  %v3027 = vadd.f32 %v2738, %v3026
  %v3028 = vpop.f32.mrf.mxu0
  %v3029 = vpop.f32.mrf.mxu0
  %v3030 = vadd.f32 %v2741, %v3029
  %v3031 = vpop.f32.mrf.mxu0
  %3032 = vmatprep.mubr.bf16.mxu0 %v1423
  %3033 = vmatmul.mubr.bf16.gmra.mxu0 %v1422
  %v3034 = vpop.f32.mrf.mxu0
  %v3035 = vadd.f32 %v2746, %v3034
  %v3036 = vpop.f32.mrf.mxu0
  %v3037 = vpop.f32.mrf.mxu0
  %v3038 = vadd.f32 %v2749, %v3037
  %v3039 = vpop.f32.mrf.mxu0
  %3040 = vmatprep.mubr.bf16.mxu0 %v1432
  %3041 = vmatmul.mubr.bf16.gmra.mxu0 %v1431
  %v3042 = vpop.f32.mrf.mxu0
  %v3043 = vadd.f32 %v2754, %v3042
  %v3044 = vpop.f32.mrf.mxu0
  %v3045 = vpop.f32.mrf.mxu0
  %v3046 = vadd.f32 %v2757, %v3045
  %v3047 = vpop.f32.mrf.mxu0
  %3048 = vmatprep.mubr.bf16.mxu0 %v1441
  %3049 = vmatmul.mubr.bf16.gmra.mxu0 %v1440
  %v3050 = vpop.f32.mrf.mxu0
  %v3051 = vadd.f32 %v2762, %v3050
  %v3052 = vpop.f32.mrf.mxu0
  %v3053 = vpop.f32.mrf.mxu0
  %v3054 = vadd.f32 %v2765, %v3053
  %v3055 = vpop.f32.mrf.mxu0
  %3056 = vmatprep.mubr.bf16.mxu0 %v1450
  %3057 = vmatmul.mubr.bf16.gmra.mxu0 %v1449
  %v3058 = vpop.f32.mrf.mxu0
  %v3059 = vadd.f32 %v2770, %v3058
  %v3060 = vpop.f32.mrf.mxu0
  %v3061 = vpop.f32.mrf.mxu0
  %v3062 = vadd.f32 %v2773, %v3061
  %v3063 = vpop.f32.mrf.mxu0
  %3064 = vmatprep.mubr.bf16.mxu0 %v1459
  %3065 = vmatmul.mubr.bf16.gmra.mxu0 %v1458
  %v3066 = vpop.f32.mrf.mxu0
  %v3067 = vadd.f32 %v2778, %v3066
  %v3068 = vpop.f32.mrf.mxu0
  %v3069 = vpop.f32.mrf.mxu0
  %v3070 = vadd.f32 %v2781, %v3069
  %v3071 = vpop.f32.mrf.mxu0
  %3072 = vmatprep.mubr.bf16.mxu0 %v1468
  %3073 = vmatmul.mubr.bf16.gmra.mxu0 %v1467
  %v3074 = vpop.f32.mrf.mxu0
  %v3075 = vadd.f32 %v2786, %v3074
  %v3076 = vpop.f32.mrf.mxu0
  %v3077 = vpop.f32.mrf.mxu0
  %v3078 = vadd.f32 %v2789, %v3077
  %v3079 = vpop.f32.mrf.mxu0
  %3080 = vmatprep.mubr.bf16.mxu0 %v1477
  %3081 = vmatmul.mubr.bf16.gmra.mxu0 %v1476
  %v3082 = vpop.f32.mrf.mxu0
  %v3083 = vadd.f32 %v2794, %v3082
  %v3084 = vpop.f32.mrf.mxu0
  %v3085 = vpop.f32.mrf.mxu0
  %v3086 = vadd.f32 %v2797, %v3085
  %v3087 = vpop.f32.mrf.mxu0
  %3088 = vmatprep.mubr.bf16.mxu0 %v1486
  %3089 = vmatmul.mubr.bf16.gmra.mxu0 %v1485
  %v3090 = vpop.f32.mrf.mxu0
  %v3091 = vadd.f32 %v2802, %v3090
  %v3092 = vpop.f32.mrf.mxu0
  %v3093 = vpop.f32.mrf.mxu0
  %v3094 = vadd.f32 %v2805, %v3093
  %v3095 = vpop.f32.mrf.mxu0
  %3096 = vmatprep.mubr.bf16.mxu0 %v1495
  %3097 = vmatmul.mubr.bf16.gmra.mxu0 %v1494
  %v3098 = vpop.f32.mrf.mxu0
  %v3099 = vadd.f32 %v2810, %v3098
  %v3100 = vpop.f32.mrf.mxu0
  %v3101 = vpop.f32.mrf.mxu0
  %v3102 = vadd.f32 %v2813, %v3101
  %v3103 = vpop.f32.mrf.mxu0
  %3104 = vmatprep.mubr.bf16.mxu0 %v1504
  %3105 = vmatmul.mubr.bf16.gmra.mxu0 %v1503
  %v3106 = vpop.f32.mrf.mxu0
  %v3107 = vadd.f32 %v2818, %v3106
  %v3108 = vpop.f32.mrf.mxu0
  %v3109 = vpop.f32.mrf.mxu0
  %v3110 = vadd.f32 %v2821, %v3109
  %v3111 = vpop.f32.mrf.mxu0
  %3112 = vmatprep.mubr.bf16.mxu0 %v1513
  %3113 = vmatmul.mubr.bf16.gmra.mxu0 %v1512
  %v3114 = vpop.f32.mrf.mxu0
  %v3115 = vadd.f32 %v2826, %v3114
  %v3116 = vpop.f32.mrf.mxu0
  %v3117 = vpop.f32.mrf.mxu0
  %v3118 = vadd.f32 %v2829, %v3117
  %v3119 = vpop.f32.mrf.mxu0
  %3120 = vmatprep.mubr.bf16.mxu0 %v1522
  %3121 = vmatmul.mubr.bf16.gmra.mxu0 %v1521
  %v3122 = vpop.f32.mrf.mxu0
  %v3123 = vadd.f32 %v2834, %v3122
  %v3124 = vpop.f32.mrf.mxu0
  %v3125 = vpop.f32.mrf.mxu0
  %v3126 = vadd.f32 %v2837, %v3125
  %v3127 = vpop.f32.mrf.mxu0
  %3128 = vmatprep.mubr.bf16.mxu0 %v1531
  %3129 = vmatmul.mubr.bf16.gmra.mxu0 %v1530
  %v3130 = vpop.f32.mrf.mxu0
  %v3131 = vadd.f32 %v2842, %v3130
  %v3132 = vpop.f32.mrf.mxu0
  %v3133 = vpop.f32.mrf.mxu0
  %v3134 = vadd.f32 %v2845, %v3133
  %v3135 = vpop.f32.mrf.mxu0
  %3136 = vmatprep.mubr.bf16.mxu0 %v1540
  %3137 = vmatmul.mubr.bf16.gmra.mxu0 %v1539
  %v3138 = vpop.f32.mrf.mxu0
  %v3139 = vadd.f32 %v2850, %v3138
  %v3140 = vpop.f32.mrf.mxu0
  %v3141 = vpop.f32.mrf.mxu0
  %v3142 = vadd.f32 %v2853, %v3141
  %v3143 = vpop.f32.mrf.mxu0
  %3144 = vmatprep.mubr.bf16.mxu0 %v1549
  %3145 = vmatmul.mubr.bf16.gmra.mxu0 %v1548
  %v3146 = vpop.f32.mrf.mxu0
  %v3147 = vadd.f32 %v2858, %v3146
  %v3148 = vpop.f32.mrf.mxu0
  %v3149 = vpop.f32.mrf.mxu0
  %v3150 = vadd.f32 %v2861, %v3149
  %v3151 = vpop.f32.mrf.mxu0
  %3152 = vmatprep.mubr.bf16.mxu0 %v1558
  %3153 = vmatmul.mubr.bf16.gmra.mxu0 %v1557
  %v3154 = vpop.f32.mrf.mxu0
  %v3155 = vadd.f32 %v2866, %v3154
  %v3156 = vpop.f32.mrf.mxu0
  %v3157 = vpop.f32.mrf.mxu0
  %v3158 = vadd.f32 %v2869, %v3157
  %v3159 = vpop.f32.mrf.mxu0
  %3160 = vmatprep.mubr.bf16.mxu0 %v1567
  %3161 = vmatmul.mubr.bf16.gmra.mxu0 %v1566
  %v3162 = vpop.f32.mrf.mxu0
  %v3163 = vadd.f32 %v2874, %v3162
  %v3164 = vpop.f32.mrf.mxu0
  %v3165 = vpop.f32.mrf.mxu0
  %v3166 = vadd.f32 %v2877, %v3165
  %v3167 = vpop.f32.mrf.mxu0
  %3168 = vmatprep.mubr.bf16.mxu0 %v1576
  %3169 = vmatmul.mubr.bf16.gmra.mxu0 %v1575
  %v3170 = vpop.f32.mrf.mxu0
  %v3171 = vadd.f32 %v2882, %v3170
  %v3172 = vpop.f32.mrf.mxu0
  %v3173 = vpop.f32.mrf.mxu0
  %v3174 = vadd.f32 %v2885, %v3173
  %v3175 = vpop.f32.mrf.mxu0
  %3176 = vmatprep.mubr.bf16.mxu0 %v1585
  %3177 = vmatmul.mubr.bf16.gmra.mxu0 %v1584
  %v3178 = vpop.f32.mrf.mxu0
  %v3179 = vadd.f32 %v2890, %v3178
  %v3180 = vpop.f32.mrf.mxu0
  %v3181 = vpop.f32.mrf.mxu0
  %v3182 = vadd.f32 %v2893, %v3181
  %v3183 = vpop.f32.mrf.mxu0
  %3184 = vmatprep.mubr.bf16.mxu0 %v1594
  %3185 = vmatmul.mubr.bf16.gmra.mxu0 %v1593
  %v3186 = vpop.f32.mrf.mxu0
  %v3187 = vadd.f32 %v2898, %v3186
  %v3188 = vpop.f32.mrf.mxu0
  %v3189 = vpop.f32.mrf.mxu0
  %v3190 = vadd.f32 %v2901, %v3189
  %v3191 = vpop.f32.mrf.mxu0
  %3192 = vmatprep.mubr.bf16.mxu0 %v1603
  %3193 = vmatmul.mubr.bf16.gmra.mxu0 %v1602
  %v3194 = vpop.f32.mrf.mxu0
  %v3195 = vadd.f32 %v2906, %v3194
  %v3196 = vpop.f32.mrf.mxu0
  %v3197 = vpop.f32.mrf.mxu0
  %v3198 = vadd.f32 %v2909, %v3197
  %v3199 = vpop.f32.mrf.mxu0
  %3200 = vmatprep.mubr.bf16.mxu0 %v1612
  %3201 = vmatmul.mubr.bf16.gmra.mxu0 %v1611
  %v3202 = vpop.f32.mrf.mxu0
  %v3203 = vadd.f32 %v2914, %v3202
  %v3204 = vpop.f32.mrf.mxu0
  %v3205 = vpop.f32.mrf.mxu0
  %v3206 = vadd.f32 %v2917, %v3205
  %v3207 = vpop.f32.mrf.mxu0
  %3208 = vmatprep.mubr.bf16.mxu0 %v1621
  %3209 = vmatmul.mubr.bf16.gmra.mxu0 %v1620
  %v3210 = vpop.f32.mrf.mxu0
  %v3211 = vadd.f32 %v2922, %v3210
  %v3212 = vpop.f32.mrf.mxu0
  %v3213 = vpop.f32.mrf.mxu0
  %v3214 = vadd.f32 %v2925, %v3213
  %v3215 = vpop.f32.mrf.mxu0
  %3216 = vmatprep.mubr.bf16.mxu0 %v1630
  %3217 = vmatmul.mubr.bf16.gmra.mxu0 %v1629
  %v3218 = vpop.f32.mrf.mxu0
  %v3219 = vadd.f32 %v2930, %v3218
  %v3220 = vpop.f32.mrf.mxu0
  %v3221 = vpop.f32.mrf.mxu0
  %v3222 = vadd.f32 %v2933, %v3221
  %v3223 = vpop.f32.mrf.mxu0
  %3224 = vmatprep.mubr.bf16.mxu0 %v1639
  %3225 = vmatmul.mubr.bf16.gmra.mxu0 %v1638
  %v3226 = vpop.f32.mrf.mxu0
  %v3227 = vadd.f32 %v2938, %v3226
  %v3228 = vpop.f32.mrf.mxu0
  %v3229 = vpop.f32.mrf.mxu0
  %v3230 = vadd.f32 %v2941, %v3229
  %v3231 = vpop.f32.mrf.mxu0
  %3232 = vmatprep.mubr.bf16.mxu0 %v1648
  %3233 = vmatmul.mubr.bf16.gmra.mxu0 %v1647
  %v3234 = vpop.f32.mrf.mxu0
  %v3235 = vadd.f32 %v2946, %v3234
  %v3236 = vpop.f32.mrf.mxu0
  %v3237 = vpop.f32.mrf.mxu0
  %v3238 = vadd.f32 %v2949, %v3237
  %v3239 = vpop.f32.mrf.mxu0
  %3240 = vmatprep.mubr.bf16.mxu0 %v1657
  %3241 = vmatmul.mubr.bf16.gmra.mxu0 %v1656
  %v3242 = vpop.f32.mrf.mxu0
  %v3243 = vadd.f32 %v2954, %v3242
  %v3244 = vpop.f32.mrf.mxu0
  %v3245 = vpop.f32.mrf.mxu0
  %v3246 = vadd.f32 %v2957, %v3245
  %v3247 = vpop.f32.mrf.mxu0
  %3248 = vmatprep.mubr.bf16.mxu0 %v1666
  %3249 = vmatmul.mubr.bf16.gmra.mxu0 %v1665
  %v3250 = vpop.f32.mrf.mxu0
  %v3251 = vadd.f32 %v2962, %v3250
  %v3252 = vpop.f32.mrf.mxu0
  %v3253 = vpop.f32.mrf.mxu0
  %v3254 = vadd.f32 %v2965, %v3253
  %v3255 = vpop.f32.mrf.mxu0
  %3256 = vdwg.mxu0
  %3257 = vmatprep.subr.bf16.mxu0 0
  %3258 = vmatpush1.bf16.msra.mxu0 %v2301
  %3259 = vmatprep.subr.bf16.mxu0 0
  %3260 = vmatpush1.bf16.msra.mxu0 %v2300
  %3261 = vmatprep.subr.bf16.mxu0 0
  %3262 = vmatpush1.bf16.msra.mxu0 %v2299
  %3263 = vmatprep.subr.bf16.mxu0 0
  %3264 = vmatpush1.bf16.msra.mxu0 %v2298
  %3265 = vmatprep.subr.bf16.mxu0 0
  %3266 = vmatpush1.bf16.msra.mxu0 %v2297
  %3267 = vmatprep.subr.bf16.mxu0 0
  %3268 = vmatpush1.bf16.msra.mxu0 %v2296
  %3269 = vmatprep.subr.bf16.mxu0 0
  %3270 = vmatpush1.bf16.msra.mxu0 %v2295
  %3271 = vmatprep.subr.bf16.mxu0 0
  %3272 = vmatpush1.bf16.msra.mxu0 %v2294
  %3273 = vmatprep.subr.bf16.mxu0 0
  %3274 = vmatpush2.bf16.msra.mxu0 %v2309
  %3275 = vmatprep.subr.bf16.mxu0 0
  %3276 = vmatpush2.bf16.msra.mxu0 %v2308
  %3277 = vmatprep.subr.bf16.mxu0 0
  %3278 = vmatpush2.bf16.msra.mxu0 %v2307
  %3279 = vmatprep.subr.bf16.mxu0 0
  %3280 = vmatpush2.bf16.msra.mxu0 %v2306
  %3281 = vmatprep.subr.bf16.mxu0 0
  %3282 = vmatpush2.bf16.msra.mxu0 %v2305
  %3283 = vmatprep.subr.bf16.mxu0 0
  %3284 = vmatpush2.bf16.msra.mxu0 %v2304
  %3285 = vmatprep.subr.bf16.mxu0 0
  %3286 = vmatpush2.bf16.msra.mxu0 %v2303
  %3287 = vmatprep.subr.bf16.mxu0 0
  %3288 = vmatpush2.bf16.msra.mxu0 %v2302
  %3289 = vmatprep.mubr.bf16.mxu0 %v1389
  %3290 = vmatmul.mubr.bf16.gmra.mxu0 %v1388
  %v3291 = vpop.f32.mrf.mxu0
  %v3292 = vadd.f32 %v3003, %v3291
  %v3293 = vpop.f32.mrf.mxu0
  %v3294 = vpop.f32.mrf.mxu0
  %v3295 = vadd.f32 %v3006, %v3294
  %v3296 = vpop.f32.mrf.mxu0
  %3297 = vmatprep.mubr.bf16.mxu0 %v1398
  %3298 = vmatmul.mubr.bf16.gmra.mxu0 %v1397
  %v3299 = vpop.f32.mrf.mxu0
  %v3300 = vadd.f32 %v3011, %v3299
  %v3301 = vpop.f32.mrf.mxu0
  %v3302 = vpop.f32.mrf.mxu0
  %v3303 = vadd.f32 %v3014, %v3302
  %v3304 = vpop.f32.mrf.mxu0
  %3305 = vmatprep.mubr.bf16.mxu0 %v1407
  %3306 = vmatmul.mubr.bf16.gmra.mxu0 %v1406
  %v3307 = vpop.f32.mrf.mxu0
  %v3308 = vadd.f32 %v3019, %v3307
  %v3309 = vpop.f32.mrf.mxu0
  %v3310 = vpop.f32.mrf.mxu0
  %v3311 = vadd.f32 %v3022, %v3310
  %v3312 = vpop.f32.mrf.mxu0
  %3313 = vmatprep.mubr.bf16.mxu0 %v1416
  %3314 = vmatmul.mubr.bf16.gmra.mxu0 %v1415
  %v3315 = vpop.f32.mrf.mxu0
  %v3316 = vadd.f32 %v3027, %v3315
  %v3317 = vpop.f32.mrf.mxu0
  %v3318 = vpop.f32.mrf.mxu0
  %v3319 = vadd.f32 %v3030, %v3318
  %v3320 = vpop.f32.mrf.mxu0
  %3321 = vmatprep.mubr.bf16.mxu0 %v1425
  %3322 = vmatmul.mubr.bf16.gmra.mxu0 %v1424
  %v3323 = vpop.f32.mrf.mxu0
  %v3324 = vadd.f32 %v3035, %v3323
  %v3325 = vpop.f32.mrf.mxu0
  %v3326 = vpop.f32.mrf.mxu0
  %v3327 = vadd.f32 %v3038, %v3326
  %v3328 = vpop.f32.mrf.mxu0
  %3329 = vmatprep.mubr.bf16.mxu0 %v1434
  %3330 = vmatmul.mubr.bf16.gmra.mxu0 %v1433
  %v3331 = vpop.f32.mrf.mxu0
  %v3332 = vadd.f32 %v3043, %v3331
  %v3333 = vpop.f32.mrf.mxu0
  %v3334 = vpop.f32.mrf.mxu0
  %v3335 = vadd.f32 %v3046, %v3334
  %v3336 = vpop.f32.mrf.mxu0
  %3337 = vmatprep.mubr.bf16.mxu0 %v1443
  %3338 = vmatmul.mubr.bf16.gmra.mxu0 %v1442
  %v3339 = vpop.f32.mrf.mxu0
  %v3340 = vadd.f32 %v3051, %v3339
  %v3341 = vpop.f32.mrf.mxu0
  %v3342 = vpop.f32.mrf.mxu0
  %v3343 = vadd.f32 %v3054, %v3342
  %v3344 = vpop.f32.mrf.mxu0
  %3345 = vmatprep.mubr.bf16.mxu0 %v1452
  %3346 = vmatmul.mubr.bf16.gmra.mxu0 %v1451
  %v3347 = vpop.f32.mrf.mxu0
  %v3348 = vadd.f32 %v3059, %v3347
  %v3349 = vpop.f32.mrf.mxu0
  %v3350 = vpop.f32.mrf.mxu0
  %v3351 = vadd.f32 %v3062, %v3350
  %v3352 = vpop.f32.mrf.mxu0
  %3353 = vmatprep.mubr.bf16.mxu0 %v1461
  %3354 = vmatmul.mubr.bf16.gmra.mxu0 %v1460
  %v3355 = vpop.f32.mrf.mxu0
  %v3356 = vadd.f32 %v3067, %v3355
  %v3357 = vpop.f32.mrf.mxu0
  %v3358 = vpop.f32.mrf.mxu0
  %v3359 = vadd.f32 %v3070, %v3358
  %v3360 = vpop.f32.mrf.mxu0
  %3361 = vmatprep.mubr.bf16.mxu0 %v1470
  %3362 = vmatmul.mubr.bf16.gmra.mxu0 %v1469
  %v3363 = vpop.f32.mrf.mxu0
  %v3364 = vadd.f32 %v3075, %v3363
  %v3365 = vpop.f32.mrf.mxu0
  %v3366 = vpop.f32.mrf.mxu0
  %v3367 = vadd.f32 %v3078, %v3366
  %v3368 = vpop.f32.mrf.mxu0
  %3369 = vmatprep.mubr.bf16.mxu0 %v1479
  %3370 = vmatmul.mubr.bf16.gmra.mxu0 %v1478
  %v3371 = vpop.f32.mrf.mxu0
  %v3372 = vadd.f32 %v3083, %v3371
  %v3373 = vpop.f32.mrf.mxu0
  %v3374 = vpop.f32.mrf.mxu0
  %v3375 = vadd.f32 %v3086, %v3374
  %v3376 = vpop.f32.mrf.mxu0
  %3377 = vmatprep.mubr.bf16.mxu0 %v1488
  %3378 = vmatmul.mubr.bf16.gmra.mxu0 %v1487
  %v3379 = vpop.f32.mrf.mxu0
  %v3380 = vadd.f32 %v3091, %v3379
  %v3381 = vpop.f32.mrf.mxu0
  %v3382 = vpop.f32.mrf.mxu0
  %v3383 = vadd.f32 %v3094, %v3382
  %v3384 = vpop.f32.mrf.mxu0
  %3385 = vmatprep.mubr.bf16.mxu0 %v1497
  %3386 = vmatmul.mubr.bf16.gmra.mxu0 %v1496
  %v3387 = vpop.f32.mrf.mxu0
  %v3388 = vadd.f32 %v3099, %v3387
  %v3389 = vpop.f32.mrf.mxu0
  %v3390 = vpop.f32.mrf.mxu0
  %v3391 = vadd.f32 %v3102, %v3390
  %v3392 = vpop.f32.mrf.mxu0
  %3393 = vmatprep.mubr.bf16.mxu0 %v1506
  %3394 = vmatmul.mubr.bf16.gmra.mxu0 %v1505
  %v3395 = vpop.f32.mrf.mxu0
  %v3396 = vadd.f32 %v3107, %v3395
  %v3397 = vpop.f32.mrf.mxu0
  %v3398 = vpop.f32.mrf.mxu0
  %v3399 = vadd.f32 %v3110, %v3398
  %v3400 = vpop.f32.mrf.mxu0
  %3401 = vmatprep.mubr.bf16.mxu0 %v1515
  %3402 = vmatmul.mubr.bf16.gmra.mxu0 %v1514
  %v3403 = vpop.f32.mrf.mxu0
  %v3404 = vadd.f32 %v3115, %v3403
  %v3405 = vpop.f32.mrf.mxu0
  %v3406 = vpop.f32.mrf.mxu0
  %v3407 = vadd.f32 %v3118, %v3406
  %v3408 = vpop.f32.mrf.mxu0
  %3409 = vmatprep.mubr.bf16.mxu0 %v1524
  %3410 = vmatmul.mubr.bf16.gmra.mxu0 %v1523
  %v3411 = vpop.f32.mrf.mxu0
  %v3412 = vadd.f32 %v3123, %v3411
  %v3413 = vpop.f32.mrf.mxu0
  %v3414 = vpop.f32.mrf.mxu0
  %v3415 = vadd.f32 %v3126, %v3414
  %v3416 = vpop.f32.mrf.mxu0
  %3417 = vmatprep.mubr.bf16.mxu0 %v1533
  %3418 = vmatmul.mubr.bf16.gmra.mxu0 %v1532
  %v3419 = vpop.f32.mrf.mxu0
  %v3420 = vadd.f32 %v3131, %v3419
  %v3421 = vpop.f32.mrf.mxu0
  %v3422 = vpop.f32.mrf.mxu0
  %v3423 = vadd.f32 %v3134, %v3422
  %v3424 = vpop.f32.mrf.mxu0
  %3425 = vmatprep.mubr.bf16.mxu0 %v1542
  %3426 = vmatmul.mubr.bf16.gmra.mxu0 %v1541
  %v3427 = vpop.f32.mrf.mxu0
  %v3428 = vadd.f32 %v3139, %v3427
  %v3429 = vpop.f32.mrf.mxu0
  %v3430 = vpop.f32.mrf.mxu0
  %v3431 = vadd.f32 %v3142, %v3430
  %v3432 = vpop.f32.mrf.mxu0
  %3433 = vmatprep.mubr.bf16.mxu0 %v1551
  %3434 = vmatmul.mubr.bf16.gmra.mxu0 %v1550
  %v3435 = vpop.f32.mrf.mxu0
  %v3436 = vadd.f32 %v3147, %v3435
  %v3437 = vpop.f32.mrf.mxu0
  %v3438 = vpop.f32.mrf.mxu0
  %v3439 = vadd.f32 %v3150, %v3438
  %v3440 = vpop.f32.mrf.mxu0
  %3441 = vmatprep.mubr.bf16.mxu0 %v1560
  %3442 = vmatmul.mubr.bf16.gmra.mxu0 %v1559
  %v3443 = vpop.f32.mrf.mxu0
  %v3444 = vadd.f32 %v3155, %v3443
  %v3445 = vpop.f32.mrf.mxu0
  %v3446 = vpop.f32.mrf.mxu0
  %v3447 = vadd.f32 %v3158, %v3446
  %v3448 = vpop.f32.mrf.mxu0
  %3449 = vmatprep.mubr.bf16.mxu0 %v1569
  %3450 = vmatmul.mubr.bf16.gmra.mxu0 %v1568
  %v3451 = vpop.f32.mrf.mxu0
  %v3452 = vadd.f32 %v3163, %v3451
  %v3453 = vpop.f32.mrf.mxu0
  %v3454 = vpop.f32.mrf.mxu0
  %v3455 = vadd.f32 %v3166, %v3454
  %v3456 = vpop.f32.mrf.mxu0
  %3457 = vmatprep.mubr.bf16.mxu0 %v1578
  %3458 = vmatmul.mubr.bf16.gmra.mxu0 %v1577
  %v3459 = vpop.f32.mrf.mxu0
  %v3460 = vadd.f32 %v3171, %v3459
  %v3461 = vpop.f32.mrf.mxu0
  %v3462 = vpop.f32.mrf.mxu0
  %v3463 = vadd.f32 %v3174, %v3462
  %v3464 = vpop.f32.mrf.mxu0
  %3465 = vmatprep.mubr.bf16.mxu0 %v1587
  %3466 = vmatmul.mubr.bf16.gmra.mxu0 %v1586
  %v3467 = vpop.f32.mrf.mxu0
  %v3468 = vadd.f32 %v3179, %v3467
  %v3469 = vpop.f32.mrf.mxu0
  %v3470 = vpop.f32.mrf.mxu0
  %v3471 = vadd.f32 %v3182, %v3470
  %v3472 = vpop.f32.mrf.mxu0
  %3473 = vmatprep.mubr.bf16.mxu0 %v1596
  %3474 = vmatmul.mubr.bf16.gmra.mxu0 %v1595
  %v3475 = vpop.f32.mrf.mxu0
  %v3476 = vadd.f32 %v3187, %v3475
  %v3477 = vpop.f32.mrf.mxu0
  %v3478 = vpop.f32.mrf.mxu0
  %v3479 = vadd.f32 %v3190, %v3478
  %v3480 = vpop.f32.mrf.mxu0
  %3481 = vmatprep.mubr.bf16.mxu0 %v1605
  %3482 = vmatmul.mubr.bf16.gmra.mxu0 %v1604
  %v3483 = vpop.f32.mrf.mxu0
  %v3484 = vadd.f32 %v3195, %v3483
  %v3485 = vpop.f32.mrf.mxu0
  %v3486 = vpop.f32.mrf.mxu0
  %v3487 = vadd.f32 %v3198, %v3486
  %v3488 = vpop.f32.mrf.mxu0
  %3489 = vmatprep.mubr.bf16.mxu0 %v1614
  %3490 = vmatmul.mubr.bf16.gmra.mxu0 %v1613
  %v3491 = vpop.f32.mrf.mxu0
  %v3492 = vadd.f32 %v3203, %v3491
  %v3493 = vpop.f32.mrf.mxu0
  %v3494 = vpop.f32.mrf.mxu0
  %v3495 = vadd.f32 %v3206, %v3494
  %v3496 = vpop.f32.mrf.mxu0
  %3497 = vmatprep.mubr.bf16.mxu0 %v1623
  %3498 = vmatmul.mubr.bf16.gmra.mxu0 %v1622
  %v3499 = vpop.f32.mrf.mxu0
  %v3500 = vadd.f32 %v3211, %v3499
  %v3501 = vpop.f32.mrf.mxu0
  %v3502 = vpop.f32.mrf.mxu0
  %v3503 = vadd.f32 %v3214, %v3502
  %v3504 = vpop.f32.mrf.mxu0
  %3505 = vmatprep.mubr.bf16.mxu0 %v1632
  %3506 = vmatmul.mubr.bf16.gmra.mxu0 %v1631
  %v3507 = vpop.f32.mrf.mxu0
  %v3508 = vadd.f32 %v3219, %v3507
  %v3509 = vpop.f32.mrf.mxu0
  %v3510 = vpop.f32.mrf.mxu0
  %v3511 = vadd.f32 %v3222, %v3510
  %v3512 = vpop.f32.mrf.mxu0
  %3513 = vmatprep.mubr.bf16.mxu0 %v1641
  %3514 = vmatmul.mubr.bf16.gmra.mxu0 %v1640
  %v3515 = vpop.f32.mrf.mxu0
  %v3516 = vadd.f32 %v3227, %v3515
  %v3517 = vpop.f32.mrf.mxu0
  %v3518 = vpop.f32.mrf.mxu0
  %v3519 = vadd.f32 %v3230, %v3518
  %v3520 = vpop.f32.mrf.mxu0
  %3521 = vmatprep.mubr.bf16.mxu0 %v1650
  %3522 = vmatmul.mubr.bf16.gmra.mxu0 %v1649
  %v3523 = vpop.f32.mrf.mxu0
  %v3524 = vadd.f32 %v3235, %v3523
  %v3525 = vpop.f32.mrf.mxu0
  %v3526 = vpop.f32.mrf.mxu0
  %v3527 = vadd.f32 %v3238, %v3526
  %v3528 = vpop.f32.mrf.mxu0
  %3529 = vmatprep.mubr.bf16.mxu0 %v1659
  %3530 = vmatmul.mubr.bf16.gmra.mxu0 %v1658
  %v3531 = vpop.f32.mrf.mxu0
  %v3532 = vadd.f32 %v3243, %v3531
  %v3533 = vpop.f32.mrf.mxu0
  %v3534 = vpop.f32.mrf.mxu0
  %v3535 = vadd.f32 %v3246, %v3534
  %v3536 = vpop.f32.mrf.mxu0
  %3537 = vmatprep.mubr.bf16.mxu0 %v1668
  %3538 = vmatmul.mubr.bf16.gmra.mxu0 %v1667
  %v3539 = vpop.f32.mrf.mxu0
  %v3540 = vadd.f32 %v3251, %v3539
  %v3541 = vpop.f32.mrf.mxu0
  %v3542 = vpop.f32.mrf.mxu0
  %v3543 = vadd.f32 %v3254, %v3542
  %v3544 = vpop.f32.mrf.mxu0
  %3545 = vdwg.mxu0
  %3546 = vmatprep.subr.bf16.mxu0 0
  %3547 = vmatpush1.bf16.msra.mxu0 %v2317
  %3548 = vmatprep.subr.bf16.mxu0 0
  %3549 = vmatpush1.bf16.msra.mxu0 %v2316
  %3550 = vmatprep.subr.bf16.mxu0 0
  %3551 = vmatpush1.bf16.msra.mxu0 %v2315
  %3552 = vmatprep.subr.bf16.mxu0 0
  %3553 = vmatpush1.bf16.msra.mxu0 %v2314
  %3554 = vmatprep.subr.bf16.mxu0 0
  %3555 = vmatpush1.bf16.msra.mxu0 %v2313
  %3556 = vmatprep.subr.bf16.mxu0 0
  %3557 = vmatpush1.bf16.msra.mxu0 %v2312
  %3558 = vmatprep.subr.bf16.mxu0 0
  %3559 = vmatpush1.bf16.msra.mxu0 %v2311
  %3560 = vmatprep.subr.bf16.mxu0 0
  %3561 = vmatpush1.bf16.msra.mxu0 %v2310
  %3562 = vmatprep.subr.bf16.mxu0 0
  %3563 = vmatpush2.bf16.msra.mxu0 0
  %3564 = vmatprep.subr.bf16.mxu0 0
  %3565 = vmatpush2.bf16.msra.mxu0 0
  %3566 = vmatprep.subr.bf16.mxu0 0
  %3567 = vmatpush2.bf16.msra.mxu0 0
  %3568 = vmatprep.subr.bf16.mxu0 0
  %3569 = vmatpush2.bf16.msra.mxu0 0
  %3570 = vmatprep.subr.bf16.mxu0 0
  %3571 = vmatpush2.bf16.msra.mxu0 0
  %3572 = vmatprep.subr.bf16.mxu0 0
  %3573 = vmatpush2.bf16.msra.mxu0 0
  %3574 = vmatprep.subr.bf16.mxu0 0
  %3575 = vmatpush2.bf16.msra.mxu0 0
  %3576 = vmatprep.subr.bf16.mxu0 0
  %3577 = vmatpush2.bf16.msra.mxu0 0
  %3578 = vmatprep.mubr.bf16.mxu0 0
  %3579 = vmatmul.mubr.bf16.gmra.mxu0 %v1390
  %v3580 = vpop.f32.mrf.mxu0
  %v3581 = vadd.f32 %v3292, %v3580
  %v3582 = vpop.f32.mrf.mxu0
  %v3583 = vpop.f32.mrf.mxu0
  %v3584 = vadd.f32 %v3295, %v3583
  %v3585 = vpop.f32.mrf.mxu0
  %3586 = vmatprep.mubr.bf16.mxu0 0
  %3587 = vmatmul.mubr.bf16.gmra.mxu0 %v1399
  %v3588 = vpop.f32.mrf.mxu0
  %v3589 = vadd.f32 %v3300, %v3588
  %v3590 = vpop.f32.mrf.mxu0
  %v3591 = vpop.f32.mrf.mxu0
  %v3592 = vadd.f32 %v3303, %v3591
  %v3593 = vpop.f32.mrf.mxu0
  %3594 = vmatprep.mubr.bf16.mxu0 0
  %3595 = vmatmul.mubr.bf16.gmra.mxu0 %v1408
  %v3596 = vpop.f32.mrf.mxu0
  %v3597 = vadd.f32 %v3308, %v3596
  %v3598 = vpop.f32.mrf.mxu0
  %v3599 = vpop.f32.mrf.mxu0
  %v3600 = vadd.f32 %v3311, %v3599
  %v3601 = vpop.f32.mrf.mxu0
  %3602 = vmatprep.mubr.bf16.mxu0 0
  %3603 = vmatmul.mubr.bf16.gmra.mxu0 %v1417
  %v3604 = vpop.f32.mrf.mxu0
  %v3605 = vadd.f32 %v3316, %v3604
  %v3606 = vpop.f32.mrf.mxu0
  %v3607 = vpop.f32.mrf.mxu0
  %v3608 = vadd.f32 %v3319, %v3607
  %v3609 = vpop.f32.mrf.mxu0
  %3610 = vmatprep.mubr.bf16.mxu0 0
  %3611 = vmatmul.mubr.bf16.gmra.mxu0 %v1426
  %v3612 = vpop.f32.mrf.mxu0
  %v3613 = vadd.f32 %v3324, %v3612
  %v3614 = vpop.f32.mrf.mxu0
  %v3615 = vpop.f32.mrf.mxu0
  %v3616 = vadd.f32 %v3327, %v3615
  %v3617 = vpop.f32.mrf.mxu0
  %3618 = vmatprep.mubr.bf16.mxu0 0
  %3619 = vmatmul.mubr.bf16.gmra.mxu0 %v1435
  %v3620 = vpop.f32.mrf.mxu0
  %v3621 = vadd.f32 %v3332, %v3620
  %v3622 = vpop.f32.mrf.mxu0
  %v3623 = vpop.f32.mrf.mxu0
  %v3624 = vadd.f32 %v3335, %v3623
  %v3625 = vpop.f32.mrf.mxu0
  %3626 = vmatprep.mubr.bf16.mxu0 0
  %3627 = vmatmul.mubr.bf16.gmra.mxu0 %v1444
  %v3628 = vpop.f32.mrf.mxu0
  %v3629 = vadd.f32 %v3340, %v3628
  %v3630 = vpop.f32.mrf.mxu0
  %v3631 = vpop.f32.mrf.mxu0
  %v3632 = vadd.f32 %v3343, %v3631
  %v3633 = vpop.f32.mrf.mxu0
  %3634 = vmatprep.mubr.bf16.mxu0 0
  %3635 = vmatmul.mubr.bf16.gmra.mxu0 %v1453
  %v3636 = vpop.f32.mrf.mxu0
  %v3637 = vadd.f32 %v3348, %v3636
  %v3638 = vpop.f32.mrf.mxu0
  %v3639 = vpop.f32.mrf.mxu0
  %v3640 = vadd.f32 %v3351, %v3639
  %v3641 = vpop.f32.mrf.mxu0
  %3642 = vmatprep.mubr.bf16.mxu0 0
  %3643 = vmatmul.mubr.bf16.gmra.mxu0 %v1462
  %v3644 = vpop.f32.mrf.mxu0
  %v3645 = vadd.f32 %v3356, %v3644
  %v3646 = vpop.f32.mrf.mxu0
  %v3647 = vpop.f32.mrf.mxu0
  %v3648 = vadd.f32 %v3359, %v3647
  %v3649 = vpop.f32.mrf.mxu0
  %3650 = vmatprep.mubr.bf16.mxu0 0
  %3651 = vmatmul.mubr.bf16.gmra.mxu0 %v1471
  %v3652 = vpop.f32.mrf.mxu0
  %v3653 = vadd.f32 %v3364, %v3652
  %v3654 = vpop.f32.mrf.mxu0
  %v3655 = vpop.f32.mrf.mxu0
  %v3656 = vadd.f32 %v3367, %v3655
  %v3657 = vpop.f32.mrf.mxu0
  %3658 = vmatprep.mubr.bf16.mxu0 0
  %3659 = vmatmul.mubr.bf16.gmra.mxu0 %v1480
  %v3660 = vpop.f32.mrf.mxu0
  %v3661 = vadd.f32 %v3372, %v3660
  %v3662 = vpop.f32.mrf.mxu0
  %v3663 = vpop.f32.mrf.mxu0
  %v3664 = vadd.f32 %v3375, %v3663
  %v3665 = vpop.f32.mrf.mxu0
  %3666 = vmatprep.mubr.bf16.mxu0 0
  %3667 = vmatmul.mubr.bf16.gmra.mxu0 %v1489
  %v3668 = vpop.f32.mrf.mxu0
  %v3669 = vadd.f32 %v3380, %v3668
  %v3670 = vpop.f32.mrf.mxu0
  %v3671 = vpop.f32.mrf.mxu0
  %v3672 = vadd.f32 %v3383, %v3671
  %v3673 = vpop.f32.mrf.mxu0
  %3674 = vmatprep.mubr.bf16.mxu0 0
  %3675 = vmatmul.mubr.bf16.gmra.mxu0 %v1498
  %v3676 = vpop.f32.mrf.mxu0
  %v3677 = vadd.f32 %v3388, %v3676
  %v3678 = vpop.f32.mrf.mxu0
  %v3679 = vpop.f32.mrf.mxu0
  %v3680 = vadd.f32 %v3391, %v3679
  %v3681 = vpop.f32.mrf.mxu0
  %3682 = vmatprep.mubr.bf16.mxu0 0
  %3683 = vmatmul.mubr.bf16.gmra.mxu0 %v1507
  %v3684 = vpop.f32.mrf.mxu0
  %v3685 = vadd.f32 %v3396, %v3684
  %v3686 = vpop.f32.mrf.mxu0
  %v3687 = vpop.f32.mrf.mxu0
  %v3688 = vadd.f32 %v3399, %v3687
  %v3689 = vpop.f32.mrf.mxu0
  %3690 = vmatprep.mubr.bf16.mxu0 0
  %3691 = vmatmul.mubr.bf16.gmra.mxu0 %v1516
  %v3692 = vpop.f32.mrf.mxu0
  %v3693 = vadd.f32 %v3404, %v3692
  %v3694 = vpop.f32.mrf.mxu0
  %v3695 = vpop.f32.mrf.mxu0
  %v3696 = vadd.f32 %v3407, %v3695
  %v3697 = vpop.f32.mrf.mxu0
  %3698 = vmatprep.mubr.bf16.mxu0 0
  %3699 = vmatmul.mubr.bf16.gmra.mxu0 %v1525
  %v3700 = vpop.f32.mrf.mxu0
  %v3701 = vadd.f32 %v3412, %v3700
  %v3702 = vpop.f32.mrf.mxu0
  %v3703 = vpop.f32.mrf.mxu0
  %v3704 = vadd.f32 %v3415, %v3703
  %v3705 = vpop.f32.mrf.mxu0
  %3706 = vmatprep.mubr.bf16.mxu0 0
  %3707 = vmatmul.mubr.bf16.gmra.mxu0 %v1534
  %v3708 = vpop.f32.mrf.mxu0
  %v3709 = vadd.f32 %v3420, %v3708
  %v3710 = vpop.f32.mrf.mxu0
  %v3711 = vpop.f32.mrf.mxu0
  %v3712 = vadd.f32 %v3423, %v3711
  %v3713 = vpop.f32.mrf.mxu0
  %3714 = vmatprep.mubr.bf16.mxu0 0
  %3715 = vmatmul.mubr.bf16.gmra.mxu0 %v1543
  %v3716 = vpop.f32.mrf.mxu0
  %v3717 = vadd.f32 %v3428, %v3716
  %v3718 = vpop.f32.mrf.mxu0
  %v3719 = vpop.f32.mrf.mxu0
  %v3720 = vadd.f32 %v3431, %v3719
  %v3721 = vpop.f32.mrf.mxu0
  %3722 = vmatprep.mubr.bf16.mxu0 0
  %3723 = vmatmul.mubr.bf16.gmra.mxu0 %v1552
  %v3724 = vpop.f32.mrf.mxu0
  %v3725 = vadd.f32 %v3436, %v3724
  %v3726 = vpop.f32.mrf.mxu0
  %v3727 = vpop.f32.mrf.mxu0
  %v3728 = vadd.f32 %v3439, %v3727
  %v3729 = vpop.f32.mrf.mxu0
  %3730 = vmatprep.mubr.bf16.mxu0 0
  %3731 = vmatmul.mubr.bf16.gmra.mxu0 %v1561
  %v3732 = vpop.f32.mrf.mxu0
  %v3733 = vadd.f32 %v3444, %v3732
  %v3734 = vpop.f32.mrf.mxu0
  %v3735 = vpop.f32.mrf.mxu0
  %v3736 = vadd.f32 %v3447, %v3735
  %v3737 = vpop.f32.mrf.mxu0
  %3738 = vmatprep.mubr.bf16.mxu0 0
  %3739 = vmatmul.mubr.bf16.gmra.mxu0 %v1570
  %v3740 = vpop.f32.mrf.mxu0
  %v3741 = vadd.f32 %v3452, %v3740
  %v3742 = vpop.f32.mrf.mxu0
  %v3743 = vpop.f32.mrf.mxu0
  %v3744 = vadd.f32 %v3455, %v3743
  %v3745 = vpop.f32.mrf.mxu0
  %3746 = vmatprep.mubr.bf16.mxu0 0
  %3747 = vmatmul.mubr.bf16.gmra.mxu0 %v1579
  %v3748 = vpop.f32.mrf.mxu0
  %v3749 = vadd.f32 %v3460, %v3748
  %v3750 = vpop.f32.mrf.mxu0
  %v3751 = vpop.f32.mrf.mxu0
  %v3752 = vadd.f32 %v3463, %v3751
  %v3753 = vpop.f32.mrf.mxu0
  %3754 = vmatprep.mubr.bf16.mxu0 0
  %3755 = vmatmul.mubr.bf16.gmra.mxu0 %v1588
  %v3756 = vpop.f32.mrf.mxu0
  %v3757 = vadd.f32 %v3468, %v3756
  %v3758 = vpop.f32.mrf.mxu0
  %v3759 = vpop.f32.mrf.mxu0
  %v3760 = vadd.f32 %v3471, %v3759
  %v3761 = vpop.f32.mrf.mxu0
  %3762 = vmatprep.mubr.bf16.mxu0 0
  %3763 = vmatmul.mubr.bf16.gmra.mxu0 %v1597
  %v3764 = vpop.f32.mrf.mxu0
  %v3765 = vadd.f32 %v3476, %v3764
  %v3766 = vpop.f32.mrf.mxu0
  %v3767 = vpop.f32.mrf.mxu0
  %v3768 = vadd.f32 %v3479, %v3767
  %v3769 = vpop.f32.mrf.mxu0
  %3770 = vmatprep.mubr.bf16.mxu0 0
  %3771 = vmatmul.mubr.bf16.gmra.mxu0 %v1606
  %v3772 = vpop.f32.mrf.mxu0
  %v3773 = vadd.f32 %v3484, %v3772
  %v3774 = vpop.f32.mrf.mxu0
  %v3775 = vpop.f32.mrf.mxu0
  %v3776 = vadd.f32 %v3487, %v3775
  %v3777 = vpop.f32.mrf.mxu0
  %3778 = vmatprep.mubr.bf16.mxu0 0
  %3779 = vmatmul.mubr.bf16.gmra.mxu0 %v1615
  %v3780 = vpop.f32.mrf.mxu0
  %v3781 = vadd.f32 %v3492, %v3780
  %v3782 = vpop.f32.mrf.mxu0
  %v3783 = vpop.f32.mrf.mxu0
  %v3784 = vadd.f32 %v3495, %v3783
  %v3785 = vpop.f32.mrf.mxu0
  %3786 = vmatprep.mubr.bf16.mxu0 0
  %3787 = vmatmul.mubr.bf16.gmra.mxu0 %v1624
  %v3788 = vpop.f32.mrf.mxu0
  %v3789 = vadd.f32 %v3500, %v3788
  %v3790 = vpop.f32.mrf.mxu0
  %v3791 = vpop.f32.mrf.mxu0
  %v3792 = vadd.f32 %v3503, %v3791
  %v3793 = vpop.f32.mrf.mxu0
  %3794 = vmatprep.mubr.bf16.mxu0 0
  %3795 = vmatmul.mubr.bf16.gmra.mxu0 %v1633
  %v3796 = vpop.f32.mrf.mxu0
  %v3797 = vadd.f32 %v3508, %v3796
  %v3798 = vpop.f32.mrf.mxu0
  %v3799 = vpop.f32.mrf.mxu0
  %v3800 = vadd.f32 %v3511, %v3799
  %v3801 = vpop.f32.mrf.mxu0
  %3802 = vmatprep.mubr.bf16.mxu0 0
  %3803 = vmatmul.mubr.bf16.gmra.mxu0 %v1642
  %v3804 = vpop.f32.mrf.mxu0
  %v3805 = vadd.f32 %v3516, %v3804
  %v3806 = vpop.f32.mrf.mxu0
  %v3807 = vpop.f32.mrf.mxu0
  %v3808 = vadd.f32 %v3519, %v3807
  %v3809 = vpop.f32.mrf.mxu0
  %3810 = vmatprep.mubr.bf16.mxu0 0
  %3811 = vmatmul.mubr.bf16.gmra.mxu0 %v1651
  %v3812 = vpop.f32.mrf.mxu0
  %v3813 = vadd.f32 %v3524, %v3812
  %v3814 = vpop.f32.mrf.mxu0
  %v3815 = vpop.f32.mrf.mxu0
  %v3816 = vadd.f32 %v3527, %v3815
  %v3817 = vpop.f32.mrf.mxu0
  %3818 = vmatprep.mubr.bf16.mxu0 0
  %3819 = vmatmul.mubr.bf16.gmra.mxu0 %v1660
  %v3820 = vpop.f32.mrf.mxu0
  %v3821 = vadd.f32 %v3532, %v3820
  %v3822 = vpop.f32.mrf.mxu0
  %v3823 = vpop.f32.mrf.mxu0
  %v3824 = vadd.f32 %v3535, %v3823
  %v3825 = vpop.f32.mrf.mxu0
  %3826 = vmatprep.mubr.bf16.mxu0 0
  %3827 = vmatmul.mubr.bf16.gmra.mxu0 %v1669
  %v3828 = vpop.f32.mrf.mxu0
  %v3829 = vadd.f32 %v3540, %v3828
  %v3830 = vpop.f32.mrf.mxu0
  %v3831 = vpop.f32.mrf.mxu0
  %v3832 = vadd.f32 %v3543, %v3831
  %v3833 = vpop.f32.mrf.mxu0
  %3834 = vdwg.mxu0
  %v3835 = vmax.f32 %v3581, 0.0
  %v3836 = vmax.f32 %v3584, 0.0
  %v3837 = vmax.f32 %v3589, 0.0
  %v3838 = vmax.f32 %v3592, 0.0
  %v3839 = vmax.f32 %v3597, 0.0
  %v3840 = vmax.f32 %v3600, 0.0
  %v3841 = vmax.f32 %v3605, 0.0
  %v3842 = vmax.f32 %v3608, 0.0
  %v3843 = vmax.f32 %v3613, 0.0
  %v3844 = vmax.f32 %v3616, 0.0
  %v3845 = vmax.f32 %v3621, 0.0
  %v3846 = vmax.f32 %v3624, 0.0
  %v3847 = vmax.f32 %v3629, 0.0
  %v3848 = vmax.f32 %v3632, 0.0
  %v3849 = vmax.f32 %v3637, 0.0
  %v3850 = vmax.f32 %v3640, 0.0
  %v3851 = vmax.f32 %v3645, 0.0
  %v3852 = vmax.f32 %v3648, 0.0
  %v3853 = vmax.f32 %v3653, 0.0
  %v3854 = vmax.f32 %v3656, 0.0
  %v3855 = vmax.f32 %v3661, 0.0
  %v3856 = vmax.f32 %v3664, 0.0
  %v3857 = vmax.f32 %v3669, 0.0
  %v3858 = vmax.f32 %v3672, 0.0
  %v3859 = vmax.f32 %v3677, 0.0
  %v3860 = vmax.f32 %v3680, 0.0
  %v3861 = vmax.f32 %v3685, 0.0
  %v3862 = vmax.f32 %v3688, 0.0
  %v3863 = vmax.f32 %v3693, 0.0
  %v3864 = vmax.f32 %v3696, 0.0
  %v3865 = vmax.f32 %v3701, 0.0
  %v3866 = vmax.f32 %v3704, 0.0
  %v3867 = vmax.f32 %v3709, 0.0
  %v3868 = vmax.f32 %v3712, 0.0
  %v3869 = vmax.f32 %v3717, 0.0
  %v3870 = vmax.f32 %v3720, 0.0
  %v3871 = vmax.f32 %v3725, 0.0
  %v3872 = vmax.f32 %v3728, 0.0
  %v3873 = vmax.f32 %v3733, 0.0
  %v3874 = vmax.f32 %v3736, 0.0
  %v3875 = vmax.f32 %v3741, 0.0
  %v3876 = vmax.f32 %v3744, 0.0
  %v3877 = vmax.f32 %v3749, 0.0
  %v3878 = vmax.f32 %v3752, 0.0
  %v3879 = vmax.f32 %v3757, 0.0
  %v3880 = vmax.f32 %v3760, 0.0
  %v3881 = vmax.f32 %v3765, 0.0
  %v3882 = vmax.f32 %v3768, 0.0
  %v3883 = vmax.f32 %v3773, 0.0
  %v3884 = vmax.f32 %v3776, 0.0
  %v3885 = vmax.f32 %v3781, 0.0
  %v3886 = vmax.f32 %v3784, 0.0
  %v3887 = vmax.f32 %v3789, 0.0
  %v3888 = vmax.f32 %v3792, 0.0
  %v3889 = vmax.f32 %v3797, 0.0
  %v3890 = vmax.f32 %v3800, 0.0
  %v3891 = vmax.f32 %v3805, 0.0
  %v3892 = vmax.f32 %v3808, 0.0
  %v3893 = vmax.f32 %v3813, 0.0
  %v3894 = vmax.f32 %v3816, 0.0
  %v3895 = vmax.f32 %v3821, 0.0
  %v3896 = vmax.f32 %v3824, 0.0
  %v3897 = vmax.f32 %v3829, 0.0
  %v3898 = vmax.f32 %v3832, 0.0
  %3899 = vst [vmem:[%s3] sm:$0xff] %v3835
  %3900 = vst [vmem:[%s3 + $0x8] sm:$0xff] %v3836
  %3901 = vst [vmem:[%s3 + $0x10] sm:$0xff] %v3837
  %3902 = vst [vmem:[%s3 + $0x18] sm:$0xff] %v3838
  %3903 = vst [vmem:[%s3 + $0x20] sm:$0xff] %v3839
  %3904 = vst [vmem:[%s3 + $0x28] sm:$0xff] %v3840
  %3905 = vst [vmem:[%s3 + $0x30] sm:$0xff] %v3841
  %3906 = vst [vmem:[%s3 + $0x38] sm:$0xff] %v3842
  %3907 = vst [vmem:[%s3 + $0x40] sm:$0xff] %v3843
  %3908 = vst [vmem:[%s3 + $0x48] sm:$0xff] %v3844
  %3909 = vst [vmem:[%s3 + $0x50] sm:$0xff] %v3845
  %3910 = vst [vmem:[%s3 + $0x58] sm:$0xff] %v3846
  %3911 = vst [vmem:[%s3 + $0x60] sm:$0xff] %v3847
  %3912 = vst [vmem:[%s3 + $0x68] sm:$0xff] %v3848
  %3913 = vst [vmem:[%s3 + $0x70] sm:$0xff] %v3849
  %3914 = vst [vmem:[%s3 + $0x78] sm:$0xff] %v3850
  %3915 = vst [vmem:[%s3 + $0x80] sm:$0xff] %v3851
  %3916 = vst [vmem:[%s3 + $0x88] sm:$0xff] %v3852
  %3917 = vst [vmem:[%s3 + $0x90] sm:$0xff] %v3853
  %3918 = vst [vmem:[%s3 + $0x98] sm:$0xff] %v3854
  %3919 = vst [vmem:[%s3 + $0xa0] sm:$0xff] %v3855
  %3920 = vst [vmem:[%s3 + $0xa8] sm:$0xff] %v3856
  %3921 = vst [vmem:[%s3 + $0xb0] sm:$0xff] %v3857
  %3922 = vst [vmem:[%s3 + $0xb8] sm:$0xff] %v3858
  %3923 = vst [vmem:[%s3 + $0xc0] sm:$0xff] %v3859
  %3924 = vst [vmem:[%s3 + $0xc8] sm:$0xff] %v3860
  %3925 = vst [vmem:[%s3 + $0xd0] sm:$0xff] %v3861
  %3926 = vst [vmem:[%s3 + $0xd8] sm:$0xff] %v3862
  %3927 = vst [vmem:[%s3 + $0xe0] sm:$0xff] %v3863
  %3928 = vst [vmem:[%s3 + $0xe8] sm:$0xff] %v3864
  %3929 = vst [vmem:[%s3 + $0xf0] sm:$0xff] %v3865
  %3930 = vst [vmem:[%s3 + $0xf8] sm:$0xff] %v3866
  %3931 = vst [vmem:[%s3 + $0x100] sm:$0xff] %v3867
  %3932 = vst [vmem:[%s3 + $0x108] sm:$0xff] %v3868
  %3933 = vst [vmem:[%s3 + $0x110] sm:$0xff] %v3869
  %3934 = vst [vmem:[%s3 + $0x118] sm:$0xff] %v3870
  %3935 = vst [vmem:[%s3 + $0x120] sm:$0xff] %v3871
  %3936 = vst [vmem:[%s3 + $0x128] sm:$0xff] %v3872
  %3937 = vst [vmem:[%s3 + $0x130] sm:$0xff] %v3873
  %3938 = vst [vmem:[%s3 + $0x138] sm:$0xff] %v3874
  %3939 = vst [vmem:[%s3 + $0x140] sm:$0xff] %v3875
  %3940 = vst [vmem:[%s3 + $0x148] sm:$0xff] %v3876
  %3941 = vst [vmem:[%s3 + $0x150] sm:$0xff] %v3877
  %3942 = vst [vmem:[%s3 + $0x158] sm:$0xff] %v3878
  %3943 = vst [vmem:[%s3 + $0x160] sm:$0xff] %v3879
  %3944 = vst [vmem:[%s3 + $0x168] sm:$0xff] %v3880
  %3945 = vst [vmem:[%s3 + $0x170] sm:$0xff] %v3881
  %3946 = vst [vmem:[%s3 + $0x178] sm:$0xff] %v3882
  %3947 = vst [vmem:[%s3 + $0x180] sm:$0xff] %v3883
  %3948 = vst [vmem:[%s3 + $0x188] sm:$0xff] %v3884
  %3949 = vst [vmem:[%s3 + $0x190] sm:$0xff] %v3885
  %3950 = vst [vmem:[%s3 + $0x198] sm:$0xff] %v3886
  %3951 = vst [vmem:[%s3 + $0x1a0] sm:$0xff] %v3887
  %3952 = vst [vmem:[%s3 + $0x1a8] sm:$0xff] %v3888
  %3953 = vst [vmem:[%s3 + $0x1b0] sm:$0xff] %v3889
  %3954 = vst [vmem:[%s3 + $0x1b8] sm:$0xff] %v3890
  %3955 = vst [vmem:[%s3 + $0x1c0] sm:$0xff] %v3891
  %3956 = vst [vmem:[%s3 + $0x1c8] sm:$0xff] %v3892
  %3957 = vst [vmem:[%s3 + $0x1d0] sm:$0xff] %v3893
  %3958 = vst [vmem:[%s3 + $0x1d8] sm:$0xff] %v3894
  %3959 = vst [vmem:[%s3 + $0x1e0] sm:$0xff] %v3895
  %3960 = vst [vmem:[%s3 + $0x1e8] sm:$0xff] %v3896
  %3961 = vst [vmem:[%s3 + $0x1f0] sm:$0xff] %v3897
  %3962 = vst [vmem:[%s3 + $0x1f8] sm:$0xff] %v3898
  // Predicated region
  $region14: #{relight_net_forward.15} parent=0 // pred_check
    _
  $region15: #{relight_net_forward.15} parent=0 // pred_check_branch
    %3964 = sbr.rel (0) target = $region17
  $region16: #{relight_net_forward.15} parent=0 // pred_region
    _
  $region17: #{relight_net_forward.15} parent=0 // pred_fallthru
    _
  // Predicated region
  $region18: #{relight_net_forward.15} parent=0 // pred_check
    _
  $region19: #{relight_net_forward.15} parent=0 // pred_check_branch
    %3966 = sbr.rel (0) target = $region21
  $region20: #{relight_net_forward.15} parent=0 // pred_region
    _
  $region21: #{relight_net_forward.15} parent=0 // pred_fallthru
    _

// kernel: relight_net_forward.16
$region0: #{relight_net_forward.16}
  #allocation0 [shape = 'u32[]', space=smem, size = 0x4, offset = 0x4, fixed_abs, tag = 'smem constant byte address 0x4 - core index']
  #allocation1 [shape = 'u32[144,128]{1,0:T(1,128)}', space=vmem, size = 0x12000, scoped, tag = 'internal scratch']
  %s0 = inlined_call_operand.vmem [shape: bf16[1024,192], index: 0, kind: input, shape index: {}]
  %s1 = inlined_call_operand.vmem [shape: bf16[192,128], index: 1, kind: input, shape index: {}]
  %s2 = inlined_call_operand.vmem [shape: f32[1,128], index: 2, kind: input, shape index: {}]
  %s3 = inlined_call_operand.vmem [shape: f32[1024,128], index: 3, kind: output, shape index: {}]
  %s4 = sld [smem:[#allocation0]]
  $region45: #{relight_net_forward.16} parent=0
    _
  %s6 = ssub.s32 1, %s4
  %s7 = scalar_select 0, %s6, %s4
  loop: start=0, step=1, limit=4
  $region2: #{relight_net_forward.16} parent=0 // loop_pre_header
    _
  $region3: #{relight_net_forward.16} parent=0 // loop_header
    %s9 = sphi 0, %s13
    %p10 = scmp.ge.s32.totalorder %s9, 4
    %s19 = sphi 0, %s21
    %s22 = sphi 0, %s19
    %s23 = sphi 0, %s22
    %s39 = sphi 0, %s23
    %s43 = sphi 0, %s43
    %s45 = sphi 0, %s43
    %s46 = sphi 0, %s45
    %s60 = sphi 0, %s46
    %s64 = sphi 0, %s64
    %s66 = sphi 0, %s64
    %s67 = sphi 0, %s66
    %s81 = sphi 0, %s67
    %s87 = sphi 0, %s89
    %s90 = sphi 0, %s87
    %s91 = sphi 0, %s90
    %s107 = sphi 0, %s91
  $region4: #{relight_net_forward.16} parent=0 // loop_header_branch
    %12 = sbr.rel (%p10) target = $region8
  $region5: #{relight_net_forward.16} parent=0 // loop_body
    %s14 = ssub.s32 %s9, 1
    %s15 = ssub.s32 %s9, 2
    %s16 = sadd.s32 %s9, 1
    %s17 = ssub.s32 %s9, %s16
    %p18 = scmp.eq.s32.totalorder %s17, 0
    %s20 = sadd.s32 %s19, 1
    %s21 = scalar_select %p18, %s19, %s20
    %p24 = pneg %p18
    %p25 = scmp.eq.s32.totalorder %s9, 1
    %p26 = por %p24, %p25
    %p27 = scmp.ne.s32.totalorder %s19, %s22
    %p28 = scmp.eq.s32.totalorder %s9, 0
    %p29 = por %p27, %p28
    %p30 = scmp.ne.s32.totalorder %s19, %s22
    %p31 = scmp.eq.s32.totalorder %s14, 1
    %p32 = por %p30, %p31
    %p33 = scmp.ne.s32.totalorder %s22, %s23
    %p34 = scmp.eq.s32.totalorder %s14, 0
    %p35 = por %p33, %p34
    %p36 = scmp.ne.s32.totalorder %s22, %s23
    %p37 = scmp.eq.s32.totalorder %s15, 1
    %p38 = por %p36, %p37
    %p40 = scmp.ne.s32.totalorder %s23, %s39
    %p41 = scmp.eq.s32.totalorder %s15, 0
    %p42 = por %p40, %p41
    %s44 = sadd.s32 %s43, 1
    %p47 = scmp.eq.s32.totalorder %s9, 1
    %p48 = scmp.ne.s32.totalorder %s43, %s45
    %p49 = scmp.eq.s32.totalorder %s9, 0
    %p50 = por %p48, %p49
    %p51 = scmp.ne.s32.totalorder %s43, %s45
    %p52 = scmp.eq.s32.totalorder %s14, 1
    %p53 = por %p51, %p52
    %p54 = scmp.ne.s32.totalorder %s45, %s46
    %p55 = scmp.eq.s32.totalorder %s14, 0
    %p56 = por %p54, %p55
    %p57 = scmp.ne.s32.totalorder %s45, %s46
    %p58 = scmp.eq.s32.totalorder %s15, 1
    %p59 = por %p57, %p58
    %p61 = scmp.ne.s32.totalorder %s46, %s60
    %p62 = scmp.eq.s32.totalorder %s15, 0
    %p63 = por %p61, %p62
    %s65 = sadd.s32 %s64, 1
    %p68 = scmp.eq.s32.totalorder %s9, 1
    %p69 = scmp.ne.s32.totalorder %s64, %s66
    %p70 = scmp.eq.s32.totalorder %s9, 0
    %p71 = por %p69, %p70
    %p72 = scmp.ne.s32.totalorder %s64, %s66
    %p73 = scmp.eq.s32.totalorder %s14, 1
    %p74 = por %p72, %p73
    %p75 = scmp.ne.s32.totalorder %s66, %s67
    %p76 = scmp.eq.s32.totalorder %s14, 0
    %p77 = por %p75, %p76
    %p78 = scmp.ne.s32.totalorder %s66, %s67
    %p79 = scmp.eq.s32.totalorder %s15, 1
    %p80 = por %p78, %p79
    %p82 = scmp.ne.s32.totalorder %s67, %s81
    %p83 = scmp.eq.s32.totalorder %s15, 0
    %p84 = por %p82, %p83
    %s85 = ssub.s32 %s9, %s16
    %p86 = scmp.eq.s32.totalorder %s85, 0
    %s88 = sadd.s32 %s87, 1
    %s89 = scalar_select %p86, %s87, %s88
    %p92 = pneg %p86
    %p93 = scmp.eq.s32.totalorder %s9, 1
    %p94 = por %p92, %p93
    %p95 = scmp.ne.s32.totalorder %s87, %s90
    %p96 = scmp.eq.s32.totalorder %s9, 0
    %p97 = por %p95, %p96
    %p98 = scmp.ne.s32.totalorder %s87, %s90
    %p99 = scmp.eq.s32.totalorder %s14, 1
    %p100 = por %p98, %p99
    %p101 = scmp.ne.s32.totalorder %s90, %s91
    %p102 = scmp.eq.s32.totalorder %s14, 0
    %p103 = por %p101, %p102
    %p104 = scmp.ne.s32.totalorder %s90, %s91
    %p105 = scmp.eq.s32.totalorder %s15, 1
    %p106 = por %p104, %p105
    %p108 = scmp.ne.s32.totalorder %s91, %s107
    %p109 = scmp.eq.s32.totalorder %s15, 0
    %p110 = por %p108, %p109
    %p111 = scmp.le.s32.totalorder 1, %s9
    %p112 = scmp.lt.s32.totalorder %s9, 3
    %p113 = pnand %p111, %p112
    %p114 = pneg %p113
    // Predicated region
    $region9: #{relight_net_forward.16} parent=5 // pred_check
      _
    $region10: #{relight_net_forward.16} parent=5 // pred_check_branch
      %116 = sbr.rel (%p113) target = $region12
    $region11: #{relight_net_forward.16} parent=5 // pred_region
      %s117 = ssub.s32 %s9, 1
      // Predicated region
      $region13: #{relight_net_forward.16} parent=11 // pred_check
        %p118 = pneg %p56
      $region14: #{relight_net_forward.16} parent=11 // pred_check_branch
        %120 = sbr.rel (%p118) target = $region16
      $region15: #{relight_net_forward.16} parent=11 // pred_region
        _
      $region16: #{relight_net_forward.16} parent=11 // pred_fallthru
        _
      // Predicated region
      $region17: #{relight_net_forward.16} parent=11 // pred_check
        %p121 = pneg %p77
      $region18: #{relight_net_forward.16} parent=11 // pred_check_branch
        %123 = sbr.rel (%p121) target = $region20
      $region19: #{relight_net_forward.16} parent=11 // pred_region
        _
      $region20: #{relight_net_forward.16} parent=11 // pred_fallthru
        _
    $region12: #{relight_net_forward.16} parent=5 // pred_fallthru
      _
    %p124 = scmp.lt.s32.totalorder %s9, 2
    // Predicated region
    $region21: #{relight_net_forward.16} parent=5 // pred_check
      %p125 = pneg %p124
    $region22: #{relight_net_forward.16} parent=5 // pred_check_branch
      %127 = sbr.rel (%p125) target = $region24
    $region23: #{relight_net_forward.16} parent=5 // pred_region
      // Predicated region
      $region25: #{relight_net_forward.16} parent=23 // pred_check
        %p128 = pneg %p29
      $region26: #{relight_net_forward.16} parent=23 // pred_check_branch
        %130 = sbr.rel (%p128) target = $region28
      $region27: #{relight_net_forward.16} parent=23 // pred_region
        %s131 = smul.u32 64, %s9
        %p132 = scmp.lt.s32.totalorder %s131, 127
        %s133 = scalar_select %p132, %s131, 127
        %s134 = smul.addr %s133, 2
        %s135 = smul.addr %s134, 4
        %s136 = scalar_lea.vmem %s0, %s135
        %s137 = smul.u32 64, %s9
      $region28: #{relight_net_forward.16} parent=23 // pred_fallthru
        _
    $region24: #{relight_net_forward.16} parent=5 // pred_fallthru
      _
    %p138 = scmp.le.s32.totalorder 1, %s9
    %p139 = scmp.lt.s32.totalorder %s9, 3
    %p140 = pnand %p138, %p139
    %p141 = pneg %p140
    // Predicated region
    $region29: #{relight_net_forward.16} parent=5 // pred_check
      _
    $region30: #{relight_net_forward.16} parent=5 // pred_check_branch
      %143 = sbr.rel (%p140) target = $region32
    $region31: #{relight_net_forward.16} parent=5 // pred_region
      %s144 = ssub.s32 %s9, 1
      %s145 = smul.u32 64, %s14
      %p146 = scmp.lt.s32.totalorder %s145, 127
      %s147 = scalar_select %p146, %s145, 127
      %s148 = smul.addr %s147, 2
      %s149 = smul.addr %s148, 4
      %s150 = scalar_lea.vmem %s0, %s149
      %p151 = pneg %p35
      %p152 = pneg %p32
      %p153 = pneg %p56
      %p154 = pneg %p53
      %p155 = pneg %p77
      %p156 = pneg %p74
      %p157 = pneg %p103
      %p158 = pneg %p100
      %s159 = smul.u32 64, %s14
      %p160 = scmp.lt.s32.totalorder %s159, 127
      %s161 = scalar_select %p160, %s159, 127
      %s162 = smul.addr %s161, 8
      %s163 = scalar_lea.vmem %s3, %s162
      %s164 = smul.u32 64, %s14
      %p165 = scmp.lt.s32.totalorder %s164, 127
      %s166 = scalar_select %p165, %s164, 127
      %s167 = smul.addr %s166, 2
      %s168 = smul.addr %s167, 4
      %s169 = scalar_lea.vmem %s0, %s168
      %s170 = smul.u32 64, %s14
      %s171 = smul.u32 64, %s14
      %p172 = scmp.lt.s32.totalorder %s171, 127
      %s173 = scalar_select %p172, %s171, 127
      %s174 = smul.addr %s173, 8
      %s175 = scalar_lea.vmem %s3, %s174
      %s176 = smul.u32 64, %s14
      %v178 = vld [vmem:[%s169] sm:$0xff]
      %v179 = vld [vmem:[%s169 + $0x8] sm:$0xff]
      %v180 = vld [vmem:[%s169 + $0x10] sm:$0xff]
      %v181 = vld [vmem:[%s169 + $0x18] sm:$0xff]
      %v182 = vld [vmem:[%s169 + $0x20] sm:$0xff]
      %v183 = vld [vmem:[%s169 + $0x28] sm:$0xff]
      %v184 = vld [vmem:[%s169 + $0x30] sm:$0xff]
      %v185 = vld [vmem:[%s169 + $0x38] sm:$0xff]
      %v186 = vld [vmem:[%s169 + $0x40] sm:$0xff]
      %v187 = vld [vmem:[%s169 + $0x48] sm:$0xff]
      %v188 = vld [vmem:[%s169 + $0x50] sm:$0xff]
      %v189 = vld [vmem:[%s169 + $0x58] sm:$0xff]
      %v190 = vld [vmem:[%s169 + $0x60] sm:$0xff]
      %v191 = vld [vmem:[%s169 + $0x68] sm:$0xff]
      %v192 = vld [vmem:[%s169 + $0x70] sm:$0xff]
      %v193 = vld [vmem:[%s169 + $0x78] sm:$0xff]
      %v194 = vld [vmem:[%s169 + $0x80] sm:$0xff]
      %v195 = vld [vmem:[%s169 + $0x88] sm:$0xff]
      %v196 = vld [vmem:[%s169 + $0x90] sm:$0xff]
      %v197 = vld [vmem:[%s169 + $0x98] sm:$0xff]
      %v198 = vld [vmem:[%s169 + $0xa0] sm:$0xff]
      %v199 = vld [vmem:[%s169 + $0xa8] sm:$0xff]
      %v200 = vld [vmem:[%s169 + $0xb0] sm:$0xff]
      %v201 = vld [vmem:[%s169 + $0xb8] sm:$0xff]
      %v202 = vld [vmem:[%s169 + $0xc0] sm:$0xff]
      %v203 = vld [vmem:[%s169 + $0xc8] sm:$0xff]
      %v204 = vld [vmem:[%s169 + $0xd0] sm:$0xff]
      %v205 = vld [vmem:[%s169 + $0xd8] sm:$0xff]
      %v206 = vld [vmem:[%s169 + $0xe0] sm:$0xff]
      %v207 = vld [vmem:[%s169 + $0xe8] sm:$0xff]
      %v208 = vld [vmem:[%s169 + $0xf0] sm:$0xff]
      %v209 = vld [vmem:[%s169 + $0xf8] sm:$0xff]
      %v210 = vld [vmem:[%s169 + $0x100] sm:$0xff]
      %v211 = vld [vmem:[%s169 + $0x108] sm:$0xff]
      %v212 = vld [vmem:[%s169 + $0x110] sm:$0xff]
      %v213 = vld [vmem:[%s169 + $0x118] sm:$0xff]
      %v214 = vld [vmem:[%s169 + $0x120] sm:$0xff]
      %v215 = vld [vmem:[%s169 + $0x128] sm:$0xff]
      %v216 = vld [vmem:[%s169 + $0x130] sm:$0xff]
      %v217 = vld [vmem:[%s169 + $0x138] sm:$0xff]
      %v218 = vld [vmem:[%s169 + $0x140] sm:$0xff]
      %v219 = vld [vmem:[%s169 + $0x148] sm:$0xff]
      %v220 = vld [vmem:[%s169 + $0x150] sm:$0xff]
      %v221 = vld [vmem:[%s169 + $0x158] sm:$0xff]
      %v222 = vld [vmem:[%s169 + $0x160] sm:$0xff]
      %v223 = vld [vmem:[%s169 + $0x168] sm:$0xff]
      %v224 = vld [vmem:[%s169 + $0x170] sm:$0xff]
      %v225 = vld [vmem:[%s169 + $0x178] sm:$0xff]
      %v226 = vld [vmem:[%s169 + $0x180] sm:$0xff]
      %v227 = vld [vmem:[%s169 + $0x188] sm:$0xff]
      %v228 = vld [vmem:[%s169 + $0x190] sm:$0xff]
      %v229 = vld [vmem:[%s169 + $0x198] sm:$0xff]
      %v230 = vld [vmem:[%s169 + $0x1a0] sm:$0xff]
      %v231 = vld [vmem:[%s169 + $0x1a8] sm:$0xff]
      %v232 = vld [vmem:[%s169 + $0x1b0] sm:$0xff]
      %v233 = vld [vmem:[%s169 + $0x1b8] sm:$0xff]
      %v234 = vld [vmem:[%s169 + $0x1c0] sm:$0xff]
      %v235 = vld [vmem:[%s169 + $0x1c8] sm:$0xff]
      %v236 = vld [vmem:[%s169 + $0x1d0] sm:$0xff]
      %v237 = vld [vmem:[%s169 + $0x1d8] sm:$0xff]
      %v238 = vld [vmem:[%s169 + $0x1e0] sm:$0xff]
      %v239 = vld [vmem:[%s169 + $0x1e8] sm:$0xff]
      %v240 = vld [vmem:[%s169 + $0x1f0] sm:$0xff]
      %v241 = vld [vmem:[%s169 + $0x1f8] sm:$0xff]
      %v242 = vld [vmem:[%s1] sm:$0xf]
      %v243 = vld [vmem:[%s1 + $0x4] sm:$0xf]
      %v244 = vld [vmem:[%s1 + $0x8] sm:$0xf]
      %v245 = vld [vmem:[%s1 + $0xc] sm:$0xf]
      %v246 = vld [vmem:[%s1 + $0x10] sm:$0xf]
      %v247 = vld [vmem:[%s1 + $0x14] sm:$0xf]
      %v248 = vld [vmem:[%s1 + $0x18] sm:$0xf]
      %v249 = vld [vmem:[%s1 + $0x1c] sm:$0xf]
      %v250 = vld [vmem:[%s1 + $0x20] sm:$0xf]
      %v251 = vld [vmem:[%s1 + $0x24] sm:$0xf]
      %v252 = vld [vmem:[%s1 + $0x28] sm:$0xf]
      %v253 = vld [vmem:[%s1 + $0x2c] sm:$0xf]
      %v254 = vld [vmem:[%s1 + $0x30] sm:$0xf]
      %v255 = vld [vmem:[%s1 + $0x34] sm:$0xf]
      %v256 = vld [vmem:[%s1 + $0x38] sm:$0xf]
      %v257 = vld [vmem:[%s1 + $0x3c] sm:$0xf]
      %v258 = vld [vmem:[%s1 + $0x40] sm:$0xf]
      %v259 = vld [vmem:[%s1 + $0x44] sm:$0xf]
      %v260 = vld [vmem:[%s1 + $0x48] sm:$0xf]
      %v261 = vld [vmem:[%s1 + $0x4c] sm:$0xf]
      %v262 = vld [vmem:[%s1 + $0x50] sm:$0xf]
      %v263 = vld [vmem:[%s1 + $0x54] sm:$0xf]
      %v264 = vld [vmem:[%s1 + $0x58] sm:$0xf]
      %v265 = vld [vmem:[%s1 + $0x5c] sm:$0xf]
      %v266 = vld [vmem:[%s2] sm:$0x1]
      %v268 = vlaneseq
      %v269 = vshrl.u32 %v268, 7
      %v270 = vsub.s32 0, %v269
      %v271 = vrot.slane %v266, %v270
      %v337 = vunpack.c.l.b16 %v178
      %v338 = vunpack.c.h.b16 %v178
      %v339 = vunpack.c.l.b16 %v179
      %v340 = vunpack.c.h.b16 %v179
      %v341 = vunpack.c.l.b16 %v180
      %v342 = vunpack.c.h.b16 %v180
      %v343 = vunpack.c.l.b16 %v181
      %v344 = vunpack.c.h.b16 %v181
      %v345 = vunpack.c.l.b16 %v182
      %v346 = vunpack.c.h.b16 %v182
      %v347 = vunpack.c.l.b16 %v183
      %v348 = vunpack.c.h.b16 %v183
      %v349 = vunpack.c.l.b16 %v184
      %v350 = vunpack.c.h.b16 %v184
      %v351 = vunpack.c.l.b16 %v185
      %v352 = vunpack.c.h.b16 %v185
      %v353 = vunpack.c.l.b16 %v186
      %v354 = vunpack.c.h.b16 %v186
      %v355 = vunpack.c.l.b16 %v187
      %v356 = vunpack.c.h.b16 %v187
      %v357 = vunpack.c.l.b16 %v188
      %v358 = vunpack.c.h.b16 %v188
      %v359 = vunpack.c.l.b16 %v189
      %v360 = vunpack.c.h.b16 %v189
      %v361 = vunpack.c.l.b16 %v190
      %v362 = vunpack.c.h.b16 %v190
      %v363 = vunpack.c.l.b16 %v191
      %v364 = vunpack.c.h.b16 %v191
      %v365 = vunpack.c.l.b16 %v192
      %v366 = vunpack.c.h.b16 %v192
      %v367 = vunpack.c.l.b16 %v193
      %v368 = vunpack.c.h.b16 %v193
      %v369 = vunpack.c.l.b16 %v194
      %v370 = vunpack.c.h.b16 %v194
      %v371 = vunpack.c.l.b16 %v195
      %v372 = vunpack.c.h.b16 %v195
      %v373 = vunpack.c.l.b16 %v196
      %v374 = vunpack.c.h.b16 %v196
      %v375 = vunpack.c.l.b16 %v197
      %v376 = vunpack.c.h.b16 %v197
      %v377 = vunpack.c.l.b16 %v198
      %v378 = vunpack.c.h.b16 %v198
      %v379 = vunpack.c.l.b16 %v199
      %v380 = vunpack.c.h.b16 %v199
      %v381 = vunpack.c.l.b16 %v200
      %v382 = vunpack.c.h.b16 %v200
      %v383 = vunpack.c.l.b16 %v201
      %v384 = vunpack.c.h.b16 %v201
      %v385 = vunpack.c.l.b16 %v202
      %v386 = vunpack.c.h.b16 %v202
      %v387 = vunpack.c.l.b16 %v203
      %v388 = vunpack.c.h.b16 %v203
      %v389 = vunpack.c.l.b16 %v204
      %v390 = vunpack.c.h.b16 %v204
      %v391 = vunpack.c.l.b16 %v205
      %v392 = vunpack.c.h.b16 %v205
      %v393 = vunpack.c.l.b16 %v206
      %v394 = vunpack.c.h.b16 %v206
      %v395 = vunpack.c.l.b16 %v207
      %v396 = vunpack.c.h.b16 %v207
      %v397 = vunpack.c.l.b16 %v208
      %v398 = vunpack.c.h.b16 %v208
      %v399 = vunpack.c.l.b16 %v209
      %v400 = vunpack.c.h.b16 %v209
      %v401 = vunpack.c.l.b16 %v210
      %v402 = vunpack.c.h.b16 %v210
      %v403 = vunpack.c.l.b16 %v211
      %v404 = vunpack.c.h.b16 %v211
      %v405 = vunpack.c.l.b16 %v212
      %v406 = vunpack.c.h.b16 %v212
      %v407 = vunpack.c.l.b16 %v213
      %v408 = vunpack.c.h.b16 %v213
      %v409 = vunpack.c.l.b16 %v214
      %v410 = vunpack.c.h.b16 %v214
      %v411 = vunpack.c.l.b16 %v215
      %v412 = vunpack.c.h.b16 %v215
      %v413 = vunpack.c.l.b16 %v216
      %v414 = vunpack.c.h.b16 %v216
      %v415 = vunpack.c.l.b16 %v217
      %v416 = vunpack.c.h.b16 %v217
      %v417 = vunpack.c.l.b16 %v218
      %v418 = vunpack.c.h.b16 %v218
      %v419 = vunpack.c.l.b16 %v219
      %v420 = vunpack.c.h.b16 %v219
      %v421 = vunpack.c.l.b16 %v220
      %v422 = vunpack.c.h.b16 %v220
      %v423 = vunpack.c.l.b16 %v221
      %v424 = vunpack.c.h.b16 %v221
      %v425 = vunpack.c.l.b16 %v222
      %v426 = vunpack.c.h.b16 %v222
      %v427 = vunpack.c.l.b16 %v223
      %v428 = vunpack.c.h.b16 %v223
      %v429 = vunpack.c.l.b16 %v224
      %v430 = vunpack.c.h.b16 %v224
      %v431 = vunpack.c.l.b16 %v225
      %v432 = vunpack.c.h.b16 %v225
      %v433 = vunpack.c.l.b16 %v226
      %v434 = vunpack.c.h.b16 %v226
      %v435 = vunpack.c.l.b16 %v227
      %v436 = vunpack.c.h.b16 %v227
      %v437 = vunpack.c.l.b16 %v228
      %v438 = vunpack.c.h.b16 %v228
      %v439 = vunpack.c.l.b16 %v229
      %v440 = vunpack.c.h.b16 %v229
      %v441 = vunpack.c.l.b16 %v230
      %v442 = vunpack.c.h.b16 %v230
      %v443 = vunpack.c.l.b16 %v231
      %v444 = vunpack.c.h.b16 %v231
      %v445 = vunpack.c.l.b16 %v232
      %v446 = vunpack.c.h.b16 %v232
      %v447 = vunpack.c.l.b16 %v233
      %v448 = vunpack.c.h.b16 %v233
      %v449 = vunpack.c.l.b16 %v234
      %v450 = vunpack.c.h.b16 %v234
      %v451 = vunpack.c.l.b16 %v235
      %v452 = vunpack.c.h.b16 %v235
      %v453 = vunpack.c.l.b16 %v236
      %v454 = vunpack.c.h.b16 %v236
      %v455 = vunpack.c.l.b16 %v237
      %v456 = vunpack.c.h.b16 %v237
      %v457 = vunpack.c.l.b16 %v238
      %v458 = vunpack.c.h.b16 %v238
      %v459 = vunpack.c.l.b16 %v239
      %v460 = vunpack.c.h.b16 %v239
      %v461 = vunpack.c.l.b16 %v240
      %v462 = vunpack.c.h.b16 %v240
      %v463 = vunpack.c.l.b16 %v241
      %v464 = vunpack.c.h.b16 %v241
      %v465 = vpack.c.b16 %v339, %v337
      %v466 = vpack.c.b16 %v340, %v338
      %v467 = vpack.c.b16 %v343, %v341
      %v468 = vpack.c.b16 %v344, %v342
      %v469 = vpack.c.b16 %v347, %v345
      %v470 = vpack.c.b16 %v348, %v346
      %v471 = vpack.c.b16 %v351, %v349
      %v472 = vpack.c.b16 %v352, %v350
      %v473 = vpack.c.b16 %v355, %v353
      %v474 = vpack.c.b16 %v356, %v354
      %v475 = vpack.c.b16 %v359, %v357
      %v476 = vpack.c.b16 %v360, %v358
      %v477 = vpack.c.b16 %v363, %v361
      %v478 = vpack.c.b16 %v364, %v362
      %v479 = vpack.c.b16 %v367, %v365
      %v480 = vpack.c.b16 %v368, %v366
      %v481 = vpack.c.b16 %v371, %v369
      %v482 = vpack.c.b16 %v372, %v370
      %v483 = vpack.c.b16 %v375, %v373
      %v484 = vpack.c.b16 %v376, %v374
      %v485 = vpack.c.b16 %v379, %v377
      %v486 = vpack.c.b16 %v380, %v378
      %v487 = vpack.c.b16 %v383, %v381
      %v488 = vpack.c.b16 %v384, %v382
      %v489 = vpack.c.b16 %v387, %v385
      %v490 = vpack.c.b16 %v388, %v386
      %v491 = vpack.c.b16 %v391, %v389
      %v492 = vpack.c.b16 %v392, %v390
      %v493 = vpack.c.b16 %v395, %v393
      %v494 = vpack.c.b16 %v396, %v394
      %v495 = vpack.c.b16 %v399, %v397
      %v496 = vpack.c.b16 %v400, %v398
      %v497 = vpack.c.b16 %v403, %v401
      %v498 = vpack.c.b16 %v404, %v402
      %v499 = vpack.c.b16 %v407, %v405
      %v500 = vpack.c.b16 %v408, %v406
      %v501 = vpack.c.b16 %v411, %v409
      %v502 = vpack.c.b16 %v412, %v410
      %v503 = vpack.c.b16 %v415, %v413
      %v504 = vpack.c.b16 %v416, %v414
      %v505 = vpack.c.b16 %v419, %v417
      %v506 = vpack.c.b16 %v420, %v418
      %v507 = vpack.c.b16 %v423, %v421
      %v508 = vpack.c.b16 %v424, %v422
      %v509 = vpack.c.b16 %v427, %v425
      %v510 = vpack.c.b16 %v428, %v426
      %v511 = vpack.c.b16 %v431, %v429
      %v512 = vpack.c.b16 %v432, %v430
      %v513 = vpack.c.b16 %v435, %v433
      %v514 = vpack.c.b16 %v436, %v434
      %v515 = vpack.c.b16 %v439, %v437
      %v516 = vpack.c.b16 %v440, %v438
      %v517 = vpack.c.b16 %v443, %v441
      %v518 = vpack.c.b16 %v444, %v442
      %v519 = vpack.c.b16 %v447, %v445
      %v520 = vpack.c.b16 %v448, %v446
      %v521 = vpack.c.b16 %v451, %v449
      %v522 = vpack.c.b16 %v452, %v450
      %v523 = vpack.c.b16 %v455, %v453
      %v524 = vpack.c.b16 %v456, %v454
      %v525 = vpack.c.b16 %v459, %v457
      %v526 = vpack.c.b16 %v460, %v458
      %v527 = vpack.c.b16 %v463, %v461
      %v528 = vpack.c.b16 %v464, %v462
      %v585 = vunpack.c.l.b16 %v242
      %v586 = vunpack.c.l.b16 %v243
      %v587 = vunpack.c.l.b16 %v244
      %v588 = vunpack.c.l.b16 %v245
      %v589 = vunpack.c.l.b16 %v246
      %v590 = vunpack.c.l.b16 %v247
      %v591 = vunpack.c.l.b16 %v248
      %v592 = vunpack.c.l.b16 %v249
      %v593 = vunpack.c.l.b16 %v250
      %v594 = vunpack.c.l.b16 %v251
      %v595 = vunpack.c.l.b16 %v252
      %v596 = vunpack.c.l.b16 %v253
      %v597 = vunpack.c.l.b16 %v254
      %v598 = vunpack.c.l.b16 %v255
      %v599 = vunpack.c.l.b16 %v256
      %v600 = vunpack.c.l.b16 %v257
      %v601 = vunpack.c.l.b16 %v258
      %v602 = vunpack.c.l.b16 %v259
      %v603 = vunpack.c.l.b16 %v260
      %v604 = vunpack.c.l.b16 %v261
      %v605 = vunpack.c.l.b16 %v262
      %v606 = vunpack.c.l.b16 %v263
      %v607 = vunpack.c.l.b16 %v264
      %v608 = vunpack.c.l.b16 %v265
      %v609 = vpack.c.b16 %v586, %v585
      %v610 = vpack.c.b16 %v588, %v587
      %v611 = vpack.c.b16 %v590, %v589
      %v612 = vpack.c.b16 %v592, %v591
      %v613 = vpack.c.b16 %v594, %v593
      %v614 = vpack.c.b16 %v596, %v595
      %v615 = vpack.c.b16 %v598, %v597
      %v616 = vpack.c.b16 %v600, %v599
      %v617 = vpack.c.b16 %v602, %v601
      %v618 = vpack.c.b16 %v604, %v603
      %v619 = vpack.c.b16 %v606, %v605
      %v620 = vpack.c.b16 %v608, %v607
      %vm633 = vcmask 523264
      %v635 = vsel %vm633, %v466, 0
      %v638 = vsel %vm633, %v468, 0
      %v641 = vsel %vm633, %v470, 0
      %v644 = vsel %vm633, %v472, 0
      %v647 = vsel %vm633, %v474, 0
      %v650 = vsel %vm633, %v476, 0
      %v653 = vsel %vm633, %v478, 0
      %v656 = vsel %vm633, %v480, 0
      %v659 = vsel %vm633, %v482, 0
      %v662 = vsel %vm633, %v484, 0
      %v665 = vsel %vm633, %v486, 0
      %v668 = vsel %vm633, %v488, 0
      %v671 = vsel %vm633, %v490, 0
      %v674 = vsel %vm633, %v492, 0
      %v677 = vsel %vm633, %v494, 0
      %v680 = vsel %vm633, %v496, 0
      %v683 = vsel %vm633, %v498, 0
      %v686 = vsel %vm633, %v500, 0
      %v689 = vsel %vm633, %v502, 0
      %v692 = vsel %vm633, %v504, 0
      %v695 = vsel %vm633, %v506, 0
      %v698 = vsel %vm633, %v508, 0
      %v701 = vsel %vm633, %v510, 0
      %v704 = vsel %vm633, %v512, 0
      %v707 = vsel %vm633, %v514, 0
      %v710 = vsel %vm633, %v516, 0
      %v713 = vsel %vm633, %v518, 0
      %v716 = vsel %vm633, %v520, 0
      %v719 = vsel %vm633, %v522, 0
      %v722 = vsel %vm633, %v524, 0
      %v725 = vsel %vm633, %v526, 0
      %v728 = vsel %vm633, %v528, 0
      %730 = vmatprep.subr.bf16.mxu0 0
      %731 = vmatpush1.bf16.msra.mxu0 %v616
      %732 = vmatprep.subr.bf16.mxu0 0
      %733 = vmatpush1.bf16.msra.mxu0 %v615
      %734 = vmatprep.subr.bf16.mxu0 0
      %735 = vmatpush1.bf16.msra.mxu0 %v614
      %736 = vmatprep.subr.bf16.mxu0 0
      %737 = vmatpush1.bf16.msra.mxu0 %v613
      %738 = vmatprep.subr.bf16.mxu0 0
      %739 = vmatpush1.bf16.msra.mxu0 %v612
      %740 = vmatprep.subr.bf16.mxu0 0
      %741 = vmatpush1.bf16.msra.mxu0 %v611
      %742 = vmatprep.subr.bf16.mxu0 0
      %743 = vmatpush1.bf16.msra.mxu0 %v610
      %744 = vmatprep.subr.bf16.mxu0 0
      %745 = vmatpush1.bf16.msra.mxu0 %v609
      %746 = vmatprep.subr.bf16.mxu0 0
      %747 = vmatpush2.bf16.msra.mxu0 0
      %748 = vmatprep.subr.bf16.mxu0 0
      %749 = vmatpush2.bf16.msra.mxu0 0
      %750 = vmatprep.subr.bf16.mxu0 0
      %751 = vmatpush2.bf16.msra.mxu0 0
      %752 = vmatprep.subr.bf16.mxu0 0
      %753 = vmatpush2.bf16.msra.mxu0 0
      %754 = vmatprep.subr.bf16.mxu0 0
      %755 = vmatpush2.bf16.msra.mxu0 %v620
      %756 = vmatprep.subr.bf16.mxu0 0
      %757 = vmatpush2.bf16.msra.mxu0 %v619
      %758 = vmatprep.subr.bf16.mxu0 0
      %759 = vmatpush2.bf16.msra.mxu0 %v618
      %760 = vmatprep.subr.bf16.mxu0 0
      %761 = vmatpush2.bf16.msra.mxu0 %v617
      %762 = vmatprep.mubr.bf16.mxu0 %v635
      %763 = vmatmul.mubr.bf16.gmra.mxu0 %v465
      %v764 = vpop.f32.mrf.mxu0
      %v765 = vadd.f32 %v271, %v764
      %v766 = vpop.f32.mrf.mxu0
      %v767 = vpop.f32.mrf.mxu0
      %v768 = vadd.f32 %v271, %v767
      %v769 = vpop.f32.mrf.mxu0
      %770 = vmatprep.mubr.bf16.mxu0 %v638
      %771 = vmatmul.mubr.bf16.gmra.mxu0 %v467
      %v772 = vpop.f32.mrf.mxu0
      %v773 = vadd.f32 %v271, %v772
      %v774 = vpop.f32.mrf.mxu0
      %v775 = vpop.f32.mrf.mxu0
      %v776 = vadd.f32 %v271, %v775
      %v777 = vpop.f32.mrf.mxu0
      %778 = vmatprep.mubr.bf16.mxu0 %v641
      %779 = vmatmul.mubr.bf16.gmra.mxu0 %v469
      %v780 = vpop.f32.mrf.mxu0
      %v781 = vadd.f32 %v271, %v780
      %v782 = vpop.f32.mrf.mxu0
      %v783 = vpop.f32.mrf.mxu0
      %v784 = vadd.f32 %v271, %v783
      %v785 = vpop.f32.mrf.mxu0
      %786 = vmatprep.mubr.bf16.mxu0 %v644
      %787 = vmatmul.mubr.bf16.gmra.mxu0 %v471
      %v788 = vpop.f32.mrf.mxu0
      %v789 = vadd.f32 %v271, %v788
      %v790 = vpop.f32.mrf.mxu0
      %v791 = vpop.f32.mrf.mxu0
      %v792 = vadd.f32 %v271, %v791
      %v793 = vpop.f32.mrf.mxu0
      %794 = vmatprep.mubr.bf16.mxu0 %v647
      %795 = vmatmul.mubr.bf16.gmra.mxu0 %v473
      %v796 = vpop.f32.mrf.mxu0
      %v797 = vadd.f32 %v271, %v796
      %v798 = vpop.f32.mrf.mxu0
      %v799 = vpop.f32.mrf.mxu0
      %v800 = vadd.f32 %v271, %v799
      %v801 = vpop.f32.mrf.mxu0
      %802 = vmatprep.mubr.bf16.mxu0 %v650
      %803 = vmatmul.mubr.bf16.gmra.mxu0 %v475
      %v804 = vpop.f32.mrf.mxu0
      %v805 = vadd.f32 %v271, %v804
      %v806 = vpop.f32.mrf.mxu0
      %v807 = vpop.f32.mrf.mxu0
      %v808 = vadd.f32 %v271, %v807
      %v809 = vpop.f32.mrf.mxu0
      %810 = vmatprep.mubr.bf16.mxu0 %v653
      %811 = vmatmul.mubr.bf16.gmra.mxu0 %v477
      %v812 = vpop.f32.mrf.mxu0
      %v813 = vadd.f32 %v271, %v812
      %v814 = vpop.f32.mrf.mxu0
      %v815 = vpop.f32.mrf.mxu0
      %v816 = vadd.f32 %v271, %v815
      %v817 = vpop.f32.mrf.mxu0
      %818 = vmatprep.mubr.bf16.mxu0 %v656
      %819 = vmatmul.mubr.bf16.gmra.mxu0 %v479
      %v820 = vpop.f32.mrf.mxu0
      %v821 = vadd.f32 %v271, %v820
      %v822 = vpop.f32.mrf.mxu0
      %v823 = vpop.f32.mrf.mxu0
      %v824 = vadd.f32 %v271, %v823
      %v825 = vpop.f32.mrf.mxu0
      %826 = vmatprep.mubr.bf16.mxu0 %v659
      %827 = vmatmul.mubr.bf16.gmra.mxu0 %v481
      %v828 = vpop.f32.mrf.mxu0
      %v829 = vadd.f32 %v271, %v828
      %v830 = vpop.f32.mrf.mxu0
      %v831 = vpop.f32.mrf.mxu0
      %v832 = vadd.f32 %v271, %v831
      %v833 = vpop.f32.mrf.mxu0
      %834 = vmatprep.mubr.bf16.mxu0 %v662
      %835 = vmatmul.mubr.bf16.gmra.mxu0 %v483
      %v836 = vpop.f32.mrf.mxu0
      %v837 = vadd.f32 %v271, %v836
      %v838 = vpop.f32.mrf.mxu0
      %v839 = vpop.f32.mrf.mxu0
      %v840 = vadd.f32 %v271, %v839
      %v841 = vpop.f32.mrf.mxu0
      %842 = vmatprep.mubr.bf16.mxu0 %v665
      %843 = vmatmul.mubr.bf16.gmra.mxu0 %v485
      %v844 = vpop.f32.mrf.mxu0
      %v845 = vadd.f32 %v271, %v844
      %v846 = vpop.f32.mrf.mxu0
      %v847 = vpop.f32.mrf.mxu0
      %v848 = vadd.f32 %v271, %v847
      %v849 = vpop.f32.mrf.mxu0
      %850 = vmatprep.mubr.bf16.mxu0 %v668
      %851 = vmatmul.mubr.bf16.gmra.mxu0 %v487
      %v852 = vpop.f32.mrf.mxu0
      %v853 = vadd.f32 %v271, %v852
      %v854 = vpop.f32.mrf.mxu0
      %v855 = vpop.f32.mrf.mxu0
      %v856 = vadd.f32 %v271, %v855
      %v857 = vpop.f32.mrf.mxu0
      %858 = vmatprep.mubr.bf16.mxu0 %v671
      %859 = vmatmul.mubr.bf16.gmra.mxu0 %v489
      %v860 = vpop.f32.mrf.mxu0
      %v861 = vadd.f32 %v271, %v860
      %v862 = vpop.f32.mrf.mxu0
      %v863 = vpop.f32.mrf.mxu0
      %v864 = vadd.f32 %v271, %v863
      %v865 = vpop.f32.mrf.mxu0
      %866 = vmatprep.mubr.bf16.mxu0 %v674
      %867 = vmatmul.mubr.bf16.gmra.mxu0 %v491
      %v868 = vpop.f32.mrf.mxu0
      %v869 = vadd.f32 %v271, %v868
      %v870 = vpop.f32.mrf.mxu0
      %v871 = vpop.f32.mrf.mxu0
      %v872 = vadd.f32 %v271, %v871
      %v873 = vpop.f32.mrf.mxu0
      %874 = vmatprep.mubr.bf16.mxu0 %v677
      %875 = vmatmul.mubr.bf16.gmra.mxu0 %v493
      %v876 = vpop.f32.mrf.mxu0
      %v877 = vadd.f32 %v271, %v876
      %v878 = vpop.f32.mrf.mxu0
      %v879 = vpop.f32.mrf.mxu0
      %v880 = vadd.f32 %v271, %v879
      %v881 = vpop.f32.mrf.mxu0
      %882 = vmatprep.mubr.bf16.mxu0 %v680
      %883 = vmatmul.mubr.bf16.gmra.mxu0 %v495
      %v884 = vpop.f32.mrf.mxu0
      %v885 = vadd.f32 %v271, %v884
      %v886 = vpop.f32.mrf.mxu0
      %v887 = vpop.f32.mrf.mxu0
      %v888 = vadd.f32 %v271, %v887
      %v889 = vpop.f32.mrf.mxu0
      %890 = vmatprep.mubr.bf16.mxu0 %v683
      %891 = vmatmul.mubr.bf16.gmra.mxu0 %v497
      %v892 = vpop.f32.mrf.mxu0
      %v893 = vadd.f32 %v271, %v892
      %v894 = vpop.f32.mrf.mxu0
      %v895 = vpop.f32.mrf.mxu0
      %v896 = vadd.f32 %v271, %v895
      %v897 = vpop.f32.mrf.mxu0
      %898 = vmatprep.mubr.bf16.mxu0 %v686
      %899 = vmatmul.mubr.bf16.gmra.mxu0 %v499
      %v900 = vpop.f32.mrf.mxu0
      %v901 = vadd.f32 %v271, %v900
      %v902 = vpop.f32.mrf.mxu0
      %v903 = vpop.f32.mrf.mxu0
      %v904 = vadd.f32 %v271, %v903
      %v905 = vpop.f32.mrf.mxu0
      %906 = vmatprep.mubr.bf16.mxu0 %v689
      %907 = vmatmul.mubr.bf16.gmra.mxu0 %v501
      %v908 = vpop.f32.mrf.mxu0
      %v909 = vadd.f32 %v271, %v908
      %v910 = vpop.f32.mrf.mxu0
      %v911 = vpop.f32.mrf.mxu0
      %v912 = vadd.f32 %v271, %v911
      %v913 = vpop.f32.mrf.mxu0
      %914 = vmatprep.mubr.bf16.mxu0 %v692
      %915 = vmatmul.mubr.bf16.gmra.mxu0 %v503
      %v916 = vpop.f32.mrf.mxu0
      %v917 = vadd.f32 %v271, %v916
      %v918 = vpop.f32.mrf.mxu0
      %v919 = vpop.f32.mrf.mxu0
      %v920 = vadd.f32 %v271, %v919
      %v921 = vpop.f32.mrf.mxu0
      %922 = vmatprep.mubr.bf16.mxu0 %v695
      %923 = vmatmul.mubr.bf16.gmra.mxu0 %v505
      %v924 = vpop.f32.mrf.mxu0
      %v925 = vadd.f32 %v271, %v924
      %v926 = vpop.f32.mrf.mxu0
      %v927 = vpop.f32.mrf.mxu0
      %v928 = vadd.f32 %v271, %v927
      %v929 = vpop.f32.mrf.mxu0
      %930 = vmatprep.mubr.bf16.mxu0 %v698
      %931 = vmatmul.mubr.bf16.gmra.mxu0 %v507
      %v932 = vpop.f32.mrf.mxu0
      %v933 = vadd.f32 %v271, %v932
      %v934 = vpop.f32.mrf.mxu0
      %v935 = vpop.f32.mrf.mxu0
      %v936 = vadd.f32 %v271, %v935
      %v937 = vpop.f32.mrf.mxu0
      %938 = vmatprep.mubr.bf16.mxu0 %v701
      %939 = vmatmul.mubr.bf16.gmra.mxu0 %v509
      %v940 = vpop.f32.mrf.mxu0
      %v941 = vadd.f32 %v271, %v940
      %v942 = vpop.f32.mrf.mxu0
      %v943 = vpop.f32.mrf.mxu0
      %v944 = vadd.f32 %v271, %v943
      %v945 = vpop.f32.mrf.mxu0
      %946 = vmatprep.mubr.bf16.mxu0 %v704
      %947 = vmatmul.mubr.bf16.gmra.mxu0 %v511
      %v948 = vpop.f32.mrf.mxu0
      %v949 = vadd.f32 %v271, %v948
      %v950 = vpop.f32.mrf.mxu0
      %v951 = vpop.f32.mrf.mxu0
      %v952 = vadd.f32 %v271, %v951
      %v953 = vpop.f32.mrf.mxu0
      %954 = vmatprep.mubr.bf16.mxu0 %v707
      %955 = vmatmul.mubr.bf16.gmra.mxu0 %v513
      %v956 = vpop.f32.mrf.mxu0
      %v957 = vadd.f32 %v271, %v956
      %v958 = vpop.f32.mrf.mxu0
      %v959 = vpop.f32.mrf.mxu0
      %v960 = vadd.f32 %v271, %v959
      %v961 = vpop.f32.mrf.mxu0
      %962 = vmatprep.mubr.bf16.mxu0 %v710
      %963 = vmatmul.mubr.bf16.gmra.mxu0 %v515
      %v964 = vpop.f32.mrf.mxu0
      %v965 = vadd.f32 %v271, %v964
      %v966 = vpop.f32.mrf.mxu0
      %v967 = vpop.f32.mrf.mxu0
      %v968 = vadd.f32 %v271, %v967
      %v969 = vpop.f32.mrf.mxu0
      %970 = vmatprep.mubr.bf16.mxu0 %v713
      %971 = vmatmul.mubr.bf16.gmra.mxu0 %v517
      %v972 = vpop.f32.mrf.mxu0
      %v973 = vadd.f32 %v271, %v972
      %v974 = vpop.f32.mrf.mxu0
      %v975 = vpop.f32.mrf.mxu0
      %v976 = vadd.f32 %v271, %v975
      %v977 = vpop.f32.mrf.mxu0
      %978 = vmatprep.mubr.bf16.mxu0 %v716
      %979 = vmatmul.mubr.bf16.gmra.mxu0 %v519
      %v980 = vpop.f32.mrf.mxu0
      %v981 = vadd.f32 %v271, %v980
      %v982 = vpop.f32.mrf.mxu0
      %v983 = vpop.f32.mrf.mxu0
      %v984 = vadd.f32 %v271, %v983
      %v985 = vpop.f32.mrf.mxu0
      %986 = vmatprep.mubr.bf16.mxu0 %v719
      %987 = vmatmul.mubr.bf16.gmra.mxu0 %v521
      %v988 = vpop.f32.mrf.mxu0
      %v989 = vadd.f32 %v271, %v988
      %v990 = vpop.f32.mrf.mxu0
      %v991 = vpop.f32.mrf.mxu0
      %v992 = vadd.f32 %v271, %v991
      %v993 = vpop.f32.mrf.mxu0
      %994 = vmatprep.mubr.bf16.mxu0 %v722
      %995 = vmatmul.mubr.bf16.gmra.mxu0 %v523
      %v996 = vpop.f32.mrf.mxu0
      %v997 = vadd.f32 %v271, %v996
      %v998 = vpop.f32.mrf.mxu0
      %v999 = vpop.f32.mrf.mxu0
      %v1000 = vadd.f32 %v271, %v999
      %v1001 = vpop.f32.mrf.mxu0
      %1002 = vmatprep.mubr.bf16.mxu0 %v725
      %1003 = vmatmul.mubr.bf16.gmra.mxu0 %v525
      %v1004 = vpop.f32.mrf.mxu0
      %v1005 = vadd.f32 %v271, %v1004
      %v1006 = vpop.f32.mrf.mxu0
      %v1007 = vpop.f32.mrf.mxu0
      %v1008 = vadd.f32 %v271, %v1007
      %v1009 = vpop.f32.mrf.mxu0
      %1010 = vmatprep.mubr.bf16.mxu0 %v728
      %1011 = vmatmul.mubr.bf16.gmra.mxu0 %v527
      %v1012 = vpop.f32.mrf.mxu0
      %v1013 = vadd.f32 %v271, %v1012
      %v1014 = vpop.f32.mrf.mxu0
      %v1015 = vpop.f32.mrf.mxu0
      %v1016 = vadd.f32 %v271, %v1015
      %v1017 = vpop.f32.mrf.mxu0
      %1018 = vdwg.mxu0
      %1019 = vst [vmem:[%s175] sm:$0xff] %v765
      %1020 = vst [vmem:[%s175 + $0x8] sm:$0xff] %v768
      %1021 = vst [vmem:[%s175 + $0x10] sm:$0xff] %v773
      %1022 = vst [vmem:[%s175 + $0x18] sm:$0xff] %v776
      %1023 = vst [vmem:[%s175 + $0x20] sm:$0xff] %v781
      %1024 = vst [vmem:[%s175 + $0x28] sm:$0xff] %v784
      %1025 = vst [vmem:[%s175 + $0x30] sm:$0xff] %v789
      %1026 = vst [vmem:[%s175 + $0x38] sm:$0xff] %v792
      %1027 = vst [vmem:[%s175 + $0x40] sm:$0xff] %v797
      %1028 = vst [vmem:[%s175 + $0x48] sm:$0xff] %v800
      %1029 = vst [vmem:[%s175 + $0x50] sm:$0xff] %v805
      %1030 = vst [vmem:[%s175 + $0x58] sm:$0xff] %v808
      %1031 = vst [vmem:[%s175 + $0x60] sm:$0xff] %v813
      %1032 = vst [vmem:[%s175 + $0x68] sm:$0xff] %v816
      %1033 = vst [vmem:[%s175 + $0x70] sm:$0xff] %v821
      %1034 = vst [vmem:[%s175 + $0x78] sm:$0xff] %v824
      %1035 = vst [vmem:[%s175 + $0x80] sm:$0xff] %v829
      %1036 = vst [vmem:[%s175 + $0x88] sm:$0xff] %v832
      %1037 = vst [vmem:[%s175 + $0x90] sm:$0xff] %v837
      %1038 = vst [vmem:[%s175 + $0x98] sm:$0xff] %v840
      %1039 = vst [vmem:[%s175 + $0xa0] sm:$0xff] %v845
      %1040 = vst [vmem:[%s175 + $0xa8] sm:$0xff] %v848
      %1041 = vst [vmem:[%s175 + $0xb0] sm:$0xff] %v853
      %1042 = vst [vmem:[%s175 + $0xb8] sm:$0xff] %v856
      %1043 = vst [vmem:[%s175 + $0xc0] sm:$0xff] %v861
      %1044 = vst [vmem:[%s175 + $0xc8] sm:$0xff] %v864
      %1045 = vst [vmem:[%s175 + $0xd0] sm:$0xff] %v869
      %1046 = vst [vmem:[%s175 + $0xd8] sm:$0xff] %v872
      %1047 = vst [vmem:[%s175 + $0xe0] sm:$0xff] %v877
      %1048 = vst [vmem:[%s175 + $0xe8] sm:$0xff] %v880
      %1049 = vst [vmem:[%s175 + $0xf0] sm:$0xff] %v885
      %1050 = vst [vmem:[%s175 + $0xf8] sm:$0xff] %v888
      %1051 = vst [vmem:[%s175 + $0x100] sm:$0xff] %v893
      %1052 = vst [vmem:[%s175 + $0x108] sm:$0xff] %v896
      %1053 = vst [vmem:[%s175 + $0x110] sm:$0xff] %v901
      %1054 = vst [vmem:[%s175 + $0x118] sm:$0xff] %v904
      %1055 = vst [vmem:[%s175 + $0x120] sm:$0xff] %v909
      %1056 = vst [vmem:[%s175 + $0x128] sm:$0xff] %v912
      %1057 = vst [vmem:[%s175 + $0x130] sm:$0xff] %v917
      %1058 = vst [vmem:[%s175 + $0x138] sm:$0xff] %v920
      %1059 = vst [vmem:[%s175 + $0x140] sm:$0xff] %v925
      %1060 = vst [vmem:[%s175 + $0x148] sm:$0xff] %v928
      %1061 = vst [vmem:[%s175 + $0x150] sm:$0xff] %v933
      %1062 = vst [vmem:[%s175 + $0x158] sm:$0xff] %v936
      %1063 = vst [vmem:[%s175 + $0x160] sm:$0xff] %v941
      %1064 = vst [vmem:[%s175 + $0x168] sm:$0xff] %v944
      %1065 = vst [vmem:[%s175 + $0x170] sm:$0xff] %v949
      %1066 = vst [vmem:[%s175 + $0x178] sm:$0xff] %v952
      %1067 = vst [vmem:[%s175 + $0x180] sm:$0xff] %v957
      %1068 = vst [vmem:[%s175 + $0x188] sm:$0xff] %v960
      %1069 = vst [vmem:[%s175 + $0x190] sm:$0xff] %v965
      %1070 = vst [vmem:[%s175 + $0x198] sm:$0xff] %v968
      %1071 = vst [vmem:[%s175 + $0x1a0] sm:$0xff] %v973
      %1072 = vst [vmem:[%s175 + $0x1a8] sm:$0xff] %v976
      %1073 = vst [vmem:[%s175 + $0x1b0] sm:$0xff] %v981
      %1074 = vst [vmem:[%s175 + $0x1b8] sm:$0xff] %v984
      %1075 = vst [vmem:[%s175 + $0x1c0] sm:$0xff] %v989
      %1076 = vst [vmem:[%s175 + $0x1c8] sm:$0xff] %v992
      %1077 = vst [vmem:[%s175 + $0x1d0] sm:$0xff] %v997
      %1078 = vst [vmem:[%s175 + $0x1d8] sm:$0xff] %v1000
      %1079 = vst [vmem:[%s175 + $0x1e0] sm:$0xff] %v1005
      %1080 = vst [vmem:[%s175 + $0x1e8] sm:$0xff] %v1008
      %1081 = vst [vmem:[%s175 + $0x1f0] sm:$0xff] %v1013
      %1082 = vst [vmem:[%s175 + $0x1f8] sm:$0xff] %v1016
      %s1083 = smul.u32 64, %s14
      %p1084 = scmp.lt.s32.totalorder %s1083, 127
      %s1085 = scalar_select %p1084, %s1083, 127
      %s1086 = smul.addr %s1085, 8
      %s1087 = scalar_lea.vmem %s3, %s1086
      // Predicated region
      $region33: #{relight_net_forward.16} parent=31 // pred_check
        %p1088 = pneg %p100
      $region34: #{relight_net_forward.16} parent=31 // pred_check_branch
        %1090 = sbr.rel (%p1088) target = $region36
      $region35: #{relight_net_forward.16} parent=31 // pred_region
        %s1091 = smul.u32 64, %s14
      $region36: #{relight_net_forward.16} parent=31 // pred_fallthru
        _
    $region32: #{relight_net_forward.16} parent=5 // pred_fallthru
      _
    %p1092 = scmp.le.s32.totalorder 2, %s9
    // Predicated region
    $region37: #{relight_net_forward.16} parent=5 // pred_check
      %p1093 = pneg %p1092
    $region38: #{relight_net_forward.16} parent=5 // pred_check_branch
      %1095 = sbr.rel (%p1093) target = $region40
    $region39: #{relight_net_forward.16} parent=5 // pred_region
      %s1096 = ssub.s32 %s9, 2
      // Predicated region
      $region41: #{relight_net_forward.16} parent=39 // pred_check
        %p1097 = pneg %p106
      $region42: #{relight_net_forward.16} parent=39 // pred_check_branch
        %1099 = sbr.rel (%p1097) target = $region44
      $region43: #{relight_net_forward.16} parent=39 // pred_region
        %s1100 = smul.u32 64, %s15
        %p1101 = scmp.lt.s32.totalorder %s1100, 127
        %s1102 = scalar_select %p1101, %s1100, 127
        %s1103 = smul.addr %s1102, 8
        %s1104 = scalar_lea.vmem %s3, %s1103
      $region44: #{relight_net_forward.16} parent=39 // pred_fallthru
        _
    $region40: #{relight_net_forward.16} parent=5 // pred_fallthru
      _
  $region6: #{relight_net_forward.16} parent=0 // loop_footer
    %s13 = sadd.s32 1, %s9
  $region7: #{relight_net_forward.16} parent=0 // loop_footer_branch
    %8 = sbr.rel target = $region3
  $region8: #{relight_net_forward.16} parent=0 // loop_exit
    _

// kernel: relight_net_forward.17
$region0: #{relight_net_forward.17}
  #allocation0 [shape = 'u32[]', space=smem, size = 0x4, offset = 0x4, fixed_abs, tag = 'smem constant byte address 0x4 - core index']
  #allocation1 [shape = 'u32[144,128]{1,0:T(1,128)}', space=vmem, size = 0x12000, scoped, tag = 'internal scratch']
  %s0 = inlined_call_operand.vmem [shape: bf16[512,576], index: 0, kind: input, shape index: {}]
  %s1 = inlined_call_operand.vmem [shape: bf16[576,128], index: 1, kind: input, shape index: {}]
  %s2 = inlined_call_operand.vmem [shape: f32[1,128], index: 2, kind: input, shape index: {}]
  %s3 = inlined_call_operand.vmem [shape: f32[512,128], index: 3, kind: output, shape index: {}]
  %s4 = sld [smem:[#allocation0]]
  $region22: #{relight_net_forward.17} parent=0
    _
  %s6 = ssub.s32 1, %s4
  %s7 = scalar_select 0, %s6, %s4
  // Predicated region
  $region2: #{relight_net_forward.17} parent=0 // pred_check
    _
  $region3: #{relight_net_forward.17} parent=0 // pred_check_branch
    %9 = sbr.rel (0) target = $region5
  $region4: #{relight_net_forward.17} parent=0 // pred_region
    _
  $region5: #{relight_net_forward.17} parent=0 // pred_fallthru
    _
  // Predicated region
  $region6: #{relight_net_forward.17} parent=0 // pred_check
    _
  $region7: #{relight_net_forward.17} parent=0 // pred_check_branch
    %11 = sbr.rel (0) target = $region9
  $region8: #{relight_net_forward.17} parent=0 // pred_region
    _
  $region9: #{relight_net_forward.17} parent=0 // pred_fallthru
    _
  // Predicated region
  $region10: #{relight_net_forward.17} parent=0 // pred_check
    _
  $region11: #{relight_net_forward.17} parent=0 // pred_check_branch
    %13 = sbr.rel (0) target = $region13
  $region12: #{relight_net_forward.17} parent=0 // pred_region
    _
  $region13: #{relight_net_forward.17} parent=0 // pred_fallthru
    _
  %v15 = vld [vmem:[%s0] sm:$0xff]
  %v16 = vld [vmem:[%s0 + $0x8] sm:$0xff]
  %v17 = vld [vmem:[%s0 + $0x10] sm:$0xf]
  %v18 = vld [vmem:[%s0 + $0x14] sm:$0xff]
  %v19 = vld [vmem:[%s0 + $0x1c] sm:$0xff]
  %v20 = vld [vmem:[%s0 + $0x24] sm:$0xf]
  %v21 = vld [vmem:[%s0 + $0x28] sm:$0xff]
  %v22 = vld [vmem:[%s0 + $0x30] sm:$0xff]
  %v23 = vld [vmem:[%s0 + $0x38] sm:$0xf]
  %v24 = vld [vmem:[%s0 + $0x3c] sm:$0xff]
  %v25 = vld [vmem:[%s0 + $0x44] sm:$0xff]
  %v26 = vld [vmem:[%s0 + $0x4c] sm:$0xf]
  %v27 = vld [vmem:[%s0 + $0x50] sm:$0xff]
  %v28 = vld [vmem:[%s0 + $0x58] sm:$0xff]
  %v29 = vld [vmem:[%s0 + $0x60] sm:$0xf]
  %v30 = vld [vmem:[%s0 + $0x64] sm:$0xff]
  %v31 = vld [vmem:[%s0 + $0x6c] sm:$0xff]
  %v32 = vld [vmem:[%s0 + $0x74] sm:$0xf]
  %v33 = vld [vmem:[%s0 + $0x78] sm:$0xff]
  %v34 = vld [vmem:[%s0 + $0x80] sm:$0xff]
  %v35 = vld [vmem:[%s0 + $0x88] sm:$0xf]
  %v36 = vld [vmem:[%s0 + $0x8c] sm:$0xff]
  %v37 = vld [vmem:[%s0 + $0x94] sm:$0xff]
  %v38 = vld [vmem:[%s0 + $0x9c] sm:$0xf]
  %v39 = vld [vmem:[%s0 + $0xa0] sm:$0xff]
  %v40 = vld [vmem:[%s0 + $0xa8] sm:$0xff]
  %v41 = vld [vmem:[%s0 + $0xb0] sm:$0xf]
  %v42 = vld [vmem:[%s0 + $0xb4] sm:$0xff]
  %v43 = vld [vmem:[%s0 + $0xbc] sm:$0xff]
  %v44 = vld [vmem:[%s0 + $0xc4] sm:$0xf]
  %v45 = vld [vmem:[%s0 + $0xc8] sm:$0xff]
  %v46 = vld [vmem:[%s0 + $0xd0] sm:$0xff]
  %v47 = vld [vmem:[%s0 + $0xd8] sm:$0xf]
  %v48 = vld [vmem:[%s0 + $0xdc] sm:$0xff]
  %v49 = vld [vmem:[%s0 + $0xe4] sm:$0xff]
  %v50 = vld [vmem:[%s0 + $0xec] sm:$0xf]
  %v51 = vld [vmem:[%s0 + $0xf0] sm:$0xff]
  %v52 = vld [vmem:[%s0 + $0xf8] sm:$0xff]
  %v53 = vld [vmem:[%s0 + $0x100] sm:$0xf]
  %v54 = vld [vmem:[%s0 + $0x104] sm:$0xff]
  %v55 = vld [vmem:[%s0 + $0x10c] sm:$0xff]
  %v56 = vld [vmem:[%s0 + $0x114] sm:$0xf]
  %v57 = vld [vmem:[%s0 + $0x118] sm:$0xff]
  %v58 = vld [vmem:[%s0 + $0x120] sm:$0xff]
  %v59 = vld [vmem:[%s0 + $0x128] sm:$0xf]
  %v60 = vld [vmem:[%s0 + $0x12c] sm:$0xff]
  %v61 = vld [vmem:[%s0 + $0x134] sm:$0xff]
  %v62 = vld [vmem:[%s0 + $0x13c] sm:$0xf]
  %v63 = vld [vmem:[%s0 + $0x140] sm:$0xff]
  %v64 = vld [vmem:[%s0 + $0x148] sm:$0xff]
  %v65 = vld [vmem:[%s0 + $0x150] sm:$0xf]
  %v66 = vld [vmem:[%s0 + $0x154] sm:$0xff]
  %v67 = vld [vmem:[%s0 + $0x15c] sm:$0xff]
  %v68 = vld [vmem:[%s0 + $0x164] sm:$0xf]
  %v69 = vld [vmem:[%s0 + $0x168] sm:$0xff]
  %v70 = vld [vmem:[%s0 + $0x170] sm:$0xff]
  %v71 = vld [vmem:[%s0 + $0x178] sm:$0xf]
  %v72 = vld [vmem:[%s0 + $0x17c] sm:$0xff]
  %v73 = vld [vmem:[%s0 + $0x184] sm:$0xff]
  %v74 = vld [vmem:[%s0 + $0x18c] sm:$0xf]
  %v75 = vld [vmem:[%s0 + $0x190] sm:$0xff]
  %v76 = vld [vmem:[%s0 + $0x198] sm:$0xff]
  %v77 = vld [vmem:[%s0 + $0x1a0] sm:$0xf]
  %v78 = vld [vmem:[%s0 + $0x1a4] sm:$0xff]
  %v79 = vld [vmem:[%s0 + $0x1ac] sm:$0xff]
  %v80 = vld [vmem:[%s0 + $0x1b4] sm:$0xf]
  %v81 = vld [vmem:[%s0 + $0x1b8] sm:$0xff]
  %v82 = vld [vmem:[%s0 + $0x1c0] sm:$0xff]
  %v83 = vld [vmem:[%s0 + $0x1c8] sm:$0xf]
  %v84 = vld [vmem:[%s0 + $0x1cc] sm:$0xff]
  %v85 = vld [vmem:[%s0 + $0x1d4] sm:$0xff]
  %v86 = vld [vmem:[%s0 + $0x1dc] sm:$0xf]
  %v87 = vld [vmem:[%s0 + $0x1e0] sm:$0xff]
  %v88 = vld [vmem:[%s0 + $0x1e8] sm:$0xff]
  %v89 = vld [vmem:[%s0 + $0x1f0] sm:$0xf]
  %v90 = vld [vmem:[%s0 + $0x1f4] sm:$0xff]
  %v91 = vld [vmem:[%s0 + $0x1fc] sm:$0xff]
  %v92 = vld [vmem:[%s0 + $0x204] sm:$0xf]
  %v93 = vld [vmem:[%s0 + $0x208] sm:$0xff]
  %v94 = vld [vmem:[%s0 + $0x210] sm:$0xff]
  %v95 = vld [vmem:[%s0 + $0x218] sm:$0xf]
  %v96 = vld [vmem:[%s0 + $0x21c] sm:$0xff]
  %v97 = vld [vmem:[%s0 + $0x224] sm:$0xff]
  %v98 = vld [vmem:[%s0 + $0x22c] sm:$0xf]
  %v99 = vld [vmem:[%s0 + $0x230] sm:$0xff]
  %v100 = vld [vmem:[%s0 + $0x238] sm:$0xff]
  %v101 = vld [vmem:[%s0 + $0x240] sm:$0xf]
  %v102 = vld [vmem:[%s0 + $0x244] sm:$0xff]
  %v103 = vld [vmem:[%s0 + $0x24c] sm:$0xff]
  %v104 = vld [vmem:[%s0 + $0x254] sm:$0xf]
  %v105 = vld [vmem:[%s0 + $0x258] sm:$0xff]
  %v106 = vld [vmem:[%s0 + $0x260] sm:$0xff]
  %v107 = vld [vmem:[%s0 + $0x268] sm:$0xf]
  %v108 = vld [vmem:[%s0 + $0x26c] sm:$0xff]
  %v109 = vld [vmem:[%s0 + $0x274] sm:$0xff]
  %v110 = vld [vmem:[%s0 + $0x27c] sm:$0xf]
  %v111 = vld [vmem:[%s0 + $0x280] sm:$0xff]
  %v112 = vld [vmem:[%s0 + $0x288] sm:$0xff]
  %v113 = vld [vmem:[%s0 + $0x290] sm:$0xf]
  %v114 = vld [vmem:[%s0 + $0x294] sm:$0xff]
  %v115 = vld [vmem:[%s0 + $0x29c] sm:$0xff]
  %v116 = vld [vmem:[%s0 + $0x2a4] sm:$0xf]
  %v117 = vld [vmem:[%s0 + $0x2a8] sm:$0xff]
  %v118 = vld [vmem:[%s0 + $0x2b0] sm:$0xff]
  %v119 = vld [vmem:[%s0 + $0x2b8] sm:$0xf]
  %v120 = vld [vmem:[%s0 + $0x2bc] sm:$0xff]
  %v121 = vld [vmem:[%s0 + $0x2c4] sm:$0xff]
  %v122 = vld [vmem:[%s0 + $0x2cc] sm:$0xf]
  %v123 = vld [vmem:[%s0 + $0x2d0] sm:$0xff]
  %v124 = vld [vmem:[%s0 + $0x2d8] sm:$0xff]
  %v125 = vld [vmem:[%s0 + $0x2e0] sm:$0xf]
  %v126 = vld [vmem:[%s0 + $0x2e4] sm:$0xff]
  %v127 = vld [vmem:[%s0 + $0x2ec] sm:$0xff]
  %v128 = vld [vmem:[%s0 + $0x2f4] sm:$0xf]
  %v129 = vld [vmem:[%s0 + $0x2f8] sm:$0xff]
  %v130 = vld [vmem:[%s0 + $0x300] sm:$0xff]
  %v131 = vld [vmem:[%s0 + $0x308] sm:$0xf]
  %v132 = vld [vmem:[%s0 + $0x30c] sm:$0xff]
  %v133 = vld [vmem:[%s0 + $0x314] sm:$0xff]
  %v134 = vld [vmem:[%s0 + $0x31c] sm:$0xf]
  %v135 = vld [vmem:[%s0 + $0x320] sm:$0xff]
  %v136 = vld [vmem:[%s0 + $0x328] sm:$0xff]
  %v137 = vld [vmem:[%s0 + $0x330] sm:$0xf]
  %v138 = vld [vmem:[%s0 + $0x334] sm:$0xff]
  %v139 = vld [vmem:[%s0 + $0x33c] sm:$0xff]
  %v140 = vld [vmem:[%s0 + $0x344] sm:$0xf]
  %v141 = vld [vmem:[%s0 + $0x348] sm:$0xff]
  %v142 = vld [vmem:[%s0 + $0x350] sm:$0xff]
  %v143 = vld [vmem:[%s0 + $0x358] sm:$0xf]
  %v144 = vld [vmem:[%s0 + $0x35c] sm:$0xff]
  %v145 = vld [vmem:[%s0 + $0x364] sm:$0xff]
  %v146 = vld [vmem:[%s0 + $0x36c] sm:$0xf]
  %v147 = vld [vmem:[%s0 + $0x370] sm:$0xff]
  %v148 = vld [vmem:[%s0 + $0x378] sm:$0xff]
  %v149 = vld [vmem:[%s0 + $0x380] sm:$0xf]
  %v150 = vld [vmem:[%s0 + $0x384] sm:$0xff]
  %v151 = vld [vmem:[%s0 + $0x38c] sm:$0xff]
  %v152 = vld [vmem:[%s0 + $0x394] sm:$0xf]
  %v153 = vld [vmem:[%s0 + $0x398] sm:$0xff]
  %v154 = vld [vmem:[%s0 + $0x3a0] sm:$0xff]
  %v155 = vld [vmem:[%s0 + $0x3a8] sm:$0xf]
  %v156 = vld [vmem:[%s0 + $0x3ac] sm:$0xff]
  %v157 = vld [vmem:[%s0 + $0x3b4] sm:$0xff]
  %v158 = vld [vmem:[%s0 + $0x3bc] sm:$0xf]
  %v159 = vld [vmem:[%s0 + $0x3c0] sm:$0xff]
  %v160 = vld [vmem:[%s0 + $0x3c8] sm:$0xff]
  %v161 = vld [vmem:[%s0 + $0x3d0] sm:$0xf]
  %v162 = vld [vmem:[%s0 + $0x3d4] sm:$0xff]
  %v163 = vld [vmem:[%s0 + $0x3dc] sm:$0xff]
  %v164 = vld [vmem:[%s0 + $0x3e4] sm:$0xf]
  %v165 = vld [vmem:[%s0 + $0x3e8] sm:$0xff]
  %v166 = vld [vmem:[%s0 + $0x3f0] sm:$0xff]
  %v167 = vld [vmem:[%s0 + $0x3f8] sm:$0xf]
  %v168 = vld [vmem:[%s0 + $0x3fc] sm:$0xff]
  %v169 = vld [vmem:[%s0 + $0x404] sm:$0xff]
  %v170 = vld [vmem:[%s0 + $0x40c] sm:$0xf]
  %v171 = vld [vmem:[%s0 + $0x410] sm:$0xff]
  %v172 = vld [vmem:[%s0 + $0x418] sm:$0xff]
  %v173 = vld [vmem:[%s0 + $0x420] sm:$0xf]
  %v174 = vld [vmem:[%s0 + $0x424] sm:$0xff]
  %v175 = vld [vmem:[%s0 + $0x42c] sm:$0xff]
  %v176 = vld [vmem:[%s0 + $0x434] sm:$0xf]
  %v177 = vld [vmem:[%s0 + $0x438] sm:$0xff]
  %v178 = vld [vmem:[%s0 + $0x440] sm:$0xff]
  %v179 = vld [vmem:[%s0 + $0x448] sm:$0xf]
  %v180 = vld [vmem:[%s0 + $0x44c] sm:$0xff]
  %v181 = vld [vmem:[%s0 + $0x454] sm:$0xff]
  %v182 = vld [vmem:[%s0 + $0x45c] sm:$0xf]
  %v183 = vld [vmem:[%s0 + $0x460] sm:$0xff]
  %v184 = vld [vmem:[%s0 + $0x468] sm:$0xff]
  %v185 = vld [vmem:[%s0 + $0x470] sm:$0xf]
  %v186 = vld [vmem:[%s0 + $0x474] sm:$0xff]
  %v187 = vld [vmem:[%s0 + $0x47c] sm:$0xff]
  %v188 = vld [vmem:[%s0 + $0x484] sm:$0xf]
  %v189 = vld [vmem:[%s0 + $0x488] sm:$0xff]
  %v190 = vld [vmem:[%s0 + $0x490] sm:$0xff]
  %v191 = vld [vmem:[%s0 + $0x498] sm:$0xf]
  %v192 = vld [vmem:[%s0 + $0x49c] sm:$0xff]
  %v193 = vld [vmem:[%s0 + $0x4a4] sm:$0xff]
  %v194 = vld [vmem:[%s0 + $0x4ac] sm:$0xf]
  %v195 = vld [vmem:[%s0 + $0x4b0] sm:$0xff]
  %v196 = vld [vmem:[%s0 + $0x4b8] sm:$0xff]
  %v197 = vld [vmem:[%s0 + $0x4c0] sm:$0xf]
  %v198 = vld [vmem:[%s0 + $0x4c4] sm:$0xff]
  %v199 = vld [vmem:[%s0 + $0x4cc] sm:$0xff]
  %v200 = vld [vmem:[%s0 + $0x4d4] sm:$0xf]
  %v201 = vld [vmem:[%s0 + $0x4d8] sm:$0xff]
  %v202 = vld [vmem:[%s0 + $0x4e0] sm:$0xff]
  %v203 = vld [vmem:[%s0 + $0x4e8] sm:$0xf]
  %v204 = vld [vmem:[%s0 + $0x4ec] sm:$0xff]
  %v205 = vld [vmem:[%s0 + $0x4f4] sm:$0xff]
  %v206 = vld [vmem:[%s0 + $0x4fc] sm:$0xf]
  %v207 = vld [vmem:[%s1] sm:$0xf]
  %v208 = vld [vmem:[%s1 + $0x4] sm:$0xf]
  %v209 = vld [vmem:[%s1 + $0x8] sm:$0xf]
  %v210 = vld [vmem:[%s1 + $0xc] sm:$0xf]
  %v211 = vld [vmem:[%s1 + $0x10] sm:$0xf]
  %v212 = vld [vmem:[%s1 + $0x14] sm:$0xf]
  %v213 = vld [vmem:[%s1 + $0x18] sm:$0xf]
  %v214 = vld [vmem:[%s1 + $0x1c] sm:$0xf]
  %v215 = vld [vmem:[%s1 + $0x20] sm:$0xf]
  %v216 = vld [vmem:[%s1 + $0x24] sm:$0xf]
  %v217 = vld [vmem:[%s1 + $0x28] sm:$0xf]
  %v218 = vld [vmem:[%s1 + $0x2c] sm:$0xf]
  %v219 = vld [vmem:[%s1 + $0x30] sm:$0xf]
  %v220 = vld [vmem:[%s1 + $0x34] sm:$0xf]
  %v221 = vld [vmem:[%s1 + $0x38] sm:$0xf]
  %v222 = vld [vmem:[%s1 + $0x3c] sm:$0xf]
  %v223 = vld [vmem:[%s1 + $0x40] sm:$0xf]
  %v224 = vld [vmem:[%s1 + $0x44] sm:$0xf]
  %v225 = vld [vmem:[%s1 + $0x48] sm:$0xf]
  %v226 = vld [vmem:[%s1 + $0x4c] sm:$0xf]
  %v227 = vld [vmem:[%s1 + $0x50] sm:$0xf]
  %v228 = vld [vmem:[%s1 + $0x54] sm:$0xf]
  %v229 = vld [vmem:[%s1 + $0x58] sm:$0xf]
  %v230 = vld [vmem:[%s1 + $0x5c] sm:$0xf]
  %v231 = vld [vmem:[%s1 + $0x60] sm:$0xf]
  %v232 = vld [vmem:[%s1 + $0x64] sm:$0xf]
  %v233 = vld [vmem:[%s1 + $0x68] sm:$0xf]
  %v234 = vld [vmem:[%s1 + $0x6c] sm:$0xf]
  %v235 = vld [vmem:[%s1 + $0x70] sm:$0xf]
  %v236 = vld [vmem:[%s1 + $0x74] sm:$0xf]
  %v237 = vld [vmem:[%s1 + $0x78] sm:$0xf]
  %v238 = vld [vmem:[%s1 + $0x7c] sm:$0xf]
  %v239 = vld [vmem:[%s1 + $0x80] sm:$0xf]
  %v240 = vld [vmem:[%s1 + $0x84] sm:$0xf]
  %v241 = vld [vmem:[%s1 + $0x88] sm:$0xf]
  %v242 = vld [vmem:[%s1 + $0x8c] sm:$0xf]
  %v243 = vld [vmem:[%s1 + $0x90] sm:$0xf]
  %v244 = vld [vmem:[%s1 + $0x94] sm:$0xf]
  %v245 = vld [vmem:[%s1 + $0x98] sm:$0xf]
  %v246 = vld [vmem:[%s1 + $0x9c] sm:$0xf]
  %v247 = vld [vmem:[%s1 + $0xa0] sm:$0xf]
  %v248 = vld [vmem:[%s1 + $0xa4] sm:$0xf]
  %v249 = vld [vmem:[%s1 + $0xa8] sm:$0xf]
  %v250 = vld [vmem:[%s1 + $0xac] sm:$0xf]
  %v251 = vld [vmem:[%s1 + $0xb0] sm:$0xf]
  %v252 = vld [vmem:[%s1 + $0xb4] sm:$0xf]
  %v253 = vld [vmem:[%s1 + $0xb8] sm:$0xf]
  %v254 = vld [vmem:[%s1 + $0xbc] sm:$0xf]
  %v255 = vld [vmem:[%s1 + $0xc0] sm:$0xf]
  %v256 = vld [vmem:[%s1 + $0xc4] sm:$0xf]
  %v257 = vld [vmem:[%s1 + $0xc8] sm:$0xf]
  %v258 = vld [vmem:[%s1 + $0xcc] sm:$0xf]
  %v259 = vld [vmem:[%s1 + $0xd0] sm:$0xf]
  %v260 = vld [vmem:[%s1 + $0xd4] sm:$0xf]
  %v261 = vld [vmem:[%s1 + $0xd8] sm:$0xf]
  %v262 = vld [vmem:[%s1 + $0xdc] sm:$0xf]
  %v263 = vld [vmem:[%s1 + $0xe0] sm:$0xf]
  %v264 = vld [vmem:[%s1 + $0xe4] sm:$0xf]
  %v265 = vld [vmem:[%s1 + $0xe8] sm:$0xf]
  %v266 = vld [vmem:[%s1 + $0xec] sm:$0xf]
  %v267 = vld [vmem:[%s1 + $0xf0] sm:$0xf]
  %v268 = vld [vmem:[%s1 + $0xf4] sm:$0xf]
  %v269 = vld [vmem:[%s1 + $0xf8] sm:$0xf]
  %v270 = vld [vmem:[%s1 + $0xfc] sm:$0xf]
  %v271 = vld [vmem:[%s1 + $0x100] sm:$0xf]
  %v272 = vld [vmem:[%s1 + $0x104] sm:$0xf]
  %v273 = vld [vmem:[%s1 + $0x108] sm:$0xf]
  %v274 = vld [vmem:[%s1 + $0x10c] sm:$0xf]
  %v275 = vld [vmem:[%s1 + $0x110] sm:$0xf]
  %v276 = vld [vmem:[%s1 + $0x114] sm:$0xf]
  %v277 = vld [vmem:[%s1 + $0x118] sm:$0xf]
  %v278 = vld [vmem:[%s1 + $0x11c] sm:$0xf]
  %v279 = vld [vmem:[%s2] sm:$0x1]
  %v281 = vlaneseq
  %v282 = vshrl.u32 %v281, 7
  %v283 = vsub.s32 0, %v282
  %v284 = vrot.slane %v279, %v283
  %v478 = vunpack.c.l.b16 %v15
  %v479 = vunpack.c.h.b16 %v15
  %v480 = vunpack.c.l.b16 %v16
  %v481 = vunpack.c.h.b16 %v16
  %v482 = vunpack.c.l.b16 %v17
  %v483 = vunpack.c.l.b16 %v18
  %v484 = vunpack.c.h.b16 %v18
  %v485 = vunpack.c.l.b16 %v19
  %v486 = vunpack.c.h.b16 %v19
  %v487 = vunpack.c.l.b16 %v20
  %v488 = vunpack.c.l.b16 %v21
  %v489 = vunpack.c.h.b16 %v21
  %v490 = vunpack.c.l.b16 %v22
  %v491 = vunpack.c.h.b16 %v22
  %v492 = vunpack.c.l.b16 %v23
  %v493 = vunpack.c.l.b16 %v24
  %v494 = vunpack.c.h.b16 %v24
  %v495 = vunpack.c.l.b16 %v25
  %v496 = vunpack.c.h.b16 %v25
  %v497 = vunpack.c.l.b16 %v26
  %v498 = vunpack.c.l.b16 %v27
  %v499 = vunpack.c.h.b16 %v27
  %v500 = vunpack.c.l.b16 %v28
  %v501 = vunpack.c.h.b16 %v28
  %v502 = vunpack.c.l.b16 %v29
  %v503 = vunpack.c.l.b16 %v30
  %v504 = vunpack.c.h.b16 %v30
  %v505 = vunpack.c.l.b16 %v31
  %v506 = vunpack.c.h.b16 %v31
  %v507 = vunpack.c.l.b16 %v32
  %v508 = vunpack.c.l.b16 %v33
  %v509 = vunpack.c.h.b16 %v33
  %v510 = vunpack.c.l.b16 %v34
  %v511 = vunpack.c.h.b16 %v34
  %v512 = vunpack.c.l.b16 %v35
  %v513 = vunpack.c.l.b16 %v36
  %v514 = vunpack.c.h.b16 %v36
  %v515 = vunpack.c.l.b16 %v37
  %v516 = vunpack.c.h.b16 %v37
  %v517 = vunpack.c.l.b16 %v38
  %v518 = vunpack.c.l.b16 %v39
  %v519 = vunpack.c.h.b16 %v39
  %v520 = vunpack.c.l.b16 %v40
  %v521 = vunpack.c.h.b16 %v40
  %v522 = vunpack.c.l.b16 %v41
  %v523 = vunpack.c.l.b16 %v42
  %v524 = vunpack.c.h.b16 %v42
  %v525 = vunpack.c.l.b16 %v43
  %v526 = vunpack.c.h.b16 %v43
  %v527 = vunpack.c.l.b16 %v44
  %v528 = vunpack.c.l.b16 %v45
  %v529 = vunpack.c.h.b16 %v45
  %v530 = vunpack.c.l.b16 %v46
  %v531 = vunpack.c.h.b16 %v46
  %v532 = vunpack.c.l.b16 %v47
  %v533 = vunpack.c.l.b16 %v48
  %v534 = vunpack.c.h.b16 %v48
  %v535 = vunpack.c.l.b16 %v49
  %v536 = vunpack.c.h.b16 %v49
  %v537 = vunpack.c.l.b16 %v50
  %v538 = vunpack.c.l.b16 %v51
  %v539 = vunpack.c.h.b16 %v51
  %v540 = vunpack.c.l.b16 %v52
  %v541 = vunpack.c.h.b16 %v52
  %v542 = vunpack.c.l.b16 %v53
  %v543 = vunpack.c.l.b16 %v54
  %v544 = vunpack.c.h.b16 %v54
  %v545 = vunpack.c.l.b16 %v55
  %v546 = vunpack.c.h.b16 %v55
  %v547 = vunpack.c.l.b16 %v56
  %v548 = vunpack.c.l.b16 %v57
  %v549 = vunpack.c.h.b16 %v57
  %v550 = vunpack.c.l.b16 %v58
  %v551 = vunpack.c.h.b16 %v58
  %v552 = vunpack.c.l.b16 %v59
  %v553 = vunpack.c.l.b16 %v60
  %v554 = vunpack.c.h.b16 %v60
  %v555 = vunpack.c.l.b16 %v61
  %v556 = vunpack.c.h.b16 %v61
  %v557 = vunpack.c.l.b16 %v62
  %v558 = vunpack.c.l.b16 %v63
  %v559 = vunpack.c.h.b16 %v63
  %v560 = vunpack.c.l.b16 %v64
  %v561 = vunpack.c.h.b16 %v64
  %v562 = vunpack.c.l.b16 %v65
  %v563 = vunpack.c.l.b16 %v66
  %v564 = vunpack.c.h.b16 %v66
  %v565 = vunpack.c.l.b16 %v67
  %v566 = vunpack.c.h.b16 %v67
  %v567 = vunpack.c.l.b16 %v68
  %v568 = vunpack.c.l.b16 %v69
  %v569 = vunpack.c.h.b16 %v69
  %v570 = vunpack.c.l.b16 %v70
  %v571 = vunpack.c.h.b16 %v70
  %v572 = vunpack.c.l.b16 %v71
  %v573 = vunpack.c.l.b16 %v72
  %v574 = vunpack.c.h.b16 %v72
  %v575 = vunpack.c.l.b16 %v73
  %v576 = vunpack.c.h.b16 %v73
  %v577 = vunpack.c.l.b16 %v74
  %v578 = vunpack.c.l.b16 %v75
  %v579 = vunpack.c.h.b16 %v75
  %v580 = vunpack.c.l.b16 %v76
  %v581 = vunpack.c.h.b16 %v76
  %v582 = vunpack.c.l.b16 %v77
  %v583 = vunpack.c.l.b16 %v78
  %v584 = vunpack.c.h.b16 %v78
  %v585 = vunpack.c.l.b16 %v79
  %v586 = vunpack.c.h.b16 %v79
  %v587 = vunpack.c.l.b16 %v80
  %v588 = vunpack.c.l.b16 %v81
  %v589 = vunpack.c.h.b16 %v81
  %v590 = vunpack.c.l.b16 %v82
  %v591 = vunpack.c.h.b16 %v82
  %v592 = vunpack.c.l.b16 %v83
  %v593 = vunpack.c.l.b16 %v84
  %v594 = vunpack.c.h.b16 %v84
  %v595 = vunpack.c.l.b16 %v85
  %v596 = vunpack.c.h.b16 %v85
  %v597 = vunpack.c.l.b16 %v86
  %v598 = vunpack.c.l.b16 %v87
  %v599 = vunpack.c.h.b16 %v87
  %v600 = vunpack.c.l.b16 %v88
  %v601 = vunpack.c.h.b16 %v88
  %v602 = vunpack.c.l.b16 %v89
  %v603 = vunpack.c.l.b16 %v90
  %v604 = vunpack.c.h.b16 %v90
  %v605 = vunpack.c.l.b16 %v91
  %v606 = vunpack.c.h.b16 %v91
  %v607 = vunpack.c.l.b16 %v92
  %v608 = vunpack.c.l.b16 %v93
  %v609 = vunpack.c.h.b16 %v93
  %v610 = vunpack.c.l.b16 %v94
  %v611 = vunpack.c.h.b16 %v94
  %v612 = vunpack.c.l.b16 %v95
  %v613 = vunpack.c.l.b16 %v96
  %v614 = vunpack.c.h.b16 %v96
  %v615 = vunpack.c.l.b16 %v97
  %v616 = vunpack.c.h.b16 %v97
  %v617 = vunpack.c.l.b16 %v98
  %v618 = vunpack.c.l.b16 %v99
  %v619 = vunpack.c.h.b16 %v99
  %v620 = vunpack.c.l.b16 %v100
  %v621 = vunpack.c.h.b16 %v100
  %v622 = vunpack.c.l.b16 %v101
  %v623 = vunpack.c.l.b16 %v102
  %v624 = vunpack.c.h.b16 %v102
  %v625 = vunpack.c.l.b16 %v103
  %v626 = vunpack.c.h.b16 %v103
  %v627 = vunpack.c.l.b16 %v104
  %v628 = vunpack.c.l.b16 %v105
  %v629 = vunpack.c.h.b16 %v105
  %v630 = vunpack.c.l.b16 %v106
  %v631 = vunpack.c.h.b16 %v106
  %v632 = vunpack.c.l.b16 %v107
  %v633 = vunpack.c.l.b16 %v108
  %v634 = vunpack.c.h.b16 %v108
  %v635 = vunpack.c.l.b16 %v109
  %v636 = vunpack.c.h.b16 %v109
  %v637 = vunpack.c.l.b16 %v110
  %v638 = vunpack.c.l.b16 %v111
  %v639 = vunpack.c.h.b16 %v111
  %v640 = vunpack.c.l.b16 %v112
  %v641 = vunpack.c.h.b16 %v112
  %v642 = vunpack.c.l.b16 %v113
  %v643 = vunpack.c.l.b16 %v114
  %v644 = vunpack.c.h.b16 %v114
  %v645 = vunpack.c.l.b16 %v115
  %v646 = vunpack.c.h.b16 %v115
  %v647 = vunpack.c.l.b16 %v116
  %v648 = vunpack.c.l.b16 %v117
  %v649 = vunpack.c.h.b16 %v117
  %v650 = vunpack.c.l.b16 %v118
  %v651 = vunpack.c.h.b16 %v118
  %v652 = vunpack.c.l.b16 %v119
  %v653 = vunpack.c.l.b16 %v120
  %v654 = vunpack.c.h.b16 %v120
  %v655 = vunpack.c.l.b16 %v121
  %v656 = vunpack.c.h.b16 %v121
  %v657 = vunpack.c.l.b16 %v122
  %v658 = vunpack.c.l.b16 %v123
  %v659 = vunpack.c.h.b16 %v123
  %v660 = vunpack.c.l.b16 %v124
  %v661 = vunpack.c.h.b16 %v124
  %v662 = vunpack.c.l.b16 %v125
  %v663 = vunpack.c.l.b16 %v126
  %v664 = vunpack.c.h.b16 %v126
  %v665 = vunpack.c.l.b16 %v127
  %v666 = vunpack.c.h.b16 %v127
  %v667 = vunpack.c.l.b16 %v128
  %v668 = vunpack.c.l.b16 %v129
  %v669 = vunpack.c.h.b16 %v129
  %v670 = vunpack.c.l.b16 %v130
  %v671 = vunpack.c.h.b16 %v130
  %v672 = vunpack.c.l.b16 %v131
  %v673 = vunpack.c.l.b16 %v132
  %v674 = vunpack.c.h.b16 %v132
  %v675 = vunpack.c.l.b16 %v133
  %v676 = vunpack.c.h.b16 %v133
  %v677 = vunpack.c.l.b16 %v134
  %v678 = vunpack.c.l.b16 %v135
  %v679 = vunpack.c.h.b16 %v135
  %v680 = vunpack.c.l.b16 %v136
  %v681 = vunpack.c.h.b16 %v136
  %v682 = vunpack.c.l.b16 %v137
  %v683 = vunpack.c.l.b16 %v138
  %v684 = vunpack.c.h.b16 %v138
  %v685 = vunpack.c.l.b16 %v139
  %v686 = vunpack.c.h.b16 %v139
  %v687 = vunpack.c.l.b16 %v140
  %v688 = vunpack.c.l.b16 %v141
  %v689 = vunpack.c.h.b16 %v141
  %v690 = vunpack.c.l.b16 %v142
  %v691 = vunpack.c.h.b16 %v142
  %v692 = vunpack.c.l.b16 %v143
  %v693 = vunpack.c.l.b16 %v144
  %v694 = vunpack.c.h.b16 %v144
  %v695 = vunpack.c.l.b16 %v145
  %v696 = vunpack.c.h.b16 %v145
  %v697 = vunpack.c.l.b16 %v146
  %v698 = vunpack.c.l.b16 %v147
  %v699 = vunpack.c.h.b16 %v147
  %v700 = vunpack.c.l.b16 %v148
  %v701 = vunpack.c.h.b16 %v148
  %v702 = vunpack.c.l.b16 %v149
  %v703 = vunpack.c.l.b16 %v150
  %v704 = vunpack.c.h.b16 %v150
  %v705 = vunpack.c.l.b16 %v151
  %v706 = vunpack.c.h.b16 %v151
  %v707 = vunpack.c.l.b16 %v152
  %v708 = vunpack.c.l.b16 %v153
  %v709 = vunpack.c.h.b16 %v153
  %v710 = vunpack.c.l.b16 %v154
  %v711 = vunpack.c.h.b16 %v154
  %v712 = vunpack.c.l.b16 %v155
  %v713 = vunpack.c.l.b16 %v156
  %v714 = vunpack.c.h.b16 %v156
  %v715 = vunpack.c.l.b16 %v157
  %v716 = vunpack.c.h.b16 %v157
  %v717 = vunpack.c.l.b16 %v158
  %v718 = vunpack.c.l.b16 %v159
  %v719 = vunpack.c.h.b16 %v159
  %v720 = vunpack.c.l.b16 %v160
  %v721 = vunpack.c.h.b16 %v160
  %v722 = vunpack.c.l.b16 %v161
  %v723 = vunpack.c.l.b16 %v162
  %v724 = vunpack.c.h.b16 %v162
  %v725 = vunpack.c.l.b16 %v163
  %v726 = vunpack.c.h.b16 %v163
  %v727 = vunpack.c.l.b16 %v164
  %v728 = vunpack.c.l.b16 %v165
  %v729 = vunpack.c.h.b16 %v165
  %v730 = vunpack.c.l.b16 %v166
  %v731 = vunpack.c.h.b16 %v166
  %v732 = vunpack.c.l.b16 %v167
  %v733 = vunpack.c.l.b16 %v168
  %v734 = vunpack.c.h.b16 %v168
  %v735 = vunpack.c.l.b16 %v169
  %v736 = vunpack.c.h.b16 %v169
  %v737 = vunpack.c.l.b16 %v170
  %v738 = vunpack.c.l.b16 %v171
  %v739 = vunpack.c.h.b16 %v171
  %v740 = vunpack.c.l.b16 %v172
  %v741 = vunpack.c.h.b16 %v172
  %v742 = vunpack.c.l.b16 %v173
  %v743 = vunpack.c.l.b16 %v174
  %v744 = vunpack.c.h.b16 %v174
  %v745 = vunpack.c.l.b16 %v175
  %v746 = vunpack.c.h.b16 %v175
  %v747 = vunpack.c.l.b16 %v176
  %v748 = vunpack.c.l.b16 %v177
  %v749 = vunpack.c.h.b16 %v177
  %v750 = vunpack.c.l.b16 %v178
  %v751 = vunpack.c.h.b16 %v178
  %v752 = vunpack.c.l.b16 %v179
  %v753 = vunpack.c.l.b16 %v180
  %v754 = vunpack.c.h.b16 %v180
  %v755 = vunpack.c.l.b16 %v181
  %v756 = vunpack.c.h.b16 %v181
  %v757 = vunpack.c.l.b16 %v182
  %v758 = vunpack.c.l.b16 %v183
  %v759 = vunpack.c.h.b16 %v183
  %v760 = vunpack.c.l.b16 %v184
  %v761 = vunpack.c.h.b16 %v184
  %v762 = vunpack.c.l.b16 %v185
  %v763 = vunpack.c.l.b16 %v186
  %v764 = vunpack.c.h.b16 %v186
  %v765 = vunpack.c.l.b16 %v187
  %v766 = vunpack.c.h.b16 %v187
  %v767 = vunpack.c.l.b16 %v188
  %v768 = vunpack.c.l.b16 %v189
  %v769 = vunpack.c.h.b16 %v189
  %v770 = vunpack.c.l.b16 %v190
  %v771 = vunpack.c.h.b16 %v190
  %v772 = vunpack.c.l.b16 %v191
  %v773 = vunpack.c.l.b16 %v192
  %v774 = vunpack.c.h.b16 %v192
  %v775 = vunpack.c.l.b16 %v193
  %v776 = vunpack.c.h.b16 %v193
  %v777 = vunpack.c.l.b16 %v194
  %v778 = vunpack.c.l.b16 %v195
  %v779 = vunpack.c.h.b16 %v195
  %v780 = vunpack.c.l.b16 %v196
  %v781 = vunpack.c.h.b16 %v196
  %v782 = vunpack.c.l.b16 %v197
  %v783 = vunpack.c.l.b16 %v198
  %v784 = vunpack.c.h.b16 %v198
  %v785 = vunpack.c.l.b16 %v199
  %v786 = vunpack.c.h.b16 %v199
  %v787 = vunpack.c.l.b16 %v200
  %v788 = vunpack.c.l.b16 %v201
  %v789 = vunpack.c.h.b16 %v201
  %v790 = vunpack.c.l.b16 %v202
  %v791 = vunpack.c.h.b16 %v202
  %v792 = vunpack.c.l.b16 %v203
  %v793 = vunpack.c.l.b16 %v204
  %v794 = vunpack.c.h.b16 %v204
  %v795 = vunpack.c.l.b16 %v205
  %v796 = vunpack.c.h.b16 %v205
  %v797 = vunpack.c.l.b16 %v206
  %v798 = vpack.c.b16 %v483, %v478
  %v799 = vpack.c.b16 %v484, %v479
  %v800 = vpack.c.b16 %v485, %v480
  %v801 = vpack.c.b16 %v486, %v481
  %v802 = vpack.c.b16 %v487, %v482
  %v803 = vpack.c.b16 %v493, %v488
  %v804 = vpack.c.b16 %v494, %v489
  %v805 = vpack.c.b16 %v495, %v490
  %v806 = vpack.c.b16 %v496, %v491
  %v807 = vpack.c.b16 %v497, %v492
  %v808 = vpack.c.b16 %v503, %v498
  %v809 = vpack.c.b16 %v504, %v499
  %v810 = vpack.c.b16 %v505, %v500
  %v811 = vpack.c.b16 %v506, %v501
  %v812 = vpack.c.b16 %v507, %v502
  %v813 = vpack.c.b16 %v513, %v508
  %v814 = vpack.c.b16 %v514, %v509
  %v815 = vpack.c.b16 %v515, %v510
  %v816 = vpack.c.b16 %v516, %v511
  %v817 = vpack.c.b16 %v517, %v512
  %v818 = vpack.c.b16 %v523, %v518
  %v819 = vpack.c.b16 %v524, %v519
  %v820 = vpack.c.b16 %v525, %v520
  %v821 = vpack.c.b16 %v526, %v521
  %v822 = vpack.c.b16 %v527, %v522
  %v823 = vpack.c.b16 %v533, %v528
  %v824 = vpack.c.b16 %v534, %v529
  %v825 = vpack.c.b16 %v535, %v530
  %v826 = vpack.c.b16 %v536, %v531
  %v827 = vpack.c.b16 %v537, %v532
  %v828 = vpack.c.b16 %v543, %v538
  %v829 = vpack.c.b16 %v544, %v539
  %v830 = vpack.c.b16 %v545, %v540
  %v831 = vpack.c.b16 %v546, %v541
  %v832 = vpack.c.b16 %v547, %v542
  %v833 = vpack.c.b16 %v553, %v548
  %v834 = vpack.c.b16 %v554, %v549
  %v835 = vpack.c.b16 %v555, %v550
  %v836 = vpack.c.b16 %v556, %v551
  %v837 = vpack.c.b16 %v557, %v552
  %v838 = vpack.c.b16 %v563, %v558
  %v839 = vpack.c.b16 %v564, %v559
  %v840 = vpack.c.b16 %v565, %v560
  %v841 = vpack.c.b16 %v566, %v561
  %v842 = vpack.c.b16 %v567, %v562
  %v843 = vpack.c.b16 %v573, %v568
  %v844 = vpack.c.b16 %v574, %v569
  %v845 = vpack.c.b16 %v575, %v570
  %v846 = vpack.c.b16 %v576, %v571
  %v847 = vpack.c.b16 %v577, %v572
  %v848 = vpack.c.b16 %v583, %v578
  %v849 = vpack.c.b16 %v584, %v579
  %v850 = vpack.c.b16 %v585, %v580
  %v851 = vpack.c.b16 %v586, %v581
  %v852 = vpack.c.b16 %v587, %v582
  %v853 = vpack.c.b16 %v593, %v588
  %v854 = vpack.c.b16 %v594, %v589
  %v855 = vpack.c.b16 %v595, %v590
  %v856 = vpack.c.b16 %v596, %v591
  %v857 = vpack.c.b16 %v597, %v592
  %v858 = vpack.c.b16 %v603, %v598
  %v859 = vpack.c.b16 %v604, %v599
  %v860 = vpack.c.b16 %v605, %v600
  %v861 = vpack.c.b16 %v606, %v601
  %v862 = vpack.c.b16 %v607, %v602
  %v863 = vpack.c.b16 %v613, %v608
  %v864 = vpack.c.b16 %v614, %v609
  %v865 = vpack.c.b16 %v615, %v610
  %v866 = vpack.c.b16 %v616, %v611
  %v867 = vpack.c.b16 %v617, %v612
  %v868 = vpack.c.b16 %v623, %v618
  %v869 = vpack.c.b16 %v624, %v619
  %v870 = vpack.c.b16 %v625, %v620
  %v871 = vpack.c.b16 %v626, %v621
  %v872 = vpack.c.b16 %v627, %v622
  %v873 = vpack.c.b16 %v633, %v628
  %v874 = vpack.c.b16 %v634, %v629
  %v875 = vpack.c.b16 %v635, %v630
  %v876 = vpack.c.b16 %v636, %v631
  %v877 = vpack.c.b16 %v637, %v632
  %v878 = vpack.c.b16 %v643, %v638
  %v879 = vpack.c.b16 %v644, %v639
  %v880 = vpack.c.b16 %v645, %v640
  %v881 = vpack.c.b16 %v646, %v641
  %v882 = vpack.c.b16 %v647, %v642
  %v883 = vpack.c.b16 %v653, %v648
  %v884 = vpack.c.b16 %v654, %v649
  %v885 = vpack.c.b16 %v655, %v650
  %v886 = vpack.c.b16 %v656, %v651
  %v887 = vpack.c.b16 %v657, %v652
  %v888 = vpack.c.b16 %v663, %v658
  %v889 = vpack.c.b16 %v664, %v659
  %v890 = vpack.c.b16 %v665, %v660
  %v891 = vpack.c.b16 %v666, %v661
  %v892 = vpack.c.b16 %v667, %v662
  %v893 = vpack.c.b16 %v673, %v668
  %v894 = vpack.c.b16 %v674, %v669
  %v895 = vpack.c.b16 %v675, %v670
  %v896 = vpack.c.b16 %v676, %v671
  %v897 = vpack.c.b16 %v677, %v672
  %v898 = vpack.c.b16 %v683, %v678
  %v899 = vpack.c.b16 %v684, %v679
  %v900 = vpack.c.b16 %v685, %v680
  %v901 = vpack.c.b16 %v686, %v681
  %v902 = vpack.c.b16 %v687, %v682
  %v903 = vpack.c.b16 %v693, %v688
  %v904 = vpack.c.b16 %v694, %v689
  %v905 = vpack.c.b16 %v695, %v690
  %v906 = vpack.c.b16 %v696, %v691
  %v907 = vpack.c.b16 %v697, %v692
  %v908 = vpack.c.b16 %v703, %v698
  %v909 = vpack.c.b16 %v704, %v699
  %v910 = vpack.c.b16 %v705, %v700
  %v911 = vpack.c.b16 %v706, %v701
  %v912 = vpack.c.b16 %v707, %v702
  %v913 = vpack.c.b16 %v713, %v708
  %v914 = vpack.c.b16 %v714, %v709
  %v915 = vpack.c.b16 %v715, %v710
  %v916 = vpack.c.b16 %v716, %v711
  %v917 = vpack.c.b16 %v717, %v712
  %v918 = vpack.c.b16 %v723, %v718
  %v919 = vpack.c.b16 %v724, %v719
  %v920 = vpack.c.b16 %v725, %v720
  %v921 = vpack.c.b16 %v726, %v721
  %v922 = vpack.c.b16 %v727, %v722
  %v923 = vpack.c.b16 %v733, %v728
  %v924 = vpack.c.b16 %v734, %v729
  %v925 = vpack.c.b16 %v735, %v730
  %v926 = vpack.c.b16 %v736, %v731
  %v927 = vpack.c.b16 %v737, %v732
  %v928 = vpack.c.b16 %v743, %v738
  %v929 = vpack.c.b16 %v744, %v739
  %v930 = vpack.c.b16 %v745, %v740
  %v931 = vpack.c.b16 %v746, %v741
  %v932 = vpack.c.b16 %v747, %v742
  %v933 = vpack.c.b16 %v753, %v748
  %v934 = vpack.c.b16 %v754, %v749
  %v935 = vpack.c.b16 %v755, %v750
  %v936 = vpack.c.b16 %v756, %v751
  %v937 = vpack.c.b16 %v757, %v752
  %v938 = vpack.c.b16 %v763, %v758
  %v939 = vpack.c.b16 %v764, %v759
  %v940 = vpack.c.b16 %v765, %v760
  %v941 = vpack.c.b16 %v766, %v761
  %v942 = vpack.c.b16 %v767, %v762
  %v943 = vpack.c.b16 %v773, %v768
  %v944 = vpack.c.b16 %v774, %v769
  %v945 = vpack.c.b16 %v775, %v770
  %v946 = vpack.c.b16 %v776, %v771
  %v947 = vpack.c.b16 %v777, %v772
  %v948 = vpack.c.b16 %v783, %v778
  %v949 = vpack.c.b16 %v784, %v779
  %v950 = vpack.c.b16 %v785, %v780
  %v951 = vpack.c.b16 %v786, %v781
  %v952 = vpack.c.b16 %v787, %v782
  %v953 = vpack.c.b16 %v793, %v788
  %v954 = vpack.c.b16 %v794, %v789
  %v955 = vpack.c.b16 %v795, %v790
  %v956 = vpack.c.b16 %v796, %v791
  %v957 = vpack.c.b16 %v797, %v792
  %v1158 = vunpack.c.l.b16 %v207
  %v1159 = vunpack.c.l.b16 %v208
  %v1160 = vunpack.c.l.b16 %v209
  %v1161 = vunpack.c.l.b16 %v210
  %v1162 = vunpack.c.l.b16 %v211
  %v1163 = vunpack.c.l.b16 %v212
  %v1164 = vunpack.c.l.b16 %v213
  %v1165 = vunpack.c.l.b16 %v214
  %v1166 = vunpack.c.l.b16 %v215
  %v1167 = vunpack.c.l.b16 %v216
  %v1168 = vunpack.c.l.b16 %v217
  %v1169 = vunpack.c.l.b16 %v218
  %v1170 = vunpack.c.l.b16 %v219
  %v1171 = vunpack.c.l.b16 %v220
  %v1172 = vunpack.c.l.b16 %v221
  %v1173 = vunpack.c.l.b16 %v222
  %v1174 = vunpack.c.l.b16 %v223
  %v1175 = vunpack.c.l.b16 %v224
  %v1176 = vunpack.c.l.b16 %v225
  %v1177 = vunpack.c.l.b16 %v226
  %v1178 = vunpack.c.l.b16 %v227
  %v1179 = vunpack.c.l.b16 %v228
  %v1180 = vunpack.c.l.b16 %v229
  %v1181 = vunpack.c.l.b16 %v230
  %v1182 = vunpack.c.l.b16 %v231
  %v1183 = vunpack.c.l.b16 %v232
  %v1184 = vunpack.c.l.b16 %v233
  %v1185 = vunpack.c.l.b16 %v234
  %v1186 = vunpack.c.l.b16 %v235
  %v1187 = vunpack.c.l.b16 %v236
  %v1188 = vunpack.c.l.b16 %v237
  %v1189 = vunpack.c.l.b16 %v238
  %v1190 = vunpack.c.l.b16 %v239
  %v1191 = vunpack.c.l.b16 %v240
  %v1192 = vunpack.c.l.b16 %v241
  %v1193 = vunpack.c.l.b16 %v242
  %v1194 = vunpack.c.l.b16 %v243
  %v1195 = vunpack.c.l.b16 %v244
  %v1196 = vunpack.c.l.b16 %v245
  %v1197 = vunpack.c.l.b16 %v246
  %v1198 = vunpack.c.l.b16 %v247
  %v1199 = vunpack.c.l.b16 %v248
  %v1200 = vunpack.c.l.b16 %v249
  %v1201 = vunpack.c.l.b16 %v250
  %v1202 = vunpack.c.l.b16 %v251
  %v1203 = vunpack.c.l.b16 %v252
  %v1204 = vunpack.c.l.b16 %v253
  %v1205 = vunpack.c.l.b16 %v254
  %v1206 = vunpack.c.l.b16 %v255
  %v1207 = vunpack.c.l.b16 %v256
  %v1208 = vunpack.c.l.b16 %v257
  %v1209 = vunpack.c.l.b16 %v258
  %v1210 = vunpack.c.l.b16 %v259
  %v1211 = vunpack.c.l.b16 %v260
  %v1212 = vunpack.c.l.b16 %v261
  %v1213 = vunpack.c.l.b16 %v262
  %v1214 = vunpack.c.l.b16 %v263
  %v1215 = vunpack.c.l.b16 %v264
  %v1216 = vunpack.c.l.b16 %v265
  %v1217 = vunpack.c.l.b16 %v266
  %v1218 = vunpack.c.l.b16 %v267
  %v1219 = vunpack.c.l.b16 %v268
  %v1220 = vunpack.c.l.b16 %v269
  %v1221 = vunpack.c.l.b16 %v270
  %v1222 = vunpack.c.l.b16 %v271
  %v1223 = vunpack.c.l.b16 %v272
  %v1224 = vunpack.c.l.b16 %v273
  %v1225 = vunpack.c.l.b16 %v274
  %v1226 = vunpack.c.l.b16 %v275
  %v1227 = vunpack.c.l.b16 %v276
  %v1228 = vunpack.c.l.b16 %v277
  %v1229 = vunpack.c.l.b16 %v278
  %v1230 = vpack.c.b16 %v1159, %v1158
  %v1231 = vpack.c.b16 %v1161, %v1160
  %v1232 = vpack.c.b16 %v1163, %v1162
  %v1233 = vpack.c.b16 %v1165, %v1164
  %v1234 = vpack.c.b16 %v1167, %v1166
  %v1235 = vpack.c.b16 %v1169, %v1168
  %v1236 = vpack.c.b16 %v1171, %v1170
  %v1237 = vpack.c.b16 %v1173, %v1172
  %v1238 = vpack.c.b16 %v1175, %v1174
  %v1239 = vpack.c.b16 %v1177, %v1176
  %v1240 = vpack.c.b16 %v1179, %v1178
  %v1241 = vpack.c.b16 %v1181, %v1180
  %v1242 = vpack.c.b16 %v1183, %v1182
  %v1243 = vpack.c.b16 %v1185, %v1184
  %v1244 = vpack.c.b16 %v1187, %v1186
  %v1245 = vpack.c.b16 %v1189, %v1188
  %v1246 = vpack.c.b16 %v1191, %v1190
  %v1247 = vpack.c.b16 %v1193, %v1192
  %v1248 = vpack.c.b16 %v1195, %v1194
  %v1249 = vpack.c.b16 %v1197, %v1196
  %v1250 = vpack.c.b16 %v1199, %v1198
  %v1251 = vpack.c.b16 %v1201, %v1200
  %v1252 = vpack.c.b16 %v1203, %v1202
  %v1253 = vpack.c.b16 %v1205, %v1204
  %v1254 = vpack.c.b16 %v1207, %v1206
  %v1255 = vpack.c.b16 %v1209, %v1208
  %v1256 = vpack.c.b16 %v1211, %v1210
  %v1257 = vpack.c.b16 %v1213, %v1212
  %v1258 = vpack.c.b16 %v1215, %v1214
  %v1259 = vpack.c.b16 %v1217, %v1216
  %v1260 = vpack.c.b16 %v1219, %v1218
  %v1261 = vpack.c.b16 %v1221, %v1220
  %v1262 = vpack.c.b16 %v1223, %v1222
  %v1263 = vpack.c.b16 %v1225, %v1224
  %v1264 = vpack.c.b16 %v1227, %v1226
  %v1265 = vpack.c.b16 %v1229, %v1228
  %vm1302 = vcmask 523264
  %v1304 = vsel %vm1302, %v802, 0
  %v1307 = vsel %vm1302, %v807, 0
  %v1310 = vsel %vm1302, %v812, 0
  %v1313 = vsel %vm1302, %v817, 0
  %v1316 = vsel %vm1302, %v822, 0
  %v1319 = vsel %vm1302, %v827, 0
  %v1322 = vsel %vm1302, %v832, 0
  %v1325 = vsel %vm1302, %v837, 0
  %v1328 = vsel %vm1302, %v842, 0
  %v1331 = vsel %vm1302, %v847, 0
  %v1334 = vsel %vm1302, %v852, 0
  %v1337 = vsel %vm1302, %v857, 0
  %v1340 = vsel %vm1302, %v862, 0
  %v1343 = vsel %vm1302, %v867, 0
  %v1346 = vsel %vm1302, %v872, 0
  %v1349 = vsel %vm1302, %v877, 0
  %v1352 = vsel %vm1302, %v882, 0
  %v1355 = vsel %vm1302, %v887, 0
  %v1358 = vsel %vm1302, %v892, 0
  %v1361 = vsel %vm1302, %v897, 0
  %v1364 = vsel %vm1302, %v902, 0
  %v1367 = vsel %vm1302, %v907, 0
  %v1370 = vsel %vm1302, %v912, 0
  %v1373 = vsel %vm1302, %v917, 0
  %v1376 = vsel %vm1302, %v922, 0
  %v1379 = vsel %vm1302, %v927, 0
  %v1382 = vsel %vm1302, %v932, 0
  %v1385 = vsel %vm1302, %v937, 0
  %v1388 = vsel %vm1302, %v942, 0
  %v1391 = vsel %vm1302, %v947, 0
  %v1394 = vsel %vm1302, %v952, 0
  %v1397 = vsel %vm1302, %v957, 0
  %1399 = vmatprep.subr.bf16.mxu0 0
  %1400 = vmatpush1.bf16.msra.mxu0 %v1237
  %1401 = vmatprep.subr.bf16.mxu0 0
  %1402 = vmatpush1.bf16.msra.mxu0 %v1236
  %1403 = vmatprep.subr.bf16.mxu0 0
  %1404 = vmatpush1.bf16.msra.mxu0 %v1235
  %1405 = vmatprep.subr.bf16.mxu0 0
  %1406 = vmatpush1.bf16.msra.mxu0 %v1234
  %1407 = vmatprep.subr.bf16.mxu0 0
  %1408 = vmatpush1.bf16.msra.mxu0 %v1233
  %1409 = vmatprep.subr.bf16.mxu0 0
  %1410 = vmatpush1.bf16.msra.mxu0 %v1232
  %1411 = vmatprep.subr.bf16.mxu0 0
  %1412 = vmatpush1.bf16.msra.mxu0 %v1231
  %1413 = vmatprep.subr.bf16.mxu0 0
  %1414 = vmatpush1.bf16.msra.mxu0 %v1230
  %1415 = vmatprep.subr.bf16.mxu0 0
  %1416 = vmatpush2.bf16.msra.mxu0 %v1245
  %1417 = vmatprep.subr.bf16.mxu0 0
  %1418 = vmatpush2.bf16.msra.mxu0 %v1244
  %1419 = vmatprep.subr.bf16.mxu0 0
  %1420 = vmatpush2.bf16.msra.mxu0 %v1243
  %1421 = vmatprep.subr.bf16.mxu0 0
  %1422 = vmatpush2.bf16.msra.mxu0 %v1242
  %1423 = vmatprep.subr.bf16.mxu0 0
  %1424 = vmatpush2.bf16.msra.mxu0 %v1241
  %1425 = vmatprep.subr.bf16.mxu0 0
  %1426 = vmatpush2.bf16.msra.mxu0 %v1240
  %1427 = vmatprep.subr.bf16.mxu0 0
  %1428 = vmatpush2.bf16.msra.mxu0 %v1239
  %1429 = vmatprep.subr.bf16.mxu0 0
  %1430 = vmatpush2.bf16.msra.mxu0 %v1238
  %1431 = vmatprep.mubr.bf16.mxu0 %v799
  %1432 = vmatmul.mubr.bf16.gmra.mxu0 %v798
  %v1433 = vpop.f32.mrf.mxu0
  %v1434 = vadd.f32 %v284, %v1433
  %v1435 = vpop.f32.mrf.mxu0
  %v1436 = vpop.f32.mrf.mxu0
  %v1437 = vadd.f32 %v284, %v1436
  %v1438 = vpop.f32.mrf.mxu0
  %1439 = vmatprep.mubr.bf16.mxu0 %v804
  %1440 = vmatmul.mubr.bf16.gmra.mxu0 %v803
  %v1441 = vpop.f32.mrf.mxu0
  %v1442 = vadd.f32 %v284, %v1441
  %v1443 = vpop.f32.mrf.mxu0
  %v1444 = vpop.f32.mrf.mxu0
  %v1445 = vadd.f32 %v284, %v1444
  %v1446 = vpop.f32.mrf.mxu0
  %1447 = vmatprep.mubr.bf16.mxu0 %v809
  %1448 = vmatmul.mubr.bf16.gmra.mxu0 %v808
  %v1449 = vpop.f32.mrf.mxu0
  %v1450 = vadd.f32 %v284, %v1449
  %v1451 = vpop.f32.mrf.mxu0
  %v1452 = vpop.f32.mrf.mxu0
  %v1453 = vadd.f32 %v284, %v1452
  %v1454 = vpop.f32.mrf.mxu0
  %1455 = vmatprep.mubr.bf16.mxu0 %v814
  %1456 = vmatmul.mubr.bf16.gmra.mxu0 %v813
  %v1457 = vpop.f32.mrf.mxu0
  %v1458 = vadd.f32 %v284, %v1457
  %v1459 = vpop.f32.mrf.mxu0
  %v1460 = vpop.f32.mrf.mxu0
  %v1461 = vadd.f32 %v284, %v1460
  %v1462 = vpop.f32.mrf.mxu0
  %1463 = vmatprep.mubr.bf16.mxu0 %v819
  %1464 = vmatmul.mubr.bf16.gmra.mxu0 %v818
  %v1465 = vpop.f32.mrf.mxu0
  %v1466 = vadd.f32 %v284, %v1465
  %v1467 = vpop.f32.mrf.mxu0
  %v1468 = vpop.f32.mrf.mxu0
  %v1469 = vadd.f32 %v284, %v1468
  %v1470 = vpop.f32.mrf.mxu0
  %1471 = vmatprep.mubr.bf16.mxu0 %v824
  %1472 = vmatmul.mubr.bf16.gmra.mxu0 %v823
  %v1473 = vpop.f32.mrf.mxu0
  %v1474 = vadd.f32 %v284, %v1473
  %v1475 = vpop.f32.mrf.mxu0
  %v1476 = vpop.f32.mrf.mxu0
  %v1477 = vadd.f32 %v284, %v1476
  %v1478 = vpop.f32.mrf.mxu0
  %1479 = vmatprep.mubr.bf16.mxu0 %v829
  %1480 = vmatmul.mubr.bf16.gmra.mxu0 %v828
  %v1481 = vpop.f32.mrf.mxu0
  %v1482 = vadd.f32 %v284, %v1481
  %v1483 = vpop.f32.mrf.mxu0
  %v1484 = vpop.f32.mrf.mxu0
  %v1485 = vadd.f32 %v284, %v1484
  %v1486 = vpop.f32.mrf.mxu0
  %1487 = vmatprep.mubr.bf16.mxu0 %v834
  %1488 = vmatmul.mubr.bf16.gmra.mxu0 %v833
  %v1489 = vpop.f32.mrf.mxu0
  %v1490 = vadd.f32 %v284, %v1489
  %v1491 = vpop.f32.mrf.mxu0
  %v1492 = vpop.f32.mrf.mxu0
  %v1493 = vadd.f32 %v284, %v1492
  %v1494 = vpop.f32.mrf.mxu0
  %1495 = vmatprep.mubr.bf16.mxu0 %v839
  %1496 = vmatmul.mubr.bf16.gmra.mxu0 %v838
  %v1497 = vpop.f32.mrf.mxu0
  %v1498 = vadd.f32 %v284, %v1497
  %v1499 = vpop.f32.mrf.mxu0
  %v1500 = vpop.f32.mrf.mxu0
  %v1501 = vadd.f32 %v284, %v1500
  %v1502 = vpop.f32.mrf.mxu0
  %1503 = vmatprep.mubr.bf16.mxu0 %v844
  %1504 = vmatmul.mubr.bf16.gmra.mxu0 %v843
  %v1505 = vpop.f32.mrf.mxu0
  %v1506 = vadd.f32 %v284, %v1505
  %v1507 = vpop.f32.mrf.mxu0
  %v1508 = vpop.f32.mrf.mxu0
  %v1509 = vadd.f32 %v284, %v1508
  %v1510 = vpop.f32.mrf.mxu0
  %1511 = vmatprep.mubr.bf16.mxu0 %v849
  %1512 = vmatmul.mubr.bf16.gmra.mxu0 %v848
  %v1513 = vpop.f32.mrf.mxu0
  %v1514 = vadd.f32 %v284, %v1513
  %v1515 = vpop.f32.mrf.mxu0
  %v1516 = vpop.f32.mrf.mxu0
  %v1517 = vadd.f32 %v284, %v1516
  %v1518 = vpop.f32.mrf.mxu0
  %1519 = vmatprep.mubr.bf16.mxu0 %v854
  %1520 = vmatmul.mubr.bf16.gmra.mxu0 %v853
  %v1521 = vpop.f32.mrf.mxu0
  %v1522 = vadd.f32 %v284, %v1521
  %v1523 = vpop.f32.mrf.mxu0
  %v1524 = vpop.f32.mrf.mxu0
  %v1525 = vadd.f32 %v284, %v1524
  %v1526 = vpop.f32.mrf.mxu0
  %1527 = vmatprep.mubr.bf16.mxu0 %v859
  %1528 = vmatmul.mubr.bf16.gmra.mxu0 %v858
  %v1529 = vpop.f32.mrf.mxu0
  %v1530 = vadd.f32 %v284, %v1529
  %v1531 = vpop.f32.mrf.mxu0
  %v1532 = vpop.f32.mrf.mxu0
  %v1533 = vadd.f32 %v284, %v1532
  %v1534 = vpop.f32.mrf.mxu0
  %1535 = vmatprep.mubr.bf16.mxu0 %v864
  %1536 = vmatmul.mubr.bf16.gmra.mxu0 %v863
  %v1537 = vpop.f32.mrf.mxu0
  %v1538 = vadd.f32 %v284, %v1537
  %v1539 = vpop.f32.mrf.mxu0
  %v1540 = vpop.f32.mrf.mxu0
  %v1541 = vadd.f32 %v284, %v1540
  %v1542 = vpop.f32.mrf.mxu0
  %1543 = vmatprep.mubr.bf16.mxu0 %v869
  %1544 = vmatmul.mubr.bf16.gmra.mxu0 %v868
  %v1545 = vpop.f32.mrf.mxu0
  %v1546 = vadd.f32 %v284, %v1545
  %v1547 = vpop.f32.mrf.mxu0
  %v1548 = vpop.f32.mrf.mxu0
  %v1549 = vadd.f32 %v284, %v1548
  %v1550 = vpop.f32.mrf.mxu0
  %1551 = vmatprep.mubr.bf16.mxu0 %v874
  %1552 = vmatmul.mubr.bf16.gmra.mxu0 %v873
  %v1553 = vpop.f32.mrf.mxu0
  %v1554 = vadd.f32 %v284, %v1553
  %v1555 = vpop.f32.mrf.mxu0
  %v1556 = vpop.f32.mrf.mxu0
  %v1557 = vadd.f32 %v284, %v1556
  %v1558 = vpop.f32.mrf.mxu0
  %1559 = vmatprep.mubr.bf16.mxu0 %v879
  %1560 = vmatmul.mubr.bf16.gmra.mxu0 %v878
  %v1561 = vpop.f32.mrf.mxu0
  %v1562 = vadd.f32 %v284, %v1561
  %v1563 = vpop.f32.mrf.mxu0
  %v1564 = vpop.f32.mrf.mxu0
  %v1565 = vadd.f32 %v284, %v1564
  %v1566 = vpop.f32.mrf.mxu0
  %1567 = vmatprep.mubr.bf16.mxu0 %v884
  %1568 = vmatmul.mubr.bf16.gmra.mxu0 %v883
  %v1569 = vpop.f32.mrf.mxu0
  %v1570 = vadd.f32 %v284, %v1569
  %v1571 = vpop.f32.mrf.mxu0
  %v1572 = vpop.f32.mrf.mxu0
  %v1573 = vadd.f32 %v284, %v1572
  %v1574 = vpop.f32.mrf.mxu0
  %1575 = vmatprep.mubr.bf16.mxu0 %v889
  %1576 = vmatmul.mubr.bf16.gmra.mxu0 %v888
  %v1577 = vpop.f32.mrf.mxu0
  %v1578 = vadd.f32 %v284, %v1577
  %v1579 = vpop.f32.mrf.mxu0
  %v1580 = vpop.f32.mrf.mxu0
  %v1581 = vadd.f32 %v284, %v1580
  %v1582 = vpop.f32.mrf.mxu0
  %1583 = vmatprep.mubr.bf16.mxu0 %v894
  %1584 = vmatmul.mubr.bf16.gmra.mxu0 %v893
  %v1585 = vpop.f32.mrf.mxu0
  %v1586 = vadd.f32 %v284, %v1585
  %v1587 = vpop.f32.mrf.mxu0
  %v1588 = vpop.f32.mrf.mxu0
  %v1589 = vadd.f32 %v284, %v1588
  %v1590 = vpop.f32.mrf.mxu0
  %1591 = vmatprep.mubr.bf16.mxu0 %v899
  %1592 = vmatmul.mubr.bf16.gmra.mxu0 %v898
  %v1593 = vpop.f32.mrf.mxu0
  %v1594 = vadd.f32 %v284, %v1593
  %v1595 = vpop.f32.mrf.mxu0
  %v1596 = vpop.f32.mrf.mxu0
  %v1597 = vadd.f32 %v284, %v1596
  %v1598 = vpop.f32.mrf.mxu0
  %1599 = vmatprep.mubr.bf16.mxu0 %v904
  %1600 = vmatmul.mubr.bf16.gmra.mxu0 %v903
  %v1601 = vpop.f32.mrf.mxu0
  %v1602 = vadd.f32 %v284, %v1601
  %v1603 = vpop.f32.mrf.mxu0
  %v1604 = vpop.f32.mrf.mxu0
  %v1605 = vadd.f32 %v284, %v1604
  %v1606 = vpop.f32.mrf.mxu0
  %1607 = vmatprep.mubr.bf16.mxu0 %v909
  %1608 = vmatmul.mubr.bf16.gmra.mxu0 %v908
  %v1609 = vpop.f32.mrf.mxu0
  %v1610 = vadd.f32 %v284, %v1609
  %v1611 = vpop.f32.mrf.mxu0
  %v1612 = vpop.f32.mrf.mxu0
  %v1613 = vadd.f32 %v284, %v1612
  %v1614 = vpop.f32.mrf.mxu0
  %1615 = vmatprep.mubr.bf16.mxu0 %v914
  %1616 = vmatmul.mubr.bf16.gmra.mxu0 %v913
  %v1617 = vpop.f32.mrf.mxu0
  %v1618 = vadd.f32 %v284, %v1617
  %v1619 = vpop.f32.mrf.mxu0
  %v1620 = vpop.f32.mrf.mxu0
  %v1621 = vadd.f32 %v284, %v1620
  %v1622 = vpop.f32.mrf.mxu0
  %1623 = vmatprep.mubr.bf16.mxu0 %v919
  %1624 = vmatmul.mubr.bf16.gmra.mxu0 %v918
  %v1625 = vpop.f32.mrf.mxu0
  %v1626 = vadd.f32 %v284, %v1625
  %v1627 = vpop.f32.mrf.mxu0
  %v1628 = vpop.f32.mrf.mxu0
  %v1629 = vadd.f32 %v284, %v1628
  %v1630 = vpop.f32.mrf.mxu0
  %1631 = vmatprep.mubr.bf16.mxu0 %v924
  %1632 = vmatmul.mubr.bf16.gmra.mxu0 %v923
  %v1633 = vpop.f32.mrf.mxu0
  %v1634 = vadd.f32 %v284, %v1633
  %v1635 = vpop.f32.mrf.mxu0
  %v1636 = vpop.f32.mrf.mxu0
  %v1637 = vadd.f32 %v284, %v1636
  %v1638 = vpop.f32.mrf.mxu0
  %1639 = vmatprep.mubr.bf16.mxu0 %v929
  %1640 = vmatmul.mubr.bf16.gmra.mxu0 %v928
  %v1641 = vpop.f32.mrf.mxu0
  %v1642 = vadd.f32 %v284, %v1641
  %v1643 = vpop.f32.mrf.mxu0
  %v1644 = vpop.f32.mrf.mxu0
  %v1645 = vadd.f32 %v284, %v1644
  %v1646 = vpop.f32.mrf.mxu0
  %1647 = vmatprep.mubr.bf16.mxu0 %v934
  %1648 = vmatmul.mubr.bf16.gmra.mxu0 %v933
  %v1649 = vpop.f32.mrf.mxu0
  %v1650 = vadd.f32 %v284, %v1649
  %v1651 = vpop.f32.mrf.mxu0
  %v1652 = vpop.f32.mrf.mxu0
  %v1653 = vadd.f32 %v284, %v1652
  %v1654 = vpop.f32.mrf.mxu0
  %1655 = vmatprep.mubr.bf16.mxu0 %v939
  %1656 = vmatmul.mubr.bf16.gmra.mxu0 %v938
  %v1657 = vpop.f32.mrf.mxu0
  %v1658 = vadd.f32 %v284, %v1657
  %v1659 = vpop.f32.mrf.mxu0
  %v1660 = vpop.f32.mrf.mxu0
  %v1661 = vadd.f32 %v284, %v1660
  %v1662 = vpop.f32.mrf.mxu0
  %1663 = vmatprep.mubr.bf16.mxu0 %v944
  %1664 = vmatmul.mubr.bf16.gmra.mxu0 %v943
  %v1665 = vpop.f32.mrf.mxu0
  %v1666 = vadd.f32 %v284, %v1665
  %v1667 = vpop.f32.mrf.mxu0
  %v1668 = vpop.f32.mrf.mxu0
  %v1669 = vadd.f32 %v284, %v1668
  %v1670 = vpop.f32.mrf.mxu0
  %1671 = vmatprep.mubr.bf16.mxu0 %v949
  %1672 = vmatmul.mubr.bf16.gmra.mxu0 %v948
  %v1673 = vpop.f32.mrf.mxu0
  %v1674 = vadd.f32 %v284, %v1673
  %v1675 = vpop.f32.mrf.mxu0
  %v1676 = vpop.f32.mrf.mxu0
  %v1677 = vadd.f32 %v284, %v1676
  %v1678 = vpop.f32.mrf.mxu0
  %1679 = vmatprep.mubr.bf16.mxu0 %v954
  %1680 = vmatmul.mubr.bf16.gmra.mxu0 %v953
  %v1681 = vpop.f32.mrf.mxu0
  %v1682 = vadd.f32 %v284, %v1681
  %v1683 = vpop.f32.mrf.mxu0
  %v1684 = vpop.f32.mrf.mxu0
  %v1685 = vadd.f32 %v284, %v1684
  %v1686 = vpop.f32.mrf.mxu0
  %1687 = vdwg.mxu0
  %1688 = vmatprep.subr.bf16.mxu0 0
  %1689 = vmatpush1.bf16.msra.mxu0 %v1253
  %1690 = vmatprep.subr.bf16.mxu0 0
  %1691 = vmatpush1.bf16.msra.mxu0 %v1252
  %1692 = vmatprep.subr.bf16.mxu0 0
  %1693 = vmatpush1.bf16.msra.mxu0 %v1251
  %1694 = vmatprep.subr.bf16.mxu0 0
  %1695 = vmatpush1.bf16.msra.mxu0 %v1250
  %1696 = vmatprep.subr.bf16.mxu0 0
  %1697 = vmatpush1.bf16.msra.mxu0 %v1249
  %1698 = vmatprep.subr.bf16.mxu0 0
  %1699 = vmatpush1.bf16.msra.mxu0 %v1248
  %1700 = vmatprep.subr.bf16.mxu0 0
  %1701 = vmatpush1.bf16.msra.mxu0 %v1247
  %1702 = vmatprep.subr.bf16.mxu0 0
  %1703 = vmatpush1.bf16.msra.mxu0 %v1246
  %1704 = vmatprep.subr.bf16.mxu0 0
  %1705 = vmatpush2.bf16.msra.mxu0 %v1261
  %1706 = vmatprep.subr.bf16.mxu0 0
  %1707 = vmatpush2.bf16.msra.mxu0 %v1260
  %1708 = vmatprep.subr.bf16.mxu0 0
  %1709 = vmatpush2.bf16.msra.mxu0 %v1259
  %1710 = vmatprep.subr.bf16.mxu0 0
  %1711 = vmatpush2.bf16.msra.mxu0 %v1258
  %1712 = vmatprep.subr.bf16.mxu0 0
  %1713 = vmatpush2.bf16.msra.mxu0 %v1257
  %1714 = vmatprep.subr.bf16.mxu0 0
  %1715 = vmatpush2.bf16.msra.mxu0 %v1256
  %1716 = vmatprep.subr.bf16.mxu0 0
  %1717 = vmatpush2.bf16.msra.mxu0 %v1255
  %1718 = vmatprep.subr.bf16.mxu0 0
  %1719 = vmatpush2.bf16.msra.mxu0 %v1254
  %1720 = vmatprep.mubr.bf16.mxu0 %v801
  %1721 = vmatmul.mubr.bf16.gmra.mxu0 %v800
  %v1722 = vpop.f32.mrf.mxu0
  %v1723 = vadd.f32 %v1434, %v1722
  %v1724 = vpop.f32.mrf.mxu0
  %v1725 = vpop.f32.mrf.mxu0
  %v1726 = vadd.f32 %v1437, %v1725
  %v1727 = vpop.f32.mrf.mxu0
  %1728 = vmatprep.mubr.bf16.mxu0 %v806
  %1729 = vmatmul.mubr.bf16.gmra.mxu0 %v805
  %v1730 = vpop.f32.mrf.mxu0
  %v1731 = vadd.f32 %v1442, %v1730
  %v1732 = vpop.f32.mrf.mxu0
  %v1733 = vpop.f32.mrf.mxu0
  %v1734 = vadd.f32 %v1445, %v1733
  %v1735 = vpop.f32.mrf.mxu0
  %1736 = vmatprep.mubr.bf16.mxu0 %v811
  %1737 = vmatmul.mubr.bf16.gmra.mxu0 %v810
  %v1738 = vpop.f32.mrf.mxu0
  %v1739 = vadd.f32 %v1450, %v1738
  %v1740 = vpop.f32.mrf.mxu0
  %v1741 = vpop.f32.mrf.mxu0
  %v1742 = vadd.f32 %v1453, %v1741
  %v1743 = vpop.f32.mrf.mxu0
  %1744 = vmatprep.mubr.bf16.mxu0 %v816
  %1745 = vmatmul.mubr.bf16.gmra.mxu0 %v815
  %v1746 = vpop.f32.mrf.mxu0
  %v1747 = vadd.f32 %v1458, %v1746
  %v1748 = vpop.f32.mrf.mxu0
  %v1749 = vpop.f32.mrf.mxu0
  %v1750 = vadd.f32 %v1461, %v1749
  %v1751 = vpop.f32.mrf.mxu0
  %1752 = vmatprep.mubr.bf16.mxu0 %v821
  %1753 = vmatmul.mubr.bf16.gmra.mxu0 %v820
  %v1754 = vpop.f32.mrf.mxu0
  %v1755 = vadd.f32 %v1466, %v1754
  %v1756 = vpop.f32.mrf.mxu0
  %v1757 = vpop.f32.mrf.mxu0
  %v1758 = vadd.f32 %v1469, %v1757
  %v1759 = vpop.f32.mrf.mxu0
  %1760 = vmatprep.mubr.bf16.mxu0 %v826
  %1761 = vmatmul.mubr.bf16.gmra.mxu0 %v825
  %v1762 = vpop.f32.mrf.mxu0
  %v1763 = vadd.f32 %v1474, %v1762
  %v1764 = vpop.f32.mrf.mxu0
  %v1765 = vpop.f32.mrf.mxu0
  %v1766 = vadd.f32 %v1477, %v1765
  %v1767 = vpop.f32.mrf.mxu0
  %1768 = vmatprep.mubr.bf16.mxu0 %v831
  %1769 = vmatmul.mubr.bf16.gmra.mxu0 %v830
  %v1770 = vpop.f32.mrf.mxu0
  %v1771 = vadd.f32 %v1482, %v1770
  %v1772 = vpop.f32.mrf.mxu0
  %v1773 = vpop.f32.mrf.mxu0
  %v1774 = vadd.f32 %v1485, %v1773
  %v1775 = vpop.f32.mrf.mxu0
  %1776 = vmatprep.mubr.bf16.mxu0 %v836
  %1777 = vmatmul.mubr.bf16.gmra.mxu0 %v835
  %v1778 = vpop.f32.mrf.mxu0
  %v1779 = vadd.f32 %v1490, %v1778
  %v1780 = vpop.f32.mrf.mxu0
  %v1781 = vpop.f32.mrf.mxu0
  %v1782 = vadd.f32 %v1493, %v1781
  %v1783 = vpop.f32.mrf.mxu0
  %1784 = vmatprep.mubr.bf16.mxu0 %v841
  %1785 = vmatmul.mubr.bf16.gmra.mxu0 %v840
  %v1786 = vpop.f32.mrf.mxu0
  %v1787 = vadd.f32 %v1498, %v1786
  %v1788 = vpop.f32.mrf.mxu0
  %v1789 = vpop.f32.mrf.mxu0
  %v1790 = vadd.f32 %v1501, %v1789
  %v1791 = vpop.f32.mrf.mxu0
  %1792 = vmatprep.mubr.bf16.mxu0 %v846
  %1793 = vmatmul.mubr.bf16.gmra.mxu0 %v845
  %v1794 = vpop.f32.mrf.mxu0
  %v1795 = vadd.f32 %v1506, %v1794
  %v1796 = vpop.f32.mrf.mxu0
  %v1797 = vpop.f32.mrf.mxu0
  %v1798 = vadd.f32 %v1509, %v1797
  %v1799 = vpop.f32.mrf.mxu0
  %1800 = vmatprep.mubr.bf16.mxu0 %v851
  %1801 = vmatmul.mubr.bf16.gmra.mxu0 %v850
  %v1802 = vpop.f32.mrf.mxu0
  %v1803 = vadd.f32 %v1514, %v1802
  %v1804 = vpop.f32.mrf.mxu0
  %v1805 = vpop.f32.mrf.mxu0
  %v1806 = vadd.f32 %v1517, %v1805
  %v1807 = vpop.f32.mrf.mxu0
  %1808 = vmatprep.mubr.bf16.mxu0 %v856
  %1809 = vmatmul.mubr.bf16.gmra.mxu0 %v855
  %v1810 = vpop.f32.mrf.mxu0
  %v1811 = vadd.f32 %v1522, %v1810
  %v1812 = vpop.f32.mrf.mxu0
  %v1813 = vpop.f32.mrf.mxu0
  %v1814 = vadd.f32 %v1525, %v1813
  %v1815 = vpop.f32.mrf.mxu0
  %1816 = vmatprep.mubr.bf16.mxu0 %v861
  %1817 = vmatmul.mubr.bf16.gmra.mxu0 %v860
  %v1818 = vpop.f32.mrf.mxu0
  %v1819 = vadd.f32 %v1530, %v1818
  %v1820 = vpop.f32.mrf.mxu0
  %v1821 = vpop.f32.mrf.mxu0
  %v1822 = vadd.f32 %v1533, %v1821
  %v1823 = vpop.f32.mrf.mxu0
  %1824 = vmatprep.mubr.bf16.mxu0 %v866
  %1825 = vmatmul.mubr.bf16.gmra.mxu0 %v865
  %v1826 = vpop.f32.mrf.mxu0
  %v1827 = vadd.f32 %v1538, %v1826
  %v1828 = vpop.f32.mrf.mxu0
  %v1829 = vpop.f32.mrf.mxu0
  %v1830 = vadd.f32 %v1541, %v1829
  %v1831 = vpop.f32.mrf.mxu0
  %1832 = vmatprep.mubr.bf16.mxu0 %v871
  %1833 = vmatmul.mubr.bf16.gmra.mxu0 %v870
  %v1834 = vpop.f32.mrf.mxu0
  %v1835 = vadd.f32 %v1546, %v1834
  %v1836 = vpop.f32.mrf.mxu0
  %v1837 = vpop.f32.mrf.mxu0
  %v1838 = vadd.f32 %v1549, %v1837
  %v1839 = vpop.f32.mrf.mxu0
  %1840 = vmatprep.mubr.bf16.mxu0 %v876
  %1841 = vmatmul.mubr.bf16.gmra.mxu0 %v875
  %v1842 = vpop.f32.mrf.mxu0
  %v1843 = vadd.f32 %v1554, %v1842
  %v1844 = vpop.f32.mrf.mxu0
  %v1845 = vpop.f32.mrf.mxu0
  %v1846 = vadd.f32 %v1557, %v1845
  %v1847 = vpop.f32.mrf.mxu0
  %1848 = vmatprep.mubr.bf16.mxu0 %v881
  %1849 = vmatmul.mubr.bf16.gmra.mxu0 %v880
  %v1850 = vpop.f32.mrf.mxu0
  %v1851 = vadd.f32 %v1562, %v1850
  %v1852 = vpop.f32.mrf.mxu0
  %v1853 = vpop.f32.mrf.mxu0
  %v1854 = vadd.f32 %v1565, %v1853
  %v1855 = vpop.f32.mrf.mxu0
  %1856 = vmatprep.mubr.bf16.mxu0 %v886
  %1857 = vmatmul.mubr.bf16.gmra.mxu0 %v885
  %v1858 = vpop.f32.mrf.mxu0
  %v1859 = vadd.f32 %v1570, %v1858
  %v1860 = vpop.f32.mrf.mxu0
  %v1861 = vpop.f32.mrf.mxu0
  %v1862 = vadd.f32 %v1573, %v1861
  %v1863 = vpop.f32.mrf.mxu0
  %1864 = vmatprep.mubr.bf16.mxu0 %v891
  %1865 = vmatmul.mubr.bf16.gmra.mxu0 %v890
  %v1866 = vpop.f32.mrf.mxu0
  %v1867 = vadd.f32 %v1578, %v1866
  %v1868 = vpop.f32.mrf.mxu0
  %v1869 = vpop.f32.mrf.mxu0
  %v1870 = vadd.f32 %v1581, %v1869
  %v1871 = vpop.f32.mrf.mxu0
  %1872 = vmatprep.mubr.bf16.mxu0 %v896
  %1873 = vmatmul.mubr.bf16.gmra.mxu0 %v895
  %v1874 = vpop.f32.mrf.mxu0
  %v1875 = vadd.f32 %v1586, %v1874
  %v1876 = vpop.f32.mrf.mxu0
  %v1877 = vpop.f32.mrf.mxu0
  %v1878 = vadd.f32 %v1589, %v1877
  %v1879 = vpop.f32.mrf.mxu0
  %1880 = vmatprep.mubr.bf16.mxu0 %v901
  %1881 = vmatmul.mubr.bf16.gmra.mxu0 %v900
  %v1882 = vpop.f32.mrf.mxu0
  %v1883 = vadd.f32 %v1594, %v1882
  %v1884 = vpop.f32.mrf.mxu0
  %v1885 = vpop.f32.mrf.mxu0
  %v1886 = vadd.f32 %v1597, %v1885
  %v1887 = vpop.f32.mrf.mxu0
  %1888 = vmatprep.mubr.bf16.mxu0 %v906
  %1889 = vmatmul.mubr.bf16.gmra.mxu0 %v905
  %v1890 = vpop.f32.mrf.mxu0
  %v1891 = vadd.f32 %v1602, %v1890
  %v1892 = vpop.f32.mrf.mxu0
  %v1893 = vpop.f32.mrf.mxu0
  %v1894 = vadd.f32 %v1605, %v1893
  %v1895 = vpop.f32.mrf.mxu0
  %1896 = vmatprep.mubr.bf16.mxu0 %v911
  %1897 = vmatmul.mubr.bf16.gmra.mxu0 %v910
  %v1898 = vpop.f32.mrf.mxu0
  %v1899 = vadd.f32 %v1610, %v1898
  %v1900 = vpop.f32.mrf.mxu0
  %v1901 = vpop.f32.mrf.mxu0
  %v1902 = vadd.f32 %v1613, %v1901
  %v1903 = vpop.f32.mrf.mxu0
  %1904 = vmatprep.mubr.bf16.mxu0 %v916
  %1905 = vmatmul.mubr.bf16.gmra.mxu0 %v915
  %v1906 = vpop.f32.mrf.mxu0
  %v1907 = vadd.f32 %v1618, %v1906
  %v1908 = vpop.f32.mrf.mxu0
  %v1909 = vpop.f32.mrf.mxu0
  %v1910 = vadd.f32 %v1621, %v1909
  %v1911 = vpop.f32.mrf.mxu0
  %1912 = vmatprep.mubr.bf16.mxu0 %v921
  %1913 = vmatmul.mubr.bf16.gmra.mxu0 %v920
  %v1914 = vpop.f32.mrf.mxu0
  %v1915 = vadd.f32 %v1626, %v1914
  %v1916 = vpop.f32.mrf.mxu0
  %v1917 = vpop.f32.mrf.mxu0
  %v1918 = vadd.f32 %v1629, %v1917
  %v1919 = vpop.f32.mrf.mxu0
  %1920 = vmatprep.mubr.bf16.mxu0 %v926
  %1921 = vmatmul.mubr.bf16.gmra.mxu0 %v925
  %v1922 = vpop.f32.mrf.mxu0
  %v1923 = vadd.f32 %v1634, %v1922
  %v1924 = vpop.f32.mrf.mxu0
  %v1925 = vpop.f32.mrf.mxu0
  %v1926 = vadd.f32 %v1637, %v1925
  %v1927 = vpop.f32.mrf.mxu0
  %1928 = vmatprep.mubr.bf16.mxu0 %v931
  %1929 = vmatmul.mubr.bf16.gmra.mxu0 %v930
  %v1930 = vpop.f32.mrf.mxu0
  %v1931 = vadd.f32 %v1642, %v1930
  %v1932 = vpop.f32.mrf.mxu0
  %v1933 = vpop.f32.mrf.mxu0
  %v1934 = vadd.f32 %v1645, %v1933
  %v1935 = vpop.f32.mrf.mxu0
  %1936 = vmatprep.mubr.bf16.mxu0 %v936
  %1937 = vmatmul.mubr.bf16.gmra.mxu0 %v935
  %v1938 = vpop.f32.mrf.mxu0
  %v1939 = vadd.f32 %v1650, %v1938
  %v1940 = vpop.f32.mrf.mxu0
  %v1941 = vpop.f32.mrf.mxu0
  %v1942 = vadd.f32 %v1653, %v1941
  %v1943 = vpop.f32.mrf.mxu0
  %1944 = vmatprep.mubr.bf16.mxu0 %v941
  %1945 = vmatmul.mubr.bf16.gmra.mxu0 %v940
  %v1946 = vpop.f32.mrf.mxu0
  %v1947 = vadd.f32 %v1658, %v1946
  %v1948 = vpop.f32.mrf.mxu0
  %v1949 = vpop.f32.mrf.mxu0
  %v1950 = vadd.f32 %v1661, %v1949
  %v1951 = vpop.f32.mrf.mxu0
  %1952 = vmatprep.mubr.bf16.mxu0 %v946
  %1953 = vmatmul.mubr.bf16.gmra.mxu0 %v945
  %v1954 = vpop.f32.mrf.mxu0
  %v1955 = vadd.f32 %v1666, %v1954
  %v1956 = vpop.f32.mrf.mxu0
  %v1957 = vpop.f32.mrf.mxu0
  %v1958 = vadd.f32 %v1669, %v1957
  %v1959 = vpop.f32.mrf.mxu0
  %1960 = vmatprep.mubr.bf16.mxu0 %v951
  %1961 = vmatmul.mubr.bf16.gmra.mxu0 %v950
  %v1962 = vpop.f32.mrf.mxu0
  %v1963 = vadd.f32 %v1674, %v1962
  %v1964 = vpop.f32.mrf.mxu0
  %v1965 = vpop.f32.mrf.mxu0
  %v1966 = vadd.f32 %v1677, %v1965
  %v1967 = vpop.f32.mrf.mxu0
  %1968 = vmatprep.mubr.bf16.mxu0 %v956
  %1969 = vmatmul.mubr.bf16.gmra.mxu0 %v955
  %v1970 = vpop.f32.mrf.mxu0
  %v1971 = vadd.f32 %v1682, %v1970
  %v1972 = vpop.f32.mrf.mxu0
  %v1973 = vpop.f32.mrf.mxu0
  %v1974 = vadd.f32 %v1685, %v1973
  %v1975 = vpop.f32.mrf.mxu0
  %1976 = vdwg.mxu0
  %1977 = vmatprep.subr.bf16.mxu0 0
  %1978 = vmatpush1.bf16.msra.mxu0 0
  %1979 = vmatprep.subr.bf16.mxu0 0
  %1980 = vmatpush1.bf16.msra.mxu0 0
  %1981 = vmatprep.subr.bf16.mxu0 0
  %1982 = vmatpush1.bf16.msra.mxu0 0
  %1983 = vmatprep.subr.bf16.mxu0 0
  %1984 = vmatpush1.bf16.msra.mxu0 0
  %1985 = vmatprep.subr.bf16.mxu0 0
  %1986 = vmatpush1.bf16.msra.mxu0 %v1265
  %1987 = vmatprep.subr.bf16.mxu0 0
  %1988 = vmatpush1.bf16.msra.mxu0 %v1264
  %1989 = vmatprep.subr.bf16.mxu0 0
  %1990 = vmatpush1.bf16.msra.mxu0 %v1263
  %1991 = vmatprep.subr.bf16.mxu0 0
  %1992 = vmatpush1.bf16.msra.mxu0 %v1262
  %1993 = vmatprep.subr.bf16.mxu0 0
  %1994 = vmatpush2.bf16.msra.mxu0 0
  %1995 = vmatprep.subr.bf16.mxu0 0
  %1996 = vmatpush2.bf16.msra.mxu0 0
  %1997 = vmatprep.subr.bf16.mxu0 0
  %1998 = vmatpush2.bf16.msra.mxu0 0
  %1999 = vmatprep.subr.bf16.mxu0 0
  %2000 = vmatpush2.bf16.msra.mxu0 0
  %2001 = vmatprep.subr.bf16.mxu0 0
  %2002 = vmatpush2.bf16.msra.mxu0 0
  %2003 = vmatprep.subr.bf16.mxu0 0
  %2004 = vmatpush2.bf16.msra.mxu0 0
  %2005 = vmatprep.subr.bf16.mxu0 0
  %2006 = vmatpush2.bf16.msra.mxu0 0
  %2007 = vmatprep.subr.bf16.mxu0 0
  %2008 = vmatpush2.bf16.msra.mxu0 0
  %2009 = vmatprep.mubr.bf16.mxu0 0
  %2010 = vmatmul.mubr.bf16.gmra.mxu0 %v1304
  %v2011 = vpop.f32.mrf.mxu0
  %v2012 = vadd.f32 %v1723, %v2011
  %v2013 = vpop.f32.mrf.mxu0
  %v2014 = vpop.f32.mrf.mxu0
  %v2015 = vadd.f32 %v1726, %v2014
  %v2016 = vpop.f32.mrf.mxu0
  %2017 = vmatprep.mubr.bf16.mxu0 0
  %2018 = vmatmul.mubr.bf16.gmra.mxu0 %v1307
  %v2019 = vpop.f32.mrf.mxu0
  %v2020 = vadd.f32 %v1731, %v2019
  %v2021 = vpop.f32.mrf.mxu0
  %v2022 = vpop.f32.mrf.mxu0
  %v2023 = vadd.f32 %v1734, %v2022
  %v2024 = vpop.f32.mrf.mxu0
  %2025 = vmatprep.mubr.bf16.mxu0 0
  %2026 = vmatmul.mubr.bf16.gmra.mxu0 %v1310
  %v2027 = vpop.f32.mrf.mxu0
  %v2028 = vadd.f32 %v1739, %v2027
  %v2029 = vpop.f32.mrf.mxu0
  %v2030 = vpop.f32.mrf.mxu0
  %v2031 = vadd.f32 %v1742, %v2030
  %v2032 = vpop.f32.mrf.mxu0
  %2033 = vmatprep.mubr.bf16.mxu0 0
  %2034 = vmatmul.mubr.bf16.gmra.mxu0 %v1313
  %v2035 = vpop.f32.mrf.mxu0
  %v2036 = vadd.f32 %v1747, %v2035
  %v2037 = vpop.f32.mrf.mxu0
  %v2038 = vpop.f32.mrf.mxu0
  %v2039 = vadd.f32 %v1750, %v2038
  %v2040 = vpop.f32.mrf.mxu0
  %2041 = vmatprep.mubr.bf16.mxu0 0
  %2042 = vmatmul.mubr.bf16.gmra.mxu0 %v1316
  %v2043 = vpop.f32.mrf.mxu0
  %v2044 = vadd.f32 %v1755, %v2043
  %v2045 = vpop.f32.mrf.mxu0
  %v2046 = vpop.f32.mrf.mxu0
  %v2047 = vadd.f32 %v1758, %v2046
  %v2048 = vpop.f32.mrf.mxu0
  %2049 = vmatprep.mubr.bf16.mxu0 0
  %2050 = vmatmul.mubr.bf16.gmra.mxu0 %v1319
  %v2051 = vpop.f32.mrf.mxu0
  %v2052 = vadd.f32 %v1763, %v2051
  %v2053 = vpop.f32.mrf.mxu0
  %v2054 = vpop.f32.mrf.mxu0
  %v2055 = vadd.f32 %v1766, %v2054
  %v2056 = vpop.f32.mrf.mxu0
  %2057 = vmatprep.mubr.bf16.mxu0 0
  %2058 = vmatmul.mubr.bf16.gmra.mxu0 %v1322
  %v2059 = vpop.f32.mrf.mxu0
  %v2060 = vadd.f32 %v1771, %v2059
  %v2061 = vpop.f32.mrf.mxu0
  %v2062 = vpop.f32.mrf.mxu0
  %v2063 = vadd.f32 %v1774, %v2062
  %v2064 = vpop.f32.mrf.mxu0
  %2065 = vmatprep.mubr.bf16.mxu0 0
  %2066 = vmatmul.mubr.bf16.gmra.mxu0 %v1325
  %v2067 = vpop.f32.mrf.mxu0
  %v2068 = vadd.f32 %v1779, %v2067
  %v2069 = vpop.f32.mrf.mxu0
  %v2070 = vpop.f32.mrf.mxu0
  %v2071 = vadd.f32 %v1782, %v2070
  %v2072 = vpop.f32.mrf.mxu0
  %2073 = vmatprep.mubr.bf16.mxu0 0
  %2074 = vmatmul.mubr.bf16.gmra.mxu0 %v1328
  %v2075 = vpop.f32.mrf.mxu0
  %v2076 = vadd.f32 %v1787, %v2075
  %v2077 = vpop.f32.mrf.mxu0
  %v2078 = vpop.f32.mrf.mxu0
  %v2079 = vadd.f32 %v1790, %v2078
  %v2080 = vpop.f32.mrf.mxu0
  %2081 = vmatprep.mubr.bf16.mxu0 0
  %2082 = vmatmul.mubr.bf16.gmra.mxu0 %v1331
  %v2083 = vpop.f32.mrf.mxu0
  %v2084 = vadd.f32 %v1795, %v2083
  %v2085 = vpop.f32.mrf.mxu0
  %v2086 = vpop.f32.mrf.mxu0
  %v2087 = vadd.f32 %v1798, %v2086
  %v2088 = vpop.f32.mrf.mxu0
  %2089 = vmatprep.mubr.bf16.mxu0 0
  %2090 = vmatmul.mubr.bf16.gmra.mxu0 %v1334
  %v2091 = vpop.f32.mrf.mxu0
  %v2092 = vadd.f32 %v1803, %v2091
  %v2093 = vpop.f32.mrf.mxu0
  %v2094 = vpop.f32.mrf.mxu0
  %v2095 = vadd.f32 %v1806, %v2094
  %v2096 = vpop.f32.mrf.mxu0
  %2097 = vmatprep.mubr.bf16.mxu0 0
  %2098 = vmatmul.mubr.bf16.gmra.mxu0 %v1337
  %v2099 = vpop.f32.mrf.mxu0
  %v2100 = vadd.f32 %v1811, %v2099
  %v2101 = vpop.f32.mrf.mxu0
  %v2102 = vpop.f32.mrf.mxu0
  %v2103 = vadd.f32 %v1814, %v2102
  %v2104 = vpop.f32.mrf.mxu0
  %2105 = vmatprep.mubr.bf16.mxu0 0
  %2106 = vmatmul.mubr.bf16.gmra.mxu0 %v1340
  %v2107 = vpop.f32.mrf.mxu0
  %v2108 = vadd.f32 %v1819, %v2107
  %v2109 = vpop.f32.mrf.mxu0
  %v2110 = vpop.f32.mrf.mxu0
  %v2111 = vadd.f32 %v1822, %v2110
  %v2112 = vpop.f32.mrf.mxu0
  %2113 = vmatprep.mubr.bf16.mxu0 0
  %2114 = vmatmul.mubr.bf16.gmra.mxu0 %v1343
  %v2115 = vpop.f32.mrf.mxu0
  %v2116 = vadd.f32 %v1827, %v2115
  %v2117 = vpop.f32.mrf.mxu0
  %v2118 = vpop.f32.mrf.mxu0
  %v2119 = vadd.f32 %v1830, %v2118
  %v2120 = vpop.f32.mrf.mxu0
  %2121 = vmatprep.mubr.bf16.mxu0 0
  %2122 = vmatmul.mubr.bf16.gmra.mxu0 %v1346
  %v2123 = vpop.f32.mrf.mxu0
  %v2124 = vadd.f32 %v1835, %v2123
  %v2125 = vpop.f32.mrf.mxu0
  %v2126 = vpop.f32.mrf.mxu0
  %v2127 = vadd.f32 %v1838, %v2126
  %v2128 = vpop.f32.mrf.mxu0
  %2129 = vmatprep.mubr.bf16.mxu0 0
  %2130 = vmatmul.mubr.bf16.gmra.mxu0 %v1349
  %v2131 = vpop.f32.mrf.mxu0
  %v2132 = vadd.f32 %v1843, %v2131
  %v2133 = vpop.f32.mrf.mxu0
  %v2134 = vpop.f32.mrf.mxu0
  %v2135 = vadd.f32 %v1846, %v2134
  %v2136 = vpop.f32.mrf.mxu0
  %2137 = vmatprep.mubr.bf16.mxu0 0
  %2138 = vmatmul.mubr.bf16.gmra.mxu0 %v1352
  %v2139 = vpop.f32.mrf.mxu0
  %v2140 = vadd.f32 %v1851, %v2139
  %v2141 = vpop.f32.mrf.mxu0
  %v2142 = vpop.f32.mrf.mxu0
  %v2143 = vadd.f32 %v1854, %v2142
  %v2144 = vpop.f32.mrf.mxu0
  %2145 = vmatprep.mubr.bf16.mxu0 0
  %2146 = vmatmul.mubr.bf16.gmra.mxu0 %v1355
  %v2147 = vpop.f32.mrf.mxu0
  %v2148 = vadd.f32 %v1859, %v2147
  %v2149 = vpop.f32.mrf.mxu0
  %v2150 = vpop.f32.mrf.mxu0
  %v2151 = vadd.f32 %v1862, %v2150
  %v2152 = vpop.f32.mrf.mxu0
  %2153 = vmatprep.mubr.bf16.mxu0 0
  %2154 = vmatmul.mubr.bf16.gmra.mxu0 %v1358
  %v2155 = vpop.f32.mrf.mxu0
  %v2156 = vadd.f32 %v1867, %v2155
  %v2157 = vpop.f32.mrf.mxu0
  %v2158 = vpop.f32.mrf.mxu0
  %v2159 = vadd.f32 %v1870, %v2158
  %v2160 = vpop.f32.mrf.mxu0
  %2161 = vmatprep.mubr.bf16.mxu0 0
  %2162 = vmatmul.mubr.bf16.gmra.mxu0 %v1361
  %v2163 = vpop.f32.mrf.mxu0
  %v2164 = vadd.f32 %v1875, %v2163
  %v2165 = vpop.f32.mrf.mxu0
  %v2166 = vpop.f32.mrf.mxu0
  %v2167 = vadd.f32 %v1878, %v2166
  %v2168 = vpop.f32.mrf.mxu0
  %2169 = vmatprep.mubr.bf16.mxu0 0
  %2170 = vmatmul.mubr.bf16.gmra.mxu0 %v1364
  %v2171 = vpop.f32.mrf.mxu0
  %v2172 = vadd.f32 %v1883, %v2171
  %v2173 = vpop.f32.mrf.mxu0
  %v2174 = vpop.f32.mrf.mxu0
  %v2175 = vadd.f32 %v1886, %v2174
  %v2176 = vpop.f32.mrf.mxu0
  %2177 = vmatprep.mubr.bf16.mxu0 0
  %2178 = vmatmul.mubr.bf16.gmra.mxu0 %v1367
  %v2179 = vpop.f32.mrf.mxu0
  %v2180 = vadd.f32 %v1891, %v2179
  %v2181 = vpop.f32.mrf.mxu0
  %v2182 = vpop.f32.mrf.mxu0
  %v2183 = vadd.f32 %v1894, %v2182
  %v2184 = vpop.f32.mrf.mxu0
  %2185 = vmatprep.mubr.bf16.mxu0 0
  %2186 = vmatmul.mubr.bf16.gmra.mxu0 %v1370
  %v2187 = vpop.f32.mrf.mxu0
  %v2188 = vadd.f32 %v1899, %v2187
  %v2189 = vpop.f32.mrf.mxu0
  %v2190 = vpop.f32.mrf.mxu0
  %v2191 = vadd.f32 %v1902, %v2190
  %v2192 = vpop.f32.mrf.mxu0
  %2193 = vmatprep.mubr.bf16.mxu0 0
  %2194 = vmatmul.mubr.bf16.gmra.mxu0 %v1373
  %v2195 = vpop.f32.mrf.mxu0
  %v2196 = vadd.f32 %v1907, %v2195
  %v2197 = vpop.f32.mrf.mxu0
  %v2198 = vpop.f32.mrf.mxu0
  %v2199 = vadd.f32 %v1910, %v2198
  %v2200 = vpop.f32.mrf.mxu0
  %2201 = vmatprep.mubr.bf16.mxu0 0
  %2202 = vmatmul.mubr.bf16.gmra.mxu0 %v1376
  %v2203 = vpop.f32.mrf.mxu0
  %v2204 = vadd.f32 %v1915, %v2203
  %v2205 = vpop.f32.mrf.mxu0
  %v2206 = vpop.f32.mrf.mxu0
  %v2207 = vadd.f32 %v1918, %v2206
  %v2208 = vpop.f32.mrf.mxu0
  %2209 = vmatprep.mubr.bf16.mxu0 0
  %2210 = vmatmul.mubr.bf16.gmra.mxu0 %v1379
  %v2211 = vpop.f32.mrf.mxu0
  %v2212 = vadd.f32 %v1923, %v2211
  %v2213 = vpop.f32.mrf.mxu0
  %v2214 = vpop.f32.mrf.mxu0
  %v2215 = vadd.f32 %v1926, %v2214
  %v2216 = vpop.f32.mrf.mxu0
  %2217 = vmatprep.mubr.bf16.mxu0 0
  %2218 = vmatmul.mubr.bf16.gmra.mxu0 %v1382
  %v2219 = vpop.f32.mrf.mxu0
  %v2220 = vadd.f32 %v1931, %v2219
  %v2221 = vpop.f32.mrf.mxu0
  %v2222 = vpop.f32.mrf.mxu0
  %v2223 = vadd.f32 %v1934, %v2222
  %v2224 = vpop.f32.mrf.mxu0
  %2225 = vmatprep.mubr.bf16.mxu0 0
  %2226 = vmatmul.mubr.bf16.gmra.mxu0 %v1385
  %v2227 = vpop.f32.mrf.mxu0
  %v2228 = vadd.f32 %v1939, %v2227
  %v2229 = vpop.f32.mrf.mxu0
  %v2230 = vpop.f32.mrf.mxu0
  %v2231 = vadd.f32 %v1942, %v2230
  %v2232 = vpop.f32.mrf.mxu0
  %2233 = vmatprep.mubr.bf16.mxu0 0
  %2234 = vmatmul.mubr.bf16.gmra.mxu0 %v1388
  %v2235 = vpop.f32.mrf.mxu0
  %v2236 = vadd.f32 %v1947, %v2235
  %v2237 = vpop.f32.mrf.mxu0
  %v2238 = vpop.f32.mrf.mxu0
  %v2239 = vadd.f32 %v1950, %v2238
  %v2240 = vpop.f32.mrf.mxu0
  %2241 = vmatprep.mubr.bf16.mxu0 0
  %2242 = vmatmul.mubr.bf16.gmra.mxu0 %v1391
  %v2243 = vpop.f32.mrf.mxu0
  %v2244 = vadd.f32 %v1955, %v2243
  %v2245 = vpop.f32.mrf.mxu0
  %v2246 = vpop.f32.mrf.mxu0
  %v2247 = vadd.f32 %v1958, %v2246
  %v2248 = vpop.f32.mrf.mxu0
  %2249 = vmatprep.mubr.bf16.mxu0 0
  %2250 = vmatmul.mubr.bf16.gmra.mxu0 %v1394
  %v2251 = vpop.f32.mrf.mxu0
  %v2252 = vadd.f32 %v1963, %v2251
  %v2253 = vpop.f32.mrf.mxu0
  %v2254 = vpop.f32.mrf.mxu0
  %v2255 = vadd.f32 %v1966, %v2254
  %v2256 = vpop.f32.mrf.mxu0
  %2257 = vmatprep.mubr.bf16.mxu0 0
  %2258 = vmatmul.mubr.bf16.gmra.mxu0 %v1397
  %v2259 = vpop.f32.mrf.mxu0
  %v2260 = vadd.f32 %v1971, %v2259
  %v2261 = vpop.f32.mrf.mxu0
  %v2262 = vpop.f32.mrf.mxu0
  %v2263 = vadd.f32 %v1974, %v2262
  %v2264 = vpop.f32.mrf.mxu0
  %2265 = vdwg.mxu0
  %2266 = vst [vmem:[%s3] sm:$0xff] %v2012
  %2267 = vst [vmem:[%s3 + $0x8] sm:$0xff] %v2015
  %2268 = vst [vmem:[%s3 + $0x10] sm:$0xff] %v2020
  %2269 = vst [vmem:[%s3 + $0x18] sm:$0xff] %v2023
  %2270 = vst [vmem:[%s3 + $0x20] sm:$0xff] %v2028
  %2271 = vst [vmem:[%s3 + $0x28] sm:$0xff] %v2031
  %2272 = vst [vmem:[%s3 + $0x30] sm:$0xff] %v2036
  %2273 = vst [vmem:[%s3 + $0x38] sm:$0xff] %v2039
  %2274 = vst [vmem:[%s3 + $0x40] sm:$0xff] %v2044
  %2275 = vst [vmem:[%s3 + $0x48] sm:$0xff] %v2047
  %2276 = vst [vmem:[%s3 + $0x50] sm:$0xff] %v2052
  %2277 = vst [vmem:[%s3 + $0x58] sm:$0xff] %v2055
  %2278 = vst [vmem:[%s3 + $0x60] sm:$0xff] %v2060
  %2279 = vst [vmem:[%s3 + $0x68] sm:$0xff] %v2063
  %2280 = vst [vmem:[%s3 + $0x70] sm:$0xff] %v2068
  %2281 = vst [vmem:[%s3 + $0x78] sm:$0xff] %v2071
  %2282 = vst [vmem:[%s3 + $0x80] sm:$0xff] %v2076
  %2283 = vst [vmem:[%s3 + $0x88] sm:$0xff] %v2079
  %2284 = vst [vmem:[%s3 + $0x90] sm:$0xff] %v2084
  %2285 = vst [vmem:[%s3 + $0x98] sm:$0xff] %v2087
  %2286 = vst [vmem:[%s3 + $0xa0] sm:$0xff] %v2092
  %2287 = vst [vmem:[%s3 + $0xa8] sm:$0xff] %v2095
  %2288 = vst [vmem:[%s3 + $0xb0] sm:$0xff] %v2100
  %2289 = vst [vmem:[%s3 + $0xb8] sm:$0xff] %v2103
  %2290 = vst [vmem:[%s3 + $0xc0] sm:$0xff] %v2108
  %2291 = vst [vmem:[%s3 + $0xc8] sm:$0xff] %v2111
  %2292 = vst [vmem:[%s3 + $0xd0] sm:$0xff] %v2116
  %2293 = vst [vmem:[%s3 + $0xd8] sm:$0xff] %v2119
  %2294 = vst [vmem:[%s3 + $0xe0] sm:$0xff] %v2124
  %2295 = vst [vmem:[%s3 + $0xe8] sm:$0xff] %v2127
  %2296 = vst [vmem:[%s3 + $0xf0] sm:$0xff] %v2132
  %2297 = vst [vmem:[%s3 + $0xf8] sm:$0xff] %v2135
  %2298 = vst [vmem:[%s3 + $0x100] sm:$0xff] %v2140
  %2299 = vst [vmem:[%s3 + $0x108] sm:$0xff] %v2143
  %2300 = vst [vmem:[%s3 + $0x110] sm:$0xff] %v2148
  %2301 = vst [vmem:[%s3 + $0x118] sm:$0xff] %v2151
  %2302 = vst [vmem:[%s3 + $0x120] sm:$0xff] %v2156
  %2303 = vst [vmem:[%s3 + $0x128] sm:$0xff] %v2159
  %2304 = vst [vmem:[%s3 + $0x130] sm:$0xff] %v2164
  %2305 = vst [vmem:[%s3 + $0x138] sm:$0xff] %v2167
  %2306 = vst [vmem:[%s3 + $0x140] sm:$0xff] %v2172
  %2307 = vst [vmem:[%s3 + $0x148] sm:$0xff] %v2175
  %2308 = vst [vmem:[%s3 + $0x150] sm:$0xff] %v2180
  %2309 = vst [vmem:[%s3 + $0x158] sm:$0xff] %v2183
  %2310 = vst [vmem:[%s3 + $0x160] sm:$0xff] %v2188
  %2311 = vst [vmem:[%s3 + $0x168] sm:$0xff] %v2191
  %2312 = vst [vmem:[%s3 + $0x170] sm:$0xff] %v2196
  %2313 = vst [vmem:[%s3 + $0x178] sm:$0xff] %v2199
  %2314 = vst [vmem:[%s3 + $0x180] sm:$0xff] %v2204
  %2315 = vst [vmem:[%s3 + $0x188] sm:$0xff] %v2207
  %2316 = vst [vmem:[%s3 + $0x190] sm:$0xff] %v2212
  %2317 = vst [vmem:[%s3 + $0x198] sm:$0xff] %v2215
  %2318 = vst [vmem:[%s3 + $0x1a0] sm:$0xff] %v2220
  %2319 = vst [vmem:[%s3 + $0x1a8] sm:$0xff] %v2223
  %2320 = vst [vmem:[%s3 + $0x1b0] sm:$0xff] %v2228
  %2321 = vst [vmem:[%s3 + $0x1b8] sm:$0xff] %v2231
  %2322 = vst [vmem:[%s3 + $0x1c0] sm:$0xff] %v2236
  %2323 = vst [vmem:[%s3 + $0x1c8] sm:$0xff] %v2239
  %2324 = vst [vmem:[%s3 + $0x1d0] sm:$0xff] %v2244
  %2325 = vst [vmem:[%s3 + $0x1d8] sm:$0xff] %v2247
  %2326 = vst [vmem:[%s3 + $0x1e0] sm:$0xff] %v2252
  %2327 = vst [vmem:[%s3 + $0x1e8] sm:$0xff] %v2255
  %2328 = vst [vmem:[%s3 + $0x1f0] sm:$0xff] %v2260
  %2329 = vst [vmem:[%s3 + $0x1f8] sm:$0xff] %v2263
  // Predicated region
  $region14: #{relight_net_forward.17} parent=0 // pred_check
    _
  $region15: #{relight_net_forward.17} parent=0 // pred_check_branch
    %2331 = sbr.rel (0) target = $region17
  $region16: #{relight_net_forward.17} parent=0 // pred_region
    _
  $region17: #{relight_net_forward.17} parent=0 // pred_fallthru
    _
  // Predicated region
  $region18: #{relight_net_forward.17} parent=0 // pred_check
    _
  $region19: #{relight_net_forward.17} parent=0 // pred_check_branch
    %2333 = sbr.rel (0) target = $region21
  $region20: #{relight_net_forward.17} parent=0 // pred_region
    _
  $region21: #{relight_net_forward.17} parent=0 // pred_fallthru
    _

</llo_original>
